<compile_context>
chip_gen: v6e
topology: v6e:2x2x1
jax: 0.10.0
libtpu: 0.0.40
codegen_flags: <defaults>
</compile_context>

<pallas_src>
import jax
import jax.numpy as jnp
from jax.experimental import pallas as pl
from jax.experimental.pallas import tpu as pltpu


_SMALL_BATCH_FALLBACK = 512     # below this, pallas launch overhead > all the work
_DEFAULT_BLOCK_ROWS = 4096      # row-major path: batch rows per tile (multiple of 8)
_DEFAULT_BLOCK_COLS = 32768     # class-major path: batch cols per tile (multiple of 128)
_VMEM_LIMIT_BYTES = 32 * 1024 * 1024  # safe on v5e/v6e/v7x; covers block_rows up to 8192


def _log_softmax_rows_kernel(x_ref, o_ref):
    # Numerically stable log-softmax over the LAST axis of a (TB, C) tile
    # (row-major [batch, classes] layout == PyTorch dim=1).
    x = x_ref[...].astype(jnp.float32)
    m = jnp.max(x, axis=-1, keepdims=True)
    shifted = x - m
    lse = jnp.log(jnp.sum(jnp.exp(shifted), axis=-1, keepdims=True))
    o_ref[...] = (shifted - lse).astype(o_ref.dtype)


def _log_softmax_cols_kernel(x_ref, o_ref):
    # Numerically stable log-softmax over AXIS 0 of a (C, TB) tile
    # (class-major layout: classes on sublanes, batch on lanes -> lane-dense
    # loads/stores, no (8,128) padding waste).
    x = x_ref[...].astype(jnp.float32)
    m = jnp.max(x, axis=0, keepdims=True)
    shifted = x - m
    lse = jnp.log(jnp.sum(jnp.exp(shifted), axis=0, keepdims=True))
    o_ref[...] = (shifted - lse).astype(o_ref.dtype)


def _cost_estimate(n_rows: int, n_classes: int, itemsize: int) -> pl.CostEstimate:
    return pl.CostEstimate(
        flops=3 * n_rows * n_classes,                     # max-sub, sum, sub
        transcendentals=n_rows * n_classes + n_rows,      # exp per element + log per row
        bytes_accessed=2 * n_rows * n_classes * itemsize, # read + write
    )


def log_softmax_pallas(
    x: jax.Array,
    *,
    block_rows: int = _DEFAULT_BLOCK_ROWS,
    small_batch_fallback: int = _SMALL_BATCH_FALLBACK,
) -> jax.Array:
    """log_softmax(x, axis=1) for row-major logits [batch, num_classes]."""
    assert x.ndim == 2, "expects [batch, num_classes] logits"
    B, C = x.shape

    # Small-input fast path: at fashion-MNIST sizes (8x10) the pallas_call
    # launch + one grid step dwarfs the ~0.3 KiB of useful work on every TPU
    # generation; let XLA fuse it (ideally into the producing matmul).
    if B <= small_batch_fallback:
        return jax.nn.log_softmax(x, axis=1)

    # Tile the batch axis. Block last dim == full C (legal regardless of 128
    # divisibility); partial trailing row blocks are masked by Pallas and the
    # garbage rows that flow through exp/log are discarded (no FP traps).
    tb = B if B <= block_rows else block_rows
    grid_b = pl.cdiv(B, tb)

    return pl.pallas_call(
        _log_softmax_rows_kernel,
        out_shape=jax.ShapeDtypeStruct((B, C), x.dtype),
        grid_spec=pltpu.PrefetchScalarGridSpec(
            num_scalar_prefetch=0,
            grid=(grid_b,),
            in_specs=[pl.BlockSpec((tb, C), lambda i: (i, 0))],
            out_specs=pl.BlockSpec((tb, C), lambda i: (i, 0)),
        ),
        # Logits are dead after log_softmax: write the result over the input
        # buffer (alias takes effect when the caller donates x under jit).
        input_output_aliases={0: 0},
        cost_estimate=_cost_estimate(B, C, x.dtype.itemsize),
        compiler_params=pltpu.CompilerParams(
            dimension_semantics=("arbitrary",),
            vmem_limit_bytes=_VMEM_LIMIT_BYTES,
        ),
    )(x)


def log_softmax_class_major_pallas(
    xt: jax.Array,
    *,
    block_cols: int = _DEFAULT_BLOCK_COLS,
) -> jax.Array:
    """Lane-dense variant: log_softmax over axis 0 of class-major logits [C, B].

    Preferred when the upstream classifier can emit (or be fused to emit)
    class-major logits: the batch axis sits on lanes, so DMA moves contiguous
    rows, stores are unmasked full-lane vst, and there is no 10->128 lane
    padding in VMEM.
    """
    assert xt.ndim == 2, "expects [num_classes, batch] logits"
    C, B = xt.shape

    tb = B if B <= block_cols else block_cols
    grid_b = pl.cdiv(B, tb)

    return pl.pallas_call(
        _log_softmax_cols_kernel,
        out_shape=jax.ShapeDtypeStruct((C, B), xt.dtype),
        grid_spec=pltpu.PrefetchScalarGridSpec(
            num_scalar_prefetch=0,
            grid=(grid_b,),
            in_specs=[pl.BlockSpec((C, tb), lambda i: (0, i))],
            out_specs=pl.BlockSpec((C, tb), lambda i: (0, i)),
        ),
        input_output_aliases={0: 0},
        cost_estimate=_cost_estimate(B, C, xt.dtype.itemsize),
        compiler_params=pltpu.CompilerParams(
            dimension_semantics=("arbitrary",),
            vmem_limit_bytes=_VMEM_LIMIT_BYTES,
        ),
    )(xt)


if __name__ == "__main__":
    # The Network module has no parameters; its forward is purely log_softmax.
    key = jax.random.PRNGKey(0)
    k1, k2, k3 = jax.random.split(key, 3)
    num_classes = 10

    # 1) Fashion-MNIST-sized logits: small-batch fast path (no pallas_call).
    x_small = jax.random.normal(k1, (8, num_classes), dtype=jnp.float32)
    ref_small = jax.nn.log_softmax(x_small, axis=1)
    out_small = jax.block_until_ready(log_softmax_pallas(x_small))
    assert out_small.shape == x_small.shape
    assert jnp.allclose(out_small, ref_small, atol=1e-5, rtol=1e-5), "mismatch (small)"

    # 2) Large batch: row-major [B, C] Pallas path (multi-tile, aliased output).
    #    Reference is computed before the (aliased) kernel call.
    x_big = jax.random.normal(k2, (8192, num_classes), dtype=jnp.float32)
    ref_big = jax.nn.log_softmax(x_big, axis=1)
    out_big = jax.block_until_ready(log_softmax_pallas(x_big))
    assert out_big.shape == x_big.shape
    assert jnp.allclose(out_big, ref_big, atol=1e-5, rtol=1e-5), "mismatch (row-major)"

    # 3) Class-major [C, B] lane-dense Pallas path (multi-tile via block_cols).
    x_cm = jax.random.normal(k3, (num_classes, 4096), dtype=jnp.float32)
    ref_cm = jax.nn.log_softmax(x_cm, axis=0)
    out_cm = jax.block_until_ready(log_softmax_class_major_pallas(x_cm, block_cols=2048))
    assert out_cm.shape == x_cm.shape
    assert jnp.allclose(out_cm, ref_cm, atol=1e-5, rtol=1e-5), "mismatch (class-major)"

    print("KERNEL_OK")
</pallas_src>

<mosaic_0001>
module attributes {stable_mosaic.version = 11 : i64} {
  func.func @_log_softmax_rows_kernel(%arg0: i32, %arg1: memref<4096x10xf32, #tpu.memory_space<vmem>>, %arg2: memref<4096x10xf32, #tpu.memory_space<vmem>>) attributes {dimension_semantics = [#tpu.dimension_semantics<arbitrary>], iteration_bounds = array<i64: 2>, scalar_prefetch = 0 : i64, scratch_operands = 0 : i64, tpu.core_type = #tpu.core_type<tc>, window_params = [{transform_indices = @transform_0, window_bounds = array<i64: 4096, 10>}, {transform_indices = @transform_1, window_bounds = array<i64: 4096, 10>}]} {
    %c0 = arith.constant 0 : index
    %c0_0 = arith.constant 0 : index
    %0 = vector.load %arg1[%c0, %c0_0] : memref<4096x10xf32, #tpu.memory_space<vmem>>, vector<4096x10xf32>
    %cst = arith.constant dense<0xFF800000> : vector<4096xf32>
    %1 = vector.multi_reduction <maximumf>, %0, %cst [1] : vector<4096x10xf32> to vector<4096xf32>
    %2 = vector.shape_cast %1 : vector<4096xf32> to vector<4096x1xf32>
    %3 = vector.broadcast %2 : vector<4096x1xf32> to vector<4096x10xf32>
    %4 = arith.subf %0, %3 : vector<4096x10xf32>
    %5 = math.exp %4 : vector<4096x10xf32>
    %cst_1 = arith.constant dense<0.000000e+00> : vector<4096xf32>
    %6 = vector.multi_reduction <add>, %5, %cst_1 [1] : vector<4096x10xf32> to vector<4096xf32>
    %7 = vector.shape_cast %6 : vector<4096xf32> to vector<4096x1xf32>
    %8 = math.log %7 : vector<4096x1xf32>
    %9 = vector.broadcast %8 : vector<4096x1xf32> to vector<4096x10xf32>
    %10 = arith.subf %4, %9 : vector<4096x10xf32>
    %c0_2 = arith.constant 0 : index
    %c0_3 = arith.constant 0 : index
    %11 = vector.load %arg2[%c0_2, %c0_3] : memref<4096x10xf32, #tpu.memory_space<vmem>>, vector<4096x10xf32>
    tpu.vector_store %arg2[%c0_2, %c0_3], %10 {strides = array<i32>} : memref<4096x10xf32, #tpu.memory_space<vmem>>, vector<4096x10xf32>,
    return
  }
  func.func @transform_0(%arg0: i32) -> (i32, i32) {
    %c0_i32 = arith.constant 0 : i32
    %c0_i32_0 = arith.constant 0 : i32
    return %arg0, %c0_i32 : i32, i32
  }
  func.func @transform_1(%arg0: i32) -> (i32, i32) {
    %c0_i32 = arith.constant 0 : i32
    %c0_i32_0 = arith.constant 0 : i32
    return %arg0, %c0_i32 : i32, i32
  }
}

</mosaic_0001>

<llo_original>
// kernel: tpu_custom_call.1
$region0: #{tpu_custom_call.1}
  #allocation0 [shape = 'u32[]', space=smem, size = 0x4, offset = 0x4, fixed_abs, tag = 'smem constant byte address 0x4 - core index']
  #allocation1 [shape = 'u32[144,128]{1,0:T(1,128)}', space=vmem, size = 0x12000, scoped, tag = 'internal scratch']
  %s0 = inlined_call_operand.vmem [shape: f32[8192,10], index: 0, kind: input, shape index: {}, may-alias: {0,1}]
  %s1 = inlined_call_operand.vmem [shape: f32[8192,10], index: 1, kind: output, shape index: {}, may-alias: {0,1}]
  %s2 = sld [smem:[#allocation0]]
  $region37: #{tpu_custom_call.1} parent=0
    _
  %s4 = ssub.s32 1, %s2
  %s5 = scalar_select 0, %s4, %s2
  loop: start=0, step=1, limit=4
  $region2: #{tpu_custom_call.1} parent=0 // loop_pre_header
    _
  $region3: #{tpu_custom_call.1} parent=0 // loop_header
    %s7 = sphi 0, %s11
    %p8 = scmp.ge.s32.totalorder %s7, 4
    %s17 = sphi 0, %s19
    %s20 = sphi 0, %s17
    %s21 = sphi 0, %s20
    %s37 = sphi 0, %s21
    %s43 = sphi 0, %s45
    %s46 = sphi 0, %s43
    %s47 = sphi 0, %s46
    %s63 = sphi 0, %s47
  $region4: #{tpu_custom_call.1} parent=0 // loop_header_branch
    %10 = sbr.rel (%p8) target = $region8
  $region5: #{tpu_custom_call.1} parent=0 // loop_body
    %s12 = ssub.s32 %s7, 1
    %s13 = ssub.s32 %s7, 2
    %s14 = sadd.s32 %s7, 1
    %s15 = ssub.s32 %s7, %s14
    %p16 = scmp.eq.s32.totalorder %s15, 0
    %s18 = sadd.s32 %s17, 1
    %s19 = scalar_select %p16, %s17, %s18
    %p22 = pneg %p16
    %p23 = scmp.eq.s32.totalorder %s7, 1
    %p24 = por %p22, %p23
    %p25 = scmp.ne.s32.totalorder %s17, %s20
    %p26 = scmp.eq.s32.totalorder %s7, 0
    %p27 = por %p25, %p26
    %p28 = scmp.ne.s32.totalorder %s17, %s20
    %p29 = scmp.eq.s32.totalorder %s12, 1
    %p30 = por %p28, %p29
    %p31 = scmp.ne.s32.totalorder %s20, %s21
    %p32 = scmp.eq.s32.totalorder %s12, 0
    %p33 = por %p31, %p32
    %p34 = scmp.ne.s32.totalorder %s20, %s21
    %p35 = scmp.eq.s32.totalorder %s13, 1
    %p36 = por %p34, %p35
    %p38 = scmp.ne.s32.totalorder %s21, %s37
    %p39 = scmp.eq.s32.totalorder %s13, 0
    %p40 = por %p38, %p39
    %s41 = ssub.s32 %s7, %s14
    %p42 = scmp.eq.s32.totalorder %s41, 0
    %s44 = sadd.s32 %s43, 1
    %s45 = scalar_select %p42, %s43, %s44
    %p48 = pneg %p42
    %p49 = scmp.eq.s32.totalorder %s7, 1
    %p50 = por %p48, %p49
    %p51 = scmp.ne.s32.totalorder %s43, %s46
    %p52 = scmp.eq.s32.totalorder %s7, 0
    %p53 = por %p51, %p52
    %p54 = scmp.ne.s32.totalorder %s43, %s46
    %p55 = scmp.eq.s32.totalorder %s12, 1
    %p56 = por %p54, %p55
    %p57 = scmp.ne.s32.totalorder %s46, %s47
    %p58 = scmp.eq.s32.totalorder %s12, 0
    %p59 = por %p57, %p58
    %p60 = scmp.ne.s32.totalorder %s46, %s47
    %p61 = scmp.eq.s32.totalorder %s13, 1
    %p62 = por %p60, %p61
    %p64 = scmp.ne.s32.totalorder %s47, %s63
    %p65 = scmp.eq.s32.totalorder %s13, 0
    %p66 = por %p64, %p65
    %p67 = scmp.le.s32.totalorder 1, %s7
    %p68 = scmp.lt.s32.totalorder %s7, 3
    %p69 = pnand %p67, %p68
    %p70 = pneg %p69
    // Predicated region
    $region9: #{tpu_custom_call.1} parent=5 // pred_check
      _
    $region10: #{tpu_custom_call.1} parent=5 // pred_check_branch
      %72 = sbr.rel (%p69) target = $region12
    $region11: #{tpu_custom_call.1} parent=5 // pred_region
      %s73 = ssub.s32 %s7, 1
    $region12: #{tpu_custom_call.1} parent=5 // pred_fallthru
      _
    %p74 = scmp.lt.s32.totalorder %s7, 2
    // Predicated region
    $region13: #{tpu_custom_call.1} parent=5 // pred_check
      %p75 = pneg %p74
    $region14: #{tpu_custom_call.1} parent=5 // pred_check_branch
      %77 = sbr.rel (%p75) target = $region16
    $region15: #{tpu_custom_call.1} parent=5 // pred_region
      // Predicated region
      $region17: #{tpu_custom_call.1} parent=15 // pred_check
        %p78 = pneg %p27
      $region18: #{tpu_custom_call.1} parent=15 // pred_check_branch
        %80 = sbr.rel (%p78) target = $region20
      $region19: #{tpu_custom_call.1} parent=15 // pred_region
        %s81 = smul.u32 512, %s7
        %p82 = scmp.lt.s32.totalorder %s81, 1023
        %s83 = scalar_select %p82, %s81, 1023
        %s84 = smul.addr %s83, 8
        %s85 = scalar_lea.vmem %s0, %s84
        %s86 = smul.u32 512, %s7
      $region20: #{tpu_custom_call.1} parent=15 // pred_fallthru
        _
    $region16: #{tpu_custom_call.1} parent=5 // pred_fallthru
      _
    %p87 = scmp.le.s32.totalorder 1, %s7
    %p88 = scmp.lt.s32.totalorder %s7, 3
    %p89 = pnand %p87, %p88
    %p90 = pneg %p89
    // Predicated region
    $region21: #{tpu_custom_call.1} parent=5 // pred_check
      _
    $region22: #{tpu_custom_call.1} parent=5 // pred_check_branch
      %92 = sbr.rel (%p89) target = $region24
    $region23: #{tpu_custom_call.1} parent=5 // pred_region
      %s93 = ssub.s32 %s7, 1
      %s94 = smul.u32 512, %s12
      %p95 = scmp.lt.s32.totalorder %s94, 1023
      %s96 = scalar_select %p95, %s94, 1023
      %s97 = smul.addr %s96, 8
      %s98 = scalar_lea.vmem %s0, %s97
      %p99 = pneg %p33
      %p100 = pneg %p30
      %p101 = pneg %p59
      %p102 = pneg %p56
      %s103 = smul.u32 512, %s12
      %p104 = scmp.lt.s32.totalorder %s103, 1023
      %s105 = scalar_select %p104, %s103, 1023
      %s106 = smul.addr %s105, 8
      %s107 = scalar_lea.vmem %s1, %s106
      %s108 = smul.u32 512, %s12
      %p109 = scmp.lt.s32.totalorder %s108, 1023
      %s110 = scalar_select %p109, %s108, 1023
      %s111 = smul.addr %s110, 8
      %s112 = scalar_lea.vmem %s0, %s111
      %s113 = smul.u32 512, %s12
      %s114 = smul.u32 512, %s12
      %p115 = scmp.lt.s32.totalorder %s114, 1023
      %s116 = scalar_select %p115, %s114, 1023
      %s117 = smul.addr %s116, 8
      %s118 = scalar_lea.vmem %s1, %s117
      %s119 = smul.u32 512, %s12
      %v120 = vld [vmem:[%s112] sm:$0xff]
      %v121 = vld [vmem:[%s112 + $0x8] sm:$0xff]
      %v122 = vld [vmem:[%s112 + $0x10] sm:$0xff]
      %v123 = vld [vmem:[%s112 + $0x18] sm:$0xff]
      %v124 = vld [vmem:[%s112 + $0x20] sm:$0xff]
      %v125 = vld [vmem:[%s112 + $0x28] sm:$0xff]
      %v126 = vld [vmem:[%s112 + $0x30] sm:$0xff]
      %v127 = vld [vmem:[%s112 + $0x38] sm:$0xff]
      %v128 = vld [vmem:[%s112 + $0x40] sm:$0xff]
      %v129 = vld [vmem:[%s112 + $0x48] sm:$0xff]
      %v130 = vld [vmem:[%s112 + $0x50] sm:$0xff]
      %v131 = vld [vmem:[%s112 + $0x58] sm:$0xff]
      %v132 = vld [vmem:[%s112 + $0x60] sm:$0xff]
      %v133 = vld [vmem:[%s112 + $0x68] sm:$0xff]
      %v134 = vld [vmem:[%s112 + $0x70] sm:$0xff]
      %v135 = vld [vmem:[%s112 + $0x78] sm:$0xff]
      %v136 = vld [vmem:[%s112 + $0x80] sm:$0xff]
      %v137 = vld [vmem:[%s112 + $0x88] sm:$0xff]
      %v138 = vld [vmem:[%s112 + $0x90] sm:$0xff]
      %v139 = vld [vmem:[%s112 + $0x98] sm:$0xff]
      %v140 = vld [vmem:[%s112 + $0xa0] sm:$0xff]
      %v141 = vld [vmem:[%s112 + $0xa8] sm:$0xff]
      %v142 = vld [vmem:[%s112 + $0xb0] sm:$0xff]
      %v143 = vld [vmem:[%s112 + $0xb8] sm:$0xff]
      %v144 = vld [vmem:[%s112 + $0xc0] sm:$0xff]
      %v145 = vld [vmem:[%s112 + $0xc8] sm:$0xff]
      %v146 = vld [vmem:[%s112 + $0xd0] sm:$0xff]
      %v147 = vld [vmem:[%s112 + $0xd8] sm:$0xff]
      %v148 = vld [vmem:[%s112 + $0xe0] sm:$0xff]
      %v149 = vld [vmem:[%s112 + $0xe8] sm:$0xff]
      %v150 = vld [vmem:[%s112 + $0xf0] sm:$0xff]
      %v151 = vld [vmem:[%s112 + $0xf8] sm:$0xff]
      %v152 = vld [vmem:[%s112 + $0x100] sm:$0xff]
      %v153 = vld [vmem:[%s112 + $0x108] sm:$0xff]
      %v154 = vld [vmem:[%s112 + $0x110] sm:$0xff]
      %v155 = vld [vmem:[%s112 + $0x118] sm:$0xff]
      %v156 = vld [vmem:[%s112 + $0x120] sm:$0xff]
      %v157 = vld [vmem:[%s112 + $0x128] sm:$0xff]
      %v158 = vld [vmem:[%s112 + $0x130] sm:$0xff]
      %v159 = vld [vmem:[%s112 + $0x138] sm:$0xff]
      %v160 = vld [vmem:[%s112 + $0x140] sm:$0xff]
      %v161 = vld [vmem:[%s112 + $0x148] sm:$0xff]
      %v162 = vld [vmem:[%s112 + $0x150] sm:$0xff]
      %v163 = vld [vmem:[%s112 + $0x158] sm:$0xff]
      %v164 = vld [vmem:[%s112 + $0x160] sm:$0xff]
      %v165 = vld [vmem:[%s112 + $0x168] sm:$0xff]
      %v166 = vld [vmem:[%s112 + $0x170] sm:$0xff]
      %v167 = vld [vmem:[%s112 + $0x178] sm:$0xff]
      %v168 = vld [vmem:[%s112 + $0x180] sm:$0xff]
      %v169 = vld [vmem:[%s112 + $0x188] sm:$0xff]
      %v170 = vld [vmem:[%s112 + $0x190] sm:$0xff]
      %v171 = vld [vmem:[%s112 + $0x198] sm:$0xff]
      %v172 = vld [vmem:[%s112 + $0x1a0] sm:$0xff]
      %v173 = vld [vmem:[%s112 + $0x1a8] sm:$0xff]
      %v174 = vld [vmem:[%s112 + $0x1b0] sm:$0xff]
      %v175 = vld [vmem:[%s112 + $0x1b8] sm:$0xff]
      %v176 = vld [vmem:[%s112 + $0x1c0] sm:$0xff]
      %v177 = vld [vmem:[%s112 + $0x1c8] sm:$0xff]
      %v178 = vld [vmem:[%s112 + $0x1d0] sm:$0xff]
      %v179 = vld [vmem:[%s112 + $0x1d8] sm:$0xff]
      %v180 = vld [vmem:[%s112 + $0x1e0] sm:$0xff]
      %v181 = vld [vmem:[%s112 + $0x1e8] sm:$0xff]
      %v182 = vld [vmem:[%s112 + $0x1f0] sm:$0xff]
      %v183 = vld [vmem:[%s112 + $0x1f8] sm:$0xff]
      %v184 = vld [vmem:[%s112 + $0x200] sm:$0xff]
      %v185 = vld [vmem:[%s112 + $0x208] sm:$0xff]
      %v186 = vld [vmem:[%s112 + $0x210] sm:$0xff]
      %v187 = vld [vmem:[%s112 + $0x218] sm:$0xff]
      %v188 = vld [vmem:[%s112 + $0x220] sm:$0xff]
      %v189 = vld [vmem:[%s112 + $0x228] sm:$0xff]
      %v190 = vld [vmem:[%s112 + $0x230] sm:$0xff]
      %v191 = vld [vmem:[%s112 + $0x238] sm:$0xff]
      %v192 = vld [vmem:[%s112 + $0x240] sm:$0xff]
      %v193 = vld [vmem:[%s112 + $0x248] sm:$0xff]
      %v194 = vld [vmem:[%s112 + $0x250] sm:$0xff]
      %v195 = vld [vmem:[%s112 + $0x258] sm:$0xff]
      %v196 = vld [vmem:[%s112 + $0x260] sm:$0xff]
      %v197 = vld [vmem:[%s112 + $0x268] sm:$0xff]
      %v198 = vld [vmem:[%s112 + $0x270] sm:$0xff]
      %v199 = vld [vmem:[%s112 + $0x278] sm:$0xff]
      %v200 = vld [vmem:[%s112 + $0x280] sm:$0xff]
      %v201 = vld [vmem:[%s112 + $0x288] sm:$0xff]
      %v202 = vld [vmem:[%s112 + $0x290] sm:$0xff]
      %v203 = vld [vmem:[%s112 + $0x298] sm:$0xff]
      %v204 = vld [vmem:[%s112 + $0x2a0] sm:$0xff]
      %v205 = vld [vmem:[%s112 + $0x2a8] sm:$0xff]
      %v206 = vld [vmem:[%s112 + $0x2b0] sm:$0xff]
      %v207 = vld [vmem:[%s112 + $0x2b8] sm:$0xff]
      %v208 = vld [vmem:[%s112 + $0x2c0] sm:$0xff]
      %v209 = vld [vmem:[%s112 + $0x2c8] sm:$0xff]
      %v210 = vld [vmem:[%s112 + $0x2d0] sm:$0xff]
      %v211 = vld [vmem:[%s112 + $0x2d8] sm:$0xff]
      %v212 = vld [vmem:[%s112 + $0x2e0] sm:$0xff]
      %v213 = vld [vmem:[%s112 + $0x2e8] sm:$0xff]
      %v214 = vld [vmem:[%s112 + $0x2f0] sm:$0xff]
      %v215 = vld [vmem:[%s112 + $0x2f8] sm:$0xff]
      %v216 = vld [vmem:[%s112 + $0x300] sm:$0xff]
      %v217 = vld [vmem:[%s112 + $0x308] sm:$0xff]
      %v218 = vld [vmem:[%s112 + $0x310] sm:$0xff]
      %v219 = vld [vmem:[%s112 + $0x318] sm:$0xff]
      %v220 = vld [vmem:[%s112 + $0x320] sm:$0xff]
      %v221 = vld [vmem:[%s112 + $0x328] sm:$0xff]
      %v222 = vld [vmem:[%s112 + $0x330] sm:$0xff]
      %v223 = vld [vmem:[%s112 + $0x338] sm:$0xff]
      %v224 = vld [vmem:[%s112 + $0x340] sm:$0xff]
      %v225 = vld [vmem:[%s112 + $0x348] sm:$0xff]
      %v226 = vld [vmem:[%s112 + $0x350] sm:$0xff]
      %v227 = vld [vmem:[%s112 + $0x358] sm:$0xff]
      %v228 = vld [vmem:[%s112 + $0x360] sm:$0xff]
      %v229 = vld [vmem:[%s112 + $0x368] sm:$0xff]
      %v230 = vld [vmem:[%s112 + $0x370] sm:$0xff]
      %v231 = vld [vmem:[%s112 + $0x378] sm:$0xff]
      %v232 = vld [vmem:[%s112 + $0x380] sm:$0xff]
      %v233 = vld [vmem:[%s112 + $0x388] sm:$0xff]
      %v234 = vld [vmem:[%s112 + $0x390] sm:$0xff]
      %v235 = vld [vmem:[%s112 + $0x398] sm:$0xff]
      %v236 = vld [vmem:[%s112 + $0x3a0] sm:$0xff]
      %v237 = vld [vmem:[%s112 + $0x3a8] sm:$0xff]
      %v238 = vld [vmem:[%s112 + $0x3b0] sm:$0xff]
      %v239 = vld [vmem:[%s112 + $0x3b8] sm:$0xff]
      %v240 = vld [vmem:[%s112 + $0x3c0] sm:$0xff]
      %v241 = vld [vmem:[%s112 + $0x3c8] sm:$0xff]
      %v242 = vld [vmem:[%s112 + $0x3d0] sm:$0xff]
      %v243 = vld [vmem:[%s112 + $0x3d8] sm:$0xff]
      %v244 = vld [vmem:[%s112 + $0x3e0] sm:$0xff]
      %v245 = vld [vmem:[%s112 + $0x3e8] sm:$0xff]
      %v246 = vld [vmem:[%s112 + $0x3f0] sm:$0xff]
      %v247 = vld [vmem:[%s112 + $0x3f8] sm:$0xff]
      %v248 = vld [vmem:[%s112 + $0x400] sm:$0xff]
      %v249 = vld [vmem:[%s112 + $0x408] sm:$0xff]
      %v250 = vld [vmem:[%s112 + $0x410] sm:$0xff]
      %v251 = vld [vmem:[%s112 + $0x418] sm:$0xff]
      %v252 = vld [vmem:[%s112 + $0x420] sm:$0xff]
      %v253 = vld [vmem:[%s112 + $0x428] sm:$0xff]
      %v254 = vld [vmem:[%s112 + $0x430] sm:$0xff]
      %v255 = vld [vmem:[%s112 + $0x438] sm:$0xff]
      %v256 = vld [vmem:[%s112 + $0x440] sm:$0xff]
      %v257 = vld [vmem:[%s112 + $0x448] sm:$0xff]
      %v258 = vld [vmem:[%s112 + $0x450] sm:$0xff]
      %v259 = vld [vmem:[%s112 + $0x458] sm:$0xff]
      %v260 = vld [vmem:[%s112 + $0x460] sm:$0xff]
      %v261 = vld [vmem:[%s112 + $0x468] sm:$0xff]
      %v262 = vld [vmem:[%s112 + $0x470] sm:$0xff]
      %v263 = vld [vmem:[%s112 + $0x478] sm:$0xff]
      %v264 = vld [vmem:[%s112 + $0x480] sm:$0xff]
      %v265 = vld [vmem:[%s112 + $0x488] sm:$0xff]
      %v266 = vld [vmem:[%s112 + $0x490] sm:$0xff]
      %v267 = vld [vmem:[%s112 + $0x498] sm:$0xff]
      %v268 = vld [vmem:[%s112 + $0x4a0] sm:$0xff]
      %v269 = vld [vmem:[%s112 + $0x4a8] sm:$0xff]
      %v270 = vld [vmem:[%s112 + $0x4b0] sm:$0xff]
      %v271 = vld [vmem:[%s112 + $0x4b8] sm:$0xff]
      %v272 = vld [vmem:[%s112 + $0x4c0] sm:$0xff]
      %v273 = vld [vmem:[%s112 + $0x4c8] sm:$0xff]
      %v274 = vld [vmem:[%s112 + $0x4d0] sm:$0xff]
      %v275 = vld [vmem:[%s112 + $0x4d8] sm:$0xff]
      %v276 = vld [vmem:[%s112 + $0x4e0] sm:$0xff]
      %v277 = vld [vmem:[%s112 + $0x4e8] sm:$0xff]
      %v278 = vld [vmem:[%s112 + $0x4f0] sm:$0xff]
      %v279 = vld [vmem:[%s112 + $0x4f8] sm:$0xff]
      %v280 = vld [vmem:[%s112 + $0x500] sm:$0xff]
      %v281 = vld [vmem:[%s112 + $0x508] sm:$0xff]
      %v282 = vld [vmem:[%s112 + $0x510] sm:$0xff]
      %v283 = vld [vmem:[%s112 + $0x518] sm:$0xff]
      %v284 = vld [vmem:[%s112 + $0x520] sm:$0xff]
      %v285 = vld [vmem:[%s112 + $0x528] sm:$0xff]
      %v286 = vld [vmem:[%s112 + $0x530] sm:$0xff]
      %v287 = vld [vmem:[%s112 + $0x538] sm:$0xff]
      %v288 = vld [vmem:[%s112 + $0x540] sm:$0xff]
      %v289 = vld [vmem:[%s112 + $0x548] sm:$0xff]
      %v290 = vld [vmem:[%s112 + $0x550] sm:$0xff]
      %v291 = vld [vmem:[%s112 + $0x558] sm:$0xff]
      %v292 = vld [vmem:[%s112 + $0x560] sm:$0xff]
      %v293 = vld [vmem:[%s112 + $0x568] sm:$0xff]
      %v294 = vld [vmem:[%s112 + $0x570] sm:$0xff]
      %v295 = vld [vmem:[%s112 + $0x578] sm:$0xff]
      %v296 = vld [vmem:[%s112 + $0x580] sm:$0xff]
      %v297 = vld [vmem:[%s112 + $0x588] sm:$0xff]
      %v298 = vld [vmem:[%s112 + $0x590] sm:$0xff]
      %v299 = vld [vmem:[%s112 + $0x598] sm:$0xff]
      %v300 = vld [vmem:[%s112 + $0x5a0] sm:$0xff]
      %v301 = vld [vmem:[%s112 + $0x5a8] sm:$0xff]
      %v302 = vld [vmem:[%s112 + $0x5b0] sm:$0xff]
      %v303 = vld [vmem:[%s112 + $0x5b8] sm:$0xff]
      %v304 = vld [vmem:[%s112 + $0x5c0] sm:$0xff]
      %v305 = vld [vmem:[%s112 + $0x5c8] sm:$0xff]
      %v306 = vld [vmem:[%s112 + $0x5d0] sm:$0xff]
      %v307 = vld [vmem:[%s112 + $0x5d8] sm:$0xff]
      %v308 = vld [vmem:[%s112 + $0x5e0] sm:$0xff]
      %v309 = vld [vmem:[%s112 + $0x5e8] sm:$0xff]
      %v310 = vld [vmem:[%s112 + $0x5f0] sm:$0xff]
      %v311 = vld [vmem:[%s112 + $0x5f8] sm:$0xff]
      %v312 = vld [vmem:[%s112 + $0x600] sm:$0xff]
      %v313 = vld [vmem:[%s112 + $0x608] sm:$0xff]
      %v314 = vld [vmem:[%s112 + $0x610] sm:$0xff]
      %v315 = vld [vmem:[%s112 + $0x618] sm:$0xff]
      %v316 = vld [vmem:[%s112 + $0x620] sm:$0xff]
      %v317 = vld [vmem:[%s112 + $0x628] sm:$0xff]
      %v318 = vld [vmem:[%s112 + $0x630] sm:$0xff]
      %v319 = vld [vmem:[%s112 + $0x638] sm:$0xff]
      %v320 = vld [vmem:[%s112 + $0x640] sm:$0xff]
      %v321 = vld [vmem:[%s112 + $0x648] sm:$0xff]
      %v322 = vld [vmem:[%s112 + $0x650] sm:$0xff]
      %v323 = vld [vmem:[%s112 + $0x658] sm:$0xff]
      %v324 = vld [vmem:[%s112 + $0x660] sm:$0xff]
      %v325 = vld [vmem:[%s112 + $0x668] sm:$0xff]
      %v326 = vld [vmem:[%s112 + $0x670] sm:$0xff]
      %v327 = vld [vmem:[%s112 + $0x678] sm:$0xff]
      %v328 = vld [vmem:[%s112 + $0x680] sm:$0xff]
      %v329 = vld [vmem:[%s112 + $0x688] sm:$0xff]
      %v330 = vld [vmem:[%s112 + $0x690] sm:$0xff]
      %v331 = vld [vmem:[%s112 + $0x698] sm:$0xff]
      %v332 = vld [vmem:[%s112 + $0x6a0] sm:$0xff]
      %v333 = vld [vmem:[%s112 + $0x6a8] sm:$0xff]
      %v334 = vld [vmem:[%s112 + $0x6b0] sm:$0xff]
      %v335 = vld [vmem:[%s112 + $0x6b8] sm:$0xff]
      %v336 = vld [vmem:[%s112 + $0x6c0] sm:$0xff]
      %v337 = vld [vmem:[%s112 + $0x6c8] sm:$0xff]
      %v338 = vld [vmem:[%s112 + $0x6d0] sm:$0xff]
      %v339 = vld [vmem:[%s112 + $0x6d8] sm:$0xff]
      %v340 = vld [vmem:[%s112 + $0x6e0] sm:$0xff]
      %v341 = vld [vmem:[%s112 + $0x6e8] sm:$0xff]
      %v342 = vld [vmem:[%s112 + $0x6f0] sm:$0xff]
      %v343 = vld [vmem:[%s112 + $0x6f8] sm:$0xff]
      %v344 = vld [vmem:[%s112 + $0x700] sm:$0xff]
      %v345 = vld [vmem:[%s112 + $0x708] sm:$0xff]
      %v346 = vld [vmem:[%s112 + $0x710] sm:$0xff]
      %v347 = vld [vmem:[%s112 + $0x718] sm:$0xff]
      %v348 = vld [vmem:[%s112 + $0x720] sm:$0xff]
      %v349 = vld [vmem:[%s112 + $0x728] sm:$0xff]
      %v350 = vld [vmem:[%s112 + $0x730] sm:$0xff]
      %v351 = vld [vmem:[%s112 + $0x738] sm:$0xff]
      %v352 = vld [vmem:[%s112 + $0x740] sm:$0xff]
      %v353 = vld [vmem:[%s112 + $0x748] sm:$0xff]
      %v354 = vld [vmem:[%s112 + $0x750] sm:$0xff]
      %v355 = vld [vmem:[%s112 + $0x758] sm:$0xff]
      %v356 = vld [vmem:[%s112 + $0x760] sm:$0xff]
      %v357 = vld [vmem:[%s112 + $0x768] sm:$0xff]
      %v358 = vld [vmem:[%s112 + $0x770] sm:$0xff]
      %v359 = vld [vmem:[%s112 + $0x778] sm:$0xff]
      %v360 = vld [vmem:[%s112 + $0x780] sm:$0xff]
      %v361 = vld [vmem:[%s112 + $0x788] sm:$0xff]
      %v362 = vld [vmem:[%s112 + $0x790] sm:$0xff]
      %v363 = vld [vmem:[%s112 + $0x798] sm:$0xff]
      %v364 = vld [vmem:[%s112 + $0x7a0] sm:$0xff]
      %v365 = vld [vmem:[%s112 + $0x7a8] sm:$0xff]
      %v366 = vld [vmem:[%s112 + $0x7b0] sm:$0xff]
      %v367 = vld [vmem:[%s112 + $0x7b8] sm:$0xff]
      %v368 = vld [vmem:[%s112 + $0x7c0] sm:$0xff]
      %v369 = vld [vmem:[%s112 + $0x7c8] sm:$0xff]
      %v370 = vld [vmem:[%s112 + $0x7d0] sm:$0xff]
      %v371 = vld [vmem:[%s112 + $0x7d8] sm:$0xff]
      %v372 = vld [vmem:[%s112 + $0x7e0] sm:$0xff]
      %v373 = vld [vmem:[%s112 + $0x7e8] sm:$0xff]
      %v374 = vld [vmem:[%s112 + $0x7f0] sm:$0xff]
      %v375 = vld [vmem:[%s112 + $0x7f8] sm:$0xff]
      %v376 = vld [vmem:[%s112 + $0x800] sm:$0xff]
      %v377 = vld [vmem:[%s112 + $0x808] sm:$0xff]
      %v378 = vld [vmem:[%s112 + $0x810] sm:$0xff]
      %v379 = vld [vmem:[%s112 + $0x818] sm:$0xff]
      %v380 = vld [vmem:[%s112 + $0x820] sm:$0xff]
      %v381 = vld [vmem:[%s112 + $0x828] sm:$0xff]
      %v382 = vld [vmem:[%s112 + $0x830] sm:$0xff]
      %v383 = vld [vmem:[%s112 + $0x838] sm:$0xff]
      %v384 = vld [vmem:[%s112 + $0x840] sm:$0xff]
      %v385 = vld [vmem:[%s112 + $0x848] sm:$0xff]
      %v386 = vld [vmem:[%s112 + $0x850] sm:$0xff]
      %v387 = vld [vmem:[%s112 + $0x858] sm:$0xff]
      %v388 = vld [vmem:[%s112 + $0x860] sm:$0xff]
      %v389 = vld [vmem:[%s112 + $0x868] sm:$0xff]
      %v390 = vld [vmem:[%s112 + $0x870] sm:$0xff]
      %v391 = vld [vmem:[%s112 + $0x878] sm:$0xff]
      %v392 = vld [vmem:[%s112 + $0x880] sm:$0xff]
      %v393 = vld [vmem:[%s112 + $0x888] sm:$0xff]
      %v394 = vld [vmem:[%s112 + $0x890] sm:$0xff]
      %v395 = vld [vmem:[%s112 + $0x898] sm:$0xff]
      %v396 = vld [vmem:[%s112 + $0x8a0] sm:$0xff]
      %v397 = vld [vmem:[%s112 + $0x8a8] sm:$0xff]
      %v398 = vld [vmem:[%s112 + $0x8b0] sm:$0xff]
      %v399 = vld [vmem:[%s112 + $0x8b8] sm:$0xff]
      %v400 = vld [vmem:[%s112 + $0x8c0] sm:$0xff]
      %v401 = vld [vmem:[%s112 + $0x8c8] sm:$0xff]
      %v402 = vld [vmem:[%s112 + $0x8d0] sm:$0xff]
      %v403 = vld [vmem:[%s112 + $0x8d8] sm:$0xff]
      %v404 = vld [vmem:[%s112 + $0x8e0] sm:$0xff]
      %v405 = vld [vmem:[%s112 + $0x8e8] sm:$0xff]
      %v406 = vld [vmem:[%s112 + $0x8f0] sm:$0xff]
      %v407 = vld [vmem:[%s112 + $0x8f8] sm:$0xff]
      %v408 = vld [vmem:[%s112 + $0x900] sm:$0xff]
      %v409 = vld [vmem:[%s112 + $0x908] sm:$0xff]
      %v410 = vld [vmem:[%s112 + $0x910] sm:$0xff]
      %v411 = vld [vmem:[%s112 + $0x918] sm:$0xff]
      %v412 = vld [vmem:[%s112 + $0x920] sm:$0xff]
      %v413 = vld [vmem:[%s112 + $0x928] sm:$0xff]
      %v414 = vld [vmem:[%s112 + $0x930] sm:$0xff]
      %v415 = vld [vmem:[%s112 + $0x938] sm:$0xff]
      %v416 = vld [vmem:[%s112 + $0x940] sm:$0xff]
      %v417 = vld [vmem:[%s112 + $0x948] sm:$0xff]
      %v418 = vld [vmem:[%s112 + $0x950] sm:$0xff]
      %v419 = vld [vmem:[%s112 + $0x958] sm:$0xff]
      %v420 = vld [vmem:[%s112 + $0x960] sm:$0xff]
      %v421 = vld [vmem:[%s112 + $0x968] sm:$0xff]
      %v422 = vld [vmem:[%s112 + $0x970] sm:$0xff]
      %v423 = vld [vmem:[%s112 + $0x978] sm:$0xff]
      %v424 = vld [vmem:[%s112 + $0x980] sm:$0xff]
      %v425 = vld [vmem:[%s112 + $0x988] sm:$0xff]
      %v426 = vld [vmem:[%s112 + $0x990] sm:$0xff]
      %v427 = vld [vmem:[%s112 + $0x998] sm:$0xff]
      %v428 = vld [vmem:[%s112 + $0x9a0] sm:$0xff]
      %v429 = vld [vmem:[%s112 + $0x9a8] sm:$0xff]
      %v430 = vld [vmem:[%s112 + $0x9b0] sm:$0xff]
      %v431 = vld [vmem:[%s112 + $0x9b8] sm:$0xff]
      %v432 = vld [vmem:[%s112 + $0x9c0] sm:$0xff]
      %v433 = vld [vmem:[%s112 + $0x9c8] sm:$0xff]
      %v434 = vld [vmem:[%s112 + $0x9d0] sm:$0xff]
      %v435 = vld [vmem:[%s112 + $0x9d8] sm:$0xff]
      %v436 = vld [vmem:[%s112 + $0x9e0] sm:$0xff]
      %v437 = vld [vmem:[%s112 + $0x9e8] sm:$0xff]
      %v438 = vld [vmem:[%s112 + $0x9f0] sm:$0xff]
      %v439 = vld [vmem:[%s112 + $0x9f8] sm:$0xff]
      %v440 = vld [vmem:[%s112 + $0xa00] sm:$0xff]
      %v441 = vld [vmem:[%s112 + $0xa08] sm:$0xff]
      %v442 = vld [vmem:[%s112 + $0xa10] sm:$0xff]
      %v443 = vld [vmem:[%s112 + $0xa18] sm:$0xff]
      %v444 = vld [vmem:[%s112 + $0xa20] sm:$0xff]
      %v445 = vld [vmem:[%s112 + $0xa28] sm:$0xff]
      %v446 = vld [vmem:[%s112 + $0xa30] sm:$0xff]
      %v447 = vld [vmem:[%s112 + $0xa38] sm:$0xff]
      %v448 = vld [vmem:[%s112 + $0xa40] sm:$0xff]
      %v449 = vld [vmem:[%s112 + $0xa48] sm:$0xff]
      %v450 = vld [vmem:[%s112 + $0xa50] sm:$0xff]
      %v451 = vld [vmem:[%s112 + $0xa58] sm:$0xff]
      %v452 = vld [vmem:[%s112 + $0xa60] sm:$0xff]
      %v453 = vld [vmem:[%s112 + $0xa68] sm:$0xff]
      %v454 = vld [vmem:[%s112 + $0xa70] sm:$0xff]
      %v455 = vld [vmem:[%s112 + $0xa78] sm:$0xff]
      %v456 = vld [vmem:[%s112 + $0xa80] sm:$0xff]
      %v457 = vld [vmem:[%s112 + $0xa88] sm:$0xff]
      %v458 = vld [vmem:[%s112 + $0xa90] sm:$0xff]
      %v459 = vld [vmem:[%s112 + $0xa98] sm:$0xff]
      %v460 = vld [vmem:[%s112 + $0xaa0] sm:$0xff]
      %v461 = vld [vmem:[%s112 + $0xaa8] sm:$0xff]
      %v462 = vld [vmem:[%s112 + $0xab0] sm:$0xff]
      %v463 = vld [vmem:[%s112 + $0xab8] sm:$0xff]
      %v464 = vld [vmem:[%s112 + $0xac0] sm:$0xff]
      %v465 = vld [vmem:[%s112 + $0xac8] sm:$0xff]
      %v466 = vld [vmem:[%s112 + $0xad0] sm:$0xff]
      %v467 = vld [vmem:[%s112 + $0xad8] sm:$0xff]
      %v468 = vld [vmem:[%s112 + $0xae0] sm:$0xff]
      %v469 = vld [vmem:[%s112 + $0xae8] sm:$0xff]
      %v470 = vld [vmem:[%s112 + $0xaf0] sm:$0xff]
      %v471 = vld [vmem:[%s112 + $0xaf8] sm:$0xff]
      %v472 = vld [vmem:[%s112 + $0xb00] sm:$0xff]
      %v473 = vld [vmem:[%s112 + $0xb08] sm:$0xff]
      %v474 = vld [vmem:[%s112 + $0xb10] sm:$0xff]
      %v475 = vld [vmem:[%s112 + $0xb18] sm:$0xff]
      %v476 = vld [vmem:[%s112 + $0xb20] sm:$0xff]
      %v477 = vld [vmem:[%s112 + $0xb28] sm:$0xff]
      %v478 = vld [vmem:[%s112 + $0xb30] sm:$0xff]
      %v479 = vld [vmem:[%s112 + $0xb38] sm:$0xff]
      %v480 = vld [vmem:[%s112 + $0xb40] sm:$0xff]
      %v481 = vld [vmem:[%s112 + $0xb48] sm:$0xff]
      %v482 = vld [vmem:[%s112 + $0xb50] sm:$0xff]
      %v483 = vld [vmem:[%s112 + $0xb58] sm:$0xff]
      %v484 = vld [vmem:[%s112 + $0xb60] sm:$0xff]
      %v485 = vld [vmem:[%s112 + $0xb68] sm:$0xff]
      %v486 = vld [vmem:[%s112 + $0xb70] sm:$0xff]
      %v487 = vld [vmem:[%s112 + $0xb78] sm:$0xff]
      %v488 = vld [vmem:[%s112 + $0xb80] sm:$0xff]
      %v489 = vld [vmem:[%s112 + $0xb88] sm:$0xff]
      %v490 = vld [vmem:[%s112 + $0xb90] sm:$0xff]
      %v491 = vld [vmem:[%s112 + $0xb98] sm:$0xff]
      %v492 = vld [vmem:[%s112 + $0xba0] sm:$0xff]
      %v493 = vld [vmem:[%s112 + $0xba8] sm:$0xff]
      %v494 = vld [vmem:[%s112 + $0xbb0] sm:$0xff]
      %v495 = vld [vmem:[%s112 + $0xbb8] sm:$0xff]
      %v496 = vld [vmem:[%s112 + $0xbc0] sm:$0xff]
      %v497 = vld [vmem:[%s112 + $0xbc8] sm:$0xff]
      %v498 = vld [vmem:[%s112 + $0xbd0] sm:$0xff]
      %v499 = vld [vmem:[%s112 + $0xbd8] sm:$0xff]
      %v500 = vld [vmem:[%s112 + $0xbe0] sm:$0xff]
      %v501 = vld [vmem:[%s112 + $0xbe8] sm:$0xff]
      %v502 = vld [vmem:[%s112 + $0xbf0] sm:$0xff]
      %v503 = vld [vmem:[%s112 + $0xbf8] sm:$0xff]
      %v504 = vld [vmem:[%s112 + $0xc00] sm:$0xff]
      %v505 = vld [vmem:[%s112 + $0xc08] sm:$0xff]
      %v506 = vld [vmem:[%s112 + $0xc10] sm:$0xff]
      %v507 = vld [vmem:[%s112 + $0xc18] sm:$0xff]
      %v508 = vld [vmem:[%s112 + $0xc20] sm:$0xff]
      %v509 = vld [vmem:[%s112 + $0xc28] sm:$0xff]
      %v510 = vld [vmem:[%s112 + $0xc30] sm:$0xff]
      %v511 = vld [vmem:[%s112 + $0xc38] sm:$0xff]
      %v512 = vld [vmem:[%s112 + $0xc40] sm:$0xff]
      %v513 = vld [vmem:[%s112 + $0xc48] sm:$0xff]
      %v514 = vld [vmem:[%s112 + $0xc50] sm:$0xff]
      %v515 = vld [vmem:[%s112 + $0xc58] sm:$0xff]
      %v516 = vld [vmem:[%s112 + $0xc60] sm:$0xff]
      %v517 = vld [vmem:[%s112 + $0xc68] sm:$0xff]
      %v518 = vld [vmem:[%s112 + $0xc70] sm:$0xff]
      %v519 = vld [vmem:[%s112 + $0xc78] sm:$0xff]
      %v520 = vld [vmem:[%s112 + $0xc80] sm:$0xff]
      %v521 = vld [vmem:[%s112 + $0xc88] sm:$0xff]
      %v522 = vld [vmem:[%s112 + $0xc90] sm:$0xff]
      %v523 = vld [vmem:[%s112 + $0xc98] sm:$0xff]
      %v524 = vld [vmem:[%s112 + $0xca0] sm:$0xff]
      %v525 = vld [vmem:[%s112 + $0xca8] sm:$0xff]
      %v526 = vld [vmem:[%s112 + $0xcb0] sm:$0xff]
      %v527 = vld [vmem:[%s112 + $0xcb8] sm:$0xff]
      %v528 = vld [vmem:[%s112 + $0xcc0] sm:$0xff]
      %v529 = vld [vmem:[%s112 + $0xcc8] sm:$0xff]
      %v530 = vld [vmem:[%s112 + $0xcd0] sm:$0xff]
      %v531 = vld [vmem:[%s112 + $0xcd8] sm:$0xff]
      %v532 = vld [vmem:[%s112 + $0xce0] sm:$0xff]
      %v533 = vld [vmem:[%s112 + $0xce8] sm:$0xff]
      %v534 = vld [vmem:[%s112 + $0xcf0] sm:$0xff]
      %v535 = vld [vmem:[%s112 + $0xcf8] sm:$0xff]
      %v536 = vld [vmem:[%s112 + $0xd00] sm:$0xff]
      %v537 = vld [vmem:[%s112 + $0xd08] sm:$0xff]
      %v538 = vld [vmem:[%s112 + $0xd10] sm:$0xff]
      %v539 = vld [vmem:[%s112 + $0xd18] sm:$0xff]
      %v540 = vld [vmem:[%s112 + $0xd20] sm:$0xff]
      %v541 = vld [vmem:[%s112 + $0xd28] sm:$0xff]
      %v542 = vld [vmem:[%s112 + $0xd30] sm:$0xff]
      %v543 = vld [vmem:[%s112 + $0xd38] sm:$0xff]
      %v544 = vld [vmem:[%s112 + $0xd40] sm:$0xff]
      %v545 = vld [vmem:[%s112 + $0xd48] sm:$0xff]
      %v546 = vld [vmem:[%s112 + $0xd50] sm:$0xff]
      %v547 = vld [vmem:[%s112 + $0xd58] sm:$0xff]
      %v548 = vld [vmem:[%s112 + $0xd60] sm:$0xff]
      %v549 = vld [vmem:[%s112 + $0xd68] sm:$0xff]
      %v550 = vld [vmem:[%s112 + $0xd70] sm:$0xff]
      %v551 = vld [vmem:[%s112 + $0xd78] sm:$0xff]
      %v552 = vld [vmem:[%s112 + $0xd80] sm:$0xff]
      %v553 = vld [vmem:[%s112 + $0xd88] sm:$0xff]
      %v554 = vld [vmem:[%s112 + $0xd90] sm:$0xff]
      %v555 = vld [vmem:[%s112 + $0xd98] sm:$0xff]
      %v556 = vld [vmem:[%s112 + $0xda0] sm:$0xff]
      %v557 = vld [vmem:[%s112 + $0xda8] sm:$0xff]
      %v558 = vld [vmem:[%s112 + $0xdb0] sm:$0xff]
      %v559 = vld [vmem:[%s112 + $0xdb8] sm:$0xff]
      %v560 = vld [vmem:[%s112 + $0xdc0] sm:$0xff]
      %v561 = vld [vmem:[%s112 + $0xdc8] sm:$0xff]
      %v562 = vld [vmem:[%s112 + $0xdd0] sm:$0xff]
      %v563 = vld [vmem:[%s112 + $0xdd8] sm:$0xff]
      %v564 = vld [vmem:[%s112 + $0xde0] sm:$0xff]
      %v565 = vld [vmem:[%s112 + $0xde8] sm:$0xff]
      %v566 = vld [vmem:[%s112 + $0xdf0] sm:$0xff]
      %v567 = vld [vmem:[%s112 + $0xdf8] sm:$0xff]
      %v568 = vld [vmem:[%s112 + $0xe00] sm:$0xff]
      %v569 = vld [vmem:[%s112 + $0xe08] sm:$0xff]
      %v570 = vld [vmem:[%s112 + $0xe10] sm:$0xff]
      %v571 = vld [vmem:[%s112 + $0xe18] sm:$0xff]
      %v572 = vld [vmem:[%s112 + $0xe20] sm:$0xff]
      %v573 = vld [vmem:[%s112 + $0xe28] sm:$0xff]
      %v574 = vld [vmem:[%s112 + $0xe30] sm:$0xff]
      %v575 = vld [vmem:[%s112 + $0xe38] sm:$0xff]
      %v576 = vld [vmem:[%s112 + $0xe40] sm:$0xff]
      %v577 = vld [vmem:[%s112 + $0xe48] sm:$0xff]
      %v578 = vld [vmem:[%s112 + $0xe50] sm:$0xff]
      %v579 = vld [vmem:[%s112 + $0xe58] sm:$0xff]
      %v580 = vld [vmem:[%s112 + $0xe60] sm:$0xff]
      %v581 = vld [vmem:[%s112 + $0xe68] sm:$0xff]
      %v582 = vld [vmem:[%s112 + $0xe70] sm:$0xff]
      %v583 = vld [vmem:[%s112 + $0xe78] sm:$0xff]
      %v584 = vld [vmem:[%s112 + $0xe80] sm:$0xff]
      %v585 = vld [vmem:[%s112 + $0xe88] sm:$0xff]
      %v586 = vld [vmem:[%s112 + $0xe90] sm:$0xff]
      %v587 = vld [vmem:[%s112 + $0xe98] sm:$0xff]
      %v588 = vld [vmem:[%s112 + $0xea0] sm:$0xff]
      %v589 = vld [vmem:[%s112 + $0xea8] sm:$0xff]
      %v590 = vld [vmem:[%s112 + $0xeb0] sm:$0xff]
      %v591 = vld [vmem:[%s112 + $0xeb8] sm:$0xff]
      %v592 = vld [vmem:[%s112 + $0xec0] sm:$0xff]
      %v593 = vld [vmem:[%s112 + $0xec8] sm:$0xff]
      %v594 = vld [vmem:[%s112 + $0xed0] sm:$0xff]
      %v595 = vld [vmem:[%s112 + $0xed8] sm:$0xff]
      %v596 = vld [vmem:[%s112 + $0xee0] sm:$0xff]
      %v597 = vld [vmem:[%s112 + $0xee8] sm:$0xff]
      %v598 = vld [vmem:[%s112 + $0xef0] sm:$0xff]
      %v599 = vld [vmem:[%s112 + $0xef8] sm:$0xff]
      %v600 = vld [vmem:[%s112 + $0xf00] sm:$0xff]
      %v601 = vld [vmem:[%s112 + $0xf08] sm:$0xff]
      %v602 = vld [vmem:[%s112 + $0xf10] sm:$0xff]
      %v603 = vld [vmem:[%s112 + $0xf18] sm:$0xff]
      %v604 = vld [vmem:[%s112 + $0xf20] sm:$0xff]
      %v605 = vld [vmem:[%s112 + $0xf28] sm:$0xff]
      %v606 = vld [vmem:[%s112 + $0xf30] sm:$0xff]
      %v607 = vld [vmem:[%s112 + $0xf38] sm:$0xff]
      %v608 = vld [vmem:[%s112 + $0xf40] sm:$0xff]
      %v609 = vld [vmem:[%s112 + $0xf48] sm:$0xff]
      %v610 = vld [vmem:[%s112 + $0xf50] sm:$0xff]
      %v611 = vld [vmem:[%s112 + $0xf58] sm:$0xff]
      %v612 = vld [vmem:[%s112 + $0xf60] sm:$0xff]
      %v613 = vld [vmem:[%s112 + $0xf68] sm:$0xff]
      %v614 = vld [vmem:[%s112 + $0xf70] sm:$0xff]
      %v615 = vld [vmem:[%s112 + $0xf78] sm:$0xff]
      %v616 = vld [vmem:[%s112 + $0xf80] sm:$0xff]
      %v617 = vld [vmem:[%s112 + $0xf88] sm:$0xff]
      %v618 = vld [vmem:[%s112 + $0xf90] sm:$0xff]
      %v619 = vld [vmem:[%s112 + $0xf98] sm:$0xff]
      %v620 = vld [vmem:[%s112 + $0xfa0] sm:$0xff]
      %v621 = vld [vmem:[%s112 + $0xfa8] sm:$0xff]
      %v622 = vld [vmem:[%s112 + $0xfb0] sm:$0xff]
      %v623 = vld [vmem:[%s112 + $0xfb8] sm:$0xff]
      %v624 = vld [vmem:[%s112 + $0xfc0] sm:$0xff]
      %v625 = vld [vmem:[%s112 + $0xfc8] sm:$0xff]
      %v626 = vld [vmem:[%s112 + $0xfd0] sm:$0xff]
      %v627 = vld [vmem:[%s112 + $0xfd8] sm:$0xff]
      %v628 = vld [vmem:[%s112 + $0xfe0] sm:$0xff]
      %v629 = vld [vmem:[%s112 + $0xfe8] sm:$0xff]
      %v630 = vld [vmem:[%s112 + $0xff0] sm:$0xff]
      %v631 = vld [vmem:[%s112 + $0xff8] sm:$0xff]
      %vm632 = vcmask 80896
      %v633 = vsel %vm632, %v120, -inf
      %634 = vmax.xlane.f32.xlu0 %v633
      %v635 = vpop.xlane.xlu0 %634
      %v636 = vsel %vm632, %v121, -inf
      %637 = vmax.xlane.f32.xlu0 %v636
      %v638 = vpop.xlane.xlu0 %637
      %v639 = vsel %vm632, %v122, -inf
      %640 = vmax.xlane.f32.xlu0 %v639
      %v641 = vpop.xlane.xlu0 %640
      %v642 = vsel %vm632, %v123, -inf
      %643 = vmax.xlane.f32.xlu0 %v642
      %v644 = vpop.xlane.xlu0 %643
      %v645 = vsel %vm632, %v124, -inf
      %646 = vmax.xlane.f32.xlu0 %v645
      %v647 = vpop.xlane.xlu0 %646
      %v648 = vsel %vm632, %v125, -inf
      %649 = vmax.xlane.f32.xlu0 %v648
      %v650 = vpop.xlane.xlu0 %649
      %v651 = vsel %vm632, %v126, -inf
      %652 = vmax.xlane.f32.xlu0 %v651
      %v653 = vpop.xlane.xlu0 %652
      %v654 = vsel %vm632, %v127, -inf
      %655 = vmax.xlane.f32.xlu0 %v654
      %v656 = vpop.xlane.xlu0 %655
      %v657 = vsel %vm632, %v128, -inf
      %658 = vmax.xlane.f32.xlu0 %v657
      %v659 = vpop.xlane.xlu0 %658
      %v660 = vsel %vm632, %v129, -inf
      %661 = vmax.xlane.f32.xlu0 %v660
      %v662 = vpop.xlane.xlu0 %661
      %v663 = vsel %vm632, %v130, -inf
      %664 = vmax.xlane.f32.xlu0 %v663
      %v665 = vpop.xlane.xlu0 %664
      %v666 = vsel %vm632, %v131, -inf
      %667 = vmax.xlane.f32.xlu0 %v666
      %v668 = vpop.xlane.xlu0 %667
      %v669 = vsel %vm632, %v132, -inf
      %670 = vmax.xlane.f32.xlu0 %v669
      %v671 = vpop.xlane.xlu0 %670
      %v672 = vsel %vm632, %v133, -inf
      %673 = vmax.xlane.f32.xlu0 %v672
      %v674 = vpop.xlane.xlu0 %673
      %v675 = vsel %vm632, %v134, -inf
      %676 = vmax.xlane.f32.xlu0 %v675
      %v677 = vpop.xlane.xlu0 %676
      %v678 = vsel %vm632, %v135, -inf
      %679 = vmax.xlane.f32.xlu0 %v678
      %v680 = vpop.xlane.xlu0 %679
      %v681 = vsel %vm632, %v136, -inf
      %682 = vmax.xlane.f32.xlu0 %v681
      %v683 = vpop.xlane.xlu0 %682
      %v684 = vsel %vm632, %v137, -inf
      %685 = vmax.xlane.f32.xlu0 %v684
      %v686 = vpop.xlane.xlu0 %685
      %v687 = vsel %vm632, %v138, -inf
      %688 = vmax.xlane.f32.xlu0 %v687
      %v689 = vpop.xlane.xlu0 %688
      %v690 = vsel %vm632, %v139, -inf
      %691 = vmax.xlane.f32.xlu0 %v690
      %v692 = vpop.xlane.xlu0 %691
      %v693 = vsel %vm632, %v140, -inf
      %694 = vmax.xlane.f32.xlu0 %v693
      %v695 = vpop.xlane.xlu0 %694
      %v696 = vsel %vm632, %v141, -inf
      %697 = vmax.xlane.f32.xlu0 %v696
      %v698 = vpop.xlane.xlu0 %697
      %v699 = vsel %vm632, %v142, -inf
      %700 = vmax.xlane.f32.xlu0 %v699
      %v701 = vpop.xlane.xlu0 %700
      %v702 = vsel %vm632, %v143, -inf
      %703 = vmax.xlane.f32.xlu0 %v702
      %v704 = vpop.xlane.xlu0 %703
      %v705 = vsel %vm632, %v144, -inf
      %706 = vmax.xlane.f32.xlu0 %v705
      %v707 = vpop.xlane.xlu0 %706
      %v708 = vsel %vm632, %v145, -inf
      %709 = vmax.xlane.f32.xlu0 %v708
      %v710 = vpop.xlane.xlu0 %709
      %v711 = vsel %vm632, %v146, -inf
      %712 = vmax.xlane.f32.xlu0 %v711
      %v713 = vpop.xlane.xlu0 %712
      %v714 = vsel %vm632, %v147, -inf
      %715 = vmax.xlane.f32.xlu0 %v714
      %v716 = vpop.xlane.xlu0 %715
      %v717 = vsel %vm632, %v148, -inf
      %718 = vmax.xlane.f32.xlu0 %v717
      %v719 = vpop.xlane.xlu0 %718
      %v720 = vsel %vm632, %v149, -inf
      %721 = vmax.xlane.f32.xlu0 %v720
      %v722 = vpop.xlane.xlu0 %721
      %v723 = vsel %vm632, %v150, -inf
      %724 = vmax.xlane.f32.xlu0 %v723
      %v725 = vpop.xlane.xlu0 %724
      %v726 = vsel %vm632, %v151, -inf
      %727 = vmax.xlane.f32.xlu0 %v726
      %v728 = vpop.xlane.xlu0 %727
      %v729 = vsel %vm632, %v152, -inf
      %730 = vmax.xlane.f32.xlu0 %v729
      %v731 = vpop.xlane.xlu0 %730
      %v732 = vsel %vm632, %v153, -inf
      %733 = vmax.xlane.f32.xlu0 %v732
      %v734 = vpop.xlane.xlu0 %733
      %v735 = vsel %vm632, %v154, -inf
      %736 = vmax.xlane.f32.xlu0 %v735
      %v737 = vpop.xlane.xlu0 %736
      %v738 = vsel %vm632, %v155, -inf
      %739 = vmax.xlane.f32.xlu0 %v738
      %v740 = vpop.xlane.xlu0 %739
      %v741 = vsel %vm632, %v156, -inf
      %742 = vmax.xlane.f32.xlu0 %v741
      %v743 = vpop.xlane.xlu0 %742
      %v744 = vsel %vm632, %v157, -inf
      %745 = vmax.xlane.f32.xlu0 %v744
      %v746 = vpop.xlane.xlu0 %745
      %v747 = vsel %vm632, %v158, -inf
      %748 = vmax.xlane.f32.xlu0 %v747
      %v749 = vpop.xlane.xlu0 %748
      %v750 = vsel %vm632, %v159, -inf
      %751 = vmax.xlane.f32.xlu0 %v750
      %v752 = vpop.xlane.xlu0 %751
      %v753 = vsel %vm632, %v160, -inf
      %754 = vmax.xlane.f32.xlu0 %v753
      %v755 = vpop.xlane.xlu0 %754
      %v756 = vsel %vm632, %v161, -inf
      %757 = vmax.xlane.f32.xlu0 %v756
      %v758 = vpop.xlane.xlu0 %757
      %v759 = vsel %vm632, %v162, -inf
      %760 = vmax.xlane.f32.xlu0 %v759
      %v761 = vpop.xlane.xlu0 %760
      %v762 = vsel %vm632, %v163, -inf
      %763 = vmax.xlane.f32.xlu0 %v762
      %v764 = vpop.xlane.xlu0 %763
      %v765 = vsel %vm632, %v164, -inf
      %766 = vmax.xlane.f32.xlu0 %v765
      %v767 = vpop.xlane.xlu0 %766
      %v768 = vsel %vm632, %v165, -inf
      %769 = vmax.xlane.f32.xlu0 %v768
      %v770 = vpop.xlane.xlu0 %769
      %v771 = vsel %vm632, %v166, -inf
      %772 = vmax.xlane.f32.xlu0 %v771
      %v773 = vpop.xlane.xlu0 %772
      %v774 = vsel %vm632, %v167, -inf
      %775 = vmax.xlane.f32.xlu0 %v774
      %v776 = vpop.xlane.xlu0 %775
      %v777 = vsel %vm632, %v168, -inf
      %778 = vmax.xlane.f32.xlu0 %v777
      %v779 = vpop.xlane.xlu0 %778
      %v780 = vsel %vm632, %v169, -inf
      %781 = vmax.xlane.f32.xlu0 %v780
      %v782 = vpop.xlane.xlu0 %781
      %v783 = vsel %vm632, %v170, -inf
      %784 = vmax.xlane.f32.xlu0 %v783
      %v785 = vpop.xlane.xlu0 %784
      %v786 = vsel %vm632, %v171, -inf
      %787 = vmax.xlane.f32.xlu0 %v786
      %v788 = vpop.xlane.xlu0 %787
      %v789 = vsel %vm632, %v172, -inf
      %790 = vmax.xlane.f32.xlu0 %v789
      %v791 = vpop.xlane.xlu0 %790
      %v792 = vsel %vm632, %v173, -inf
      %793 = vmax.xlane.f32.xlu0 %v792
      %v794 = vpop.xlane.xlu0 %793
      %v795 = vsel %vm632, %v174, -inf
      %796 = vmax.xlane.f32.xlu0 %v795
      %v797 = vpop.xlane.xlu0 %796
      %v798 = vsel %vm632, %v175, -inf
      %799 = vmax.xlane.f32.xlu0 %v798
      %v800 = vpop.xlane.xlu0 %799
      %v801 = vsel %vm632, %v176, -inf
      %802 = vmax.xlane.f32.xlu0 %v801
      %v803 = vpop.xlane.xlu0 %802
      %v804 = vsel %vm632, %v177, -inf
      %805 = vmax.xlane.f32.xlu0 %v804
      %v806 = vpop.xlane.xlu0 %805
      %v807 = vsel %vm632, %v178, -inf
      %808 = vmax.xlane.f32.xlu0 %v807
      %v809 = vpop.xlane.xlu0 %808
      %v810 = vsel %vm632, %v179, -inf
      %811 = vmax.xlane.f32.xlu0 %v810
      %v812 = vpop.xlane.xlu0 %811
      %v813 = vsel %vm632, %v180, -inf
      %814 = vmax.xlane.f32.xlu0 %v813
      %v815 = vpop.xlane.xlu0 %814
      %v816 = vsel %vm632, %v181, -inf
      %817 = vmax.xlane.f32.xlu0 %v816
      %v818 = vpop.xlane.xlu0 %817
      %v819 = vsel %vm632, %v182, -inf
      %820 = vmax.xlane.f32.xlu0 %v819
      %v821 = vpop.xlane.xlu0 %820
      %v822 = vsel %vm632, %v183, -inf
      %823 = vmax.xlane.f32.xlu0 %v822
      %v824 = vpop.xlane.xlu0 %823
      %v825 = vsel %vm632, %v184, -inf
      %826 = vmax.xlane.f32.xlu0 %v825
      %v827 = vpop.xlane.xlu0 %826
      %v828 = vsel %vm632, %v185, -inf
      %829 = vmax.xlane.f32.xlu0 %v828
      %v830 = vpop.xlane.xlu0 %829
      %v831 = vsel %vm632, %v186, -inf
      %832 = vmax.xlane.f32.xlu0 %v831
      %v833 = vpop.xlane.xlu0 %832
      %v834 = vsel %vm632, %v187, -inf
      %835 = vmax.xlane.f32.xlu0 %v834
      %v836 = vpop.xlane.xlu0 %835
      %v837 = vsel %vm632, %v188, -inf
      %838 = vmax.xlane.f32.xlu0 %v837
      %v839 = vpop.xlane.xlu0 %838
      %v840 = vsel %vm632, %v189, -inf
      %841 = vmax.xlane.f32.xlu0 %v840
      %v842 = vpop.xlane.xlu0 %841
      %v843 = vsel %vm632, %v190, -inf
      %844 = vmax.xlane.f32.xlu0 %v843
      %v845 = vpop.xlane.xlu0 %844
      %v846 = vsel %vm632, %v191, -inf
      %847 = vmax.xlane.f32.xlu0 %v846
      %v848 = vpop.xlane.xlu0 %847
      %v849 = vsel %vm632, %v192, -inf
      %850 = vmax.xlane.f32.xlu0 %v849
      %v851 = vpop.xlane.xlu0 %850
      %v852 = vsel %vm632, %v193, -inf
      %853 = vmax.xlane.f32.xlu0 %v852
      %v854 = vpop.xlane.xlu0 %853
      %v855 = vsel %vm632, %v194, -inf
      %856 = vmax.xlane.f32.xlu0 %v855
      %v857 = vpop.xlane.xlu0 %856
      %v858 = vsel %vm632, %v195, -inf
      %859 = vmax.xlane.f32.xlu0 %v858
      %v860 = vpop.xlane.xlu0 %859
      %v861 = vsel %vm632, %v196, -inf
      %862 = vmax.xlane.f32.xlu0 %v861
      %v863 = vpop.xlane.xlu0 %862
      %v864 = vsel %vm632, %v197, -inf
      %865 = vmax.xlane.f32.xlu0 %v864
      %v866 = vpop.xlane.xlu0 %865
      %v867 = vsel %vm632, %v198, -inf
      %868 = vmax.xlane.f32.xlu0 %v867
      %v869 = vpop.xlane.xlu0 %868
      %v870 = vsel %vm632, %v199, -inf
      %871 = vmax.xlane.f32.xlu0 %v870
      %v872 = vpop.xlane.xlu0 %871
      %v873 = vsel %vm632, %v200, -inf
      %874 = vmax.xlane.f32.xlu0 %v873
      %v875 = vpop.xlane.xlu0 %874
      %v876 = vsel %vm632, %v201, -inf
      %877 = vmax.xlane.f32.xlu0 %v876
      %v878 = vpop.xlane.xlu0 %877
      %v879 = vsel %vm632, %v202, -inf
      %880 = vmax.xlane.f32.xlu0 %v879
      %v881 = vpop.xlane.xlu0 %880
      %v882 = vsel %vm632, %v203, -inf
      %883 = vmax.xlane.f32.xlu0 %v882
      %v884 = vpop.xlane.xlu0 %883
      %v885 = vsel %vm632, %v204, -inf
      %886 = vmax.xlane.f32.xlu0 %v885
      %v887 = vpop.xlane.xlu0 %886
      %v888 = vsel %vm632, %v205, -inf
      %889 = vmax.xlane.f32.xlu0 %v888
      %v890 = vpop.xlane.xlu0 %889
      %v891 = vsel %vm632, %v206, -inf
      %892 = vmax.xlane.f32.xlu0 %v891
      %v893 = vpop.xlane.xlu0 %892
      %v894 = vsel %vm632, %v207, -inf
      %895 = vmax.xlane.f32.xlu0 %v894
      %v896 = vpop.xlane.xlu0 %895
      %v897 = vsel %vm632, %v208, -inf
      %898 = vmax.xlane.f32.xlu0 %v897
      %v899 = vpop.xlane.xlu0 %898
      %v900 = vsel %vm632, %v209, -inf
      %901 = vmax.xlane.f32.xlu0 %v900
      %v902 = vpop.xlane.xlu0 %901
      %v903 = vsel %vm632, %v210, -inf
      %904 = vmax.xlane.f32.xlu0 %v903
      %v905 = vpop.xlane.xlu0 %904
      %v906 = vsel %vm632, %v211, -inf
      %907 = vmax.xlane.f32.xlu0 %v906
      %v908 = vpop.xlane.xlu0 %907
      %v909 = vsel %vm632, %v212, -inf
      %910 = vmax.xlane.f32.xlu0 %v909
      %v911 = vpop.xlane.xlu0 %910
      %v912 = vsel %vm632, %v213, -inf
      %913 = vmax.xlane.f32.xlu0 %v912
      %v914 = vpop.xlane.xlu0 %913
      %v915 = vsel %vm632, %v214, -inf
      %916 = vmax.xlane.f32.xlu0 %v915
      %v917 = vpop.xlane.xlu0 %916
      %v918 = vsel %vm632, %v215, -inf
      %919 = vmax.xlane.f32.xlu0 %v918
      %v920 = vpop.xlane.xlu0 %919
      %v921 = vsel %vm632, %v216, -inf
      %922 = vmax.xlane.f32.xlu0 %v921
      %v923 = vpop.xlane.xlu0 %922
      %v924 = vsel %vm632, %v217, -inf
      %925 = vmax.xlane.f32.xlu0 %v924
      %v926 = vpop.xlane.xlu0 %925
      %v927 = vsel %vm632, %v218, -inf
      %928 = vmax.xlane.f32.xlu0 %v927
      %v929 = vpop.xlane.xlu0 %928
      %v930 = vsel %vm632, %v219, -inf
      %931 = vmax.xlane.f32.xlu0 %v930
      %v932 = vpop.xlane.xlu0 %931
      %v933 = vsel %vm632, %v220, -inf
      %934 = vmax.xlane.f32.xlu0 %v933
      %v935 = vpop.xlane.xlu0 %934
      %v936 = vsel %vm632, %v221, -inf
      %937 = vmax.xlane.f32.xlu0 %v936
      %v938 = vpop.xlane.xlu0 %937
      %v939 = vsel %vm632, %v222, -inf
      %940 = vmax.xlane.f32.xlu0 %v939
      %v941 = vpop.xlane.xlu0 %940
      %v942 = vsel %vm632, %v223, -inf
      %943 = vmax.xlane.f32.xlu0 %v942
      %v944 = vpop.xlane.xlu0 %943
      %v945 = vsel %vm632, %v224, -inf
      %946 = vmax.xlane.f32.xlu0 %v945
      %v947 = vpop.xlane.xlu0 %946
      %v948 = vsel %vm632, %v225, -inf
      %949 = vmax.xlane.f32.xlu0 %v948
      %v950 = vpop.xlane.xlu0 %949
      %v951 = vsel %vm632, %v226, -inf
      %952 = vmax.xlane.f32.xlu0 %v951
      %v953 = vpop.xlane.xlu0 %952
      %v954 = vsel %vm632, %v227, -inf
      %955 = vmax.xlane.f32.xlu0 %v954
      %v956 = vpop.xlane.xlu0 %955
      %v957 = vsel %vm632, %v228, -inf
      %958 = vmax.xlane.f32.xlu0 %v957
      %v959 = vpop.xlane.xlu0 %958
      %v960 = vsel %vm632, %v229, -inf
      %961 = vmax.xlane.f32.xlu0 %v960
      %v962 = vpop.xlane.xlu0 %961
      %v963 = vsel %vm632, %v230, -inf
      %964 = vmax.xlane.f32.xlu0 %v963
      %v965 = vpop.xlane.xlu0 %964
      %v966 = vsel %vm632, %v231, -inf
      %967 = vmax.xlane.f32.xlu0 %v966
      %v968 = vpop.xlane.xlu0 %967
      %v969 = vsel %vm632, %v232, -inf
      %970 = vmax.xlane.f32.xlu0 %v969
      %v971 = vpop.xlane.xlu0 %970
      %v972 = vsel %vm632, %v233, -inf
      %973 = vmax.xlane.f32.xlu0 %v972
      %v974 = vpop.xlane.xlu0 %973
      %v975 = vsel %vm632, %v234, -inf
      %976 = vmax.xlane.f32.xlu0 %v975
      %v977 = vpop.xlane.xlu0 %976
      %v978 = vsel %vm632, %v235, -inf
      %979 = vmax.xlane.f32.xlu0 %v978
      %v980 = vpop.xlane.xlu0 %979
      %v981 = vsel %vm632, %v236, -inf
      %982 = vmax.xlane.f32.xlu0 %v981
      %v983 = vpop.xlane.xlu0 %982
      %v984 = vsel %vm632, %v237, -inf
      %985 = vmax.xlane.f32.xlu0 %v984
      %v986 = vpop.xlane.xlu0 %985
      %v987 = vsel %vm632, %v238, -inf
      %988 = vmax.xlane.f32.xlu0 %v987
      %v989 = vpop.xlane.xlu0 %988
      %v990 = vsel %vm632, %v239, -inf
      %991 = vmax.xlane.f32.xlu0 %v990
      %v992 = vpop.xlane.xlu0 %991
      %v993 = vsel %vm632, %v240, -inf
      %994 = vmax.xlane.f32.xlu0 %v993
      %v995 = vpop.xlane.xlu0 %994
      %v996 = vsel %vm632, %v241, -inf
      %997 = vmax.xlane.f32.xlu0 %v996
      %v998 = vpop.xlane.xlu0 %997
      %v999 = vsel %vm632, %v242, -inf
      %1000 = vmax.xlane.f32.xlu0 %v999
      %v1001 = vpop.xlane.xlu0 %1000
      %v1002 = vsel %vm632, %v243, -inf
      %1003 = vmax.xlane.f32.xlu0 %v1002
      %v1004 = vpop.xlane.xlu0 %1003
      %v1005 = vsel %vm632, %v244, -inf
      %1006 = vmax.xlane.f32.xlu0 %v1005
      %v1007 = vpop.xlane.xlu0 %1006
      %v1008 = vsel %vm632, %v245, -inf
      %1009 = vmax.xlane.f32.xlu0 %v1008
      %v1010 = vpop.xlane.xlu0 %1009
      %v1011 = vsel %vm632, %v246, -inf
      %1012 = vmax.xlane.f32.xlu0 %v1011
      %v1013 = vpop.xlane.xlu0 %1012
      %v1014 = vsel %vm632, %v247, -inf
      %1015 = vmax.xlane.f32.xlu0 %v1014
      %v1016 = vpop.xlane.xlu0 %1015
      %v1017 = vsel %vm632, %v248, -inf
      %1018 = vmax.xlane.f32.xlu0 %v1017
      %v1019 = vpop.xlane.xlu0 %1018
      %v1020 = vsel %vm632, %v249, -inf
      %1021 = vmax.xlane.f32.xlu0 %v1020
      %v1022 = vpop.xlane.xlu0 %1021
      %v1023 = vsel %vm632, %v250, -inf
      %1024 = vmax.xlane.f32.xlu0 %v1023
      %v1025 = vpop.xlane.xlu0 %1024
      %v1026 = vsel %vm632, %v251, -inf
      %1027 = vmax.xlane.f32.xlu0 %v1026
      %v1028 = vpop.xlane.xlu0 %1027
      %v1029 = vsel %vm632, %v252, -inf
      %1030 = vmax.xlane.f32.xlu0 %v1029
      %v1031 = vpop.xlane.xlu0 %1030
      %v1032 = vsel %vm632, %v253, -inf
      %1033 = vmax.xlane.f32.xlu0 %v1032
      %v1034 = vpop.xlane.xlu0 %1033
      %v1035 = vsel %vm632, %v254, -inf
      %1036 = vmax.xlane.f32.xlu0 %v1035
      %v1037 = vpop.xlane.xlu0 %1036
      %v1038 = vsel %vm632, %v255, -inf
      %1039 = vmax.xlane.f32.xlu0 %v1038
      %v1040 = vpop.xlane.xlu0 %1039
      %v1041 = vsel %vm632, %v256, -inf
      %1042 = vmax.xlane.f32.xlu0 %v1041
      %v1043 = vpop.xlane.xlu0 %1042
      %v1044 = vsel %vm632, %v257, -inf
      %1045 = vmax.xlane.f32.xlu0 %v1044
      %v1046 = vpop.xlane.xlu0 %1045
      %v1047 = vsel %vm632, %v258, -inf
      %1048 = vmax.xlane.f32.xlu0 %v1047
      %v1049 = vpop.xlane.xlu0 %1048
      %v1050 = vsel %vm632, %v259, -inf
      %1051 = vmax.xlane.f32.xlu0 %v1050
      %v1052 = vpop.xlane.xlu0 %1051
      %v1053 = vsel %vm632, %v260, -inf
      %1054 = vmax.xlane.f32.xlu0 %v1053
      %v1055 = vpop.xlane.xlu0 %1054
      %v1056 = vsel %vm632, %v261, -inf
      %1057 = vmax.xlane.f32.xlu0 %v1056
      %v1058 = vpop.xlane.xlu0 %1057
      %v1059 = vsel %vm632, %v262, -inf
      %1060 = vmax.xlane.f32.xlu0 %v1059
      %v1061 = vpop.xlane.xlu0 %1060
      %v1062 = vsel %vm632, %v263, -inf
      %1063 = vmax.xlane.f32.xlu0 %v1062
      %v1064 = vpop.xlane.xlu0 %1063
      %v1065 = vsel %vm632, %v264, -inf
      %1066 = vmax.xlane.f32.xlu0 %v1065
      %v1067 = vpop.xlane.xlu0 %1066
      %v1068 = vsel %vm632, %v265, -inf
      %1069 = vmax.xlane.f32.xlu0 %v1068
      %v1070 = vpop.xlane.xlu0 %1069
      %v1071 = vsel %vm632, %v266, -inf
      %1072 = vmax.xlane.f32.xlu0 %v1071
      %v1073 = vpop.xlane.xlu0 %1072
      %v1074 = vsel %vm632, %v267, -inf
      %1075 = vmax.xlane.f32.xlu0 %v1074
      %v1076 = vpop.xlane.xlu0 %1075
      %v1077 = vsel %vm632, %v268, -inf
      %1078 = vmax.xlane.f32.xlu0 %v1077
      %v1079 = vpop.xlane.xlu0 %1078
      %v1080 = vsel %vm632, %v269, -inf
      %1081 = vmax.xlane.f32.xlu0 %v1080
      %v1082 = vpop.xlane.xlu0 %1081
      %v1083 = vsel %vm632, %v270, -inf
      %1084 = vmax.xlane.f32.xlu0 %v1083
      %v1085 = vpop.xlane.xlu0 %1084
      %v1086 = vsel %vm632, %v271, -inf
      %1087 = vmax.xlane.f32.xlu0 %v1086
      %v1088 = vpop.xlane.xlu0 %1087
      %v1089 = vsel %vm632, %v272, -inf
      %1090 = vmax.xlane.f32.xlu0 %v1089
      %v1091 = vpop.xlane.xlu0 %1090
      %v1092 = vsel %vm632, %v273, -inf
      %1093 = vmax.xlane.f32.xlu0 %v1092
      %v1094 = vpop.xlane.xlu0 %1093
      %v1095 = vsel %vm632, %v274, -inf
      %1096 = vmax.xlane.f32.xlu0 %v1095
      %v1097 = vpop.xlane.xlu0 %1096
      %v1098 = vsel %vm632, %v275, -inf
      %1099 = vmax.xlane.f32.xlu0 %v1098
      %v1100 = vpop.xlane.xlu0 %1099
      %v1101 = vsel %vm632, %v276, -inf
      %1102 = vmax.xlane.f32.xlu0 %v1101
      %v1103 = vpop.xlane.xlu0 %1102
      %v1104 = vsel %vm632, %v277, -inf
      %1105 = vmax.xlane.f32.xlu0 %v1104
      %v1106 = vpop.xlane.xlu0 %1105
      %v1107 = vsel %vm632, %v278, -inf
      %1108 = vmax.xlane.f32.xlu0 %v1107
      %v1109 = vpop.xlane.xlu0 %1108
      %v1110 = vsel %vm632, %v279, -inf
      %1111 = vmax.xlane.f32.xlu0 %v1110
      %v1112 = vpop.xlane.xlu0 %1111
      %v1113 = vsel %vm632, %v280, -inf
      %1114 = vmax.xlane.f32.xlu0 %v1113
      %v1115 = vpop.xlane.xlu0 %1114
      %v1116 = vsel %vm632, %v281, -inf
      %1117 = vmax.xlane.f32.xlu0 %v1116
      %v1118 = vpop.xlane.xlu0 %1117
      %v1119 = vsel %vm632, %v282, -inf
      %1120 = vmax.xlane.f32.xlu0 %v1119
      %v1121 = vpop.xlane.xlu0 %1120
      %v1122 = vsel %vm632, %v283, -inf
      %1123 = vmax.xlane.f32.xlu0 %v1122
      %v1124 = vpop.xlane.xlu0 %1123
      %v1125 = vsel %vm632, %v284, -inf
      %1126 = vmax.xlane.f32.xlu0 %v1125
      %v1127 = vpop.xlane.xlu0 %1126
      %v1128 = vsel %vm632, %v285, -inf
      %1129 = vmax.xlane.f32.xlu0 %v1128
      %v1130 = vpop.xlane.xlu0 %1129
      %v1131 = vsel %vm632, %v286, -inf
      %1132 = vmax.xlane.f32.xlu0 %v1131
      %v1133 = vpop.xlane.xlu0 %1132
      %v1134 = vsel %vm632, %v287, -inf
      %1135 = vmax.xlane.f32.xlu0 %v1134
      %v1136 = vpop.xlane.xlu0 %1135
      %v1137 = vsel %vm632, %v288, -inf
      %1138 = vmax.xlane.f32.xlu0 %v1137
      %v1139 = vpop.xlane.xlu0 %1138
      %v1140 = vsel %vm632, %v289, -inf
      %1141 = vmax.xlane.f32.xlu0 %v1140
      %v1142 = vpop.xlane.xlu0 %1141
      %v1143 = vsel %vm632, %v290, -inf
      %1144 = vmax.xlane.f32.xlu0 %v1143
      %v1145 = vpop.xlane.xlu0 %1144
      %v1146 = vsel %vm632, %v291, -inf
      %1147 = vmax.xlane.f32.xlu0 %v1146
      %v1148 = vpop.xlane.xlu0 %1147
      %v1149 = vsel %vm632, %v292, -inf
      %1150 = vmax.xlane.f32.xlu0 %v1149
      %v1151 = vpop.xlane.xlu0 %1150
      %v1152 = vsel %vm632, %v293, -inf
      %1153 = vmax.xlane.f32.xlu0 %v1152
      %v1154 = vpop.xlane.xlu0 %1153
      %v1155 = vsel %vm632, %v294, -inf
      %1156 = vmax.xlane.f32.xlu0 %v1155
      %v1157 = vpop.xlane.xlu0 %1156
      %v1158 = vsel %vm632, %v295, -inf
      %1159 = vmax.xlane.f32.xlu0 %v1158
      %v1160 = vpop.xlane.xlu0 %1159
      %v1161 = vsel %vm632, %v296, -inf
      %1162 = vmax.xlane.f32.xlu0 %v1161
      %v1163 = vpop.xlane.xlu0 %1162
      %v1164 = vsel %vm632, %v297, -inf
      %1165 = vmax.xlane.f32.xlu0 %v1164
      %v1166 = vpop.xlane.xlu0 %1165
      %v1167 = vsel %vm632, %v298, -inf
      %1168 = vmax.xlane.f32.xlu0 %v1167
      %v1169 = vpop.xlane.xlu0 %1168
      %v1170 = vsel %vm632, %v299, -inf
      %1171 = vmax.xlane.f32.xlu0 %v1170
      %v1172 = vpop.xlane.xlu0 %1171
      %v1173 = vsel %vm632, %v300, -inf
      %1174 = vmax.xlane.f32.xlu0 %v1173
      %v1175 = vpop.xlane.xlu0 %1174
      %v1176 = vsel %vm632, %v301, -inf
      %1177 = vmax.xlane.f32.xlu0 %v1176
      %v1178 = vpop.xlane.xlu0 %1177
      %v1179 = vsel %vm632, %v302, -inf
      %1180 = vmax.xlane.f32.xlu0 %v1179
      %v1181 = vpop.xlane.xlu0 %1180
      %v1182 = vsel %vm632, %v303, -inf
      %1183 = vmax.xlane.f32.xlu0 %v1182
      %v1184 = vpop.xlane.xlu0 %1183
      %v1185 = vsel %vm632, %v304, -inf
      %1186 = vmax.xlane.f32.xlu0 %v1185
      %v1187 = vpop.xlane.xlu0 %1186
      %v1188 = vsel %vm632, %v305, -inf
      %1189 = vmax.xlane.f32.xlu0 %v1188
      %v1190 = vpop.xlane.xlu0 %1189
      %v1191 = vsel %vm632, %v306, -inf
      %1192 = vmax.xlane.f32.xlu0 %v1191
      %v1193 = vpop.xlane.xlu0 %1192
      %v1194 = vsel %vm632, %v307, -inf
      %1195 = vmax.xlane.f32.xlu0 %v1194
      %v1196 = vpop.xlane.xlu0 %1195
      %v1197 = vsel %vm632, %v308, -inf
      %1198 = vmax.xlane.f32.xlu0 %v1197
      %v1199 = vpop.xlane.xlu0 %1198
      %v1200 = vsel %vm632, %v309, -inf
      %1201 = vmax.xlane.f32.xlu0 %v1200
      %v1202 = vpop.xlane.xlu0 %1201
      %v1203 = vsel %vm632, %v310, -inf
      %1204 = vmax.xlane.f32.xlu0 %v1203
      %v1205 = vpop.xlane.xlu0 %1204
      %v1206 = vsel %vm632, %v311, -inf
      %1207 = vmax.xlane.f32.xlu0 %v1206
      %v1208 = vpop.xlane.xlu0 %1207
      %v1209 = vsel %vm632, %v312, -inf
      %1210 = vmax.xlane.f32.xlu0 %v1209
      %v1211 = vpop.xlane.xlu0 %1210
      %v1212 = vsel %vm632, %v313, -inf
      %1213 = vmax.xlane.f32.xlu0 %v1212
      %v1214 = vpop.xlane.xlu0 %1213
      %v1215 = vsel %vm632, %v314, -inf
      %1216 = vmax.xlane.f32.xlu0 %v1215
      %v1217 = vpop.xlane.xlu0 %1216
      %v1218 = vsel %vm632, %v315, -inf
      %1219 = vmax.xlane.f32.xlu0 %v1218
      %v1220 = vpop.xlane.xlu0 %1219
      %v1221 = vsel %vm632, %v316, -inf
      %1222 = vmax.xlane.f32.xlu0 %v1221
      %v1223 = vpop.xlane.xlu0 %1222
      %v1224 = vsel %vm632, %v317, -inf
      %1225 = vmax.xlane.f32.xlu0 %v1224
      %v1226 = vpop.xlane.xlu0 %1225
      %v1227 = vsel %vm632, %v318, -inf
      %1228 = vmax.xlane.f32.xlu0 %v1227
      %v1229 = vpop.xlane.xlu0 %1228
      %v1230 = vsel %vm632, %v319, -inf
      %1231 = vmax.xlane.f32.xlu0 %v1230
      %v1232 = vpop.xlane.xlu0 %1231
      %v1233 = vsel %vm632, %v320, -inf
      %1234 = vmax.xlane.f32.xlu0 %v1233
      %v1235 = vpop.xlane.xlu0 %1234
      %v1236 = vsel %vm632, %v321, -inf
      %1237 = vmax.xlane.f32.xlu0 %v1236
      %v1238 = vpop.xlane.xlu0 %1237
      %v1239 = vsel %vm632, %v322, -inf
      %1240 = vmax.xlane.f32.xlu0 %v1239
      %v1241 = vpop.xlane.xlu0 %1240
      %v1242 = vsel %vm632, %v323, -inf
      %1243 = vmax.xlane.f32.xlu0 %v1242
      %v1244 = vpop.xlane.xlu0 %1243
      %v1245 = vsel %vm632, %v324, -inf
      %1246 = vmax.xlane.f32.xlu0 %v1245
      %v1247 = vpop.xlane.xlu0 %1246
      %v1248 = vsel %vm632, %v325, -inf
      %1249 = vmax.xlane.f32.xlu0 %v1248
      %v1250 = vpop.xlane.xlu0 %1249
      %v1251 = vsel %vm632, %v326, -inf
      %1252 = vmax.xlane.f32.xlu0 %v1251
      %v1253 = vpop.xlane.xlu0 %1252
      %v1254 = vsel %vm632, %v327, -inf
      %1255 = vmax.xlane.f32.xlu0 %v1254
      %v1256 = vpop.xlane.xlu0 %1255
      %v1257 = vsel %vm632, %v328, -inf
      %1258 = vmax.xlane.f32.xlu0 %v1257
      %v1259 = vpop.xlane.xlu0 %1258
      %v1260 = vsel %vm632, %v329, -inf
      %1261 = vmax.xlane.f32.xlu0 %v1260
      %v1262 = vpop.xlane.xlu0 %1261
      %v1263 = vsel %vm632, %v330, -inf
      %1264 = vmax.xlane.f32.xlu0 %v1263
      %v1265 = vpop.xlane.xlu0 %1264
      %v1266 = vsel %vm632, %v331, -inf
      %1267 = vmax.xlane.f32.xlu0 %v1266
      %v1268 = vpop.xlane.xlu0 %1267
      %v1269 = vsel %vm632, %v332, -inf
      %1270 = vmax.xlane.f32.xlu0 %v1269
      %v1271 = vpop.xlane.xlu0 %1270
      %v1272 = vsel %vm632, %v333, -inf
      %1273 = vmax.xlane.f32.xlu0 %v1272
      %v1274 = vpop.xlane.xlu0 %1273
      %v1275 = vsel %vm632, %v334, -inf
      %1276 = vmax.xlane.f32.xlu0 %v1275
      %v1277 = vpop.xlane.xlu0 %1276
      %v1278 = vsel %vm632, %v335, -inf
      %1279 = vmax.xlane.f32.xlu0 %v1278
      %v1280 = vpop.xlane.xlu0 %1279
      %v1281 = vsel %vm632, %v336, -inf
      %1282 = vmax.xlane.f32.xlu0 %v1281
      %v1283 = vpop.xlane.xlu0 %1282
      %v1284 = vsel %vm632, %v337, -inf
      %1285 = vmax.xlane.f32.xlu0 %v1284
      %v1286 = vpop.xlane.xlu0 %1285
      %v1287 = vsel %vm632, %v338, -inf
      %1288 = vmax.xlane.f32.xlu0 %v1287
      %v1289 = vpop.xlane.xlu0 %1288
      %v1290 = vsel %vm632, %v339, -inf
      %1291 = vmax.xlane.f32.xlu0 %v1290
      %v1292 = vpop.xlane.xlu0 %1291
      %v1293 = vsel %vm632, %v340, -inf
      %1294 = vmax.xlane.f32.xlu0 %v1293
      %v1295 = vpop.xlane.xlu0 %1294
      %v1296 = vsel %vm632, %v341, -inf
      %1297 = vmax.xlane.f32.xlu0 %v1296
      %v1298 = vpop.xlane.xlu0 %1297
      %v1299 = vsel %vm632, %v342, -inf
      %1300 = vmax.xlane.f32.xlu0 %v1299
      %v1301 = vpop.xlane.xlu0 %1300
      %v1302 = vsel %vm632, %v343, -inf
      %1303 = vmax.xlane.f32.xlu0 %v1302
      %v1304 = vpop.xlane.xlu0 %1303
      %v1305 = vsel %vm632, %v344, -inf
      %1306 = vmax.xlane.f32.xlu0 %v1305
      %v1307 = vpop.xlane.xlu0 %1306
      %v1308 = vsel %vm632, %v345, -inf
      %1309 = vmax.xlane.f32.xlu0 %v1308
      %v1310 = vpop.xlane.xlu0 %1309
      %v1311 = vsel %vm632, %v346, -inf
      %1312 = vmax.xlane.f32.xlu0 %v1311
      %v1313 = vpop.xlane.xlu0 %1312
      %v1314 = vsel %vm632, %v347, -inf
      %1315 = vmax.xlane.f32.xlu0 %v1314
      %v1316 = vpop.xlane.xlu0 %1315
      %v1317 = vsel %vm632, %v348, -inf
      %1318 = vmax.xlane.f32.xlu0 %v1317
      %v1319 = vpop.xlane.xlu0 %1318
      %v1320 = vsel %vm632, %v349, -inf
      %1321 = vmax.xlane.f32.xlu0 %v1320
      %v1322 = vpop.xlane.xlu0 %1321
      %v1323 = vsel %vm632, %v350, -inf
      %1324 = vmax.xlane.f32.xlu0 %v1323
      %v1325 = vpop.xlane.xlu0 %1324
      %v1326 = vsel %vm632, %v351, -inf
      %1327 = vmax.xlane.f32.xlu0 %v1326
      %v1328 = vpop.xlane.xlu0 %1327
      %v1329 = vsel %vm632, %v352, -inf
      %1330 = vmax.xlane.f32.xlu0 %v1329
      %v1331 = vpop.xlane.xlu0 %1330
      %v1332 = vsel %vm632, %v353, -inf
      %1333 = vmax.xlane.f32.xlu0 %v1332
      %v1334 = vpop.xlane.xlu0 %1333
      %v1335 = vsel %vm632, %v354, -inf
      %1336 = vmax.xlane.f32.xlu0 %v1335
      %v1337 = vpop.xlane.xlu0 %1336
      %v1338 = vsel %vm632, %v355, -inf
      %1339 = vmax.xlane.f32.xlu0 %v1338
      %v1340 = vpop.xlane.xlu0 %1339
      %v1341 = vsel %vm632, %v356, -inf
      %1342 = vmax.xlane.f32.xlu0 %v1341
      %v1343 = vpop.xlane.xlu0 %1342
      %v1344 = vsel %vm632, %v357, -inf
      %1345 = vmax.xlane.f32.xlu0 %v1344
      %v1346 = vpop.xlane.xlu0 %1345
      %v1347 = vsel %vm632, %v358, -inf
      %1348 = vmax.xlane.f32.xlu0 %v1347
      %v1349 = vpop.xlane.xlu0 %1348
      %v1350 = vsel %vm632, %v359, -inf
      %1351 = vmax.xlane.f32.xlu0 %v1350
      %v1352 = vpop.xlane.xlu0 %1351
      %v1353 = vsel %vm632, %v360, -inf
      %1354 = vmax.xlane.f32.xlu0 %v1353
      %v1355 = vpop.xlane.xlu0 %1354
      %v1356 = vsel %vm632, %v361, -inf
      %1357 = vmax.xlane.f32.xlu0 %v1356
      %v1358 = vpop.xlane.xlu0 %1357
      %v1359 = vsel %vm632, %v362, -inf
      %1360 = vmax.xlane.f32.xlu0 %v1359
      %v1361 = vpop.xlane.xlu0 %1360
      %v1362 = vsel %vm632, %v363, -inf
      %1363 = vmax.xlane.f32.xlu0 %v1362
      %v1364 = vpop.xlane.xlu0 %1363
      %v1365 = vsel %vm632, %v364, -inf
      %1366 = vmax.xlane.f32.xlu0 %v1365
      %v1367 = vpop.xlane.xlu0 %1366
      %v1368 = vsel %vm632, %v365, -inf
      %1369 = vmax.xlane.f32.xlu0 %v1368
      %v1370 = vpop.xlane.xlu0 %1369
      %v1371 = vsel %vm632, %v366, -inf
      %1372 = vmax.xlane.f32.xlu0 %v1371
      %v1373 = vpop.xlane.xlu0 %1372
      %v1374 = vsel %vm632, %v367, -inf
      %1375 = vmax.xlane.f32.xlu0 %v1374
      %v1376 = vpop.xlane.xlu0 %1375
      %v1377 = vsel %vm632, %v368, -inf
      %1378 = vmax.xlane.f32.xlu0 %v1377
      %v1379 = vpop.xlane.xlu0 %1378
      %v1380 = vsel %vm632, %v369, -inf
      %1381 = vmax.xlane.f32.xlu0 %v1380
      %v1382 = vpop.xlane.xlu0 %1381
      %v1383 = vsel %vm632, %v370, -inf
      %1384 = vmax.xlane.f32.xlu0 %v1383
      %v1385 = vpop.xlane.xlu0 %1384
      %v1386 = vsel %vm632, %v371, -inf
      %1387 = vmax.xlane.f32.xlu0 %v1386
      %v1388 = vpop.xlane.xlu0 %1387
      %v1389 = vsel %vm632, %v372, -inf
      %1390 = vmax.xlane.f32.xlu0 %v1389
      %v1391 = vpop.xlane.xlu0 %1390
      %v1392 = vsel %vm632, %v373, -inf
      %1393 = vmax.xlane.f32.xlu0 %v1392
      %v1394 = vpop.xlane.xlu0 %1393
      %v1395 = vsel %vm632, %v374, -inf
      %1396 = vmax.xlane.f32.xlu0 %v1395
      %v1397 = vpop.xlane.xlu0 %1396
      %v1398 = vsel %vm632, %v375, -inf
      %1399 = vmax.xlane.f32.xlu0 %v1398
      %v1400 = vpop.xlane.xlu0 %1399
      %v1401 = vsel %vm632, %v376, -inf
      %1402 = vmax.xlane.f32.xlu0 %v1401
      %v1403 = vpop.xlane.xlu0 %1402
      %v1404 = vsel %vm632, %v377, -inf
      %1405 = vmax.xlane.f32.xlu0 %v1404
      %v1406 = vpop.xlane.xlu0 %1405
      %v1407 = vsel %vm632, %v378, -inf
      %1408 = vmax.xlane.f32.xlu0 %v1407
      %v1409 = vpop.xlane.xlu0 %1408
      %v1410 = vsel %vm632, %v379, -inf
      %1411 = vmax.xlane.f32.xlu0 %v1410
      %v1412 = vpop.xlane.xlu0 %1411
      %v1413 = vsel %vm632, %v380, -inf
      %1414 = vmax.xlane.f32.xlu0 %v1413
      %v1415 = vpop.xlane.xlu0 %1414
      %v1416 = vsel %vm632, %v381, -inf
      %1417 = vmax.xlane.f32.xlu0 %v1416
      %v1418 = vpop.xlane.xlu0 %1417
      %v1419 = vsel %vm632, %v382, -inf
      %1420 = vmax.xlane.f32.xlu0 %v1419
      %v1421 = vpop.xlane.xlu0 %1420
      %v1422 = vsel %vm632, %v383, -inf
      %1423 = vmax.xlane.f32.xlu0 %v1422
      %v1424 = vpop.xlane.xlu0 %1423
      %v1425 = vsel %vm632, %v384, -inf
      %1426 = vmax.xlane.f32.xlu0 %v1425
      %v1427 = vpop.xlane.xlu0 %1426
      %v1428 = vsel %vm632, %v385, -inf
      %1429 = vmax.xlane.f32.xlu0 %v1428
      %v1430 = vpop.xlane.xlu0 %1429
      %v1431 = vsel %vm632, %v386, -inf
      %1432 = vmax.xlane.f32.xlu0 %v1431
      %v1433 = vpop.xlane.xlu0 %1432
      %v1434 = vsel %vm632, %v387, -inf
      %1435 = vmax.xlane.f32.xlu0 %v1434
      %v1436 = vpop.xlane.xlu0 %1435
      %v1437 = vsel %vm632, %v388, -inf
      %1438 = vmax.xlane.f32.xlu0 %v1437
      %v1439 = vpop.xlane.xlu0 %1438
      %v1440 = vsel %vm632, %v389, -inf
      %1441 = vmax.xlane.f32.xlu0 %v1440
      %v1442 = vpop.xlane.xlu0 %1441
      %v1443 = vsel %vm632, %v390, -inf
      %1444 = vmax.xlane.f32.xlu0 %v1443
      %v1445 = vpop.xlane.xlu0 %1444
      %v1446 = vsel %vm632, %v391, -inf
      %1447 = vmax.xlane.f32.xlu0 %v1446
      %v1448 = vpop.xlane.xlu0 %1447
      %v1449 = vsel %vm632, %v392, -inf
      %1450 = vmax.xlane.f32.xlu0 %v1449
      %v1451 = vpop.xlane.xlu0 %1450
      %v1452 = vsel %vm632, %v393, -inf
      %1453 = vmax.xlane.f32.xlu0 %v1452
      %v1454 = vpop.xlane.xlu0 %1453
      %v1455 = vsel %vm632, %v394, -inf
      %1456 = vmax.xlane.f32.xlu0 %v1455
      %v1457 = vpop.xlane.xlu0 %1456
      %v1458 = vsel %vm632, %v395, -inf
      %1459 = vmax.xlane.f32.xlu0 %v1458
      %v1460 = vpop.xlane.xlu0 %1459
      %v1461 = vsel %vm632, %v396, -inf
      %1462 = vmax.xlane.f32.xlu0 %v1461
      %v1463 = vpop.xlane.xlu0 %1462
      %v1464 = vsel %vm632, %v397, -inf
      %1465 = vmax.xlane.f32.xlu0 %v1464
      %v1466 = vpop.xlane.xlu0 %1465
      %v1467 = vsel %vm632, %v398, -inf
      %1468 = vmax.xlane.f32.xlu0 %v1467
      %v1469 = vpop.xlane.xlu0 %1468
      %v1470 = vsel %vm632, %v399, -inf
      %1471 = vmax.xlane.f32.xlu0 %v1470
      %v1472 = vpop.xlane.xlu0 %1471
      %v1473 = vsel %vm632, %v400, -inf
      %1474 = vmax.xlane.f32.xlu0 %v1473
      %v1475 = vpop.xlane.xlu0 %1474
      %v1476 = vsel %vm632, %v401, -inf
      %1477 = vmax.xlane.f32.xlu0 %v1476
      %v1478 = vpop.xlane.xlu0 %1477
      %v1479 = vsel %vm632, %v402, -inf
      %1480 = vmax.xlane.f32.xlu0 %v1479
      %v1481 = vpop.xlane.xlu0 %1480
      %v1482 = vsel %vm632, %v403, -inf
      %1483 = vmax.xlane.f32.xlu0 %v1482
      %v1484 = vpop.xlane.xlu0 %1483
      %v1485 = vsel %vm632, %v404, -inf
      %1486 = vmax.xlane.f32.xlu0 %v1485
      %v1487 = vpop.xlane.xlu0 %1486
      %v1488 = vsel %vm632, %v405, -inf
      %1489 = vmax.xlane.f32.xlu0 %v1488
      %v1490 = vpop.xlane.xlu0 %1489
      %v1491 = vsel %vm632, %v406, -inf
      %1492 = vmax.xlane.f32.xlu0 %v1491
      %v1493 = vpop.xlane.xlu0 %1492
      %v1494 = vsel %vm632, %v407, -inf
      %1495 = vmax.xlane.f32.xlu0 %v1494
      %v1496 = vpop.xlane.xlu0 %1495
      %v1497 = vsel %vm632, %v408, -inf
      %1498 = vmax.xlane.f32.xlu0 %v1497
      %v1499 = vpop.xlane.xlu0 %1498
      %v1500 = vsel %vm632, %v409, -inf
      %1501 = vmax.xlane.f32.xlu0 %v1500
      %v1502 = vpop.xlane.xlu0 %1501
      %v1503 = vsel %vm632, %v410, -inf
      %1504 = vmax.xlane.f32.xlu0 %v1503
      %v1505 = vpop.xlane.xlu0 %1504
      %v1506 = vsel %vm632, %v411, -inf
      %1507 = vmax.xlane.f32.xlu0 %v1506
      %v1508 = vpop.xlane.xlu0 %1507
      %v1509 = vsel %vm632, %v412, -inf
      %1510 = vmax.xlane.f32.xlu0 %v1509
      %v1511 = vpop.xlane.xlu0 %1510
      %v1512 = vsel %vm632, %v413, -inf
      %1513 = vmax.xlane.f32.xlu0 %v1512
      %v1514 = vpop.xlane.xlu0 %1513
      %v1515 = vsel %vm632, %v414, -inf
      %1516 = vmax.xlane.f32.xlu0 %v1515
      %v1517 = vpop.xlane.xlu0 %1516
      %v1518 = vsel %vm632, %v415, -inf
      %1519 = vmax.xlane.f32.xlu0 %v1518
      %v1520 = vpop.xlane.xlu0 %1519
      %v1521 = vsel %vm632, %v416, -inf
      %1522 = vmax.xlane.f32.xlu0 %v1521
      %v1523 = vpop.xlane.xlu0 %1522
      %v1524 = vsel %vm632, %v417, -inf
      %1525 = vmax.xlane.f32.xlu0 %v1524
      %v1526 = vpop.xlane.xlu0 %1525
      %v1527 = vsel %vm632, %v418, -inf
      %1528 = vmax.xlane.f32.xlu0 %v1527
      %v1529 = vpop.xlane.xlu0 %1528
      %v1530 = vsel %vm632, %v419, -inf
      %1531 = vmax.xlane.f32.xlu0 %v1530
      %v1532 = vpop.xlane.xlu0 %1531
      %v1533 = vsel %vm632, %v420, -inf
      %1534 = vmax.xlane.f32.xlu0 %v1533
      %v1535 = vpop.xlane.xlu0 %1534
      %v1536 = vsel %vm632, %v421, -inf
      %1537 = vmax.xlane.f32.xlu0 %v1536
      %v1538 = vpop.xlane.xlu0 %1537
      %v1539 = vsel %vm632, %v422, -inf
      %1540 = vmax.xlane.f32.xlu0 %v1539
      %v1541 = vpop.xlane.xlu0 %1540
      %v1542 = vsel %vm632, %v423, -inf
      %1543 = vmax.xlane.f32.xlu0 %v1542
      %v1544 = vpop.xlane.xlu0 %1543
      %v1545 = vsel %vm632, %v424, -inf
      %1546 = vmax.xlane.f32.xlu0 %v1545
      %v1547 = vpop.xlane.xlu0 %1546
      %v1548 = vsel %vm632, %v425, -inf
      %1549 = vmax.xlane.f32.xlu0 %v1548
      %v1550 = vpop.xlane.xlu0 %1549
      %v1551 = vsel %vm632, %v426, -inf
      %1552 = vmax.xlane.f32.xlu0 %v1551
      %v1553 = vpop.xlane.xlu0 %1552
      %v1554 = vsel %vm632, %v427, -inf
      %1555 = vmax.xlane.f32.xlu0 %v1554
      %v1556 = vpop.xlane.xlu0 %1555
      %v1557 = vsel %vm632, %v428, -inf
      %1558 = vmax.xlane.f32.xlu0 %v1557
      %v1559 = vpop.xlane.xlu0 %1558
      %v1560 = vsel %vm632, %v429, -inf
      %1561 = vmax.xlane.f32.xlu0 %v1560
      %v1562 = vpop.xlane.xlu0 %1561
      %v1563 = vsel %vm632, %v430, -inf
      %1564 = vmax.xlane.f32.xlu0 %v1563
      %v1565 = vpop.xlane.xlu0 %1564
      %v1566 = vsel %vm632, %v431, -inf
      %1567 = vmax.xlane.f32.xlu0 %v1566
      %v1568 = vpop.xlane.xlu0 %1567
      %v1569 = vsel %vm632, %v432, -inf
      %1570 = vmax.xlane.f32.xlu0 %v1569
      %v1571 = vpop.xlane.xlu0 %1570
      %v1572 = vsel %vm632, %v433, -inf
      %1573 = vmax.xlane.f32.xlu0 %v1572
      %v1574 = vpop.xlane.xlu0 %1573
      %v1575 = vsel %vm632, %v434, -inf
      %1576 = vmax.xlane.f32.xlu0 %v1575
      %v1577 = vpop.xlane.xlu0 %1576
      %v1578 = vsel %vm632, %v435, -inf
      %1579 = vmax.xlane.f32.xlu0 %v1578
      %v1580 = vpop.xlane.xlu0 %1579
      %v1581 = vsel %vm632, %v436, -inf
      %1582 = vmax.xlane.f32.xlu0 %v1581
      %v1583 = vpop.xlane.xlu0 %1582
      %v1584 = vsel %vm632, %v437, -inf
      %1585 = vmax.xlane.f32.xlu0 %v1584
      %v1586 = vpop.xlane.xlu0 %1585
      %v1587 = vsel %vm632, %v438, -inf
      %1588 = vmax.xlane.f32.xlu0 %v1587
      %v1589 = vpop.xlane.xlu0 %1588
      %v1590 = vsel %vm632, %v439, -inf
      %1591 = vmax.xlane.f32.xlu0 %v1590
      %v1592 = vpop.xlane.xlu0 %1591
      %v1593 = vsel %vm632, %v440, -inf
      %1594 = vmax.xlane.f32.xlu0 %v1593
      %v1595 = vpop.xlane.xlu0 %1594
      %v1596 = vsel %vm632, %v441, -inf
      %1597 = vmax.xlane.f32.xlu0 %v1596
      %v1598 = vpop.xlane.xlu0 %1597
      %v1599 = vsel %vm632, %v442, -inf
      %1600 = vmax.xlane.f32.xlu0 %v1599
      %v1601 = vpop.xlane.xlu0 %1600
      %v1602 = vsel %vm632, %v443, -inf
      %1603 = vmax.xlane.f32.xlu0 %v1602
      %v1604 = vpop.xlane.xlu0 %1603
      %v1605 = vsel %vm632, %v444, -inf
      %1606 = vmax.xlane.f32.xlu0 %v1605
      %v1607 = vpop.xlane.xlu0 %1606
      %v1608 = vsel %vm632, %v445, -inf
      %1609 = vmax.xlane.f32.xlu0 %v1608
      %v1610 = vpop.xlane.xlu0 %1609
      %v1611 = vsel %vm632, %v446, -inf
      %1612 = vmax.xlane.f32.xlu0 %v1611
      %v1613 = vpop.xlane.xlu0 %1612
      %v1614 = vsel %vm632, %v447, -inf
      %1615 = vmax.xlane.f32.xlu0 %v1614
      %v1616 = vpop.xlane.xlu0 %1615
      %v1617 = vsel %vm632, %v448, -inf
      %1618 = vmax.xlane.f32.xlu0 %v1617
      %v1619 = vpop.xlane.xlu0 %1618
      %v1620 = vsel %vm632, %v449, -inf
      %1621 = vmax.xlane.f32.xlu0 %v1620
      %v1622 = vpop.xlane.xlu0 %1621
      %v1623 = vsel %vm632, %v450, -inf
      %1624 = vmax.xlane.f32.xlu0 %v1623
      %v1625 = vpop.xlane.xlu0 %1624
      %v1626 = vsel %vm632, %v451, -inf
      %1627 = vmax.xlane.f32.xlu0 %v1626
      %v1628 = vpop.xlane.xlu0 %1627
      %v1629 = vsel %vm632, %v452, -inf
      %1630 = vmax.xlane.f32.xlu0 %v1629
      %v1631 = vpop.xlane.xlu0 %1630
      %v1632 = vsel %vm632, %v453, -inf
      %1633 = vmax.xlane.f32.xlu0 %v1632
      %v1634 = vpop.xlane.xlu0 %1633
      %v1635 = vsel %vm632, %v454, -inf
      %1636 = vmax.xlane.f32.xlu0 %v1635
      %v1637 = vpop.xlane.xlu0 %1636
      %v1638 = vsel %vm632, %v455, -inf
      %1639 = vmax.xlane.f32.xlu0 %v1638
      %v1640 = vpop.xlane.xlu0 %1639
      %v1641 = vsel %vm632, %v456, -inf
      %1642 = vmax.xlane.f32.xlu0 %v1641
      %v1643 = vpop.xlane.xlu0 %1642
      %v1644 = vsel %vm632, %v457, -inf
      %1645 = vmax.xlane.f32.xlu0 %v1644
      %v1646 = vpop.xlane.xlu0 %1645
      %v1647 = vsel %vm632, %v458, -inf
      %1648 = vmax.xlane.f32.xlu0 %v1647
      %v1649 = vpop.xlane.xlu0 %1648
      %v1650 = vsel %vm632, %v459, -inf
      %1651 = vmax.xlane.f32.xlu0 %v1650
      %v1652 = vpop.xlane.xlu0 %1651
      %v1653 = vsel %vm632, %v460, -inf
      %1654 = vmax.xlane.f32.xlu0 %v1653
      %v1655 = vpop.xlane.xlu0 %1654
      %v1656 = vsel %vm632, %v461, -inf
      %1657 = vmax.xlane.f32.xlu0 %v1656
      %v1658 = vpop.xlane.xlu0 %1657
      %v1659 = vsel %vm632, %v462, -inf
      %1660 = vmax.xlane.f32.xlu0 %v1659
      %v1661 = vpop.xlane.xlu0 %1660
      %v1662 = vsel %vm632, %v463, -inf
      %1663 = vmax.xlane.f32.xlu0 %v1662
      %v1664 = vpop.xlane.xlu0 %1663
      %v1665 = vsel %vm632, %v464, -inf
      %1666 = vmax.xlane.f32.xlu0 %v1665
      %v1667 = vpop.xlane.xlu0 %1666
      %v1668 = vsel %vm632, %v465, -inf
      %1669 = vmax.xlane.f32.xlu0 %v1668
      %v1670 = vpop.xlane.xlu0 %1669
      %v1671 = vsel %vm632, %v466, -inf
      %1672 = vmax.xlane.f32.xlu0 %v1671
      %v1673 = vpop.xlane.xlu0 %1672
      %v1674 = vsel %vm632, %v467, -inf
      %1675 = vmax.xlane.f32.xlu0 %v1674
      %v1676 = vpop.xlane.xlu0 %1675
      %v1677 = vsel %vm632, %v468, -inf
      %1678 = vmax.xlane.f32.xlu0 %v1677
      %v1679 = vpop.xlane.xlu0 %1678
      %v1680 = vsel %vm632, %v469, -inf
      %1681 = vmax.xlane.f32.xlu0 %v1680
      %v1682 = vpop.xlane.xlu0 %1681
      %v1683 = vsel %vm632, %v470, -inf
      %1684 = vmax.xlane.f32.xlu0 %v1683
      %v1685 = vpop.xlane.xlu0 %1684
      %v1686 = vsel %vm632, %v471, -inf
      %1687 = vmax.xlane.f32.xlu0 %v1686
      %v1688 = vpop.xlane.xlu0 %1687
      %v1689 = vsel %vm632, %v472, -inf
      %1690 = vmax.xlane.f32.xlu0 %v1689
      %v1691 = vpop.xlane.xlu0 %1690
      %v1692 = vsel %vm632, %v473, -inf
      %1693 = vmax.xlane.f32.xlu0 %v1692
      %v1694 = vpop.xlane.xlu0 %1693
      %v1695 = vsel %vm632, %v474, -inf
      %1696 = vmax.xlane.f32.xlu0 %v1695
      %v1697 = vpop.xlane.xlu0 %1696
      %v1698 = vsel %vm632, %v475, -inf
      %1699 = vmax.xlane.f32.xlu0 %v1698
      %v1700 = vpop.xlane.xlu0 %1699
      %v1701 = vsel %vm632, %v476, -inf
      %1702 = vmax.xlane.f32.xlu0 %v1701
      %v1703 = vpop.xlane.xlu0 %1702
      %v1704 = vsel %vm632, %v477, -inf
      %1705 = vmax.xlane.f32.xlu0 %v1704
      %v1706 = vpop.xlane.xlu0 %1705
      %v1707 = vsel %vm632, %v478, -inf
      %1708 = vmax.xlane.f32.xlu0 %v1707
      %v1709 = vpop.xlane.xlu0 %1708
      %v1710 = vsel %vm632, %v479, -inf
      %1711 = vmax.xlane.f32.xlu0 %v1710
      %v1712 = vpop.xlane.xlu0 %1711
      %v1713 = vsel %vm632, %v480, -inf
      %1714 = vmax.xlane.f32.xlu0 %v1713
      %v1715 = vpop.xlane.xlu0 %1714
      %v1716 = vsel %vm632, %v481, -inf
      %1717 = vmax.xlane.f32.xlu0 %v1716
      %v1718 = vpop.xlane.xlu0 %1717
      %v1719 = vsel %vm632, %v482, -inf
      %1720 = vmax.xlane.f32.xlu0 %v1719
      %v1721 = vpop.xlane.xlu0 %1720
      %v1722 = vsel %vm632, %v483, -inf
      %1723 = vmax.xlane.f32.xlu0 %v1722
      %v1724 = vpop.xlane.xlu0 %1723
      %v1725 = vsel %vm632, %v484, -inf
      %1726 = vmax.xlane.f32.xlu0 %v1725
      %v1727 = vpop.xlane.xlu0 %1726
      %v1728 = vsel %vm632, %v485, -inf
      %1729 = vmax.xlane.f32.xlu0 %v1728
      %v1730 = vpop.xlane.xlu0 %1729
      %v1731 = vsel %vm632, %v486, -inf
      %1732 = vmax.xlane.f32.xlu0 %v1731
      %v1733 = vpop.xlane.xlu0 %1732
      %v1734 = vsel %vm632, %v487, -inf
      %1735 = vmax.xlane.f32.xlu0 %v1734
      %v1736 = vpop.xlane.xlu0 %1735
      %v1737 = vsel %vm632, %v488, -inf
      %1738 = vmax.xlane.f32.xlu0 %v1737
      %v1739 = vpop.xlane.xlu0 %1738
      %v1740 = vsel %vm632, %v489, -inf
      %1741 = vmax.xlane.f32.xlu0 %v1740
      %v1742 = vpop.xlane.xlu0 %1741
      %v1743 = vsel %vm632, %v490, -inf
      %1744 = vmax.xlane.f32.xlu0 %v1743
      %v1745 = vpop.xlane.xlu0 %1744
      %v1746 = vsel %vm632, %v491, -inf
      %1747 = vmax.xlane.f32.xlu0 %v1746
      %v1748 = vpop.xlane.xlu0 %1747
      %v1749 = vsel %vm632, %v492, -inf
      %1750 = vmax.xlane.f32.xlu0 %v1749
      %v1751 = vpop.xlane.xlu0 %1750
      %v1752 = vsel %vm632, %v493, -inf
      %1753 = vmax.xlane.f32.xlu0 %v1752
      %v1754 = vpop.xlane.xlu0 %1753
      %v1755 = vsel %vm632, %v494, -inf
      %1756 = vmax.xlane.f32.xlu0 %v1755
      %v1757 = vpop.xlane.xlu0 %1756
      %v1758 = vsel %vm632, %v495, -inf
      %1759 = vmax.xlane.f32.xlu0 %v1758
      %v1760 = vpop.xlane.xlu0 %1759
      %v1761 = vsel %vm632, %v496, -inf
      %1762 = vmax.xlane.f32.xlu0 %v1761
      %v1763 = vpop.xlane.xlu0 %1762
      %v1764 = vsel %vm632, %v497, -inf
      %1765 = vmax.xlane.f32.xlu0 %v1764
      %v1766 = vpop.xlane.xlu0 %1765
      %v1767 = vsel %vm632, %v498, -inf
      %1768 = vmax.xlane.f32.xlu0 %v1767
      %v1769 = vpop.xlane.xlu0 %1768
      %v1770 = vsel %vm632, %v499, -inf
      %1771 = vmax.xlane.f32.xlu0 %v1770
      %v1772 = vpop.xlane.xlu0 %1771
      %v1773 = vsel %vm632, %v500, -inf
      %1774 = vmax.xlane.f32.xlu0 %v1773
      %v1775 = vpop.xlane.xlu0 %1774
      %v1776 = vsel %vm632, %v501, -inf
      %1777 = vmax.xlane.f32.xlu0 %v1776
      %v1778 = vpop.xlane.xlu0 %1777
      %v1779 = vsel %vm632, %v502, -inf
      %1780 = vmax.xlane.f32.xlu0 %v1779
      %v1781 = vpop.xlane.xlu0 %1780
      %v1782 = vsel %vm632, %v503, -inf
      %1783 = vmax.xlane.f32.xlu0 %v1782
      %v1784 = vpop.xlane.xlu0 %1783
      %v1785 = vsel %vm632, %v504, -inf
      %1786 = vmax.xlane.f32.xlu0 %v1785
      %v1787 = vpop.xlane.xlu0 %1786
      %v1788 = vsel %vm632, %v505, -inf
      %1789 = vmax.xlane.f32.xlu0 %v1788
      %v1790 = vpop.xlane.xlu0 %1789
      %v1791 = vsel %vm632, %v506, -inf
      %1792 = vmax.xlane.f32.xlu0 %v1791
      %v1793 = vpop.xlane.xlu0 %1792
      %v1794 = vsel %vm632, %v507, -inf
      %1795 = vmax.xlane.f32.xlu0 %v1794
      %v1796 = vpop.xlane.xlu0 %1795
      %v1797 = vsel %vm632, %v508, -inf
      %1798 = vmax.xlane.f32.xlu0 %v1797
      %v1799 = vpop.xlane.xlu0 %1798
      %v1800 = vsel %vm632, %v509, -inf
      %1801 = vmax.xlane.f32.xlu0 %v1800
      %v1802 = vpop.xlane.xlu0 %1801
      %v1803 = vsel %vm632, %v510, -inf
      %1804 = vmax.xlane.f32.xlu0 %v1803
      %v1805 = vpop.xlane.xlu0 %1804
      %v1806 = vsel %vm632, %v511, -inf
      %1807 = vmax.xlane.f32.xlu0 %v1806
      %v1808 = vpop.xlane.xlu0 %1807
      %v1809 = vsel %vm632, %v512, -inf
      %1810 = vmax.xlane.f32.xlu0 %v1809
      %v1811 = vpop.xlane.xlu0 %1810
      %v1812 = vsel %vm632, %v513, -inf
      %1813 = vmax.xlane.f32.xlu0 %v1812
      %v1814 = vpop.xlane.xlu0 %1813
      %v1815 = vsel %vm632, %v514, -inf
      %1816 = vmax.xlane.f32.xlu0 %v1815
      %v1817 = vpop.xlane.xlu0 %1816
      %v1818 = vsel %vm632, %v515, -inf
      %1819 = vmax.xlane.f32.xlu0 %v1818
      %v1820 = vpop.xlane.xlu0 %1819
      %v1821 = vsel %vm632, %v516, -inf
      %1822 = vmax.xlane.f32.xlu0 %v1821
      %v1823 = vpop.xlane.xlu0 %1822
      %v1824 = vsel %vm632, %v517, -inf
      %1825 = vmax.xlane.f32.xlu0 %v1824
      %v1826 = vpop.xlane.xlu0 %1825
      %v1827 = vsel %vm632, %v518, -inf
      %1828 = vmax.xlane.f32.xlu0 %v1827
      %v1829 = vpop.xlane.xlu0 %1828
      %v1830 = vsel %vm632, %v519, -inf
      %1831 = vmax.xlane.f32.xlu0 %v1830
      %v1832 = vpop.xlane.xlu0 %1831
      %v1833 = vsel %vm632, %v520, -inf
      %1834 = vmax.xlane.f32.xlu0 %v1833
      %v1835 = vpop.xlane.xlu0 %1834
      %v1836 = vsel %vm632, %v521, -inf
      %1837 = vmax.xlane.f32.xlu0 %v1836
      %v1838 = vpop.xlane.xlu0 %1837
      %v1839 = vsel %vm632, %v522, -inf
      %1840 = vmax.xlane.f32.xlu0 %v1839
      %v1841 = vpop.xlane.xlu0 %1840
      %v1842 = vsel %vm632, %v523, -inf
      %1843 = vmax.xlane.f32.xlu0 %v1842
      %v1844 = vpop.xlane.xlu0 %1843
      %v1845 = vsel %vm632, %v524, -inf
      %1846 = vmax.xlane.f32.xlu0 %v1845
      %v1847 = vpop.xlane.xlu0 %1846
      %v1848 = vsel %vm632, %v525, -inf
      %1849 = vmax.xlane.f32.xlu0 %v1848
      %v1850 = vpop.xlane.xlu0 %1849
      %v1851 = vsel %vm632, %v526, -inf
      %1852 = vmax.xlane.f32.xlu0 %v1851
      %v1853 = vpop.xlane.xlu0 %1852
      %v1854 = vsel %vm632, %v527, -inf
      %1855 = vmax.xlane.f32.xlu0 %v1854
      %v1856 = vpop.xlane.xlu0 %1855
      %v1857 = vsel %vm632, %v528, -inf
      %1858 = vmax.xlane.f32.xlu0 %v1857
      %v1859 = vpop.xlane.xlu0 %1858
      %v1860 = vsel %vm632, %v529, -inf
      %1861 = vmax.xlane.f32.xlu0 %v1860
      %v1862 = vpop.xlane.xlu0 %1861
      %v1863 = vsel %vm632, %v530, -inf
      %1864 = vmax.xlane.f32.xlu0 %v1863
      %v1865 = vpop.xlane.xlu0 %1864
      %v1866 = vsel %vm632, %v531, -inf
      %1867 = vmax.xlane.f32.xlu0 %v1866
      %v1868 = vpop.xlane.xlu0 %1867
      %v1869 = vsel %vm632, %v532, -inf
      %1870 = vmax.xlane.f32.xlu0 %v1869
      %v1871 = vpop.xlane.xlu0 %1870
      %v1872 = vsel %vm632, %v533, -inf
      %1873 = vmax.xlane.f32.xlu0 %v1872
      %v1874 = vpop.xlane.xlu0 %1873
      %v1875 = vsel %vm632, %v534, -inf
      %1876 = vmax.xlane.f32.xlu0 %v1875
      %v1877 = vpop.xlane.xlu0 %1876
      %v1878 = vsel %vm632, %v535, -inf
      %1879 = vmax.xlane.f32.xlu0 %v1878
      %v1880 = vpop.xlane.xlu0 %1879
      %v1881 = vsel %vm632, %v536, -inf
      %1882 = vmax.xlane.f32.xlu0 %v1881
      %v1883 = vpop.xlane.xlu0 %1882
      %v1884 = vsel %vm632, %v537, -inf
      %1885 = vmax.xlane.f32.xlu0 %v1884
      %v1886 = vpop.xlane.xlu0 %1885
      %v1887 = vsel %vm632, %v538, -inf
      %1888 = vmax.xlane.f32.xlu0 %v1887
      %v1889 = vpop.xlane.xlu0 %1888
      %v1890 = vsel %vm632, %v539, -inf
      %1891 = vmax.xlane.f32.xlu0 %v1890
      %v1892 = vpop.xlane.xlu0 %1891
      %v1893 = vsel %vm632, %v540, -inf
      %1894 = vmax.xlane.f32.xlu0 %v1893
      %v1895 = vpop.xlane.xlu0 %1894
      %v1896 = vsel %vm632, %v541, -inf
      %1897 = vmax.xlane.f32.xlu0 %v1896
      %v1898 = vpop.xlane.xlu0 %1897
      %v1899 = vsel %vm632, %v542, -inf
      %1900 = vmax.xlane.f32.xlu0 %v1899
      %v1901 = vpop.xlane.xlu0 %1900
      %v1902 = vsel %vm632, %v543, -inf
      %1903 = vmax.xlane.f32.xlu0 %v1902
      %v1904 = vpop.xlane.xlu0 %1903
      %v1905 = vsel %vm632, %v544, -inf
      %1906 = vmax.xlane.f32.xlu0 %v1905
      %v1907 = vpop.xlane.xlu0 %1906
      %v1908 = vsel %vm632, %v545, -inf
      %1909 = vmax.xlane.f32.xlu0 %v1908
      %v1910 = vpop.xlane.xlu0 %1909
      %v1911 = vsel %vm632, %v546, -inf
      %1912 = vmax.xlane.f32.xlu0 %v1911
      %v1913 = vpop.xlane.xlu0 %1912
      %v1914 = vsel %vm632, %v547, -inf
      %1915 = vmax.xlane.f32.xlu0 %v1914
      %v1916 = vpop.xlane.xlu0 %1915
      %v1917 = vsel %vm632, %v548, -inf
      %1918 = vmax.xlane.f32.xlu0 %v1917
      %v1919 = vpop.xlane.xlu0 %1918
      %v1920 = vsel %vm632, %v549, -inf
      %1921 = vmax.xlane.f32.xlu0 %v1920
      %v1922 = vpop.xlane.xlu0 %1921
      %v1923 = vsel %vm632, %v550, -inf
      %1924 = vmax.xlane.f32.xlu0 %v1923
      %v1925 = vpop.xlane.xlu0 %1924
      %v1926 = vsel %vm632, %v551, -inf
      %1927 = vmax.xlane.f32.xlu0 %v1926
      %v1928 = vpop.xlane.xlu0 %1927
      %v1929 = vsel %vm632, %v552, -inf
      %1930 = vmax.xlane.f32.xlu0 %v1929
      %v1931 = vpop.xlane.xlu0 %1930
      %v1932 = vsel %vm632, %v553, -inf
      %1933 = vmax.xlane.f32.xlu0 %v1932
      %v1934 = vpop.xlane.xlu0 %1933
      %v1935 = vsel %vm632, %v554, -inf
      %1936 = vmax.xlane.f32.xlu0 %v1935
      %v1937 = vpop.xlane.xlu0 %1936
      %v1938 = vsel %vm632, %v555, -inf
      %1939 = vmax.xlane.f32.xlu0 %v1938
      %v1940 = vpop.xlane.xlu0 %1939
      %v1941 = vsel %vm632, %v556, -inf
      %1942 = vmax.xlane.f32.xlu0 %v1941
      %v1943 = vpop.xlane.xlu0 %1942
      %v1944 = vsel %vm632, %v557, -inf
      %1945 = vmax.xlane.f32.xlu0 %v1944
      %v1946 = vpop.xlane.xlu0 %1945
      %v1947 = vsel %vm632, %v558, -inf
      %1948 = vmax.xlane.f32.xlu0 %v1947
      %v1949 = vpop.xlane.xlu0 %1948
      %v1950 = vsel %vm632, %v559, -inf
      %1951 = vmax.xlane.f32.xlu0 %v1950
      %v1952 = vpop.xlane.xlu0 %1951
      %v1953 = vsel %vm632, %v560, -inf
      %1954 = vmax.xlane.f32.xlu0 %v1953
      %v1955 = vpop.xlane.xlu0 %1954
      %v1956 = vsel %vm632, %v561, -inf
      %1957 = vmax.xlane.f32.xlu0 %v1956
      %v1958 = vpop.xlane.xlu0 %1957
      %v1959 = vsel %vm632, %v562, -inf
      %1960 = vmax.xlane.f32.xlu0 %v1959
      %v1961 = vpop.xlane.xlu0 %1960
      %v1962 = vsel %vm632, %v563, -inf
      %1963 = vmax.xlane.f32.xlu0 %v1962
      %v1964 = vpop.xlane.xlu0 %1963
      %v1965 = vsel %vm632, %v564, -inf
      %1966 = vmax.xlane.f32.xlu0 %v1965
      %v1967 = vpop.xlane.xlu0 %1966
      %v1968 = vsel %vm632, %v565, -inf
      %1969 = vmax.xlane.f32.xlu0 %v1968
      %v1970 = vpop.xlane.xlu0 %1969
      %v1971 = vsel %vm632, %v566, -inf
      %1972 = vmax.xlane.f32.xlu0 %v1971
      %v1973 = vpop.xlane.xlu0 %1972
      %v1974 = vsel %vm632, %v567, -inf
      %1975 = vmax.xlane.f32.xlu0 %v1974
      %v1976 = vpop.xlane.xlu0 %1975
      %v1977 = vsel %vm632, %v568, -inf
      %1978 = vmax.xlane.f32.xlu0 %v1977
      %v1979 = vpop.xlane.xlu0 %1978
      %v1980 = vsel %vm632, %v569, -inf
      %1981 = vmax.xlane.f32.xlu0 %v1980
      %v1982 = vpop.xlane.xlu0 %1981
      %v1983 = vsel %vm632, %v570, -inf
      %1984 = vmax.xlane.f32.xlu0 %v1983
      %v1985 = vpop.xlane.xlu0 %1984
      %v1986 = vsel %vm632, %v571, -inf
      %1987 = vmax.xlane.f32.xlu0 %v1986
      %v1988 = vpop.xlane.xlu0 %1987
      %v1989 = vsel %vm632, %v572, -inf
      %1990 = vmax.xlane.f32.xlu0 %v1989
      %v1991 = vpop.xlane.xlu0 %1990
      %v1992 = vsel %vm632, %v573, -inf
      %1993 = vmax.xlane.f32.xlu0 %v1992
      %v1994 = vpop.xlane.xlu0 %1993
      %v1995 = vsel %vm632, %v574, -inf
      %1996 = vmax.xlane.f32.xlu0 %v1995
      %v1997 = vpop.xlane.xlu0 %1996
      %v1998 = vsel %vm632, %v575, -inf
      %1999 = vmax.xlane.f32.xlu0 %v1998
      %v2000 = vpop.xlane.xlu0 %1999
      %v2001 = vsel %vm632, %v576, -inf
      %2002 = vmax.xlane.f32.xlu0 %v2001
      %v2003 = vpop.xlane.xlu0 %2002
      %v2004 = vsel %vm632, %v577, -inf
      %2005 = vmax.xlane.f32.xlu0 %v2004
      %v2006 = vpop.xlane.xlu0 %2005
      %v2007 = vsel %vm632, %v578, -inf
      %2008 = vmax.xlane.f32.xlu0 %v2007
      %v2009 = vpop.xlane.xlu0 %2008
      %v2010 = vsel %vm632, %v579, -inf
      %2011 = vmax.xlane.f32.xlu0 %v2010
      %v2012 = vpop.xlane.xlu0 %2011
      %v2013 = vsel %vm632, %v580, -inf
      %2014 = vmax.xlane.f32.xlu0 %v2013
      %v2015 = vpop.xlane.xlu0 %2014
      %v2016 = vsel %vm632, %v581, -inf
      %2017 = vmax.xlane.f32.xlu0 %v2016
      %v2018 = vpop.xlane.xlu0 %2017
      %v2019 = vsel %vm632, %v582, -inf
      %2020 = vmax.xlane.f32.xlu0 %v2019
      %v2021 = vpop.xlane.xlu0 %2020
      %v2022 = vsel %vm632, %v583, -inf
      %2023 = vmax.xlane.f32.xlu0 %v2022
      %v2024 = vpop.xlane.xlu0 %2023
      %v2025 = vsel %vm632, %v584, -inf
      %2026 = vmax.xlane.f32.xlu0 %v2025
      %v2027 = vpop.xlane.xlu0 %2026
      %v2028 = vsel %vm632, %v585, -inf
      %2029 = vmax.xlane.f32.xlu0 %v2028
      %v2030 = vpop.xlane.xlu0 %2029
      %v2031 = vsel %vm632, %v586, -inf
      %2032 = vmax.xlane.f32.xlu0 %v2031
      %v2033 = vpop.xlane.xlu0 %2032
      %v2034 = vsel %vm632, %v587, -inf
      %2035 = vmax.xlane.f32.xlu0 %v2034
      %v2036 = vpop.xlane.xlu0 %2035
      %v2037 = vsel %vm632, %v588, -inf
      %2038 = vmax.xlane.f32.xlu0 %v2037
      %v2039 = vpop.xlane.xlu0 %2038
      %v2040 = vsel %vm632, %v589, -inf
      %2041 = vmax.xlane.f32.xlu0 %v2040
      %v2042 = vpop.xlane.xlu0 %2041
      %v2043 = vsel %vm632, %v590, -inf
      %2044 = vmax.xlane.f32.xlu0 %v2043
      %v2045 = vpop.xlane.xlu0 %2044
      %v2046 = vsel %vm632, %v591, -inf
      %2047 = vmax.xlane.f32.xlu0 %v2046
      %v2048 = vpop.xlane.xlu0 %2047
      %v2049 = vsel %vm632, %v592, -inf
      %2050 = vmax.xlane.f32.xlu0 %v2049
      %v2051 = vpop.xlane.xlu0 %2050
      %v2052 = vsel %vm632, %v593, -inf
      %2053 = vmax.xlane.f32.xlu0 %v2052
      %v2054 = vpop.xlane.xlu0 %2053
      %v2055 = vsel %vm632, %v594, -inf
      %2056 = vmax.xlane.f32.xlu0 %v2055
      %v2057 = vpop.xlane.xlu0 %2056
      %v2058 = vsel %vm632, %v595, -inf
      %2059 = vmax.xlane.f32.xlu0 %v2058
      %v2060 = vpop.xlane.xlu0 %2059
      %v2061 = vsel %vm632, %v596, -inf
      %2062 = vmax.xlane.f32.xlu0 %v2061
      %v2063 = vpop.xlane.xlu0 %2062
      %v2064 = vsel %vm632, %v597, -inf
      %2065 = vmax.xlane.f32.xlu0 %v2064
      %v2066 = vpop.xlane.xlu0 %2065
      %v2067 = vsel %vm632, %v598, -inf
      %2068 = vmax.xlane.f32.xlu0 %v2067
      %v2069 = vpop.xlane.xlu0 %2068
      %v2070 = vsel %vm632, %v599, -inf
      %2071 = vmax.xlane.f32.xlu0 %v2070
      %v2072 = vpop.xlane.xlu0 %2071
      %v2073 = vsel %vm632, %v600, -inf
      %2074 = vmax.xlane.f32.xlu0 %v2073
      %v2075 = vpop.xlane.xlu0 %2074
      %v2076 = vsel %vm632, %v601, -inf
      %2077 = vmax.xlane.f32.xlu0 %v2076
      %v2078 = vpop.xlane.xlu0 %2077
      %v2079 = vsel %vm632, %v602, -inf
      %2080 = vmax.xlane.f32.xlu0 %v2079
      %v2081 = vpop.xlane.xlu0 %2080
      %v2082 = vsel %vm632, %v603, -inf
      %2083 = vmax.xlane.f32.xlu0 %v2082
      %v2084 = vpop.xlane.xlu0 %2083
      %v2085 = vsel %vm632, %v604, -inf
      %2086 = vmax.xlane.f32.xlu0 %v2085
      %v2087 = vpop.xlane.xlu0 %2086
      %v2088 = vsel %vm632, %v605, -inf
      %2089 = vmax.xlane.f32.xlu0 %v2088
      %v2090 = vpop.xlane.xlu0 %2089
      %v2091 = vsel %vm632, %v606, -inf
      %2092 = vmax.xlane.f32.xlu0 %v2091
      %v2093 = vpop.xlane.xlu0 %2092
      %v2094 = vsel %vm632, %v607, -inf
      %2095 = vmax.xlane.f32.xlu0 %v2094
      %v2096 = vpop.xlane.xlu0 %2095
      %v2097 = vsel %vm632, %v608, -inf
      %2098 = vmax.xlane.f32.xlu0 %v2097
      %v2099 = vpop.xlane.xlu0 %2098
      %v2100 = vsel %vm632, %v609, -inf
      %2101 = vmax.xlane.f32.xlu0 %v2100
      %v2102 = vpop.xlane.xlu0 %2101
      %v2103 = vsel %vm632, %v610, -inf
      %2104 = vmax.xlane.f32.xlu0 %v2103
      %v2105 = vpop.xlane.xlu0 %2104
      %v2106 = vsel %vm632, %v611, -inf
      %2107 = vmax.xlane.f32.xlu0 %v2106
      %v2108 = vpop.xlane.xlu0 %2107
      %v2109 = vsel %vm632, %v612, -inf
      %2110 = vmax.xlane.f32.xlu0 %v2109
      %v2111 = vpop.xlane.xlu0 %2110
      %v2112 = vsel %vm632, %v613, -inf
      %2113 = vmax.xlane.f32.xlu0 %v2112
      %v2114 = vpop.xlane.xlu0 %2113
      %v2115 = vsel %vm632, %v614, -inf
      %2116 = vmax.xlane.f32.xlu0 %v2115
      %v2117 = vpop.xlane.xlu0 %2116
      %v2118 = vsel %vm632, %v615, -inf
      %2119 = vmax.xlane.f32.xlu0 %v2118
      %v2120 = vpop.xlane.xlu0 %2119
      %v2121 = vsel %vm632, %v616, -inf
      %2122 = vmax.xlane.f32.xlu0 %v2121
      %v2123 = vpop.xlane.xlu0 %2122
      %v2124 = vsel %vm632, %v617, -inf
      %2125 = vmax.xlane.f32.xlu0 %v2124
      %v2126 = vpop.xlane.xlu0 %2125
      %v2127 = vsel %vm632, %v618, -inf
      %2128 = vmax.xlane.f32.xlu0 %v2127
      %v2129 = vpop.xlane.xlu0 %2128
      %v2130 = vsel %vm632, %v619, -inf
      %2131 = vmax.xlane.f32.xlu0 %v2130
      %v2132 = vpop.xlane.xlu0 %2131
      %v2133 = vsel %vm632, %v620, -inf
      %2134 = vmax.xlane.f32.xlu0 %v2133
      %v2135 = vpop.xlane.xlu0 %2134
      %v2136 = vsel %vm632, %v621, -inf
      %2137 = vmax.xlane.f32.xlu0 %v2136
      %v2138 = vpop.xlane.xlu0 %2137
      %v2139 = vsel %vm632, %v622, -inf
      %2140 = vmax.xlane.f32.xlu0 %v2139
      %v2141 = vpop.xlane.xlu0 %2140
      %v2142 = vsel %vm632, %v623, -inf
      %2143 = vmax.xlane.f32.xlu0 %v2142
      %v2144 = vpop.xlane.xlu0 %2143
      %v2145 = vsel %vm632, %v624, -inf
      %2146 = vmax.xlane.f32.xlu0 %v2145
      %v2147 = vpop.xlane.xlu0 %2146
      %v2148 = vsel %vm632, %v625, -inf
      %2149 = vmax.xlane.f32.xlu0 %v2148
      %v2150 = vpop.xlane.xlu0 %2149
      %v2151 = vsel %vm632, %v626, -inf
      %2152 = vmax.xlane.f32.xlu0 %v2151
      %v2153 = vpop.xlane.xlu0 %2152
      %v2154 = vsel %vm632, %v627, -inf
      %2155 = vmax.xlane.f32.xlu0 %v2154
      %v2156 = vpop.xlane.xlu0 %2155
      %v2157 = vsel %vm632, %v628, -inf
      %2158 = vmax.xlane.f32.xlu0 %v2157
      %v2159 = vpop.xlane.xlu0 %2158
      %v2160 = vsel %vm632, %v629, -inf
      %2161 = vmax.xlane.f32.xlu0 %v2160
      %v2162 = vpop.xlane.xlu0 %2161
      %v2163 = vsel %vm632, %v630, -inf
      %2164 = vmax.xlane.f32.xlu0 %v2163
      %v2165 = vpop.xlane.xlu0 %2164
      %v2166 = vsel %vm632, %v631, -inf
      %2167 = vmax.xlane.f32.xlu0 %v2166
      %v2168 = vpop.xlane.xlu0 %2167
      %v2169 = vsub.f32 %v120, %v635
      %v2170 = vsub.f32 %v121, %v638
      %v2171 = vsub.f32 %v122, %v641
      %v2172 = vsub.f32 %v123, %v644
      %v2173 = vsub.f32 %v124, %v647
      %v2174 = vsub.f32 %v125, %v650
      %v2175 = vsub.f32 %v126, %v653
      %v2176 = vsub.f32 %v127, %v656
      %v2177 = vsub.f32 %v128, %v659
      %v2178 = vsub.f32 %v129, %v662
      %v2179 = vsub.f32 %v130, %v665
      %v2180 = vsub.f32 %v131, %v668
      %v2181 = vsub.f32 %v132, %v671
      %v2182 = vsub.f32 %v133, %v674
      %v2183 = vsub.f32 %v134, %v677
      %v2184 = vsub.f32 %v135, %v680
      %v2185 = vsub.f32 %v136, %v683
      %v2186 = vsub.f32 %v137, %v686
      %v2187 = vsub.f32 %v138, %v689
      %v2188 = vsub.f32 %v139, %v692
      %v2189 = vsub.f32 %v140, %v695
      %v2190 = vsub.f32 %v141, %v698
      %v2191 = vsub.f32 %v142, %v701
      %v2192 = vsub.f32 %v143, %v704
      %v2193 = vsub.f32 %v144, %v707
      %v2194 = vsub.f32 %v145, %v710
      %v2195 = vsub.f32 %v146, %v713
      %v2196 = vsub.f32 %v147, %v716
      %v2197 = vsub.f32 %v148, %v719
      %v2198 = vsub.f32 %v149, %v722
      %v2199 = vsub.f32 %v150, %v725
      %v2200 = vsub.f32 %v151, %v728
      %v2201 = vsub.f32 %v152, %v731
      %v2202 = vsub.f32 %v153, %v734
      %v2203 = vsub.f32 %v154, %v737
      %v2204 = vsub.f32 %v155, %v740
      %v2205 = vsub.f32 %v156, %v743
      %v2206 = vsub.f32 %v157, %v746
      %v2207 = vsub.f32 %v158, %v749
      %v2208 = vsub.f32 %v159, %v752
      %v2209 = vsub.f32 %v160, %v755
      %v2210 = vsub.f32 %v161, %v758
      %v2211 = vsub.f32 %v162, %v761
      %v2212 = vsub.f32 %v163, %v764
      %v2213 = vsub.f32 %v164, %v767
      %v2214 = vsub.f32 %v165, %v770
      %v2215 = vsub.f32 %v166, %v773
      %v2216 = vsub.f32 %v167, %v776
      %v2217 = vsub.f32 %v168, %v779
      %v2218 = vsub.f32 %v169, %v782
      %v2219 = vsub.f32 %v170, %v785
      %v2220 = vsub.f32 %v171, %v788
      %v2221 = vsub.f32 %v172, %v791
      %v2222 = vsub.f32 %v173, %v794
      %v2223 = vsub.f32 %v174, %v797
      %v2224 = vsub.f32 %v175, %v800
      %v2225 = vsub.f32 %v176, %v803
      %v2226 = vsub.f32 %v177, %v806
      %v2227 = vsub.f32 %v178, %v809
      %v2228 = vsub.f32 %v179, %v812
      %v2229 = vsub.f32 %v180, %v815
      %v2230 = vsub.f32 %v181, %v818
      %v2231 = vsub.f32 %v182, %v821
      %v2232 = vsub.f32 %v183, %v824
      %v2233 = vsub.f32 %v184, %v827
      %v2234 = vsub.f32 %v185, %v830
      %v2235 = vsub.f32 %v186, %v833
      %v2236 = vsub.f32 %v187, %v836
      %v2237 = vsub.f32 %v188, %v839
      %v2238 = vsub.f32 %v189, %v842
      %v2239 = vsub.f32 %v190, %v845
      %v2240 = vsub.f32 %v191, %v848
      %v2241 = vsub.f32 %v192, %v851
      %v2242 = vsub.f32 %v193, %v854
      %v2243 = vsub.f32 %v194, %v857
      %v2244 = vsub.f32 %v195, %v860
      %v2245 = vsub.f32 %v196, %v863
      %v2246 = vsub.f32 %v197, %v866
      %v2247 = vsub.f32 %v198, %v869
      %v2248 = vsub.f32 %v199, %v872
      %v2249 = vsub.f32 %v200, %v875
      %v2250 = vsub.f32 %v201, %v878
      %v2251 = vsub.f32 %v202, %v881
      %v2252 = vsub.f32 %v203, %v884
      %v2253 = vsub.f32 %v204, %v887
      %v2254 = vsub.f32 %v205, %v890
      %v2255 = vsub.f32 %v206, %v893
      %v2256 = vsub.f32 %v207, %v896
      %v2257 = vsub.f32 %v208, %v899
      %v2258 = vsub.f32 %v209, %v902
      %v2259 = vsub.f32 %v210, %v905
      %v2260 = vsub.f32 %v211, %v908
      %v2261 = vsub.f32 %v212, %v911
      %v2262 = vsub.f32 %v213, %v914
      %v2263 = vsub.f32 %v214, %v917
      %v2264 = vsub.f32 %v215, %v920
      %v2265 = vsub.f32 %v216, %v923
      %v2266 = vsub.f32 %v217, %v926
      %v2267 = vsub.f32 %v218, %v929
      %v2268 = vsub.f32 %v219, %v932
      %v2269 = vsub.f32 %v220, %v935
      %v2270 = vsub.f32 %v221, %v938
      %v2271 = vsub.f32 %v222, %v941
      %v2272 = vsub.f32 %v223, %v944
      %v2273 = vsub.f32 %v224, %v947
      %v2274 = vsub.f32 %v225, %v950
      %v2275 = vsub.f32 %v226, %v953
      %v2276 = vsub.f32 %v227, %v956
      %v2277 = vsub.f32 %v228, %v959
      %v2278 = vsub.f32 %v229, %v962
      %v2279 = vsub.f32 %v230, %v965
      %v2280 = vsub.f32 %v231, %v968
      %v2281 = vsub.f32 %v232, %v971
      %v2282 = vsub.f32 %v233, %v974
      %v2283 = vsub.f32 %v234, %v977
      %v2284 = vsub.f32 %v235, %v980
      %v2285 = vsub.f32 %v236, %v983
      %v2286 = vsub.f32 %v237, %v986
      %v2287 = vsub.f32 %v238, %v989
      %v2288 = vsub.f32 %v239, %v992
      %v2289 = vsub.f32 %v240, %v995
      %v2290 = vsub.f32 %v241, %v998
      %v2291 = vsub.f32 %v242, %v1001
      %v2292 = vsub.f32 %v243, %v1004
      %v2293 = vsub.f32 %v244, %v1007
      %v2294 = vsub.f32 %v245, %v1010
      %v2295 = vsub.f32 %v246, %v1013
      %v2296 = vsub.f32 %v247, %v1016
      %v2297 = vsub.f32 %v248, %v1019
      %v2298 = vsub.f32 %v249, %v1022
      %v2299 = vsub.f32 %v250, %v1025
      %v2300 = vsub.f32 %v251, %v1028
      %v2301 = vsub.f32 %v252, %v1031
      %v2302 = vsub.f32 %v253, %v1034
      %v2303 = vsub.f32 %v254, %v1037
      %v2304 = vsub.f32 %v255, %v1040
      %v2305 = vsub.f32 %v256, %v1043
      %v2306 = vsub.f32 %v257, %v1046
      %v2307 = vsub.f32 %v258, %v1049
      %v2308 = vsub.f32 %v259, %v1052
      %v2309 = vsub.f32 %v260, %v1055
      %v2310 = vsub.f32 %v261, %v1058
      %v2311 = vsub.f32 %v262, %v1061
      %v2312 = vsub.f32 %v263, %v1064
      %v2313 = vsub.f32 %v264, %v1067
      %v2314 = vsub.f32 %v265, %v1070
      %v2315 = vsub.f32 %v266, %v1073
      %v2316 = vsub.f32 %v267, %v1076
      %v2317 = vsub.f32 %v268, %v1079
      %v2318 = vsub.f32 %v269, %v1082
      %v2319 = vsub.f32 %v270, %v1085
      %v2320 = vsub.f32 %v271, %v1088
      %v2321 = vsub.f32 %v272, %v1091
      %v2322 = vsub.f32 %v273, %v1094
      %v2323 = vsub.f32 %v274, %v1097
      %v2324 = vsub.f32 %v275, %v1100
      %v2325 = vsub.f32 %v276, %v1103
      %v2326 = vsub.f32 %v277, %v1106
      %v2327 = vsub.f32 %v278, %v1109
      %v2328 = vsub.f32 %v279, %v1112
      %v2329 = vsub.f32 %v280, %v1115
      %v2330 = vsub.f32 %v281, %v1118
      %v2331 = vsub.f32 %v282, %v1121
      %v2332 = vsub.f32 %v283, %v1124
      %v2333 = vsub.f32 %v284, %v1127
      %v2334 = vsub.f32 %v285, %v1130
      %v2335 = vsub.f32 %v286, %v1133
      %v2336 = vsub.f32 %v287, %v1136
      %v2337 = vsub.f32 %v288, %v1139
      %v2338 = vsub.f32 %v289, %v1142
      %v2339 = vsub.f32 %v290, %v1145
      %v2340 = vsub.f32 %v291, %v1148
      %v2341 = vsub.f32 %v292, %v1151
      %v2342 = vsub.f32 %v293, %v1154
      %v2343 = vsub.f32 %v294, %v1157
      %v2344 = vsub.f32 %v295, %v1160
      %v2345 = vsub.f32 %v296, %v1163
      %v2346 = vsub.f32 %v297, %v1166
      %v2347 = vsub.f32 %v298, %v1169
      %v2348 = vsub.f32 %v299, %v1172
      %v2349 = vsub.f32 %v300, %v1175
      %v2350 = vsub.f32 %v301, %v1178
      %v2351 = vsub.f32 %v302, %v1181
      %v2352 = vsub.f32 %v303, %v1184
      %v2353 = vsub.f32 %v304, %v1187
      %v2354 = vsub.f32 %v305, %v1190
      %v2355 = vsub.f32 %v306, %v1193
      %v2356 = vsub.f32 %v307, %v1196
      %v2357 = vsub.f32 %v308, %v1199
      %v2358 = vsub.f32 %v309, %v1202
      %v2359 = vsub.f32 %v310, %v1205
      %v2360 = vsub.f32 %v311, %v1208
      %v2361 = vsub.f32 %v312, %v1211
      %v2362 = vsub.f32 %v313, %v1214
      %v2363 = vsub.f32 %v314, %v1217
      %v2364 = vsub.f32 %v315, %v1220
      %v2365 = vsub.f32 %v316, %v1223
      %v2366 = vsub.f32 %v317, %v1226
      %v2367 = vsub.f32 %v318, %v1229
      %v2368 = vsub.f32 %v319, %v1232
      %v2369 = vsub.f32 %v320, %v1235
      %v2370 = vsub.f32 %v321, %v1238
      %v2371 = vsub.f32 %v322, %v1241
      %v2372 = vsub.f32 %v323, %v1244
      %v2373 = vsub.f32 %v324, %v1247
      %v2374 = vsub.f32 %v325, %v1250
      %v2375 = vsub.f32 %v326, %v1253
      %v2376 = vsub.f32 %v327, %v1256
      %v2377 = vsub.f32 %v328, %v1259
      %v2378 = vsub.f32 %v329, %v1262
      %v2379 = vsub.f32 %v330, %v1265
      %v2380 = vsub.f32 %v331, %v1268
      %v2381 = vsub.f32 %v332, %v1271
      %v2382 = vsub.f32 %v333, %v1274
      %v2383 = vsub.f32 %v334, %v1277
      %v2384 = vsub.f32 %v335, %v1280
      %v2385 = vsub.f32 %v336, %v1283
      %v2386 = vsub.f32 %v337, %v1286
      %v2387 = vsub.f32 %v338, %v1289
      %v2388 = vsub.f32 %v339, %v1292
      %v2389 = vsub.f32 %v340, %v1295
      %v2390 = vsub.f32 %v341, %v1298
      %v2391 = vsub.f32 %v342, %v1301
      %v2392 = vsub.f32 %v343, %v1304
      %v2393 = vsub.f32 %v344, %v1307
      %v2394 = vsub.f32 %v345, %v1310
      %v2395 = vsub.f32 %v346, %v1313
      %v2396 = vsub.f32 %v347, %v1316
      %v2397 = vsub.f32 %v348, %v1319
      %v2398 = vsub.f32 %v349, %v1322
      %v2399 = vsub.f32 %v350, %v1325
      %v2400 = vsub.f32 %v351, %v1328
      %v2401 = vsub.f32 %v352, %v1331
      %v2402 = vsub.f32 %v353, %v1334
      %v2403 = vsub.f32 %v354, %v1337
      %v2404 = vsub.f32 %v355, %v1340
      %v2405 = vsub.f32 %v356, %v1343
      %v2406 = vsub.f32 %v357, %v1346
      %v2407 = vsub.f32 %v358, %v1349
      %v2408 = vsub.f32 %v359, %v1352
      %v2409 = vsub.f32 %v360, %v1355
      %v2410 = vsub.f32 %v361, %v1358
      %v2411 = vsub.f32 %v362, %v1361
      %v2412 = vsub.f32 %v363, %v1364
      %v2413 = vsub.f32 %v364, %v1367
      %v2414 = vsub.f32 %v365, %v1370
      %v2415 = vsub.f32 %v366, %v1373
      %v2416 = vsub.f32 %v367, %v1376
      %v2417 = vsub.f32 %v368, %v1379
      %v2418 = vsub.f32 %v369, %v1382
      %v2419 = vsub.f32 %v370, %v1385
      %v2420 = vsub.f32 %v371, %v1388
      %v2421 = vsub.f32 %v372, %v1391
      %v2422 = vsub.f32 %v373, %v1394
      %v2423 = vsub.f32 %v374, %v1397
      %v2424 = vsub.f32 %v375, %v1400
      %v2425 = vsub.f32 %v376, %v1403
      %v2426 = vsub.f32 %v377, %v1406
      %v2427 = vsub.f32 %v378, %v1409
      %v2428 = vsub.f32 %v379, %v1412
      %v2429 = vsub.f32 %v380, %v1415
      %v2430 = vsub.f32 %v381, %v1418
      %v2431 = vsub.f32 %v382, %v1421
      %v2432 = vsub.f32 %v383, %v1424
      %v2433 = vsub.f32 %v384, %v1427
      %v2434 = vsub.f32 %v385, %v1430
      %v2435 = vsub.f32 %v386, %v1433
      %v2436 = vsub.f32 %v387, %v1436
      %v2437 = vsub.f32 %v388, %v1439
      %v2438 = vsub.f32 %v389, %v1442
      %v2439 = vsub.f32 %v390, %v1445
      %v2440 = vsub.f32 %v391, %v1448
      %v2441 = vsub.f32 %v392, %v1451
      %v2442 = vsub.f32 %v393, %v1454
      %v2443 = vsub.f32 %v394, %v1457
      %v2444 = vsub.f32 %v395, %v1460
      %v2445 = vsub.f32 %v396, %v1463
      %v2446 = vsub.f32 %v397, %v1466
      %v2447 = vsub.f32 %v398, %v1469
      %v2448 = vsub.f32 %v399, %v1472
      %v2449 = vsub.f32 %v400, %v1475
      %v2450 = vsub.f32 %v401, %v1478
      %v2451 = vsub.f32 %v402, %v1481
      %v2452 = vsub.f32 %v403, %v1484
      %v2453 = vsub.f32 %v404, %v1487
      %v2454 = vsub.f32 %v405, %v1490
      %v2455 = vsub.f32 %v406, %v1493
      %v2456 = vsub.f32 %v407, %v1496
      %v2457 = vsub.f32 %v408, %v1499
      %v2458 = vsub.f32 %v409, %v1502
      %v2459 = vsub.f32 %v410, %v1505
      %v2460 = vsub.f32 %v411, %v1508
      %v2461 = vsub.f32 %v412, %v1511
      %v2462 = vsub.f32 %v413, %v1514
      %v2463 = vsub.f32 %v414, %v1517
      %v2464 = vsub.f32 %v415, %v1520
      %v2465 = vsub.f32 %v416, %v1523
      %v2466 = vsub.f32 %v417, %v1526
      %v2467 = vsub.f32 %v418, %v1529
      %v2468 = vsub.f32 %v419, %v1532
      %v2469 = vsub.f32 %v420, %v1535
      %v2470 = vsub.f32 %v421, %v1538
      %v2471 = vsub.f32 %v422, %v1541
      %v2472 = vsub.f32 %v423, %v1544
      %v2473 = vsub.f32 %v424, %v1547
      %v2474 = vsub.f32 %v425, %v1550
      %v2475 = vsub.f32 %v426, %v1553
      %v2476 = vsub.f32 %v427, %v1556
      %v2477 = vsub.f32 %v428, %v1559
      %v2478 = vsub.f32 %v429, %v1562
      %v2479 = vsub.f32 %v430, %v1565
      %v2480 = vsub.f32 %v431, %v1568
      %v2481 = vsub.f32 %v432, %v1571
      %v2482 = vsub.f32 %v433, %v1574
      %v2483 = vsub.f32 %v434, %v1577
      %v2484 = vsub.f32 %v435, %v1580
      %v2485 = vsub.f32 %v436, %v1583
      %v2486 = vsub.f32 %v437, %v1586
      %v2487 = vsub.f32 %v438, %v1589
      %v2488 = vsub.f32 %v439, %v1592
      %v2489 = vsub.f32 %v440, %v1595
      %v2490 = vsub.f32 %v441, %v1598
      %v2491 = vsub.f32 %v442, %v1601
      %v2492 = vsub.f32 %v443, %v1604
      %v2493 = vsub.f32 %v444, %v1607
      %v2494 = vsub.f32 %v445, %v1610
      %v2495 = vsub.f32 %v446, %v1613
      %v2496 = vsub.f32 %v447, %v1616
      %v2497 = vsub.f32 %v448, %v1619
      %v2498 = vsub.f32 %v449, %v1622
      %v2499 = vsub.f32 %v450, %v1625
      %v2500 = vsub.f32 %v451, %v1628
      %v2501 = vsub.f32 %v452, %v1631
      %v2502 = vsub.f32 %v453, %v1634
      %v2503 = vsub.f32 %v454, %v1637
      %v2504 = vsub.f32 %v455, %v1640
      %v2505 = vsub.f32 %v456, %v1643
      %v2506 = vsub.f32 %v457, %v1646
      %v2507 = vsub.f32 %v458, %v1649
      %v2508 = vsub.f32 %v459, %v1652
      %v2509 = vsub.f32 %v460, %v1655
      %v2510 = vsub.f32 %v461, %v1658
      %v2511 = vsub.f32 %v462, %v1661
      %v2512 = vsub.f32 %v463, %v1664
      %v2513 = vsub.f32 %v464, %v1667
      %v2514 = vsub.f32 %v465, %v1670
      %v2515 = vsub.f32 %v466, %v1673
      %v2516 = vsub.f32 %v467, %v1676
      %v2517 = vsub.f32 %v468, %v1679
      %v2518 = vsub.f32 %v469, %v1682
      %v2519 = vsub.f32 %v470, %v1685
      %v2520 = vsub.f32 %v471, %v1688
      %v2521 = vsub.f32 %v472, %v1691
      %v2522 = vsub.f32 %v473, %v1694
      %v2523 = vsub.f32 %v474, %v1697
      %v2524 = vsub.f32 %v475, %v1700
      %v2525 = vsub.f32 %v476, %v1703
      %v2526 = vsub.f32 %v477, %v1706
      %v2527 = vsub.f32 %v478, %v1709
      %v2528 = vsub.f32 %v479, %v1712
      %v2529 = vsub.f32 %v480, %v1715
      %v2530 = vsub.f32 %v481, %v1718
      %v2531 = vsub.f32 %v482, %v1721
      %v2532 = vsub.f32 %v483, %v1724
      %v2533 = vsub.f32 %v484, %v1727
      %v2534 = vsub.f32 %v485, %v1730
      %v2535 = vsub.f32 %v486, %v1733
      %v2536 = vsub.f32 %v487, %v1736
      %v2537 = vsub.f32 %v488, %v1739
      %v2538 = vsub.f32 %v489, %v1742
      %v2539 = vsub.f32 %v490, %v1745
      %v2540 = vsub.f32 %v491, %v1748
      %v2541 = vsub.f32 %v492, %v1751
      %v2542 = vsub.f32 %v493, %v1754
      %v2543 = vsub.f32 %v494, %v1757
      %v2544 = vsub.f32 %v495, %v1760
      %v2545 = vsub.f32 %v496, %v1763
      %v2546 = vsub.f32 %v497, %v1766
      %v2547 = vsub.f32 %v498, %v1769
      %v2548 = vsub.f32 %v499, %v1772
      %v2549 = vsub.f32 %v500, %v1775
      %v2550 = vsub.f32 %v501, %v1778
      %v2551 = vsub.f32 %v502, %v1781
      %v2552 = vsub.f32 %v503, %v1784
      %v2553 = vsub.f32 %v504, %v1787
      %v2554 = vsub.f32 %v505, %v1790
      %v2555 = vsub.f32 %v506, %v1793
      %v2556 = vsub.f32 %v507, %v1796
      %v2557 = vsub.f32 %v508, %v1799
      %v2558 = vsub.f32 %v509, %v1802
      %v2559 = vsub.f32 %v510, %v1805
      %v2560 = vsub.f32 %v511, %v1808
      %v2561 = vsub.f32 %v512, %v1811
      %v2562 = vsub.f32 %v513, %v1814
      %v2563 = vsub.f32 %v514, %v1817
      %v2564 = vsub.f32 %v515, %v1820
      %v2565 = vsub.f32 %v516, %v1823
      %v2566 = vsub.f32 %v517, %v1826
      %v2567 = vsub.f32 %v518, %v1829
      %v2568 = vsub.f32 %v519, %v1832
      %v2569 = vsub.f32 %v520, %v1835
      %v2570 = vsub.f32 %v521, %v1838
      %v2571 = vsub.f32 %v522, %v1841
      %v2572 = vsub.f32 %v523, %v1844
      %v2573 = vsub.f32 %v524, %v1847
      %v2574 = vsub.f32 %v525, %v1850
      %v2575 = vsub.f32 %v526, %v1853
      %v2576 = vsub.f32 %v527, %v1856
      %v2577 = vsub.f32 %v528, %v1859
      %v2578 = vsub.f32 %v529, %v1862
      %v2579 = vsub.f32 %v530, %v1865
      %v2580 = vsub.f32 %v531, %v1868
      %v2581 = vsub.f32 %v532, %v1871
      %v2582 = vsub.f32 %v533, %v1874
      %v2583 = vsub.f32 %v534, %v1877
      %v2584 = vsub.f32 %v535, %v1880
      %v2585 = vsub.f32 %v536, %v1883
      %v2586 = vsub.f32 %v537, %v1886
      %v2587 = vsub.f32 %v538, %v1889
      %v2588 = vsub.f32 %v539, %v1892
      %v2589 = vsub.f32 %v540, %v1895
      %v2590 = vsub.f32 %v541, %v1898
      %v2591 = vsub.f32 %v542, %v1901
      %v2592 = vsub.f32 %v543, %v1904
      %v2593 = vsub.f32 %v544, %v1907
      %v2594 = vsub.f32 %v545, %v1910
      %v2595 = vsub.f32 %v546, %v1913
      %v2596 = vsub.f32 %v547, %v1916
      %v2597 = vsub.f32 %v548, %v1919
      %v2598 = vsub.f32 %v549, %v1922
      %v2599 = vsub.f32 %v550, %v1925
      %v2600 = vsub.f32 %v551, %v1928
      %v2601 = vsub.f32 %v552, %v1931
      %v2602 = vsub.f32 %v553, %v1934
      %v2603 = vsub.f32 %v554, %v1937
      %v2604 = vsub.f32 %v555, %v1940
      %v2605 = vsub.f32 %v556, %v1943
      %v2606 = vsub.f32 %v557, %v1946
      %v2607 = vsub.f32 %v558, %v1949
      %v2608 = vsub.f32 %v559, %v1952
      %v2609 = vsub.f32 %v560, %v1955
      %v2610 = vsub.f32 %v561, %v1958
      %v2611 = vsub.f32 %v562, %v1961
      %v2612 = vsub.f32 %v563, %v1964
      %v2613 = vsub.f32 %v564, %v1967
      %v2614 = vsub.f32 %v565, %v1970
      %v2615 = vsub.f32 %v566, %v1973
      %v2616 = vsub.f32 %v567, %v1976
      %v2617 = vsub.f32 %v568, %v1979
      %v2618 = vsub.f32 %v569, %v1982
      %v2619 = vsub.f32 %v570, %v1985
      %v2620 = vsub.f32 %v571, %v1988
      %v2621 = vsub.f32 %v572, %v1991
      %v2622 = vsub.f32 %v573, %v1994
      %v2623 = vsub.f32 %v574, %v1997
      %v2624 = vsub.f32 %v575, %v2000
      %v2625 = vsub.f32 %v576, %v2003
      %v2626 = vsub.f32 %v577, %v2006
      %v2627 = vsub.f32 %v578, %v2009
      %v2628 = vsub.f32 %v579, %v2012
      %v2629 = vsub.f32 %v580, %v2015
      %v2630 = vsub.f32 %v581, %v2018
      %v2631 = vsub.f32 %v582, %v2021
      %v2632 = vsub.f32 %v583, %v2024
      %v2633 = vsub.f32 %v584, %v2027
      %v2634 = vsub.f32 %v585, %v2030
      %v2635 = vsub.f32 %v586, %v2033
      %v2636 = vsub.f32 %v587, %v2036
      %v2637 = vsub.f32 %v588, %v2039
      %v2638 = vsub.f32 %v589, %v2042
      %v2639 = vsub.f32 %v590, %v2045
      %v2640 = vsub.f32 %v591, %v2048
      %v2641 = vsub.f32 %v592, %v2051
      %v2642 = vsub.f32 %v593, %v2054
      %v2643 = vsub.f32 %v594, %v2057
      %v2644 = vsub.f32 %v595, %v2060
      %v2645 = vsub.f32 %v596, %v2063
      %v2646 = vsub.f32 %v597, %v2066
      %v2647 = vsub.f32 %v598, %v2069
      %v2648 = vsub.f32 %v599, %v2072
      %v2649 = vsub.f32 %v600, %v2075
      %v2650 = vsub.f32 %v601, %v2078
      %v2651 = vsub.f32 %v602, %v2081
      %v2652 = vsub.f32 %v603, %v2084
      %v2653 = vsub.f32 %v604, %v2087
      %v2654 = vsub.f32 %v605, %v2090
      %v2655 = vsub.f32 %v606, %v2093
      %v2656 = vsub.f32 %v607, %v2096
      %v2657 = vsub.f32 %v608, %v2099
      %v2658 = vsub.f32 %v609, %v2102
      %v2659 = vsub.f32 %v610, %v2105
      %v2660 = vsub.f32 %v611, %v2108
      %v2661 = vsub.f32 %v612, %v2111
      %v2662 = vsub.f32 %v613, %v2114
      %v2663 = vsub.f32 %v614, %v2117
      %v2664 = vsub.f32 %v615, %v2120
      %v2665 = vsub.f32 %v616, %v2123
      %v2666 = vsub.f32 %v617, %v2126
      %v2667 = vsub.f32 %v618, %v2129
      %v2668 = vsub.f32 %v619, %v2132
      %v2669 = vsub.f32 %v620, %v2135
      %v2670 = vsub.f32 %v621, %v2138
      %v2671 = vsub.f32 %v622, %v2141
      %v2672 = vsub.f32 %v623, %v2144
      %v2673 = vsub.f32 %v624, %v2147
      %v2674 = vsub.f32 %v625, %v2150
      %v2675 = vsub.f32 %v626, %v2153
      %v2676 = vsub.f32 %v627, %v2156
      %v2677 = vsub.f32 %v628, %v2159
      %v2678 = vsub.f32 %v629, %v2162
      %v2679 = vsub.f32 %v630, %v2165
      %v2680 = vsub.f32 %v631, %v2168
      %v2681 = vmul.f32 %v2169, 1.442695
      %v2682 = vpow.pop %v2681
      %v2683 = vmul.f32 %v2170, 1.442695
      %v2684 = vpow.pop %v2683
      %v2685 = vmul.f32 %v2171, 1.442695
      %v2686 = vpow.pop %v2685
      %v2687 = vmul.f32 %v2172, 1.442695
      %v2688 = vpow.pop %v2687
      %v2689 = vmul.f32 %v2173, 1.442695
      %v2690 = vpow.pop %v2689
      %v2691 = vmul.f32 %v2174, 1.442695
      %v2692 = vpow.pop %v2691
      %v2693 = vmul.f32 %v2175, 1.442695
      %v2694 = vpow.pop %v2693
      %v2695 = vmul.f32 %v2176, 1.442695
      %v2696 = vpow.pop %v2695
      %v2697 = vmul.f32 %v2177, 1.442695
      %v2698 = vpow.pop %v2697
      %v2699 = vmul.f32 %v2178, 1.442695
      %v2700 = vpow.pop %v2699
      %v2701 = vmul.f32 %v2179, 1.442695
      %v2702 = vpow.pop %v2701
      %v2703 = vmul.f32 %v2180, 1.442695
      %v2704 = vpow.pop %v2703
      %v2705 = vmul.f32 %v2181, 1.442695
      %v2706 = vpow.pop %v2705
      %v2707 = vmul.f32 %v2182, 1.442695
      %v2708 = vpow.pop %v2707
      %v2709 = vmul.f32 %v2183, 1.442695
      %v2710 = vpow.pop %v2709
      %v2711 = vmul.f32 %v2184, 1.442695
      %v2712 = vpow.pop %v2711
      %v2713 = vmul.f32 %v2185, 1.442695
      %v2714 = vpow.pop %v2713
      %v2715 = vmul.f32 %v2186, 1.442695
      %v2716 = vpow.pop %v2715
      %v2717 = vmul.f32 %v2187, 1.442695
      %v2718 = vpow.pop %v2717
      %v2719 = vmul.f32 %v2188, 1.442695
      %v2720 = vpow.pop %v2719
      %v2721 = vmul.f32 %v2189, 1.442695
      %v2722 = vpow.pop %v2721
      %v2723 = vmul.f32 %v2190, 1.442695
      %v2724 = vpow.pop %v2723
      %v2725 = vmul.f32 %v2191, 1.442695
      %v2726 = vpow.pop %v2725
      %v2727 = vmul.f32 %v2192, 1.442695
      %v2728 = vpow.pop %v2727
      %v2729 = vmul.f32 %v2193, 1.442695
      %v2730 = vpow.pop %v2729
      %v2731 = vmul.f32 %v2194, 1.442695
      %v2732 = vpow.pop %v2731
      %v2733 = vmul.f32 %v2195, 1.442695
      %v2734 = vpow.pop %v2733
      %v2735 = vmul.f32 %v2196, 1.442695
      %v2736 = vpow.pop %v2735
      %v2737 = vmul.f32 %v2197, 1.442695
      %v2738 = vpow.pop %v2737
      %v2739 = vmul.f32 %v2198, 1.442695
      %v2740 = vpow.pop %v2739
      %v2741 = vmul.f32 %v2199, 1.442695
      %v2742 = vpow.pop %v2741
      %v2743 = vmul.f32 %v2200, 1.442695
      %v2744 = vpow.pop %v2743
      %v2745 = vmul.f32 %v2201, 1.442695
      %v2746 = vpow.pop %v2745
      %v2747 = vmul.f32 %v2202, 1.442695
      %v2748 = vpow.pop %v2747
      %v2749 = vmul.f32 %v2203, 1.442695
      %v2750 = vpow.pop %v2749
      %v2751 = vmul.f32 %v2204, 1.442695
      %v2752 = vpow.pop %v2751
      %v2753 = vmul.f32 %v2205, 1.442695
      %v2754 = vpow.pop %v2753
      %v2755 = vmul.f32 %v2206, 1.442695
      %v2756 = vpow.pop %v2755
      %v2757 = vmul.f32 %v2207, 1.442695
      %v2758 = vpow.pop %v2757
      %v2759 = vmul.f32 %v2208, 1.442695
      %v2760 = vpow.pop %v2759
      %v2761 = vmul.f32 %v2209, 1.442695
      %v2762 = vpow.pop %v2761
      %v2763 = vmul.f32 %v2210, 1.442695
      %v2764 = vpow.pop %v2763
      %v2765 = vmul.f32 %v2211, 1.442695
      %v2766 = vpow.pop %v2765
      %v2767 = vmul.f32 %v2212, 1.442695
      %v2768 = vpow.pop %v2767
      %v2769 = vmul.f32 %v2213, 1.442695
      %v2770 = vpow.pop %v2769
      %v2771 = vmul.f32 %v2214, 1.442695
      %v2772 = vpow.pop %v2771
      %v2773 = vmul.f32 %v2215, 1.442695
      %v2774 = vpow.pop %v2773
      %v2775 = vmul.f32 %v2216, 1.442695
      %v2776 = vpow.pop %v2775
      %v2777 = vmul.f32 %v2217, 1.442695
      %v2778 = vpow.pop %v2777
      %v2779 = vmul.f32 %v2218, 1.442695
      %v2780 = vpow.pop %v2779
      %v2781 = vmul.f32 %v2219, 1.442695
      %v2782 = vpow.pop %v2781
      %v2783 = vmul.f32 %v2220, 1.442695
      %v2784 = vpow.pop %v2783
      %v2785 = vmul.f32 %v2221, 1.442695
      %v2786 = vpow.pop %v2785
      %v2787 = vmul.f32 %v2222, 1.442695
      %v2788 = vpow.pop %v2787
      %v2789 = vmul.f32 %v2223, 1.442695
      %v2790 = vpow.pop %v2789
      %v2791 = vmul.f32 %v2224, 1.442695
      %v2792 = vpow.pop %v2791
      %v2793 = vmul.f32 %v2225, 1.442695
      %v2794 = vpow.pop %v2793
      %v2795 = vmul.f32 %v2226, 1.442695
      %v2796 = vpow.pop %v2795
      %v2797 = vmul.f32 %v2227, 1.442695
      %v2798 = vpow.pop %v2797
      %v2799 = vmul.f32 %v2228, 1.442695
      %v2800 = vpow.pop %v2799
      %v2801 = vmul.f32 %v2229, 1.442695
      %v2802 = vpow.pop %v2801
      %v2803 = vmul.f32 %v2230, 1.442695
      %v2804 = vpow.pop %v2803
      %v2805 = vmul.f32 %v2231, 1.442695
      %v2806 = vpow.pop %v2805
      %v2807 = vmul.f32 %v2232, 1.442695
      %v2808 = vpow.pop %v2807
      %v2809 = vmul.f32 %v2233, 1.442695
      %v2810 = vpow.pop %v2809
      %v2811 = vmul.f32 %v2234, 1.442695
      %v2812 = vpow.pop %v2811
      %v2813 = vmul.f32 %v2235, 1.442695
      %v2814 = vpow.pop %v2813
      %v2815 = vmul.f32 %v2236, 1.442695
      %v2816 = vpow.pop %v2815
      %v2817 = vmul.f32 %v2237, 1.442695
      %v2818 = vpow.pop %v2817
      %v2819 = vmul.f32 %v2238, 1.442695
      %v2820 = vpow.pop %v2819
      %v2821 = vmul.f32 %v2239, 1.442695
      %v2822 = vpow.pop %v2821
      %v2823 = vmul.f32 %v2240, 1.442695
      %v2824 = vpow.pop %v2823
      %v2825 = vmul.f32 %v2241, 1.442695
      %v2826 = vpow.pop %v2825
      %v2827 = vmul.f32 %v2242, 1.442695
      %v2828 = vpow.pop %v2827
      %v2829 = vmul.f32 %v2243, 1.442695
      %v2830 = vpow.pop %v2829
      %v2831 = vmul.f32 %v2244, 1.442695
      %v2832 = vpow.pop %v2831
      %v2833 = vmul.f32 %v2245, 1.442695
      %v2834 = vpow.pop %v2833
      %v2835 = vmul.f32 %v2246, 1.442695
      %v2836 = vpow.pop %v2835
      %v2837 = vmul.f32 %v2247, 1.442695
      %v2838 = vpow.pop %v2837
      %v2839 = vmul.f32 %v2248, 1.442695
      %v2840 = vpow.pop %v2839
      %v2841 = vmul.f32 %v2249, 1.442695
      %v2842 = vpow.pop %v2841
      %v2843 = vmul.f32 %v2250, 1.442695
      %v2844 = vpow.pop %v2843
      %v2845 = vmul.f32 %v2251, 1.442695
      %v2846 = vpow.pop %v2845
      %v2847 = vmul.f32 %v2252, 1.442695
      %v2848 = vpow.pop %v2847
      %v2849 = vmul.f32 %v2253, 1.442695
      %v2850 = vpow.pop %v2849
      %v2851 = vmul.f32 %v2254, 1.442695
      %v2852 = vpow.pop %v2851
      %v2853 = vmul.f32 %v2255, 1.442695
      %v2854 = vpow.pop %v2853
      %v2855 = vmul.f32 %v2256, 1.442695
      %v2856 = vpow.pop %v2855
      %v2857 = vmul.f32 %v2257, 1.442695
      %v2858 = vpow.pop %v2857
      %v2859 = vmul.f32 %v2258, 1.442695
      %v2860 = vpow.pop %v2859
      %v2861 = vmul.f32 %v2259, 1.442695
      %v2862 = vpow.pop %v2861
      %v2863 = vmul.f32 %v2260, 1.442695
      %v2864 = vpow.pop %v2863
      %v2865 = vmul.f32 %v2261, 1.442695
      %v2866 = vpow.pop %v2865
      %v2867 = vmul.f32 %v2262, 1.442695
      %v2868 = vpow.pop %v2867
      %v2869 = vmul.f32 %v2263, 1.442695
      %v2870 = vpow.pop %v2869
      %v2871 = vmul.f32 %v2264, 1.442695
      %v2872 = vpow.pop %v2871
      %v2873 = vmul.f32 %v2265, 1.442695
      %v2874 = vpow.pop %v2873
      %v2875 = vmul.f32 %v2266, 1.442695
      %v2876 = vpow.pop %v2875
      %v2877 = vmul.f32 %v2267, 1.442695
      %v2878 = vpow.pop %v2877
      %v2879 = vmul.f32 %v2268, 1.442695
      %v2880 = vpow.pop %v2879
      %v2881 = vmul.f32 %v2269, 1.442695
      %v2882 = vpow.pop %v2881
      %v2883 = vmul.f32 %v2270, 1.442695
      %v2884 = vpow.pop %v2883
      %v2885 = vmul.f32 %v2271, 1.442695
      %v2886 = vpow.pop %v2885
      %v2887 = vmul.f32 %v2272, 1.442695
      %v2888 = vpow.pop %v2887
      %v2889 = vmul.f32 %v2273, 1.442695
      %v2890 = vpow.pop %v2889
      %v2891 = vmul.f32 %v2274, 1.442695
      %v2892 = vpow.pop %v2891
      %v2893 = vmul.f32 %v2275, 1.442695
      %v2894 = vpow.pop %v2893
      %v2895 = vmul.f32 %v2276, 1.442695
      %v2896 = vpow.pop %v2895
      %v2897 = vmul.f32 %v2277, 1.442695
      %v2898 = vpow.pop %v2897
      %v2899 = vmul.f32 %v2278, 1.442695
      %v2900 = vpow.pop %v2899
      %v2901 = vmul.f32 %v2279, 1.442695
      %v2902 = vpow.pop %v2901
      %v2903 = vmul.f32 %v2280, 1.442695
      %v2904 = vpow.pop %v2903
      %v2905 = vmul.f32 %v2281, 1.442695
      %v2906 = vpow.pop %v2905
      %v2907 = vmul.f32 %v2282, 1.442695
      %v2908 = vpow.pop %v2907
      %v2909 = vmul.f32 %v2283, 1.442695
      %v2910 = vpow.pop %v2909
      %v2911 = vmul.f32 %v2284, 1.442695
      %v2912 = vpow.pop %v2911
      %v2913 = vmul.f32 %v2285, 1.442695
      %v2914 = vpow.pop %v2913
      %v2915 = vmul.f32 %v2286, 1.442695
      %v2916 = vpow.pop %v2915
      %v2917 = vmul.f32 %v2287, 1.442695
      %v2918 = vpow.pop %v2917
      %v2919 = vmul.f32 %v2288, 1.442695
      %v2920 = vpow.pop %v2919
      %v2921 = vmul.f32 %v2289, 1.442695
      %v2922 = vpow.pop %v2921
      %v2923 = vmul.f32 %v2290, 1.442695
      %v2924 = vpow.pop %v2923
      %v2925 = vmul.f32 %v2291, 1.442695
      %v2926 = vpow.pop %v2925
      %v2927 = vmul.f32 %v2292, 1.442695
      %v2928 = vpow.pop %v2927
      %v2929 = vmul.f32 %v2293, 1.442695
      %v2930 = vpow.pop %v2929
      %v2931 = vmul.f32 %v2294, 1.442695
      %v2932 = vpow.pop %v2931
      %v2933 = vmul.f32 %v2295, 1.442695
      %v2934 = vpow.pop %v2933
      %v2935 = vmul.f32 %v2296, 1.442695
      %v2936 = vpow.pop %v2935
      %v2937 = vmul.f32 %v2297, 1.442695
      %v2938 = vpow.pop %v2937
      %v2939 = vmul.f32 %v2298, 1.442695
      %v2940 = vpow.pop %v2939
      %v2941 = vmul.f32 %v2299, 1.442695
      %v2942 = vpow.pop %v2941
      %v2943 = vmul.f32 %v2300, 1.442695
      %v2944 = vpow.pop %v2943
      %v2945 = vmul.f32 %v2301, 1.442695
      %v2946 = vpow.pop %v2945
      %v2947 = vmul.f32 %v2302, 1.442695
      %v2948 = vpow.pop %v2947
      %v2949 = vmul.f32 %v2303, 1.442695
      %v2950 = vpow.pop %v2949
      %v2951 = vmul.f32 %v2304, 1.442695
      %v2952 = vpow.pop %v2951
      %v2953 = vmul.f32 %v2305, 1.442695
      %v2954 = vpow.pop %v2953
      %v2955 = vmul.f32 %v2306, 1.442695
      %v2956 = vpow.pop %v2955
      %v2957 = vmul.f32 %v2307, 1.442695
      %v2958 = vpow.pop %v2957
      %v2959 = vmul.f32 %v2308, 1.442695
      %v2960 = vpow.pop %v2959
      %v2961 = vmul.f32 %v2309, 1.442695
      %v2962 = vpow.pop %v2961
      %v2963 = vmul.f32 %v2310, 1.442695
      %v2964 = vpow.pop %v2963
      %v2965 = vmul.f32 %v2311, 1.442695
      %v2966 = vpow.pop %v2965
      %v2967 = vmul.f32 %v2312, 1.442695
      %v2968 = vpow.pop %v2967
      %v2969 = vmul.f32 %v2313, 1.442695
      %v2970 = vpow.pop %v2969
      %v2971 = vmul.f32 %v2314, 1.442695
      %v2972 = vpow.pop %v2971
      %v2973 = vmul.f32 %v2315, 1.442695
      %v2974 = vpow.pop %v2973
      %v2975 = vmul.f32 %v2316, 1.442695
      %v2976 = vpow.pop %v2975
      %v2977 = vmul.f32 %v2317, 1.442695
      %v2978 = vpow.pop %v2977
      %v2979 = vmul.f32 %v2318, 1.442695
      %v2980 = vpow.pop %v2979
      %v2981 = vmul.f32 %v2319, 1.442695
      %v2982 = vpow.pop %v2981
      %v2983 = vmul.f32 %v2320, 1.442695
      %v2984 = vpow.pop %v2983
      %v2985 = vmul.f32 %v2321, 1.442695
      %v2986 = vpow.pop %v2985
      %v2987 = vmul.f32 %v2322, 1.442695
      %v2988 = vpow.pop %v2987
      %v2989 = vmul.f32 %v2323, 1.442695
      %v2990 = vpow.pop %v2989
      %v2991 = vmul.f32 %v2324, 1.442695
      %v2992 = vpow.pop %v2991
      %v2993 = vmul.f32 %v2325, 1.442695
      %v2994 = vpow.pop %v2993
      %v2995 = vmul.f32 %v2326, 1.442695
      %v2996 = vpow.pop %v2995
      %v2997 = vmul.f32 %v2327, 1.442695
      %v2998 = vpow.pop %v2997
      %v2999 = vmul.f32 %v2328, 1.442695
      %v3000 = vpow.pop %v2999
      %v3001 = vmul.f32 %v2329, 1.442695
      %v3002 = vpow.pop %v3001
      %v3003 = vmul.f32 %v2330, 1.442695
      %v3004 = vpow.pop %v3003
      %v3005 = vmul.f32 %v2331, 1.442695
      %v3006 = vpow.pop %v3005
      %v3007 = vmul.f32 %v2332, 1.442695
      %v3008 = vpow.pop %v3007
      %v3009 = vmul.f32 %v2333, 1.442695
      %v3010 = vpow.pop %v3009
      %v3011 = vmul.f32 %v2334, 1.442695
      %v3012 = vpow.pop %v3011
      %v3013 = vmul.f32 %v2335, 1.442695
      %v3014 = vpow.pop %v3013
      %v3015 = vmul.f32 %v2336, 1.442695
      %v3016 = vpow.pop %v3015
      %v3017 = vmul.f32 %v2337, 1.442695
      %v3018 = vpow.pop %v3017
      %v3019 = vmul.f32 %v2338, 1.442695
      %v3020 = vpow.pop %v3019
      %v3021 = vmul.f32 %v2339, 1.442695
      %v3022 = vpow.pop %v3021
      %v3023 = vmul.f32 %v2340, 1.442695
      %v3024 = vpow.pop %v3023
      %v3025 = vmul.f32 %v2341, 1.442695
      %v3026 = vpow.pop %v3025
      %v3027 = vmul.f32 %v2342, 1.442695
      %v3028 = vpow.pop %v3027
      %v3029 = vmul.f32 %v2343, 1.442695
      %v3030 = vpow.pop %v3029
      %v3031 = vmul.f32 %v2344, 1.442695
      %v3032 = vpow.pop %v3031
      %v3033 = vmul.f32 %v2345, 1.442695
      %v3034 = vpow.pop %v3033
      %v3035 = vmul.f32 %v2346, 1.442695
      %v3036 = vpow.pop %v3035
      %v3037 = vmul.f32 %v2347, 1.442695
      %v3038 = vpow.pop %v3037
      %v3039 = vmul.f32 %v2348, 1.442695
      %v3040 = vpow.pop %v3039
      %v3041 = vmul.f32 %v2349, 1.442695
      %v3042 = vpow.pop %v3041
      %v3043 = vmul.f32 %v2350, 1.442695
      %v3044 = vpow.pop %v3043
      %v3045 = vmul.f32 %v2351, 1.442695
      %v3046 = vpow.pop %v3045
      %v3047 = vmul.f32 %v2352, 1.442695
      %v3048 = vpow.pop %v3047
      %v3049 = vmul.f32 %v2353, 1.442695
      %v3050 = vpow.pop %v3049
      %v3051 = vmul.f32 %v2354, 1.442695
      %v3052 = vpow.pop %v3051
      %v3053 = vmul.f32 %v2355, 1.442695
      %v3054 = vpow.pop %v3053
      %v3055 = vmul.f32 %v2356, 1.442695
      %v3056 = vpow.pop %v3055
      %v3057 = vmul.f32 %v2357, 1.442695
      %v3058 = vpow.pop %v3057
      %v3059 = vmul.f32 %v2358, 1.442695
      %v3060 = vpow.pop %v3059
      %v3061 = vmul.f32 %v2359, 1.442695
      %v3062 = vpow.pop %v3061
      %v3063 = vmul.f32 %v2360, 1.442695
      %v3064 = vpow.pop %v3063
      %v3065 = vmul.f32 %v2361, 1.442695
      %v3066 = vpow.pop %v3065
      %v3067 = vmul.f32 %v2362, 1.442695
      %v3068 = vpow.pop %v3067
      %v3069 = vmul.f32 %v2363, 1.442695
      %v3070 = vpow.pop %v3069
      %v3071 = vmul.f32 %v2364, 1.442695
      %v3072 = vpow.pop %v3071
      %v3073 = vmul.f32 %v2365, 1.442695
      %v3074 = vpow.pop %v3073
      %v3075 = vmul.f32 %v2366, 1.442695
      %v3076 = vpow.pop %v3075
      %v3077 = vmul.f32 %v2367, 1.442695
      %v3078 = vpow.pop %v3077
      %v3079 = vmul.f32 %v2368, 1.442695
      %v3080 = vpow.pop %v3079
      %v3081 = vmul.f32 %v2369, 1.442695
      %v3082 = vpow.pop %v3081
      %v3083 = vmul.f32 %v2370, 1.442695
      %v3084 = vpow.pop %v3083
      %v3085 = vmul.f32 %v2371, 1.442695
      %v3086 = vpow.pop %v3085
      %v3087 = vmul.f32 %v2372, 1.442695
      %v3088 = vpow.pop %v3087
      %v3089 = vmul.f32 %v2373, 1.442695
      %v3090 = vpow.pop %v3089
      %v3091 = vmul.f32 %v2374, 1.442695
      %v3092 = vpow.pop %v3091
      %v3093 = vmul.f32 %v2375, 1.442695
      %v3094 = vpow.pop %v3093
      %v3095 = vmul.f32 %v2376, 1.442695
      %v3096 = vpow.pop %v3095
      %v3097 = vmul.f32 %v2377, 1.442695
      %v3098 = vpow.pop %v3097
      %v3099 = vmul.f32 %v2378, 1.442695
      %v3100 = vpow.pop %v3099
      %v3101 = vmul.f32 %v2379, 1.442695
      %v3102 = vpow.pop %v3101
      %v3103 = vmul.f32 %v2380, 1.442695
      %v3104 = vpow.pop %v3103
      %v3105 = vmul.f32 %v2381, 1.442695
      %v3106 = vpow.pop %v3105
      %v3107 = vmul.f32 %v2382, 1.442695
      %v3108 = vpow.pop %v3107
      %v3109 = vmul.f32 %v2383, 1.442695
      %v3110 = vpow.pop %v3109
      %v3111 = vmul.f32 %v2384, 1.442695
      %v3112 = vpow.pop %v3111
      %v3113 = vmul.f32 %v2385, 1.442695
      %v3114 = vpow.pop %v3113
      %v3115 = vmul.f32 %v2386, 1.442695
      %v3116 = vpow.pop %v3115
      %v3117 = vmul.f32 %v2387, 1.442695
      %v3118 = vpow.pop %v3117
      %v3119 = vmul.f32 %v2388, 1.442695
      %v3120 = vpow.pop %v3119
      %v3121 = vmul.f32 %v2389, 1.442695
      %v3122 = vpow.pop %v3121
      %v3123 = vmul.f32 %v2390, 1.442695
      %v3124 = vpow.pop %v3123
      %v3125 = vmul.f32 %v2391, 1.442695
      %v3126 = vpow.pop %v3125
      %v3127 = vmul.f32 %v2392, 1.442695
      %v3128 = vpow.pop %v3127
      %v3129 = vmul.f32 %v2393, 1.442695
      %v3130 = vpow.pop %v3129
      %v3131 = vmul.f32 %v2394, 1.442695
      %v3132 = vpow.pop %v3131
      %v3133 = vmul.f32 %v2395, 1.442695
      %v3134 = vpow.pop %v3133
      %v3135 = vmul.f32 %v2396, 1.442695
      %v3136 = vpow.pop %v3135
      %v3137 = vmul.f32 %v2397, 1.442695
      %v3138 = vpow.pop %v3137
      %v3139 = vmul.f32 %v2398, 1.442695
      %v3140 = vpow.pop %v3139
      %v3141 = vmul.f32 %v2399, 1.442695
      %v3142 = vpow.pop %v3141
      %v3143 = vmul.f32 %v2400, 1.442695
      %v3144 = vpow.pop %v3143
      %v3145 = vmul.f32 %v2401, 1.442695
      %v3146 = vpow.pop %v3145
      %v3147 = vmul.f32 %v2402, 1.442695
      %v3148 = vpow.pop %v3147
      %v3149 = vmul.f32 %v2403, 1.442695
      %v3150 = vpow.pop %v3149
      %v3151 = vmul.f32 %v2404, 1.442695
      %v3152 = vpow.pop %v3151
      %v3153 = vmul.f32 %v2405, 1.442695
      %v3154 = vpow.pop %v3153
      %v3155 = vmul.f32 %v2406, 1.442695
      %v3156 = vpow.pop %v3155
      %v3157 = vmul.f32 %v2407, 1.442695
      %v3158 = vpow.pop %v3157
      %v3159 = vmul.f32 %v2408, 1.442695
      %v3160 = vpow.pop %v3159
      %v3161 = vmul.f32 %v2409, 1.442695
      %v3162 = vpow.pop %v3161
      %v3163 = vmul.f32 %v2410, 1.442695
      %v3164 = vpow.pop %v3163
      %v3165 = vmul.f32 %v2411, 1.442695
      %v3166 = vpow.pop %v3165
      %v3167 = vmul.f32 %v2412, 1.442695
      %v3168 = vpow.pop %v3167
      %v3169 = vmul.f32 %v2413, 1.442695
      %v3170 = vpow.pop %v3169
      %v3171 = vmul.f32 %v2414, 1.442695
      %v3172 = vpow.pop %v3171
      %v3173 = vmul.f32 %v2415, 1.442695
      %v3174 = vpow.pop %v3173
      %v3175 = vmul.f32 %v2416, 1.442695
      %v3176 = vpow.pop %v3175
      %v3177 = vmul.f32 %v2417, 1.442695
      %v3178 = vpow.pop %v3177
      %v3179 = vmul.f32 %v2418, 1.442695
      %v3180 = vpow.pop %v3179
      %v3181 = vmul.f32 %v2419, 1.442695
      %v3182 = vpow.pop %v3181
      %v3183 = vmul.f32 %v2420, 1.442695
      %v3184 = vpow.pop %v3183
      %v3185 = vmul.f32 %v2421, 1.442695
      %v3186 = vpow.pop %v3185
      %v3187 = vmul.f32 %v2422, 1.442695
      %v3188 = vpow.pop %v3187
      %v3189 = vmul.f32 %v2423, 1.442695
      %v3190 = vpow.pop %v3189
      %v3191 = vmul.f32 %v2424, 1.442695
      %v3192 = vpow.pop %v3191
      %v3193 = vmul.f32 %v2425, 1.442695
      %v3194 = vpow.pop %v3193
      %v3195 = vmul.f32 %v2426, 1.442695
      %v3196 = vpow.pop %v3195
      %v3197 = vmul.f32 %v2427, 1.442695
      %v3198 = vpow.pop %v3197
      %v3199 = vmul.f32 %v2428, 1.442695
      %v3200 = vpow.pop %v3199
      %v3201 = vmul.f32 %v2429, 1.442695
      %v3202 = vpow.pop %v3201
      %v3203 = vmul.f32 %v2430, 1.442695
      %v3204 = vpow.pop %v3203
      %v3205 = vmul.f32 %v2431, 1.442695
      %v3206 = vpow.pop %v3205
      %v3207 = vmul.f32 %v2432, 1.442695
      %v3208 = vpow.pop %v3207
      %v3209 = vmul.f32 %v2433, 1.442695
      %v3210 = vpow.pop %v3209
      %v3211 = vmul.f32 %v2434, 1.442695
      %v3212 = vpow.pop %v3211
      %v3213 = vmul.f32 %v2435, 1.442695
      %v3214 = vpow.pop %v3213
      %v3215 = vmul.f32 %v2436, 1.442695
      %v3216 = vpow.pop %v3215
      %v3217 = vmul.f32 %v2437, 1.442695
      %v3218 = vpow.pop %v3217
      %v3219 = vmul.f32 %v2438, 1.442695
      %v3220 = vpow.pop %v3219
      %v3221 = vmul.f32 %v2439, 1.442695
      %v3222 = vpow.pop %v3221
      %v3223 = vmul.f32 %v2440, 1.442695
      %v3224 = vpow.pop %v3223
      %v3225 = vmul.f32 %v2441, 1.442695
      %v3226 = vpow.pop %v3225
      %v3227 = vmul.f32 %v2442, 1.442695
      %v3228 = vpow.pop %v3227
      %v3229 = vmul.f32 %v2443, 1.442695
      %v3230 = vpow.pop %v3229
      %v3231 = vmul.f32 %v2444, 1.442695
      %v3232 = vpow.pop %v3231
      %v3233 = vmul.f32 %v2445, 1.442695
      %v3234 = vpow.pop %v3233
      %v3235 = vmul.f32 %v2446, 1.442695
      %v3236 = vpow.pop %v3235
      %v3237 = vmul.f32 %v2447, 1.442695
      %v3238 = vpow.pop %v3237
      %v3239 = vmul.f32 %v2448, 1.442695
      %v3240 = vpow.pop %v3239
      %v3241 = vmul.f32 %v2449, 1.442695
      %v3242 = vpow.pop %v3241
      %v3243 = vmul.f32 %v2450, 1.442695
      %v3244 = vpow.pop %v3243
      %v3245 = vmul.f32 %v2451, 1.442695
      %v3246 = vpow.pop %v3245
      %v3247 = vmul.f32 %v2452, 1.442695
      %v3248 = vpow.pop %v3247
      %v3249 = vmul.f32 %v2453, 1.442695
      %v3250 = vpow.pop %v3249
      %v3251 = vmul.f32 %v2454, 1.442695
      %v3252 = vpow.pop %v3251
      %v3253 = vmul.f32 %v2455, 1.442695
      %v3254 = vpow.pop %v3253
      %v3255 = vmul.f32 %v2456, 1.442695
      %v3256 = vpow.pop %v3255
      %v3257 = vmul.f32 %v2457, 1.442695
      %v3258 = vpow.pop %v3257
      %v3259 = vmul.f32 %v2458, 1.442695
      %v3260 = vpow.pop %v3259
      %v3261 = vmul.f32 %v2459, 1.442695
      %v3262 = vpow.pop %v3261
      %v3263 = vmul.f32 %v2460, 1.442695
      %v3264 = vpow.pop %v3263
      %v3265 = vmul.f32 %v2461, 1.442695
      %v3266 = vpow.pop %v3265
      %v3267 = vmul.f32 %v2462, 1.442695
      %v3268 = vpow.pop %v3267
      %v3269 = vmul.f32 %v2463, 1.442695
      %v3270 = vpow.pop %v3269
      %v3271 = vmul.f32 %v2464, 1.442695
      %v3272 = vpow.pop %v3271
      %v3273 = vmul.f32 %v2465, 1.442695
      %v3274 = vpow.pop %v3273
      %v3275 = vmul.f32 %v2466, 1.442695
      %v3276 = vpow.pop %v3275
      %v3277 = vmul.f32 %v2467, 1.442695
      %v3278 = vpow.pop %v3277
      %v3279 = vmul.f32 %v2468, 1.442695
      %v3280 = vpow.pop %v3279
      %v3281 = vmul.f32 %v2469, 1.442695
      %v3282 = vpow.pop %v3281
      %v3283 = vmul.f32 %v2470, 1.442695
      %v3284 = vpow.pop %v3283
      %v3285 = vmul.f32 %v2471, 1.442695
      %v3286 = vpow.pop %v3285
      %v3287 = vmul.f32 %v2472, 1.442695
      %v3288 = vpow.pop %v3287
      %v3289 = vmul.f32 %v2473, 1.442695
      %v3290 = vpow.pop %v3289
      %v3291 = vmul.f32 %v2474, 1.442695
      %v3292 = vpow.pop %v3291
      %v3293 = vmul.f32 %v2475, 1.442695
      %v3294 = vpow.pop %v3293
      %v3295 = vmul.f32 %v2476, 1.442695
      %v3296 = vpow.pop %v3295
      %v3297 = vmul.f32 %v2477, 1.442695
      %v3298 = vpow.pop %v3297
      %v3299 = vmul.f32 %v2478, 1.442695
      %v3300 = vpow.pop %v3299
      %v3301 = vmul.f32 %v2479, 1.442695
      %v3302 = vpow.pop %v3301
      %v3303 = vmul.f32 %v2480, 1.442695
      %v3304 = vpow.pop %v3303
      %v3305 = vmul.f32 %v2481, 1.442695
      %v3306 = vpow.pop %v3305
      %v3307 = vmul.f32 %v2482, 1.442695
      %v3308 = vpow.pop %v3307
      %v3309 = vmul.f32 %v2483, 1.442695
      %v3310 = vpow.pop %v3309
      %v3311 = vmul.f32 %v2484, 1.442695
      %v3312 = vpow.pop %v3311
      %v3313 = vmul.f32 %v2485, 1.442695
      %v3314 = vpow.pop %v3313
      %v3315 = vmul.f32 %v2486, 1.442695
      %v3316 = vpow.pop %v3315
      %v3317 = vmul.f32 %v2487, 1.442695
      %v3318 = vpow.pop %v3317
      %v3319 = vmul.f32 %v2488, 1.442695
      %v3320 = vpow.pop %v3319
      %v3321 = vmul.f32 %v2489, 1.442695
      %v3322 = vpow.pop %v3321
      %v3323 = vmul.f32 %v2490, 1.442695
      %v3324 = vpow.pop %v3323
      %v3325 = vmul.f32 %v2491, 1.442695
      %v3326 = vpow.pop %v3325
      %v3327 = vmul.f32 %v2492, 1.442695
      %v3328 = vpow.pop %v3327
      %v3329 = vmul.f32 %v2493, 1.442695
      %v3330 = vpow.pop %v3329
      %v3331 = vmul.f32 %v2494, 1.442695
      %v3332 = vpow.pop %v3331
      %v3333 = vmul.f32 %v2495, 1.442695
      %v3334 = vpow.pop %v3333
      %v3335 = vmul.f32 %v2496, 1.442695
      %v3336 = vpow.pop %v3335
      %v3337 = vmul.f32 %v2497, 1.442695
      %v3338 = vpow.pop %v3337
      %v3339 = vmul.f32 %v2498, 1.442695
      %v3340 = vpow.pop %v3339
      %v3341 = vmul.f32 %v2499, 1.442695
      %v3342 = vpow.pop %v3341
      %v3343 = vmul.f32 %v2500, 1.442695
      %v3344 = vpow.pop %v3343
      %v3345 = vmul.f32 %v2501, 1.442695
      %v3346 = vpow.pop %v3345
      %v3347 = vmul.f32 %v2502, 1.442695
      %v3348 = vpow.pop %v3347
      %v3349 = vmul.f32 %v2503, 1.442695
      %v3350 = vpow.pop %v3349
      %v3351 = vmul.f32 %v2504, 1.442695
      %v3352 = vpow.pop %v3351
      %v3353 = vmul.f32 %v2505, 1.442695
      %v3354 = vpow.pop %v3353
      %v3355 = vmul.f32 %v2506, 1.442695
      %v3356 = vpow.pop %v3355
      %v3357 = vmul.f32 %v2507, 1.442695
      %v3358 = vpow.pop %v3357
      %v3359 = vmul.f32 %v2508, 1.442695
      %v3360 = vpow.pop %v3359
      %v3361 = vmul.f32 %v2509, 1.442695
      %v3362 = vpow.pop %v3361
      %v3363 = vmul.f32 %v2510, 1.442695
      %v3364 = vpow.pop %v3363
      %v3365 = vmul.f32 %v2511, 1.442695
      %v3366 = vpow.pop %v3365
      %v3367 = vmul.f32 %v2512, 1.442695
      %v3368 = vpow.pop %v3367
      %v3369 = vmul.f32 %v2513, 1.442695
      %v3370 = vpow.pop %v3369
      %v3371 = vmul.f32 %v2514, 1.442695
      %v3372 = vpow.pop %v3371
      %v3373 = vmul.f32 %v2515, 1.442695
      %v3374 = vpow.pop %v3373
      %v3375 = vmul.f32 %v2516, 1.442695
      %v3376 = vpow.pop %v3375
      %v3377 = vmul.f32 %v2517, 1.442695
      %v3378 = vpow.pop %v3377
      %v3379 = vmul.f32 %v2518, 1.442695
      %v3380 = vpow.pop %v3379
      %v3381 = vmul.f32 %v2519, 1.442695
      %v3382 = vpow.pop %v3381
      %v3383 = vmul.f32 %v2520, 1.442695
      %v3384 = vpow.pop %v3383
      %v3385 = vmul.f32 %v2521, 1.442695
      %v3386 = vpow.pop %v3385
      %v3387 = vmul.f32 %v2522, 1.442695
      %v3388 = vpow.pop %v3387
      %v3389 = vmul.f32 %v2523, 1.442695
      %v3390 = vpow.pop %v3389
      %v3391 = vmul.f32 %v2524, 1.442695
      %v3392 = vpow.pop %v3391
      %v3393 = vmul.f32 %v2525, 1.442695
      %v3394 = vpow.pop %v3393
      %v3395 = vmul.f32 %v2526, 1.442695
      %v3396 = vpow.pop %v3395
      %v3397 = vmul.f32 %v2527, 1.442695
      %v3398 = vpow.pop %v3397
      %v3399 = vmul.f32 %v2528, 1.442695
      %v3400 = vpow.pop %v3399
      %v3401 = vmul.f32 %v2529, 1.442695
      %v3402 = vpow.pop %v3401
      %v3403 = vmul.f32 %v2530, 1.442695
      %v3404 = vpow.pop %v3403
      %v3405 = vmul.f32 %v2531, 1.442695
      %v3406 = vpow.pop %v3405
      %v3407 = vmul.f32 %v2532, 1.442695
      %v3408 = vpow.pop %v3407
      %v3409 = vmul.f32 %v2533, 1.442695
      %v3410 = vpow.pop %v3409
      %v3411 = vmul.f32 %v2534, 1.442695
      %v3412 = vpow.pop %v3411
      %v3413 = vmul.f32 %v2535, 1.442695
      %v3414 = vpow.pop %v3413
      %v3415 = vmul.f32 %v2536, 1.442695
      %v3416 = vpow.pop %v3415
      %v3417 = vmul.f32 %v2537, 1.442695
      %v3418 = vpow.pop %v3417
      %v3419 = vmul.f32 %v2538, 1.442695
      %v3420 = vpow.pop %v3419
      %v3421 = vmul.f32 %v2539, 1.442695
      %v3422 = vpow.pop %v3421
      %v3423 = vmul.f32 %v2540, 1.442695
      %v3424 = vpow.pop %v3423
      %v3425 = vmul.f32 %v2541, 1.442695
      %v3426 = vpow.pop %v3425
      %v3427 = vmul.f32 %v2542, 1.442695
      %v3428 = vpow.pop %v3427
      %v3429 = vmul.f32 %v2543, 1.442695
      %v3430 = vpow.pop %v3429
      %v3431 = vmul.f32 %v2544, 1.442695
      %v3432 = vpow.pop %v3431
      %v3433 = vmul.f32 %v2545, 1.442695
      %v3434 = vpow.pop %v3433
      %v3435 = vmul.f32 %v2546, 1.442695
      %v3436 = vpow.pop %v3435
      %v3437 = vmul.f32 %v2547, 1.442695
      %v3438 = vpow.pop %v3437
      %v3439 = vmul.f32 %v2548, 1.442695
      %v3440 = vpow.pop %v3439
      %v3441 = vmul.f32 %v2549, 1.442695
      %v3442 = vpow.pop %v3441
      %v3443 = vmul.f32 %v2550, 1.442695
      %v3444 = vpow.pop %v3443
      %v3445 = vmul.f32 %v2551, 1.442695
      %v3446 = vpow.pop %v3445
      %v3447 = vmul.f32 %v2552, 1.442695
      %v3448 = vpow.pop %v3447
      %v3449 = vmul.f32 %v2553, 1.442695
      %v3450 = vpow.pop %v3449
      %v3451 = vmul.f32 %v2554, 1.442695
      %v3452 = vpow.pop %v3451
      %v3453 = vmul.f32 %v2555, 1.442695
      %v3454 = vpow.pop %v3453
      %v3455 = vmul.f32 %v2556, 1.442695
      %v3456 = vpow.pop %v3455
      %v3457 = vmul.f32 %v2557, 1.442695
      %v3458 = vpow.pop %v3457
      %v3459 = vmul.f32 %v2558, 1.442695
      %v3460 = vpow.pop %v3459
      %v3461 = vmul.f32 %v2559, 1.442695
      %v3462 = vpow.pop %v3461
      %v3463 = vmul.f32 %v2560, 1.442695
      %v3464 = vpow.pop %v3463
      %v3465 = vmul.f32 %v2561, 1.442695
      %v3466 = vpow.pop %v3465
      %v3467 = vmul.f32 %v2562, 1.442695
      %v3468 = vpow.pop %v3467
      %v3469 = vmul.f32 %v2563, 1.442695
      %v3470 = vpow.pop %v3469
      %v3471 = vmul.f32 %v2564, 1.442695
      %v3472 = vpow.pop %v3471
      %v3473 = vmul.f32 %v2565, 1.442695
      %v3474 = vpow.pop %v3473
      %v3475 = vmul.f32 %v2566, 1.442695
      %v3476 = vpow.pop %v3475
      %v3477 = vmul.f32 %v2567, 1.442695
      %v3478 = vpow.pop %v3477
      %v3479 = vmul.f32 %v2568, 1.442695
      %v3480 = vpow.pop %v3479
      %v3481 = vmul.f32 %v2569, 1.442695
      %v3482 = vpow.pop %v3481
      %v3483 = vmul.f32 %v2570, 1.442695
      %v3484 = vpow.pop %v3483
      %v3485 = vmul.f32 %v2571, 1.442695
      %v3486 = vpow.pop %v3485
      %v3487 = vmul.f32 %v2572, 1.442695
      %v3488 = vpow.pop %v3487
      %v3489 = vmul.f32 %v2573, 1.442695
      %v3490 = vpow.pop %v3489
      %v3491 = vmul.f32 %v2574, 1.442695
      %v3492 = vpow.pop %v3491
      %v3493 = vmul.f32 %v2575, 1.442695
      %v3494 = vpow.pop %v3493
      %v3495 = vmul.f32 %v2576, 1.442695
      %v3496 = vpow.pop %v3495
      %v3497 = vmul.f32 %v2577, 1.442695
      %v3498 = vpow.pop %v3497
      %v3499 = vmul.f32 %v2578, 1.442695
      %v3500 = vpow.pop %v3499
      %v3501 = vmul.f32 %v2579, 1.442695
      %v3502 = vpow.pop %v3501
      %v3503 = vmul.f32 %v2580, 1.442695
      %v3504 = vpow.pop %v3503
      %v3505 = vmul.f32 %v2581, 1.442695
      %v3506 = vpow.pop %v3505
      %v3507 = vmul.f32 %v2582, 1.442695
      %v3508 = vpow.pop %v3507
      %v3509 = vmul.f32 %v2583, 1.442695
      %v3510 = vpow.pop %v3509
      %v3511 = vmul.f32 %v2584, 1.442695
      %v3512 = vpow.pop %v3511
      %v3513 = vmul.f32 %v2585, 1.442695
      %v3514 = vpow.pop %v3513
      %v3515 = vmul.f32 %v2586, 1.442695
      %v3516 = vpow.pop %v3515
      %v3517 = vmul.f32 %v2587, 1.442695
      %v3518 = vpow.pop %v3517
      %v3519 = vmul.f32 %v2588, 1.442695
      %v3520 = vpow.pop %v3519
      %v3521 = vmul.f32 %v2589, 1.442695
      %v3522 = vpow.pop %v3521
      %v3523 = vmul.f32 %v2590, 1.442695
      %v3524 = vpow.pop %v3523
      %v3525 = vmul.f32 %v2591, 1.442695
      %v3526 = vpow.pop %v3525
      %v3527 = vmul.f32 %v2592, 1.442695
      %v3528 = vpow.pop %v3527
      %v3529 = vmul.f32 %v2593, 1.442695
      %v3530 = vpow.pop %v3529
      %v3531 = vmul.f32 %v2594, 1.442695
      %v3532 = vpow.pop %v3531
      %v3533 = vmul.f32 %v2595, 1.442695
      %v3534 = vpow.pop %v3533
      %v3535 = vmul.f32 %v2596, 1.442695
      %v3536 = vpow.pop %v3535
      %v3537 = vmul.f32 %v2597, 1.442695
      %v3538 = vpow.pop %v3537
      %v3539 = vmul.f32 %v2598, 1.442695
      %v3540 = vpow.pop %v3539
      %v3541 = vmul.f32 %v2599, 1.442695
      %v3542 = vpow.pop %v3541
      %v3543 = vmul.f32 %v2600, 1.442695
      %v3544 = vpow.pop %v3543
      %v3545 = vmul.f32 %v2601, 1.442695
      %v3546 = vpow.pop %v3545
      %v3547 = vmul.f32 %v2602, 1.442695
      %v3548 = vpow.pop %v3547
      %v3549 = vmul.f32 %v2603, 1.442695
      %v3550 = vpow.pop %v3549
      %v3551 = vmul.f32 %v2604, 1.442695
      %v3552 = vpow.pop %v3551
      %v3553 = vmul.f32 %v2605, 1.442695
      %v3554 = vpow.pop %v3553
      %v3555 = vmul.f32 %v2606, 1.442695
      %v3556 = vpow.pop %v3555
      %v3557 = vmul.f32 %v2607, 1.442695
      %v3558 = vpow.pop %v3557
      %v3559 = vmul.f32 %v2608, 1.442695
      %v3560 = vpow.pop %v3559
      %v3561 = vmul.f32 %v2609, 1.442695
      %v3562 = vpow.pop %v3561
      %v3563 = vmul.f32 %v2610, 1.442695
      %v3564 = vpow.pop %v3563
      %v3565 = vmul.f32 %v2611, 1.442695
      %v3566 = vpow.pop %v3565
      %v3567 = vmul.f32 %v2612, 1.442695
      %v3568 = vpow.pop %v3567
      %v3569 = vmul.f32 %v2613, 1.442695
      %v3570 = vpow.pop %v3569
      %v3571 = vmul.f32 %v2614, 1.442695
      %v3572 = vpow.pop %v3571
      %v3573 = vmul.f32 %v2615, 1.442695
      %v3574 = vpow.pop %v3573
      %v3575 = vmul.f32 %v2616, 1.442695
      %v3576 = vpow.pop %v3575
      %v3577 = vmul.f32 %v2617, 1.442695
      %v3578 = vpow.pop %v3577
      %v3579 = vmul.f32 %v2618, 1.442695
      %v3580 = vpow.pop %v3579
      %v3581 = vmul.f32 %v2619, 1.442695
      %v3582 = vpow.pop %v3581
      %v3583 = vmul.f32 %v2620, 1.442695
      %v3584 = vpow.pop %v3583
      %v3585 = vmul.f32 %v2621, 1.442695
      %v3586 = vpow.pop %v3585
      %v3587 = vmul.f32 %v2622, 1.442695
      %v3588 = vpow.pop %v3587
      %v3589 = vmul.f32 %v2623, 1.442695
      %v3590 = vpow.pop %v3589
      %v3591 = vmul.f32 %v2624, 1.442695
      %v3592 = vpow.pop %v3591
      %v3593 = vmul.f32 %v2625, 1.442695
      %v3594 = vpow.pop %v3593
      %v3595 = vmul.f32 %v2626, 1.442695
      %v3596 = vpow.pop %v3595
      %v3597 = vmul.f32 %v2627, 1.442695
      %v3598 = vpow.pop %v3597
      %v3599 = vmul.f32 %v2628, 1.442695
      %v3600 = vpow.pop %v3599
      %v3601 = vmul.f32 %v2629, 1.442695
      %v3602 = vpow.pop %v3601
      %v3603 = vmul.f32 %v2630, 1.442695
      %v3604 = vpow.pop %v3603
      %v3605 = vmul.f32 %v2631, 1.442695
      %v3606 = vpow.pop %v3605
      %v3607 = vmul.f32 %v2632, 1.442695
      %v3608 = vpow.pop %v3607
      %v3609 = vmul.f32 %v2633, 1.442695
      %v3610 = vpow.pop %v3609
      %v3611 = vmul.f32 %v2634, 1.442695
      %v3612 = vpow.pop %v3611
      %v3613 = vmul.f32 %v2635, 1.442695
      %v3614 = vpow.pop %v3613
      %v3615 = vmul.f32 %v2636, 1.442695
      %v3616 = vpow.pop %v3615
      %v3617 = vmul.f32 %v2637, 1.442695
      %v3618 = vpow.pop %v3617
      %v3619 = vmul.f32 %v2638, 1.442695
      %v3620 = vpow.pop %v3619
      %v3621 = vmul.f32 %v2639, 1.442695
      %v3622 = vpow.pop %v3621
      %v3623 = vmul.f32 %v2640, 1.442695
      %v3624 = vpow.pop %v3623
      %v3625 = vmul.f32 %v2641, 1.442695
      %v3626 = vpow.pop %v3625
      %v3627 = vmul.f32 %v2642, 1.442695
      %v3628 = vpow.pop %v3627
      %v3629 = vmul.f32 %v2643, 1.442695
      %v3630 = vpow.pop %v3629
      %v3631 = vmul.f32 %v2644, 1.442695
      %v3632 = vpow.pop %v3631
      %v3633 = vmul.f32 %v2645, 1.442695
      %v3634 = vpow.pop %v3633
      %v3635 = vmul.f32 %v2646, 1.442695
      %v3636 = vpow.pop %v3635
      %v3637 = vmul.f32 %v2647, 1.442695
      %v3638 = vpow.pop %v3637
      %v3639 = vmul.f32 %v2648, 1.442695
      %v3640 = vpow.pop %v3639
      %v3641 = vmul.f32 %v2649, 1.442695
      %v3642 = vpow.pop %v3641
      %v3643 = vmul.f32 %v2650, 1.442695
      %v3644 = vpow.pop %v3643
      %v3645 = vmul.f32 %v2651, 1.442695
      %v3646 = vpow.pop %v3645
      %v3647 = vmul.f32 %v2652, 1.442695
      %v3648 = vpow.pop %v3647
      %v3649 = vmul.f32 %v2653, 1.442695
      %v3650 = vpow.pop %v3649
      %v3651 = vmul.f32 %v2654, 1.442695
      %v3652 = vpow.pop %v3651
      %v3653 = vmul.f32 %v2655, 1.442695
      %v3654 = vpow.pop %v3653
      %v3655 = vmul.f32 %v2656, 1.442695
      %v3656 = vpow.pop %v3655
      %v3657 = vmul.f32 %v2657, 1.442695
      %v3658 = vpow.pop %v3657
      %v3659 = vmul.f32 %v2658, 1.442695
      %v3660 = vpow.pop %v3659
      %v3661 = vmul.f32 %v2659, 1.442695
      %v3662 = vpow.pop %v3661
      %v3663 = vmul.f32 %v2660, 1.442695
      %v3664 = vpow.pop %v3663
      %v3665 = vmul.f32 %v2661, 1.442695
      %v3666 = vpow.pop %v3665
      %v3667 = vmul.f32 %v2662, 1.442695
      %v3668 = vpow.pop %v3667
      %v3669 = vmul.f32 %v2663, 1.442695
      %v3670 = vpow.pop %v3669
      %v3671 = vmul.f32 %v2664, 1.442695
      %v3672 = vpow.pop %v3671
      %v3673 = vmul.f32 %v2665, 1.442695
      %v3674 = vpow.pop %v3673
      %v3675 = vmul.f32 %v2666, 1.442695
      %v3676 = vpow.pop %v3675
      %v3677 = vmul.f32 %v2667, 1.442695
      %v3678 = vpow.pop %v3677
      %v3679 = vmul.f32 %v2668, 1.442695
      %v3680 = vpow.pop %v3679
      %v3681 = vmul.f32 %v2669, 1.442695
      %v3682 = vpow.pop %v3681
      %v3683 = vmul.f32 %v2670, 1.442695
      %v3684 = vpow.pop %v3683
      %v3685 = vmul.f32 %v2671, 1.442695
      %v3686 = vpow.pop %v3685
      %v3687 = vmul.f32 %v2672, 1.442695
      %v3688 = vpow.pop %v3687
      %v3689 = vmul.f32 %v2673, 1.442695
      %v3690 = vpow.pop %v3689
      %v3691 = vmul.f32 %v2674, 1.442695
      %v3692 = vpow.pop %v3691
      %v3693 = vmul.f32 %v2675, 1.442695
      %v3694 = vpow.pop %v3693
      %v3695 = vmul.f32 %v2676, 1.442695
      %v3696 = vpow.pop %v3695
      %v3697 = vmul.f32 %v2677, 1.442695
      %v3698 = vpow.pop %v3697
      %v3699 = vmul.f32 %v2678, 1.442695
      %v3700 = vpow.pop %v3699
      %v3701 = vmul.f32 %v2679, 1.442695
      %v3702 = vpow.pop %v3701
      %v3703 = vmul.f32 %v2680, 1.442695
      %v3704 = vpow.pop %v3703
      %v3705 = vsel %vm632, %v2682, 0.0
      %3706 = vadd.xlane.f32.xlu0 %v3705
      %v3707 = vpop.xlane.xlu0 %3706
      %v3708 = vsel %vm632, %v2684, 0.0
      %3709 = vadd.xlane.f32.xlu0 %v3708
      %v3710 = vpop.xlane.xlu0 %3709
      %v3711 = vsel %vm632, %v2686, 0.0
      %3712 = vadd.xlane.f32.xlu0 %v3711
      %v3713 = vpop.xlane.xlu0 %3712
      %v3714 = vsel %vm632, %v2688, 0.0
      %3715 = vadd.xlane.f32.xlu0 %v3714
      %v3716 = vpop.xlane.xlu0 %3715
      %v3717 = vsel %vm632, %v2690, 0.0
      %3718 = vadd.xlane.f32.xlu0 %v3717
      %v3719 = vpop.xlane.xlu0 %3718
      %v3720 = vsel %vm632, %v2692, 0.0
      %3721 = vadd.xlane.f32.xlu0 %v3720
      %v3722 = vpop.xlane.xlu0 %3721
      %v3723 = vsel %vm632, %v2694, 0.0
      %3724 = vadd.xlane.f32.xlu0 %v3723
      %v3725 = vpop.xlane.xlu0 %3724
      %v3726 = vsel %vm632, %v2696, 0.0
      %3727 = vadd.xlane.f32.xlu0 %v3726
      %v3728 = vpop.xlane.xlu0 %3727
      %v3729 = vsel %vm632, %v2698, 0.0
      %3730 = vadd.xlane.f32.xlu0 %v3729
      %v3731 = vpop.xlane.xlu0 %3730
      %v3732 = vsel %vm632, %v2700, 0.0
      %3733 = vadd.xlane.f32.xlu0 %v3732
      %v3734 = vpop.xlane.xlu0 %3733
      %v3735 = vsel %vm632, %v2702, 0.0
      %3736 = vadd.xlane.f32.xlu0 %v3735
      %v3737 = vpop.xlane.xlu0 %3736
      %v3738 = vsel %vm632, %v2704, 0.0
      %3739 = vadd.xlane.f32.xlu0 %v3738
      %v3740 = vpop.xlane.xlu0 %3739
      %v3741 = vsel %vm632, %v2706, 0.0
      %3742 = vadd.xlane.f32.xlu0 %v3741
      %v3743 = vpop.xlane.xlu0 %3742
      %v3744 = vsel %vm632, %v2708, 0.0
      %3745 = vadd.xlane.f32.xlu0 %v3744
      %v3746 = vpop.xlane.xlu0 %3745
      %v3747 = vsel %vm632, %v2710, 0.0
      %3748 = vadd.xlane.f32.xlu0 %v3747
      %v3749 = vpop.xlane.xlu0 %3748
      %v3750 = vsel %vm632, %v2712, 0.0
      %3751 = vadd.xlane.f32.xlu0 %v3750
      %v3752 = vpop.xlane.xlu0 %3751
      %v3753 = vsel %vm632, %v2714, 0.0
      %3754 = vadd.xlane.f32.xlu0 %v3753
      %v3755 = vpop.xlane.xlu0 %3754
      %v3756 = vsel %vm632, %v2716, 0.0
      %3757 = vadd.xlane.f32.xlu0 %v3756
      %v3758 = vpop.xlane.xlu0 %3757
      %v3759 = vsel %vm632, %v2718, 0.0
      %3760 = vadd.xlane.f32.xlu0 %v3759
      %v3761 = vpop.xlane.xlu0 %3760
      %v3762 = vsel %vm632, %v2720, 0.0
      %3763 = vadd.xlane.f32.xlu0 %v3762
      %v3764 = vpop.xlane.xlu0 %3763
      %v3765 = vsel %vm632, %v2722, 0.0
      %3766 = vadd.xlane.f32.xlu0 %v3765
      %v3767 = vpop.xlane.xlu0 %3766
      %v3768 = vsel %vm632, %v2724, 0.0
      %3769 = vadd.xlane.f32.xlu0 %v3768
      %v3770 = vpop.xlane.xlu0 %3769
      %v3771 = vsel %vm632, %v2726, 0.0
      %3772 = vadd.xlane.f32.xlu0 %v3771
      %v3773 = vpop.xlane.xlu0 %3772
      %v3774 = vsel %vm632, %v2728, 0.0
      %3775 = vadd.xlane.f32.xlu0 %v3774
      %v3776 = vpop.xlane.xlu0 %3775
      %v3777 = vsel %vm632, %v2730, 0.0
      %3778 = vadd.xlane.f32.xlu0 %v3777
      %v3779 = vpop.xlane.xlu0 %3778
      %v3780 = vsel %vm632, %v2732, 0.0
      %3781 = vadd.xlane.f32.xlu0 %v3780
      %v3782 = vpop.xlane.xlu0 %3781
      %v3783 = vsel %vm632, %v2734, 0.0
      %3784 = vadd.xlane.f32.xlu0 %v3783
      %v3785 = vpop.xlane.xlu0 %3784
      %v3786 = vsel %vm632, %v2736, 0.0
      %3787 = vadd.xlane.f32.xlu0 %v3786
      %v3788 = vpop.xlane.xlu0 %3787
      %v3789 = vsel %vm632, %v2738, 0.0
      %3790 = vadd.xlane.f32.xlu0 %v3789
      %v3791 = vpop.xlane.xlu0 %3790
      %v3792 = vsel %vm632, %v2740, 0.0
      %3793 = vadd.xlane.f32.xlu0 %v3792
      %v3794 = vpop.xlane.xlu0 %3793
      %v3795 = vsel %vm632, %v2742, 0.0
      %3796 = vadd.xlane.f32.xlu0 %v3795
      %v3797 = vpop.xlane.xlu0 %3796
      %v3798 = vsel %vm632, %v2744, 0.0
      %3799 = vadd.xlane.f32.xlu0 %v3798
      %v3800 = vpop.xlane.xlu0 %3799
      %v3801 = vsel %vm632, %v2746, 0.0
      %3802 = vadd.xlane.f32.xlu0 %v3801
      %v3803 = vpop.xlane.xlu0 %3802
      %v3804 = vsel %vm632, %v2748, 0.0
      %3805 = vadd.xlane.f32.xlu0 %v3804
      %v3806 = vpop.xlane.xlu0 %3805
      %v3807 = vsel %vm632, %v2750, 0.0
      %3808 = vadd.xlane.f32.xlu0 %v3807
      %v3809 = vpop.xlane.xlu0 %3808
      %v3810 = vsel %vm632, %v2752, 0.0
      %3811 = vadd.xlane.f32.xlu0 %v3810
      %v3812 = vpop.xlane.xlu0 %3811
      %v3813 = vsel %vm632, %v2754, 0.0
      %3814 = vadd.xlane.f32.xlu0 %v3813
      %v3815 = vpop.xlane.xlu0 %3814
      %v3816 = vsel %vm632, %v2756, 0.0
      %3817 = vadd.xlane.f32.xlu0 %v3816
      %v3818 = vpop.xlane.xlu0 %3817
      %v3819 = vsel %vm632, %v2758, 0.0
      %3820 = vadd.xlane.f32.xlu0 %v3819
      %v3821 = vpop.xlane.xlu0 %3820
      %v3822 = vsel %vm632, %v2760, 0.0
      %3823 = vadd.xlane.f32.xlu0 %v3822
      %v3824 = vpop.xlane.xlu0 %3823
      %v3825 = vsel %vm632, %v2762, 0.0
      %3826 = vadd.xlane.f32.xlu0 %v3825
      %v3827 = vpop.xlane.xlu0 %3826
      %v3828 = vsel %vm632, %v2764, 0.0
      %3829 = vadd.xlane.f32.xlu0 %v3828
      %v3830 = vpop.xlane.xlu0 %3829
      %v3831 = vsel %vm632, %v2766, 0.0
      %3832 = vadd.xlane.f32.xlu0 %v3831
      %v3833 = vpop.xlane.xlu0 %3832
      %v3834 = vsel %vm632, %v2768, 0.0
      %3835 = vadd.xlane.f32.xlu0 %v3834
      %v3836 = vpop.xlane.xlu0 %3835
      %v3837 = vsel %vm632, %v2770, 0.0
      %3838 = vadd.xlane.f32.xlu0 %v3837
      %v3839 = vpop.xlane.xlu0 %3838
      %v3840 = vsel %vm632, %v2772, 0.0
      %3841 = vadd.xlane.f32.xlu0 %v3840
      %v3842 = vpop.xlane.xlu0 %3841
      %v3843 = vsel %vm632, %v2774, 0.0
      %3844 = vadd.xlane.f32.xlu0 %v3843
      %v3845 = vpop.xlane.xlu0 %3844
      %v3846 = vsel %vm632, %v2776, 0.0
      %3847 = vadd.xlane.f32.xlu0 %v3846
      %v3848 = vpop.xlane.xlu0 %3847
      %v3849 = vsel %vm632, %v2778, 0.0
      %3850 = vadd.xlane.f32.xlu0 %v3849
      %v3851 = vpop.xlane.xlu0 %3850
      %v3852 = vsel %vm632, %v2780, 0.0
      %3853 = vadd.xlane.f32.xlu0 %v3852
      %v3854 = vpop.xlane.xlu0 %3853
      %v3855 = vsel %vm632, %v2782, 0.0
      %3856 = vadd.xlane.f32.xlu0 %v3855
      %v3857 = vpop.xlane.xlu0 %3856
      %v3858 = vsel %vm632, %v2784, 0.0
      %3859 = vadd.xlane.f32.xlu0 %v3858
      %v3860 = vpop.xlane.xlu0 %3859
      %v3861 = vsel %vm632, %v2786, 0.0
      %3862 = vadd.xlane.f32.xlu0 %v3861
      %v3863 = vpop.xlane.xlu0 %3862
      %v3864 = vsel %vm632, %v2788, 0.0
      %3865 = vadd.xlane.f32.xlu0 %v3864
      %v3866 = vpop.xlane.xlu0 %3865
      %v3867 = vsel %vm632, %v2790, 0.0
      %3868 = vadd.xlane.f32.xlu0 %v3867
      %v3869 = vpop.xlane.xlu0 %3868
      %v3870 = vsel %vm632, %v2792, 0.0
      %3871 = vadd.xlane.f32.xlu0 %v3870
      %v3872 = vpop.xlane.xlu0 %3871
      %v3873 = vsel %vm632, %v2794, 0.0
      %3874 = vadd.xlane.f32.xlu0 %v3873
      %v3875 = vpop.xlane.xlu0 %3874
      %v3876 = vsel %vm632, %v2796, 0.0
      %3877 = vadd.xlane.f32.xlu0 %v3876
      %v3878 = vpop.xlane.xlu0 %3877
      %v3879 = vsel %vm632, %v2798, 0.0
      %3880 = vadd.xlane.f32.xlu0 %v3879
      %v3881 = vpop.xlane.xlu0 %3880
      %v3882 = vsel %vm632, %v2800, 0.0
      %3883 = vadd.xlane.f32.xlu0 %v3882
      %v3884 = vpop.xlane.xlu0 %3883
      %v3885 = vsel %vm632, %v2802, 0.0
      %3886 = vadd.xlane.f32.xlu0 %v3885
      %v3887 = vpop.xlane.xlu0 %3886
      %v3888 = vsel %vm632, %v2804, 0.0
      %3889 = vadd.xlane.f32.xlu0 %v3888
      %v3890 = vpop.xlane.xlu0 %3889
      %v3891 = vsel %vm632, %v2806, 0.0
      %3892 = vadd.xlane.f32.xlu0 %v3891
      %v3893 = vpop.xlane.xlu0 %3892
      %v3894 = vsel %vm632, %v2808, 0.0
      %3895 = vadd.xlane.f32.xlu0 %v3894
      %v3896 = vpop.xlane.xlu0 %3895
      %v3897 = vsel %vm632, %v2810, 0.0
      %3898 = vadd.xlane.f32.xlu0 %v3897
      %v3899 = vpop.xlane.xlu0 %3898
      %v3900 = vsel %vm632, %v2812, 0.0
      %3901 = vadd.xlane.f32.xlu0 %v3900
      %v3902 = vpop.xlane.xlu0 %3901
      %v3903 = vsel %vm632, %v2814, 0.0
      %3904 = vadd.xlane.f32.xlu0 %v3903
      %v3905 = vpop.xlane.xlu0 %3904
      %v3906 = vsel %vm632, %v2816, 0.0
      %3907 = vadd.xlane.f32.xlu0 %v3906
      %v3908 = vpop.xlane.xlu0 %3907
      %v3909 = vsel %vm632, %v2818, 0.0
      %3910 = vadd.xlane.f32.xlu0 %v3909
      %v3911 = vpop.xlane.xlu0 %3910
      %v3912 = vsel %vm632, %v2820, 0.0
      %3913 = vadd.xlane.f32.xlu0 %v3912
      %v3914 = vpop.xlane.xlu0 %3913
      %v3915 = vsel %vm632, %v2822, 0.0
      %3916 = vadd.xlane.f32.xlu0 %v3915
      %v3917 = vpop.xlane.xlu0 %3916
      %v3918 = vsel %vm632, %v2824, 0.0
      %3919 = vadd.xlane.f32.xlu0 %v3918
      %v3920 = vpop.xlane.xlu0 %3919
      %v3921 = vsel %vm632, %v2826, 0.0
      %3922 = vadd.xlane.f32.xlu0 %v3921
      %v3923 = vpop.xlane.xlu0 %3922
      %v3924 = vsel %vm632, %v2828, 0.0
      %3925 = vadd.xlane.f32.xlu0 %v3924
      %v3926 = vpop.xlane.xlu0 %3925
      %v3927 = vsel %vm632, %v2830, 0.0
      %3928 = vadd.xlane.f32.xlu0 %v3927
      %v3929 = vpop.xlane.xlu0 %3928
      %v3930 = vsel %vm632, %v2832, 0.0
      %3931 = vadd.xlane.f32.xlu0 %v3930
      %v3932 = vpop.xlane.xlu0 %3931
      %v3933 = vsel %vm632, %v2834, 0.0
      %3934 = vadd.xlane.f32.xlu0 %v3933
      %v3935 = vpop.xlane.xlu0 %3934
      %v3936 = vsel %vm632, %v2836, 0.0
      %3937 = vadd.xlane.f32.xlu0 %v3936
      %v3938 = vpop.xlane.xlu0 %3937
      %v3939 = vsel %vm632, %v2838, 0.0
      %3940 = vadd.xlane.f32.xlu0 %v3939
      %v3941 = vpop.xlane.xlu0 %3940
      %v3942 = vsel %vm632, %v2840, 0.0
      %3943 = vadd.xlane.f32.xlu0 %v3942
      %v3944 = vpop.xlane.xlu0 %3943
      %v3945 = vsel %vm632, %v2842, 0.0
      %3946 = vadd.xlane.f32.xlu0 %v3945
      %v3947 = vpop.xlane.xlu0 %3946
      %v3948 = vsel %vm632, %v2844, 0.0
      %3949 = vadd.xlane.f32.xlu0 %v3948
      %v3950 = vpop.xlane.xlu0 %3949
      %v3951 = vsel %vm632, %v2846, 0.0
      %3952 = vadd.xlane.f32.xlu0 %v3951
      %v3953 = vpop.xlane.xlu0 %3952
      %v3954 = vsel %vm632, %v2848, 0.0
      %3955 = vadd.xlane.f32.xlu0 %v3954
      %v3956 = vpop.xlane.xlu0 %3955
      %v3957 = vsel %vm632, %v2850, 0.0
      %3958 = vadd.xlane.f32.xlu0 %v3957
      %v3959 = vpop.xlane.xlu0 %3958
      %v3960 = vsel %vm632, %v2852, 0.0
      %3961 = vadd.xlane.f32.xlu0 %v3960
      %v3962 = vpop.xlane.xlu0 %3961
      %v3963 = vsel %vm632, %v2854, 0.0
      %3964 = vadd.xlane.f32.xlu0 %v3963
      %v3965 = vpop.xlane.xlu0 %3964
      %v3966 = vsel %vm632, %v2856, 0.0
      %3967 = vadd.xlane.f32.xlu0 %v3966
      %v3968 = vpop.xlane.xlu0 %3967
      %v3969 = vsel %vm632, %v2858, 0.0
      %3970 = vadd.xlane.f32.xlu0 %v3969
      %v3971 = vpop.xlane.xlu0 %3970
      %v3972 = vsel %vm632, %v2860, 0.0
      %3973 = vadd.xlane.f32.xlu0 %v3972
      %v3974 = vpop.xlane.xlu0 %3973
      %v3975 = vsel %vm632, %v2862, 0.0
      %3976 = vadd.xlane.f32.xlu0 %v3975
      %v3977 = vpop.xlane.xlu0 %3976
      %v3978 = vsel %vm632, %v2864, 0.0
      %3979 = vadd.xlane.f32.xlu0 %v3978
      %v3980 = vpop.xlane.xlu0 %3979
      %v3981 = vsel %vm632, %v2866, 0.0
      %3982 = vadd.xlane.f32.xlu0 %v3981
      %v3983 = vpop.xlane.xlu0 %3982
      %v3984 = vsel %vm632, %v2868, 0.0
      %3985 = vadd.xlane.f32.xlu0 %v3984
      %v3986 = vpop.xlane.xlu0 %3985
      %v3987 = vsel %vm632, %v2870, 0.0
      %3988 = vadd.xlane.f32.xlu0 %v3987
      %v3989 = vpop.xlane.xlu0 %3988
      %v3990 = vsel %vm632, %v2872, 0.0
      %3991 = vadd.xlane.f32.xlu0 %v3990
      %v3992 = vpop.xlane.xlu0 %3991
      %v3993 = vsel %vm632, %v2874, 0.0
      %3994 = vadd.xlane.f32.xlu0 %v3993
      %v3995 = vpop.xlane.xlu0 %3994
      %v3996 = vsel %vm632, %v2876, 0.0
      %3997 = vadd.xlane.f32.xlu0 %v3996
      %v3998 = vpop.xlane.xlu0 %3997
      %v3999 = vsel %vm632, %v2878, 0.0
      %4000 = vadd.xlane.f32.xlu0 %v3999
      %v4001 = vpop.xlane.xlu0 %4000
      %v4002 = vsel %vm632, %v2880, 0.0
      %4003 = vadd.xlane.f32.xlu0 %v4002
      %v4004 = vpop.xlane.xlu0 %4003
      %v4005 = vsel %vm632, %v2882, 0.0
      %4006 = vadd.xlane.f32.xlu0 %v4005
      %v4007 = vpop.xlane.xlu0 %4006
      %v4008 = vsel %vm632, %v2884, 0.0
      %4009 = vadd.xlane.f32.xlu0 %v4008
      %v4010 = vpop.xlane.xlu0 %4009
      %v4011 = vsel %vm632, %v2886, 0.0
      %4012 = vadd.xlane.f32.xlu0 %v4011
      %v4013 = vpop.xlane.xlu0 %4012
      %v4014 = vsel %vm632, %v2888, 0.0
      %4015 = vadd.xlane.f32.xlu0 %v4014
      %v4016 = vpop.xlane.xlu0 %4015
      %v4017 = vsel %vm632, %v2890, 0.0
      %4018 = vadd.xlane.f32.xlu0 %v4017
      %v4019 = vpop.xlane.xlu0 %4018
      %v4020 = vsel %vm632, %v2892, 0.0
      %4021 = vadd.xlane.f32.xlu0 %v4020
      %v4022 = vpop.xlane.xlu0 %4021
      %v4023 = vsel %vm632, %v2894, 0.0
      %4024 = vadd.xlane.f32.xlu0 %v4023
      %v4025 = vpop.xlane.xlu0 %4024
      %v4026 = vsel %vm632, %v2896, 0.0
      %4027 = vadd.xlane.f32.xlu0 %v4026
      %v4028 = vpop.xlane.xlu0 %4027
      %v4029 = vsel %vm632, %v2898, 0.0
      %4030 = vadd.xlane.f32.xlu0 %v4029
      %v4031 = vpop.xlane.xlu0 %4030
      %v4032 = vsel %vm632, %v2900, 0.0
      %4033 = vadd.xlane.f32.xlu0 %v4032
      %v4034 = vpop.xlane.xlu0 %4033
      %v4035 = vsel %vm632, %v2902, 0.0
      %4036 = vadd.xlane.f32.xlu0 %v4035
      %v4037 = vpop.xlane.xlu0 %4036
      %v4038 = vsel %vm632, %v2904, 0.0
      %4039 = vadd.xlane.f32.xlu0 %v4038
      %v4040 = vpop.xlane.xlu0 %4039
      %v4041 = vsel %vm632, %v2906, 0.0
      %4042 = vadd.xlane.f32.xlu0 %v4041
      %v4043 = vpop.xlane.xlu0 %4042
      %v4044 = vsel %vm632, %v2908, 0.0
      %4045 = vadd.xlane.f32.xlu0 %v4044
      %v4046 = vpop.xlane.xlu0 %4045
      %v4047 = vsel %vm632, %v2910, 0.0
      %4048 = vadd.xlane.f32.xlu0 %v4047
      %v4049 = vpop.xlane.xlu0 %4048
      %v4050 = vsel %vm632, %v2912, 0.0
      %4051 = vadd.xlane.f32.xlu0 %v4050
      %v4052 = vpop.xlane.xlu0 %4051
      %v4053 = vsel %vm632, %v2914, 0.0
      %4054 = vadd.xlane.f32.xlu0 %v4053
      %v4055 = vpop.xlane.xlu0 %4054
      %v4056 = vsel %vm632, %v2916, 0.0
      %4057 = vadd.xlane.f32.xlu0 %v4056
      %v4058 = vpop.xlane.xlu0 %4057
      %v4059 = vsel %vm632, %v2918, 0.0
      %4060 = vadd.xlane.f32.xlu0 %v4059
      %v4061 = vpop.xlane.xlu0 %4060
      %v4062 = vsel %vm632, %v2920, 0.0
      %4063 = vadd.xlane.f32.xlu0 %v4062
      %v4064 = vpop.xlane.xlu0 %4063
      %v4065 = vsel %vm632, %v2922, 0.0
      %4066 = vadd.xlane.f32.xlu0 %v4065
      %v4067 = vpop.xlane.xlu0 %4066
      %v4068 = vsel %vm632, %v2924, 0.0
      %4069 = vadd.xlane.f32.xlu0 %v4068
      %v4070 = vpop.xlane.xlu0 %4069
      %v4071 = vsel %vm632, %v2926, 0.0
      %4072 = vadd.xlane.f32.xlu0 %v4071
      %v4073 = vpop.xlane.xlu0 %4072
      %v4074 = vsel %vm632, %v2928, 0.0
      %4075 = vadd.xlane.f32.xlu0 %v4074
      %v4076 = vpop.xlane.xlu0 %4075
      %v4077 = vsel %vm632, %v2930, 0.0
      %4078 = vadd.xlane.f32.xlu0 %v4077
      %v4079 = vpop.xlane.xlu0 %4078
      %v4080 = vsel %vm632, %v2932, 0.0
      %4081 = vadd.xlane.f32.xlu0 %v4080
      %v4082 = vpop.xlane.xlu0 %4081
      %v4083 = vsel %vm632, %v2934, 0.0
      %4084 = vadd.xlane.f32.xlu0 %v4083
      %v4085 = vpop.xlane.xlu0 %4084
      %v4086 = vsel %vm632, %v2936, 0.0
      %4087 = vadd.xlane.f32.xlu0 %v4086
      %v4088 = vpop.xlane.xlu0 %4087
      %v4089 = vsel %vm632, %v2938, 0.0
      %4090 = vadd.xlane.f32.xlu0 %v4089
      %v4091 = vpop.xlane.xlu0 %4090
      %v4092 = vsel %vm632, %v2940, 0.0
      %4093 = vadd.xlane.f32.xlu0 %v4092
      %v4094 = vpop.xlane.xlu0 %4093
      %v4095 = vsel %vm632, %v2942, 0.0
      %4096 = vadd.xlane.f32.xlu0 %v4095
      %v4097 = vpop.xlane.xlu0 %4096
      %v4098 = vsel %vm632, %v2944, 0.0
      %4099 = vadd.xlane.f32.xlu0 %v4098
      %v4100 = vpop.xlane.xlu0 %4099
      %v4101 = vsel %vm632, %v2946, 0.0
      %4102 = vadd.xlane.f32.xlu0 %v4101
      %v4103 = vpop.xlane.xlu0 %4102
      %v4104 = vsel %vm632, %v2948, 0.0
      %4105 = vadd.xlane.f32.xlu0 %v4104
      %v4106 = vpop.xlane.xlu0 %4105
      %v4107 = vsel %vm632, %v2950, 0.0
      %4108 = vadd.xlane.f32.xlu0 %v4107
      %v4109 = vpop.xlane.xlu0 %4108
      %v4110 = vsel %vm632, %v2952, 0.0
      %4111 = vadd.xlane.f32.xlu0 %v4110
      %v4112 = vpop.xlane.xlu0 %4111
      %v4113 = vsel %vm632, %v2954, 0.0
      %4114 = vadd.xlane.f32.xlu0 %v4113
      %v4115 = vpop.xlane.xlu0 %4114
      %v4116 = vsel %vm632, %v2956, 0.0
      %4117 = vadd.xlane.f32.xlu0 %v4116
      %v4118 = vpop.xlane.xlu0 %4117
      %v4119 = vsel %vm632, %v2958, 0.0
      %4120 = vadd.xlane.f32.xlu0 %v4119
      %v4121 = vpop.xlane.xlu0 %4120
      %v4122 = vsel %vm632, %v2960, 0.0
      %4123 = vadd.xlane.f32.xlu0 %v4122
      %v4124 = vpop.xlane.xlu0 %4123
      %v4125 = vsel %vm632, %v2962, 0.0
      %4126 = vadd.xlane.f32.xlu0 %v4125
      %v4127 = vpop.xlane.xlu0 %4126
      %v4128 = vsel %vm632, %v2964, 0.0
      %4129 = vadd.xlane.f32.xlu0 %v4128
      %v4130 = vpop.xlane.xlu0 %4129
      %v4131 = vsel %vm632, %v2966, 0.0
      %4132 = vadd.xlane.f32.xlu0 %v4131
      %v4133 = vpop.xlane.xlu0 %4132
      %v4134 = vsel %vm632, %v2968, 0.0
      %4135 = vadd.xlane.f32.xlu0 %v4134
      %v4136 = vpop.xlane.xlu0 %4135
      %v4137 = vsel %vm632, %v2970, 0.0
      %4138 = vadd.xlane.f32.xlu0 %v4137
      %v4139 = vpop.xlane.xlu0 %4138
      %v4140 = vsel %vm632, %v2972, 0.0
      %4141 = vadd.xlane.f32.xlu0 %v4140
      %v4142 = vpop.xlane.xlu0 %4141
      %v4143 = vsel %vm632, %v2974, 0.0
      %4144 = vadd.xlane.f32.xlu0 %v4143
      %v4145 = vpop.xlane.xlu0 %4144
      %v4146 = vsel %vm632, %v2976, 0.0
      %4147 = vadd.xlane.f32.xlu0 %v4146
      %v4148 = vpop.xlane.xlu0 %4147
      %v4149 = vsel %vm632, %v2978, 0.0
      %4150 = vadd.xlane.f32.xlu0 %v4149
      %v4151 = vpop.xlane.xlu0 %4150
      %v4152 = vsel %vm632, %v2980, 0.0
      %4153 = vadd.xlane.f32.xlu0 %v4152
      %v4154 = vpop.xlane.xlu0 %4153
      %v4155 = vsel %vm632, %v2982, 0.0
      %4156 = vadd.xlane.f32.xlu0 %v4155
      %v4157 = vpop.xlane.xlu0 %4156
      %v4158 = vsel %vm632, %v2984, 0.0
      %4159 = vadd.xlane.f32.xlu0 %v4158
      %v4160 = vpop.xlane.xlu0 %4159
      %v4161 = vsel %vm632, %v2986, 0.0
      %4162 = vadd.xlane.f32.xlu0 %v4161
      %v4163 = vpop.xlane.xlu0 %4162
      %v4164 = vsel %vm632, %v2988, 0.0
      %4165 = vadd.xlane.f32.xlu0 %v4164
      %v4166 = vpop.xlane.xlu0 %4165
      %v4167 = vsel %vm632, %v2990, 0.0
      %4168 = vadd.xlane.f32.xlu0 %v4167
      %v4169 = vpop.xlane.xlu0 %4168
      %v4170 = vsel %vm632, %v2992, 0.0
      %4171 = vadd.xlane.f32.xlu0 %v4170
      %v4172 = vpop.xlane.xlu0 %4171
      %v4173 = vsel %vm632, %v2994, 0.0
      %4174 = vadd.xlane.f32.xlu0 %v4173
      %v4175 = vpop.xlane.xlu0 %4174
      %v4176 = vsel %vm632, %v2996, 0.0
      %4177 = vadd.xlane.f32.xlu0 %v4176
      %v4178 = vpop.xlane.xlu0 %4177
      %v4179 = vsel %vm632, %v2998, 0.0
      %4180 = vadd.xlane.f32.xlu0 %v4179
      %v4181 = vpop.xlane.xlu0 %4180
      %v4182 = vsel %vm632, %v3000, 0.0
      %4183 = vadd.xlane.f32.xlu0 %v4182
      %v4184 = vpop.xlane.xlu0 %4183
      %v4185 = vsel %vm632, %v3002, 0.0
      %4186 = vadd.xlane.f32.xlu0 %v4185
      %v4187 = vpop.xlane.xlu0 %4186
      %v4188 = vsel %vm632, %v3004, 0.0
      %4189 = vadd.xlane.f32.xlu0 %v4188
      %v4190 = vpop.xlane.xlu0 %4189
      %v4191 = vsel %vm632, %v3006, 0.0
      %4192 = vadd.xlane.f32.xlu0 %v4191
      %v4193 = vpop.xlane.xlu0 %4192
      %v4194 = vsel %vm632, %v3008, 0.0
      %4195 = vadd.xlane.f32.xlu0 %v4194
      %v4196 = vpop.xlane.xlu0 %4195
      %v4197 = vsel %vm632, %v3010, 0.0
      %4198 = vadd.xlane.f32.xlu0 %v4197
      %v4199 = vpop.xlane.xlu0 %4198
      %v4200 = vsel %vm632, %v3012, 0.0
      %4201 = vadd.xlane.f32.xlu0 %v4200
      %v4202 = vpop.xlane.xlu0 %4201
      %v4203 = vsel %vm632, %v3014, 0.0
      %4204 = vadd.xlane.f32.xlu0 %v4203
      %v4205 = vpop.xlane.xlu0 %4204
      %v4206 = vsel %vm632, %v3016, 0.0
      %4207 = vadd.xlane.f32.xlu0 %v4206
      %v4208 = vpop.xlane.xlu0 %4207
      %v4209 = vsel %vm632, %v3018, 0.0
      %4210 = vadd.xlane.f32.xlu0 %v4209
      %v4211 = vpop.xlane.xlu0 %4210
      %v4212 = vsel %vm632, %v3020, 0.0
      %4213 = vadd.xlane.f32.xlu0 %v4212
      %v4214 = vpop.xlane.xlu0 %4213
      %v4215 = vsel %vm632, %v3022, 0.0
      %4216 = vadd.xlane.f32.xlu0 %v4215
      %v4217 = vpop.xlane.xlu0 %4216
      %v4218 = vsel %vm632, %v3024, 0.0
      %4219 = vadd.xlane.f32.xlu0 %v4218
      %v4220 = vpop.xlane.xlu0 %4219
      %v4221 = vsel %vm632, %v3026, 0.0
      %4222 = vadd.xlane.f32.xlu0 %v4221
      %v4223 = vpop.xlane.xlu0 %4222
      %v4224 = vsel %vm632, %v3028, 0.0
      %4225 = vadd.xlane.f32.xlu0 %v4224
      %v4226 = vpop.xlane.xlu0 %4225
      %v4227 = vsel %vm632, %v3030, 0.0
      %4228 = vadd.xlane.f32.xlu0 %v4227
      %v4229 = vpop.xlane.xlu0 %4228
      %v4230 = vsel %vm632, %v3032, 0.0
      %4231 = vadd.xlane.f32.xlu0 %v4230
      %v4232 = vpop.xlane.xlu0 %4231
      %v4233 = vsel %vm632, %v3034, 0.0
      %4234 = vadd.xlane.f32.xlu0 %v4233
      %v4235 = vpop.xlane.xlu0 %4234
      %v4236 = vsel %vm632, %v3036, 0.0
      %4237 = vadd.xlane.f32.xlu0 %v4236
      %v4238 = vpop.xlane.xlu0 %4237
      %v4239 = vsel %vm632, %v3038, 0.0
      %4240 = vadd.xlane.f32.xlu0 %v4239
      %v4241 = vpop.xlane.xlu0 %4240
      %v4242 = vsel %vm632, %v3040, 0.0
      %4243 = vadd.xlane.f32.xlu0 %v4242
      %v4244 = vpop.xlane.xlu0 %4243
      %v4245 = vsel %vm632, %v3042, 0.0
      %4246 = vadd.xlane.f32.xlu0 %v4245
      %v4247 = vpop.xlane.xlu0 %4246
      %v4248 = vsel %vm632, %v3044, 0.0
      %4249 = vadd.xlane.f32.xlu0 %v4248
      %v4250 = vpop.xlane.xlu0 %4249
      %v4251 = vsel %vm632, %v3046, 0.0
      %4252 = vadd.xlane.f32.xlu0 %v4251
      %v4253 = vpop.xlane.xlu0 %4252
      %v4254 = vsel %vm632, %v3048, 0.0
      %4255 = vadd.xlane.f32.xlu0 %v4254
      %v4256 = vpop.xlane.xlu0 %4255
      %v4257 = vsel %vm632, %v3050, 0.0
      %4258 = vadd.xlane.f32.xlu0 %v4257
      %v4259 = vpop.xlane.xlu0 %4258
      %v4260 = vsel %vm632, %v3052, 0.0
      %4261 = vadd.xlane.f32.xlu0 %v4260
      %v4262 = vpop.xlane.xlu0 %4261
      %v4263 = vsel %vm632, %v3054, 0.0
      %4264 = vadd.xlane.f32.xlu0 %v4263
      %v4265 = vpop.xlane.xlu0 %4264
      %v4266 = vsel %vm632, %v3056, 0.0
      %4267 = vadd.xlane.f32.xlu0 %v4266
      %v4268 = vpop.xlane.xlu0 %4267
      %v4269 = vsel %vm632, %v3058, 0.0
      %4270 = vadd.xlane.f32.xlu0 %v4269
      %v4271 = vpop.xlane.xlu0 %4270
      %v4272 = vsel %vm632, %v3060, 0.0
      %4273 = vadd.xlane.f32.xlu0 %v4272
      %v4274 = vpop.xlane.xlu0 %4273
      %v4275 = vsel %vm632, %v3062, 0.0
      %4276 = vadd.xlane.f32.xlu0 %v4275
      %v4277 = vpop.xlane.xlu0 %4276
      %v4278 = vsel %vm632, %v3064, 0.0
      %4279 = vadd.xlane.f32.xlu0 %v4278
      %v4280 = vpop.xlane.xlu0 %4279
      %v4281 = vsel %vm632, %v3066, 0.0
      %4282 = vadd.xlane.f32.xlu0 %v4281
      %v4283 = vpop.xlane.xlu0 %4282
      %v4284 = vsel %vm632, %v3068, 0.0
      %4285 = vadd.xlane.f32.xlu0 %v4284
      %v4286 = vpop.xlane.xlu0 %4285
      %v4287 = vsel %vm632, %v3070, 0.0
      %4288 = vadd.xlane.f32.xlu0 %v4287
      %v4289 = vpop.xlane.xlu0 %4288
      %v4290 = vsel %vm632, %v3072, 0.0
      %4291 = vadd.xlane.f32.xlu0 %v4290
      %v4292 = vpop.xlane.xlu0 %4291
      %v4293 = vsel %vm632, %v3074, 0.0
      %4294 = vadd.xlane.f32.xlu0 %v4293
      %v4295 = vpop.xlane.xlu0 %4294
      %v4296 = vsel %vm632, %v3076, 0.0
      %4297 = vadd.xlane.f32.xlu0 %v4296
      %v4298 = vpop.xlane.xlu0 %4297
      %v4299 = vsel %vm632, %v3078, 0.0
      %4300 = vadd.xlane.f32.xlu0 %v4299
      %v4301 = vpop.xlane.xlu0 %4300
      %v4302 = vsel %vm632, %v3080, 0.0
      %4303 = vadd.xlane.f32.xlu0 %v4302
      %v4304 = vpop.xlane.xlu0 %4303
      %v4305 = vsel %vm632, %v3082, 0.0
      %4306 = vadd.xlane.f32.xlu0 %v4305
      %v4307 = vpop.xlane.xlu0 %4306
      %v4308 = vsel %vm632, %v3084, 0.0
      %4309 = vadd.xlane.f32.xlu0 %v4308
      %v4310 = vpop.xlane.xlu0 %4309
      %v4311 = vsel %vm632, %v3086, 0.0
      %4312 = vadd.xlane.f32.xlu0 %v4311
      %v4313 = vpop.xlane.xlu0 %4312
      %v4314 = vsel %vm632, %v3088, 0.0
      %4315 = vadd.xlane.f32.xlu0 %v4314
      %v4316 = vpop.xlane.xlu0 %4315
      %v4317 = vsel %vm632, %v3090, 0.0
      %4318 = vadd.xlane.f32.xlu0 %v4317
      %v4319 = vpop.xlane.xlu0 %4318
      %v4320 = vsel %vm632, %v3092, 0.0
      %4321 = vadd.xlane.f32.xlu0 %v4320
      %v4322 = vpop.xlane.xlu0 %4321
      %v4323 = vsel %vm632, %v3094, 0.0
      %4324 = vadd.xlane.f32.xlu0 %v4323
      %v4325 = vpop.xlane.xlu0 %4324
      %v4326 = vsel %vm632, %v3096, 0.0
      %4327 = vadd.xlane.f32.xlu0 %v4326
      %v4328 = vpop.xlane.xlu0 %4327
      %v4329 = vsel %vm632, %v3098, 0.0
      %4330 = vadd.xlane.f32.xlu0 %v4329
      %v4331 = vpop.xlane.xlu0 %4330
      %v4332 = vsel %vm632, %v3100, 0.0
      %4333 = vadd.xlane.f32.xlu0 %v4332
      %v4334 = vpop.xlane.xlu0 %4333
      %v4335 = vsel %vm632, %v3102, 0.0
      %4336 = vadd.xlane.f32.xlu0 %v4335
      %v4337 = vpop.xlane.xlu0 %4336
      %v4338 = vsel %vm632, %v3104, 0.0
      %4339 = vadd.xlane.f32.xlu0 %v4338
      %v4340 = vpop.xlane.xlu0 %4339
      %v4341 = vsel %vm632, %v3106, 0.0
      %4342 = vadd.xlane.f32.xlu0 %v4341
      %v4343 = vpop.xlane.xlu0 %4342
      %v4344 = vsel %vm632, %v3108, 0.0
      %4345 = vadd.xlane.f32.xlu0 %v4344
      %v4346 = vpop.xlane.xlu0 %4345
      %v4347 = vsel %vm632, %v3110, 0.0
      %4348 = vadd.xlane.f32.xlu0 %v4347
      %v4349 = vpop.xlane.xlu0 %4348
      %v4350 = vsel %vm632, %v3112, 0.0
      %4351 = vadd.xlane.f32.xlu0 %v4350
      %v4352 = vpop.xlane.xlu0 %4351
      %v4353 = vsel %vm632, %v3114, 0.0
      %4354 = vadd.xlane.f32.xlu0 %v4353
      %v4355 = vpop.xlane.xlu0 %4354
      %v4356 = vsel %vm632, %v3116, 0.0
      %4357 = vadd.xlane.f32.xlu0 %v4356
      %v4358 = vpop.xlane.xlu0 %4357
      %v4359 = vsel %vm632, %v3118, 0.0
      %4360 = vadd.xlane.f32.xlu0 %v4359
      %v4361 = vpop.xlane.xlu0 %4360
      %v4362 = vsel %vm632, %v3120, 0.0
      %4363 = vadd.xlane.f32.xlu0 %v4362
      %v4364 = vpop.xlane.xlu0 %4363
      %v4365 = vsel %vm632, %v3122, 0.0
      %4366 = vadd.xlane.f32.xlu0 %v4365
      %v4367 = vpop.xlane.xlu0 %4366
      %v4368 = vsel %vm632, %v3124, 0.0
      %4369 = vadd.xlane.f32.xlu0 %v4368
      %v4370 = vpop.xlane.xlu0 %4369
      %v4371 = vsel %vm632, %v3126, 0.0
      %4372 = vadd.xlane.f32.xlu0 %v4371
      %v4373 = vpop.xlane.xlu0 %4372
      %v4374 = vsel %vm632, %v3128, 0.0
      %4375 = vadd.xlane.f32.xlu0 %v4374
      %v4376 = vpop.xlane.xlu0 %4375
      %v4377 = vsel %vm632, %v3130, 0.0
      %4378 = vadd.xlane.f32.xlu0 %v4377
      %v4379 = vpop.xlane.xlu0 %4378
      %v4380 = vsel %vm632, %v3132, 0.0
      %4381 = vadd.xlane.f32.xlu0 %v4380
      %v4382 = vpop.xlane.xlu0 %4381
      %v4383 = vsel %vm632, %v3134, 0.0
      %4384 = vadd.xlane.f32.xlu0 %v4383
      %v4385 = vpop.xlane.xlu0 %4384
      %v4386 = vsel %vm632, %v3136, 0.0
      %4387 = vadd.xlane.f32.xlu0 %v4386
      %v4388 = vpop.xlane.xlu0 %4387
      %v4389 = vsel %vm632, %v3138, 0.0
      %4390 = vadd.xlane.f32.xlu0 %v4389
      %v4391 = vpop.xlane.xlu0 %4390
      %v4392 = vsel %vm632, %v3140, 0.0
      %4393 = vadd.xlane.f32.xlu0 %v4392
      %v4394 = vpop.xlane.xlu0 %4393
      %v4395 = vsel %vm632, %v3142, 0.0
      %4396 = vadd.xlane.f32.xlu0 %v4395
      %v4397 = vpop.xlane.xlu0 %4396
      %v4398 = vsel %vm632, %v3144, 0.0
      %4399 = vadd.xlane.f32.xlu0 %v4398
      %v4400 = vpop.xlane.xlu0 %4399
      %v4401 = vsel %vm632, %v3146, 0.0
      %4402 = vadd.xlane.f32.xlu0 %v4401
      %v4403 = vpop.xlane.xlu0 %4402
      %v4404 = vsel %vm632, %v3148, 0.0
      %4405 = vadd.xlane.f32.xlu0 %v4404
      %v4406 = vpop.xlane.xlu0 %4405
      %v4407 = vsel %vm632, %v3150, 0.0
      %4408 = vadd.xlane.f32.xlu0 %v4407
      %v4409 = vpop.xlane.xlu0 %4408
      %v4410 = vsel %vm632, %v3152, 0.0
      %4411 = vadd.xlane.f32.xlu0 %v4410
      %v4412 = vpop.xlane.xlu0 %4411
      %v4413 = vsel %vm632, %v3154, 0.0
      %4414 = vadd.xlane.f32.xlu0 %v4413
      %v4415 = vpop.xlane.xlu0 %4414
      %v4416 = vsel %vm632, %v3156, 0.0
      %4417 = vadd.xlane.f32.xlu0 %v4416
      %v4418 = vpop.xlane.xlu0 %4417
      %v4419 = vsel %vm632, %v3158, 0.0
      %4420 = vadd.xlane.f32.xlu0 %v4419
      %v4421 = vpop.xlane.xlu0 %4420
      %v4422 = vsel %vm632, %v3160, 0.0
      %4423 = vadd.xlane.f32.xlu0 %v4422
      %v4424 = vpop.xlane.xlu0 %4423
      %v4425 = vsel %vm632, %v3162, 0.0
      %4426 = vadd.xlane.f32.xlu0 %v4425
      %v4427 = vpop.xlane.xlu0 %4426
      %v4428 = vsel %vm632, %v3164, 0.0
      %4429 = vadd.xlane.f32.xlu0 %v4428
      %v4430 = vpop.xlane.xlu0 %4429
      %v4431 = vsel %vm632, %v3166, 0.0
      %4432 = vadd.xlane.f32.xlu0 %v4431
      %v4433 = vpop.xlane.xlu0 %4432
      %v4434 = vsel %vm632, %v3168, 0.0
      %4435 = vadd.xlane.f32.xlu0 %v4434
      %v4436 = vpop.xlane.xlu0 %4435
      %v4437 = vsel %vm632, %v3170, 0.0
      %4438 = vadd.xlane.f32.xlu0 %v4437
      %v4439 = vpop.xlane.xlu0 %4438
      %v4440 = vsel %vm632, %v3172, 0.0
      %4441 = vadd.xlane.f32.xlu0 %v4440
      %v4442 = vpop.xlane.xlu0 %4441
      %v4443 = vsel %vm632, %v3174, 0.0
      %4444 = vadd.xlane.f32.xlu0 %v4443
      %v4445 = vpop.xlane.xlu0 %4444
      %v4446 = vsel %vm632, %v3176, 0.0
      %4447 = vadd.xlane.f32.xlu0 %v4446
      %v4448 = vpop.xlane.xlu0 %4447
      %v4449 = vsel %vm632, %v3178, 0.0
      %4450 = vadd.xlane.f32.xlu0 %v4449
      %v4451 = vpop.xlane.xlu0 %4450
      %v4452 = vsel %vm632, %v3180, 0.0
      %4453 = vadd.xlane.f32.xlu0 %v4452
      %v4454 = vpop.xlane.xlu0 %4453
      %v4455 = vsel %vm632, %v3182, 0.0
      %4456 = vadd.xlane.f32.xlu0 %v4455
      %v4457 = vpop.xlane.xlu0 %4456
      %v4458 = vsel %vm632, %v3184, 0.0
      %4459 = vadd.xlane.f32.xlu0 %v4458
      %v4460 = vpop.xlane.xlu0 %4459
      %v4461 = vsel %vm632, %v3186, 0.0
      %4462 = vadd.xlane.f32.xlu0 %v4461
      %v4463 = vpop.xlane.xlu0 %4462
      %v4464 = vsel %vm632, %v3188, 0.0
      %4465 = vadd.xlane.f32.xlu0 %v4464
      %v4466 = vpop.xlane.xlu0 %4465
      %v4467 = vsel %vm632, %v3190, 0.0
      %4468 = vadd.xlane.f32.xlu0 %v4467
      %v4469 = vpop.xlane.xlu0 %4468
      %v4470 = vsel %vm632, %v3192, 0.0
      %4471 = vadd.xlane.f32.xlu0 %v4470
      %v4472 = vpop.xlane.xlu0 %4471
      %v4473 = vsel %vm632, %v3194, 0.0
      %4474 = vadd.xlane.f32.xlu0 %v4473
      %v4475 = vpop.xlane.xlu0 %4474
      %v4476 = vsel %vm632, %v3196, 0.0
      %4477 = vadd.xlane.f32.xlu0 %v4476
      %v4478 = vpop.xlane.xlu0 %4477
      %v4479 = vsel %vm632, %v3198, 0.0
      %4480 = vadd.xlane.f32.xlu0 %v4479
      %v4481 = vpop.xlane.xlu0 %4480
      %v4482 = vsel %vm632, %v3200, 0.0
      %4483 = vadd.xlane.f32.xlu0 %v4482
      %v4484 = vpop.xlane.xlu0 %4483
      %v4485 = vsel %vm632, %v3202, 0.0
      %4486 = vadd.xlane.f32.xlu0 %v4485
      %v4487 = vpop.xlane.xlu0 %4486
      %v4488 = vsel %vm632, %v3204, 0.0
      %4489 = vadd.xlane.f32.xlu0 %v4488
      %v4490 = vpop.xlane.xlu0 %4489
      %v4491 = vsel %vm632, %v3206, 0.0
      %4492 = vadd.xlane.f32.xlu0 %v4491
      %v4493 = vpop.xlane.xlu0 %4492
      %v4494 = vsel %vm632, %v3208, 0.0
      %4495 = vadd.xlane.f32.xlu0 %v4494
      %v4496 = vpop.xlane.xlu0 %4495
      %v4497 = vsel %vm632, %v3210, 0.0
      %4498 = vadd.xlane.f32.xlu0 %v4497
      %v4499 = vpop.xlane.xlu0 %4498
      %v4500 = vsel %vm632, %v3212, 0.0
      %4501 = vadd.xlane.f32.xlu0 %v4500
      %v4502 = vpop.xlane.xlu0 %4501
      %v4503 = vsel %vm632, %v3214, 0.0
      %4504 = vadd.xlane.f32.xlu0 %v4503
      %v4505 = vpop.xlane.xlu0 %4504
      %v4506 = vsel %vm632, %v3216, 0.0
      %4507 = vadd.xlane.f32.xlu0 %v4506
      %v4508 = vpop.xlane.xlu0 %4507
      %v4509 = vsel %vm632, %v3218, 0.0
      %4510 = vadd.xlane.f32.xlu0 %v4509
      %v4511 = vpop.xlane.xlu0 %4510
      %v4512 = vsel %vm632, %v3220, 0.0
      %4513 = vadd.xlane.f32.xlu0 %v4512
      %v4514 = vpop.xlane.xlu0 %4513
      %v4515 = vsel %vm632, %v3222, 0.0
      %4516 = vadd.xlane.f32.xlu0 %v4515
      %v4517 = vpop.xlane.xlu0 %4516
      %v4518 = vsel %vm632, %v3224, 0.0
      %4519 = vadd.xlane.f32.xlu0 %v4518
      %v4520 = vpop.xlane.xlu0 %4519
      %v4521 = vsel %vm632, %v3226, 0.0
      %4522 = vadd.xlane.f32.xlu0 %v4521
      %v4523 = vpop.xlane.xlu0 %4522
      %v4524 = vsel %vm632, %v3228, 0.0
      %4525 = vadd.xlane.f32.xlu0 %v4524
      %v4526 = vpop.xlane.xlu0 %4525
      %v4527 = vsel %vm632, %v3230, 0.0
      %4528 = vadd.xlane.f32.xlu0 %v4527
      %v4529 = vpop.xlane.xlu0 %4528
      %v4530 = vsel %vm632, %v3232, 0.0
      %4531 = vadd.xlane.f32.xlu0 %v4530
      %v4532 = vpop.xlane.xlu0 %4531
      %v4533 = vsel %vm632, %v3234, 0.0
      %4534 = vadd.xlane.f32.xlu0 %v4533
      %v4535 = vpop.xlane.xlu0 %4534
      %v4536 = vsel %vm632, %v3236, 0.0
      %4537 = vadd.xlane.f32.xlu0 %v4536
      %v4538 = vpop.xlane.xlu0 %4537
      %v4539 = vsel %vm632, %v3238, 0.0
      %4540 = vadd.xlane.f32.xlu0 %v4539
      %v4541 = vpop.xlane.xlu0 %4540
      %v4542 = vsel %vm632, %v3240, 0.0
      %4543 = vadd.xlane.f32.xlu0 %v4542
      %v4544 = vpop.xlane.xlu0 %4543
      %v4545 = vsel %vm632, %v3242, 0.0
      %4546 = vadd.xlane.f32.xlu0 %v4545
      %v4547 = vpop.xlane.xlu0 %4546
      %v4548 = vsel %vm632, %v3244, 0.0
      %4549 = vadd.xlane.f32.xlu0 %v4548
      %v4550 = vpop.xlane.xlu0 %4549
      %v4551 = vsel %vm632, %v3246, 0.0
      %4552 = vadd.xlane.f32.xlu0 %v4551
      %v4553 = vpop.xlane.xlu0 %4552
      %v4554 = vsel %vm632, %v3248, 0.0
      %4555 = vadd.xlane.f32.xlu0 %v4554
      %v4556 = vpop.xlane.xlu0 %4555
      %v4557 = vsel %vm632, %v3250, 0.0
      %4558 = vadd.xlane.f32.xlu0 %v4557
      %v4559 = vpop.xlane.xlu0 %4558
      %v4560 = vsel %vm632, %v3252, 0.0
      %4561 = vadd.xlane.f32.xlu0 %v4560
      %v4562 = vpop.xlane.xlu0 %4561
      %v4563 = vsel %vm632, %v3254, 0.0
      %4564 = vadd.xlane.f32.xlu0 %v4563
      %v4565 = vpop.xlane.xlu0 %4564
      %v4566 = vsel %vm632, %v3256, 0.0
      %4567 = vadd.xlane.f32.xlu0 %v4566
      %v4568 = vpop.xlane.xlu0 %4567
      %v4569 = vsel %vm632, %v3258, 0.0
      %4570 = vadd.xlane.f32.xlu0 %v4569
      %v4571 = vpop.xlane.xlu0 %4570
      %v4572 = vsel %vm632, %v3260, 0.0
      %4573 = vadd.xlane.f32.xlu0 %v4572
      %v4574 = vpop.xlane.xlu0 %4573
      %v4575 = vsel %vm632, %v3262, 0.0
      %4576 = vadd.xlane.f32.xlu0 %v4575
      %v4577 = vpop.xlane.xlu0 %4576
      %v4578 = vsel %vm632, %v3264, 0.0
      %4579 = vadd.xlane.f32.xlu0 %v4578
      %v4580 = vpop.xlane.xlu0 %4579
      %v4581 = vsel %vm632, %v3266, 0.0
      %4582 = vadd.xlane.f32.xlu0 %v4581
      %v4583 = vpop.xlane.xlu0 %4582
      %v4584 = vsel %vm632, %v3268, 0.0
      %4585 = vadd.xlane.f32.xlu0 %v4584
      %v4586 = vpop.xlane.xlu0 %4585
      %v4587 = vsel %vm632, %v3270, 0.0
      %4588 = vadd.xlane.f32.xlu0 %v4587
      %v4589 = vpop.xlane.xlu0 %4588
      %v4590 = vsel %vm632, %v3272, 0.0
      %4591 = vadd.xlane.f32.xlu0 %v4590
      %v4592 = vpop.xlane.xlu0 %4591
      %v4593 = vsel %vm632, %v3274, 0.0
      %4594 = vadd.xlane.f32.xlu0 %v4593
      %v4595 = vpop.xlane.xlu0 %4594
      %v4596 = vsel %vm632, %v3276, 0.0
      %4597 = vadd.xlane.f32.xlu0 %v4596
      %v4598 = vpop.xlane.xlu0 %4597
      %v4599 = vsel %vm632, %v3278, 0.0
      %4600 = vadd.xlane.f32.xlu0 %v4599
      %v4601 = vpop.xlane.xlu0 %4600
      %v4602 = vsel %vm632, %v3280, 0.0
      %4603 = vadd.xlane.f32.xlu0 %v4602
      %v4604 = vpop.xlane.xlu0 %4603
      %v4605 = vsel %vm632, %v3282, 0.0
      %4606 = vadd.xlane.f32.xlu0 %v4605
      %v4607 = vpop.xlane.xlu0 %4606
      %v4608 = vsel %vm632, %v3284, 0.0
      %4609 = vadd.xlane.f32.xlu0 %v4608
      %v4610 = vpop.xlane.xlu0 %4609
      %v4611 = vsel %vm632, %v3286, 0.0
      %4612 = vadd.xlane.f32.xlu0 %v4611
      %v4613 = vpop.xlane.xlu0 %4612
      %v4614 = vsel %vm632, %v3288, 0.0
      %4615 = vadd.xlane.f32.xlu0 %v4614
      %v4616 = vpop.xlane.xlu0 %4615
      %v4617 = vsel %vm632, %v3290, 0.0
      %4618 = vadd.xlane.f32.xlu0 %v4617
      %v4619 = vpop.xlane.xlu0 %4618
      %v4620 = vsel %vm632, %v3292, 0.0
      %4621 = vadd.xlane.f32.xlu0 %v4620
      %v4622 = vpop.xlane.xlu0 %4621
      %v4623 = vsel %vm632, %v3294, 0.0
      %4624 = vadd.xlane.f32.xlu0 %v4623
      %v4625 = vpop.xlane.xlu0 %4624
      %v4626 = vsel %vm632, %v3296, 0.0
      %4627 = vadd.xlane.f32.xlu0 %v4626
      %v4628 = vpop.xlane.xlu0 %4627
      %v4629 = vsel %vm632, %v3298, 0.0
      %4630 = vadd.xlane.f32.xlu0 %v4629
      %v4631 = vpop.xlane.xlu0 %4630
      %v4632 = vsel %vm632, %v3300, 0.0
      %4633 = vadd.xlane.f32.xlu0 %v4632
      %v4634 = vpop.xlane.xlu0 %4633
      %v4635 = vsel %vm632, %v3302, 0.0
      %4636 = vadd.xlane.f32.xlu0 %v4635
      %v4637 = vpop.xlane.xlu0 %4636
      %v4638 = vsel %vm632, %v3304, 0.0
      %4639 = vadd.xlane.f32.xlu0 %v4638
      %v4640 = vpop.xlane.xlu0 %4639
      %v4641 = vsel %vm632, %v3306, 0.0
      %4642 = vadd.xlane.f32.xlu0 %v4641
      %v4643 = vpop.xlane.xlu0 %4642
      %v4644 = vsel %vm632, %v3308, 0.0
      %4645 = vadd.xlane.f32.xlu0 %v4644
      %v4646 = vpop.xlane.xlu0 %4645
      %v4647 = vsel %vm632, %v3310, 0.0
      %4648 = vadd.xlane.f32.xlu0 %v4647
      %v4649 = vpop.xlane.xlu0 %4648
      %v4650 = vsel %vm632, %v3312, 0.0
      %4651 = vadd.xlane.f32.xlu0 %v4650
      %v4652 = vpop.xlane.xlu0 %4651
      %v4653 = vsel %vm632, %v3314, 0.0
      %4654 = vadd.xlane.f32.xlu0 %v4653
      %v4655 = vpop.xlane.xlu0 %4654
      %v4656 = vsel %vm632, %v3316, 0.0
      %4657 = vadd.xlane.f32.xlu0 %v4656
      %v4658 = vpop.xlane.xlu0 %4657
      %v4659 = vsel %vm632, %v3318, 0.0
      %4660 = vadd.xlane.f32.xlu0 %v4659
      %v4661 = vpop.xlane.xlu0 %4660
      %v4662 = vsel %vm632, %v3320, 0.0
      %4663 = vadd.xlane.f32.xlu0 %v4662
      %v4664 = vpop.xlane.xlu0 %4663
      %v4665 = vsel %vm632, %v3322, 0.0
      %4666 = vadd.xlane.f32.xlu0 %v4665
      %v4667 = vpop.xlane.xlu0 %4666
      %v4668 = vsel %vm632, %v3324, 0.0
      %4669 = vadd.xlane.f32.xlu0 %v4668
      %v4670 = vpop.xlane.xlu0 %4669
      %v4671 = vsel %vm632, %v3326, 0.0
      %4672 = vadd.xlane.f32.xlu0 %v4671
      %v4673 = vpop.xlane.xlu0 %4672
      %v4674 = vsel %vm632, %v3328, 0.0
      %4675 = vadd.xlane.f32.xlu0 %v4674
      %v4676 = vpop.xlane.xlu0 %4675
      %v4677 = vsel %vm632, %v3330, 0.0
      %4678 = vadd.xlane.f32.xlu0 %v4677
      %v4679 = vpop.xlane.xlu0 %4678
      %v4680 = vsel %vm632, %v3332, 0.0
      %4681 = vadd.xlane.f32.xlu0 %v4680
      %v4682 = vpop.xlane.xlu0 %4681
      %v4683 = vsel %vm632, %v3334, 0.0
      %4684 = vadd.xlane.f32.xlu0 %v4683
      %v4685 = vpop.xlane.xlu0 %4684
      %v4686 = vsel %vm632, %v3336, 0.0
      %4687 = vadd.xlane.f32.xlu0 %v4686
      %v4688 = vpop.xlane.xlu0 %4687
      %v4689 = vsel %vm632, %v3338, 0.0
      %4690 = vadd.xlane.f32.xlu0 %v4689
      %v4691 = vpop.xlane.xlu0 %4690
      %v4692 = vsel %vm632, %v3340, 0.0
      %4693 = vadd.xlane.f32.xlu0 %v4692
      %v4694 = vpop.xlane.xlu0 %4693
      %v4695 = vsel %vm632, %v3342, 0.0
      %4696 = vadd.xlane.f32.xlu0 %v4695
      %v4697 = vpop.xlane.xlu0 %4696
      %v4698 = vsel %vm632, %v3344, 0.0
      %4699 = vadd.xlane.f32.xlu0 %v4698
      %v4700 = vpop.xlane.xlu0 %4699
      %v4701 = vsel %vm632, %v3346, 0.0
      %4702 = vadd.xlane.f32.xlu0 %v4701
      %v4703 = vpop.xlane.xlu0 %4702
      %v4704 = vsel %vm632, %v3348, 0.0
      %4705 = vadd.xlane.f32.xlu0 %v4704
      %v4706 = vpop.xlane.xlu0 %4705
      %v4707 = vsel %vm632, %v3350, 0.0
      %4708 = vadd.xlane.f32.xlu0 %v4707
      %v4709 = vpop.xlane.xlu0 %4708
      %v4710 = vsel %vm632, %v3352, 0.0
      %4711 = vadd.xlane.f32.xlu0 %v4710
      %v4712 = vpop.xlane.xlu0 %4711
      %v4713 = vsel %vm632, %v3354, 0.0
      %4714 = vadd.xlane.f32.xlu0 %v4713
      %v4715 = vpop.xlane.xlu0 %4714
      %v4716 = vsel %vm632, %v3356, 0.0
      %4717 = vadd.xlane.f32.xlu0 %v4716
      %v4718 = vpop.xlane.xlu0 %4717
      %v4719 = vsel %vm632, %v3358, 0.0
      %4720 = vadd.xlane.f32.xlu0 %v4719
      %v4721 = vpop.xlane.xlu0 %4720
      %v4722 = vsel %vm632, %v3360, 0.0
      %4723 = vadd.xlane.f32.xlu0 %v4722
      %v4724 = vpop.xlane.xlu0 %4723
      %v4725 = vsel %vm632, %v3362, 0.0
      %4726 = vadd.xlane.f32.xlu0 %v4725
      %v4727 = vpop.xlane.xlu0 %4726
      %v4728 = vsel %vm632, %v3364, 0.0
      %4729 = vadd.xlane.f32.xlu0 %v4728
      %v4730 = vpop.xlane.xlu0 %4729
      %v4731 = vsel %vm632, %v3366, 0.0
      %4732 = vadd.xlane.f32.xlu0 %v4731
      %v4733 = vpop.xlane.xlu0 %4732
      %v4734 = vsel %vm632, %v3368, 0.0
      %4735 = vadd.xlane.f32.xlu0 %v4734
      %v4736 = vpop.xlane.xlu0 %4735
      %v4737 = vsel %vm632, %v3370, 0.0
      %4738 = vadd.xlane.f32.xlu0 %v4737
      %v4739 = vpop.xlane.xlu0 %4738
      %v4740 = vsel %vm632, %v3372, 0.0
      %4741 = vadd.xlane.f32.xlu0 %v4740
      %v4742 = vpop.xlane.xlu0 %4741
      %v4743 = vsel %vm632, %v3374, 0.0
      %4744 = vadd.xlane.f32.xlu0 %v4743
      %v4745 = vpop.xlane.xlu0 %4744
      %v4746 = vsel %vm632, %v3376, 0.0
      %4747 = vadd.xlane.f32.xlu0 %v4746
      %v4748 = vpop.xlane.xlu0 %4747
      %v4749 = vsel %vm632, %v3378, 0.0
      %4750 = vadd.xlane.f32.xlu0 %v4749
      %v4751 = vpop.xlane.xlu0 %4750
      %v4752 = vsel %vm632, %v3380, 0.0
      %4753 = vadd.xlane.f32.xlu0 %v4752
      %v4754 = vpop.xlane.xlu0 %4753
      %v4755 = vsel %vm632, %v3382, 0.0
      %4756 = vadd.xlane.f32.xlu0 %v4755
      %v4757 = vpop.xlane.xlu0 %4756
      %v4758 = vsel %vm632, %v3384, 0.0
      %4759 = vadd.xlane.f32.xlu0 %v4758
      %v4760 = vpop.xlane.xlu0 %4759
      %v4761 = vsel %vm632, %v3386, 0.0
      %4762 = vadd.xlane.f32.xlu0 %v4761
      %v4763 = vpop.xlane.xlu0 %4762
      %v4764 = vsel %vm632, %v3388, 0.0
      %4765 = vadd.xlane.f32.xlu0 %v4764
      %v4766 = vpop.xlane.xlu0 %4765
      %v4767 = vsel %vm632, %v3390, 0.0
      %4768 = vadd.xlane.f32.xlu0 %v4767
      %v4769 = vpop.xlane.xlu0 %4768
      %v4770 = vsel %vm632, %v3392, 0.0
      %4771 = vadd.xlane.f32.xlu0 %v4770
      %v4772 = vpop.xlane.xlu0 %4771
      %v4773 = vsel %vm632, %v3394, 0.0
      %4774 = vadd.xlane.f32.xlu0 %v4773
      %v4775 = vpop.xlane.xlu0 %4774
      %v4776 = vsel %vm632, %v3396, 0.0
      %4777 = vadd.xlane.f32.xlu0 %v4776
      %v4778 = vpop.xlane.xlu0 %4777
      %v4779 = vsel %vm632, %v3398, 0.0
      %4780 = vadd.xlane.f32.xlu0 %v4779
      %v4781 = vpop.xlane.xlu0 %4780
      %v4782 = vsel %vm632, %v3400, 0.0
      %4783 = vadd.xlane.f32.xlu0 %v4782
      %v4784 = vpop.xlane.xlu0 %4783
      %v4785 = vsel %vm632, %v3402, 0.0
      %4786 = vadd.xlane.f32.xlu0 %v4785
      %v4787 = vpop.xlane.xlu0 %4786
      %v4788 = vsel %vm632, %v3404, 0.0
      %4789 = vadd.xlane.f32.xlu0 %v4788
      %v4790 = vpop.xlane.xlu0 %4789
      %v4791 = vsel %vm632, %v3406, 0.0
      %4792 = vadd.xlane.f32.xlu0 %v4791
      %v4793 = vpop.xlane.xlu0 %4792
      %v4794 = vsel %vm632, %v3408, 0.0
      %4795 = vadd.xlane.f32.xlu0 %v4794
      %v4796 = vpop.xlane.xlu0 %4795
      %v4797 = vsel %vm632, %v3410, 0.0
      %4798 = vadd.xlane.f32.xlu0 %v4797
      %v4799 = vpop.xlane.xlu0 %4798
      %v4800 = vsel %vm632, %v3412, 0.0
      %4801 = vadd.xlane.f32.xlu0 %v4800
      %v4802 = vpop.xlane.xlu0 %4801
      %v4803 = vsel %vm632, %v3414, 0.0
      %4804 = vadd.xlane.f32.xlu0 %v4803
      %v4805 = vpop.xlane.xlu0 %4804
      %v4806 = vsel %vm632, %v3416, 0.0
      %4807 = vadd.xlane.f32.xlu0 %v4806
      %v4808 = vpop.xlane.xlu0 %4807
      %v4809 = vsel %vm632, %v3418, 0.0
      %4810 = vadd.xlane.f32.xlu0 %v4809
      %v4811 = vpop.xlane.xlu0 %4810
      %v4812 = vsel %vm632, %v3420, 0.0
      %4813 = vadd.xlane.f32.xlu0 %v4812
      %v4814 = vpop.xlane.xlu0 %4813
      %v4815 = vsel %vm632, %v3422, 0.0
      %4816 = vadd.xlane.f32.xlu0 %v4815
      %v4817 = vpop.xlane.xlu0 %4816
      %v4818 = vsel %vm632, %v3424, 0.0
      %4819 = vadd.xlane.f32.xlu0 %v4818
      %v4820 = vpop.xlane.xlu0 %4819
      %v4821 = vsel %vm632, %v3426, 0.0
      %4822 = vadd.xlane.f32.xlu0 %v4821
      %v4823 = vpop.xlane.xlu0 %4822
      %v4824 = vsel %vm632, %v3428, 0.0
      %4825 = vadd.xlane.f32.xlu0 %v4824
      %v4826 = vpop.xlane.xlu0 %4825
      %v4827 = vsel %vm632, %v3430, 0.0
      %4828 = vadd.xlane.f32.xlu0 %v4827
      %v4829 = vpop.xlane.xlu0 %4828
      %v4830 = vsel %vm632, %v3432, 0.0
      %4831 = vadd.xlane.f32.xlu0 %v4830
      %v4832 = vpop.xlane.xlu0 %4831
      %v4833 = vsel %vm632, %v3434, 0.0
      %4834 = vadd.xlane.f32.xlu0 %v4833
      %v4835 = vpop.xlane.xlu0 %4834
      %v4836 = vsel %vm632, %v3436, 0.0
      %4837 = vadd.xlane.f32.xlu0 %v4836
      %v4838 = vpop.xlane.xlu0 %4837
      %v4839 = vsel %vm632, %v3438, 0.0
      %4840 = vadd.xlane.f32.xlu0 %v4839
      %v4841 = vpop.xlane.xlu0 %4840
      %v4842 = vsel %vm632, %v3440, 0.0
      %4843 = vadd.xlane.f32.xlu0 %v4842
      %v4844 = vpop.xlane.xlu0 %4843
      %v4845 = vsel %vm632, %v3442, 0.0
      %4846 = vadd.xlane.f32.xlu0 %v4845
      %v4847 = vpop.xlane.xlu0 %4846
      %v4848 = vsel %vm632, %v3444, 0.0
      %4849 = vadd.xlane.f32.xlu0 %v4848
      %v4850 = vpop.xlane.xlu0 %4849
      %v4851 = vsel %vm632, %v3446, 0.0
      %4852 = vadd.xlane.f32.xlu0 %v4851
      %v4853 = vpop.xlane.xlu0 %4852
      %v4854 = vsel %vm632, %v3448, 0.0
      %4855 = vadd.xlane.f32.xlu0 %v4854
      %v4856 = vpop.xlane.xlu0 %4855
      %v4857 = vsel %vm632, %v3450, 0.0
      %4858 = vadd.xlane.f32.xlu0 %v4857
      %v4859 = vpop.xlane.xlu0 %4858
      %v4860 = vsel %vm632, %v3452, 0.0
      %4861 = vadd.xlane.f32.xlu0 %v4860
      %v4862 = vpop.xlane.xlu0 %4861
      %v4863 = vsel %vm632, %v3454, 0.0
      %4864 = vadd.xlane.f32.xlu0 %v4863
      %v4865 = vpop.xlane.xlu0 %4864
      %v4866 = vsel %vm632, %v3456, 0.0
      %4867 = vadd.xlane.f32.xlu0 %v4866
      %v4868 = vpop.xlane.xlu0 %4867
      %v4869 = vsel %vm632, %v3458, 0.0
      %4870 = vadd.xlane.f32.xlu0 %v4869
      %v4871 = vpop.xlane.xlu0 %4870
      %v4872 = vsel %vm632, %v3460, 0.0
      %4873 = vadd.xlane.f32.xlu0 %v4872
      %v4874 = vpop.xlane.xlu0 %4873
      %v4875 = vsel %vm632, %v3462, 0.0
      %4876 = vadd.xlane.f32.xlu0 %v4875
      %v4877 = vpop.xlane.xlu0 %4876
      %v4878 = vsel %vm632, %v3464, 0.0
      %4879 = vadd.xlane.f32.xlu0 %v4878
      %v4880 = vpop.xlane.xlu0 %4879
      %v4881 = vsel %vm632, %v3466, 0.0
      %4882 = vadd.xlane.f32.xlu0 %v4881
      %v4883 = vpop.xlane.xlu0 %4882
      %v4884 = vsel %vm632, %v3468, 0.0
      %4885 = vadd.xlane.f32.xlu0 %v4884
      %v4886 = vpop.xlane.xlu0 %4885
      %v4887 = vsel %vm632, %v3470, 0.0
      %4888 = vadd.xlane.f32.xlu0 %v4887
      %v4889 = vpop.xlane.xlu0 %4888
      %v4890 = vsel %vm632, %v3472, 0.0
      %4891 = vadd.xlane.f32.xlu0 %v4890
      %v4892 = vpop.xlane.xlu0 %4891
      %v4893 = vsel %vm632, %v3474, 0.0
      %4894 = vadd.xlane.f32.xlu0 %v4893
      %v4895 = vpop.xlane.xlu0 %4894
      %v4896 = vsel %vm632, %v3476, 0.0
      %4897 = vadd.xlane.f32.xlu0 %v4896
      %v4898 = vpop.xlane.xlu0 %4897
      %v4899 = vsel %vm632, %v3478, 0.0
      %4900 = vadd.xlane.f32.xlu0 %v4899
      %v4901 = vpop.xlane.xlu0 %4900
      %v4902 = vsel %vm632, %v3480, 0.0
      %4903 = vadd.xlane.f32.xlu0 %v4902
      %v4904 = vpop.xlane.xlu0 %4903
      %v4905 = vsel %vm632, %v3482, 0.0
      %4906 = vadd.xlane.f32.xlu0 %v4905
      %v4907 = vpop.xlane.xlu0 %4906
      %v4908 = vsel %vm632, %v3484, 0.0
      %4909 = vadd.xlane.f32.xlu0 %v4908
      %v4910 = vpop.xlane.xlu0 %4909
      %v4911 = vsel %vm632, %v3486, 0.0
      %4912 = vadd.xlane.f32.xlu0 %v4911
      %v4913 = vpop.xlane.xlu0 %4912
      %v4914 = vsel %vm632, %v3488, 0.0
      %4915 = vadd.xlane.f32.xlu0 %v4914
      %v4916 = vpop.xlane.xlu0 %4915
      %v4917 = vsel %vm632, %v3490, 0.0
      %4918 = vadd.xlane.f32.xlu0 %v4917
      %v4919 = vpop.xlane.xlu0 %4918
      %v4920 = vsel %vm632, %v3492, 0.0
      %4921 = vadd.xlane.f32.xlu0 %v4920
      %v4922 = vpop.xlane.xlu0 %4921
      %v4923 = vsel %vm632, %v3494, 0.0
      %4924 = vadd.xlane.f32.xlu0 %v4923
      %v4925 = vpop.xlane.xlu0 %4924
      %v4926 = vsel %vm632, %v3496, 0.0
      %4927 = vadd.xlane.f32.xlu0 %v4926
      %v4928 = vpop.xlane.xlu0 %4927
      %v4929 = vsel %vm632, %v3498, 0.0
      %4930 = vadd.xlane.f32.xlu0 %v4929
      %v4931 = vpop.xlane.xlu0 %4930
      %v4932 = vsel %vm632, %v3500, 0.0
      %4933 = vadd.xlane.f32.xlu0 %v4932
      %v4934 = vpop.xlane.xlu0 %4933
      %v4935 = vsel %vm632, %v3502, 0.0
      %4936 = vadd.xlane.f32.xlu0 %v4935
      %v4937 = vpop.xlane.xlu0 %4936
      %v4938 = vsel %vm632, %v3504, 0.0
      %4939 = vadd.xlane.f32.xlu0 %v4938
      %v4940 = vpop.xlane.xlu0 %4939
      %v4941 = vsel %vm632, %v3506, 0.0
      %4942 = vadd.xlane.f32.xlu0 %v4941
      %v4943 = vpop.xlane.xlu0 %4942
      %v4944 = vsel %vm632, %v3508, 0.0
      %4945 = vadd.xlane.f32.xlu0 %v4944
      %v4946 = vpop.xlane.xlu0 %4945
      %v4947 = vsel %vm632, %v3510, 0.0
      %4948 = vadd.xlane.f32.xlu0 %v4947
      %v4949 = vpop.xlane.xlu0 %4948
      %v4950 = vsel %vm632, %v3512, 0.0
      %4951 = vadd.xlane.f32.xlu0 %v4950
      %v4952 = vpop.xlane.xlu0 %4951
      %v4953 = vsel %vm632, %v3514, 0.0
      %4954 = vadd.xlane.f32.xlu0 %v4953
      %v4955 = vpop.xlane.xlu0 %4954
      %v4956 = vsel %vm632, %v3516, 0.0
      %4957 = vadd.xlane.f32.xlu0 %v4956
      %v4958 = vpop.xlane.xlu0 %4957
      %v4959 = vsel %vm632, %v3518, 0.0
      %4960 = vadd.xlane.f32.xlu0 %v4959
      %v4961 = vpop.xlane.xlu0 %4960
      %v4962 = vsel %vm632, %v3520, 0.0
      %4963 = vadd.xlane.f32.xlu0 %v4962
      %v4964 = vpop.xlane.xlu0 %4963
      %v4965 = vsel %vm632, %v3522, 0.0
      %4966 = vadd.xlane.f32.xlu0 %v4965
      %v4967 = vpop.xlane.xlu0 %4966
      %v4968 = vsel %vm632, %v3524, 0.0
      %4969 = vadd.xlane.f32.xlu0 %v4968
      %v4970 = vpop.xlane.xlu0 %4969
      %v4971 = vsel %vm632, %v3526, 0.0
      %4972 = vadd.xlane.f32.xlu0 %v4971
      %v4973 = vpop.xlane.xlu0 %4972
      %v4974 = vsel %vm632, %v3528, 0.0
      %4975 = vadd.xlane.f32.xlu0 %v4974
      %v4976 = vpop.xlane.xlu0 %4975
      %v4977 = vsel %vm632, %v3530, 0.0
      %4978 = vadd.xlane.f32.xlu0 %v4977
      %v4979 = vpop.xlane.xlu0 %4978
      %v4980 = vsel %vm632, %v3532, 0.0
      %4981 = vadd.xlane.f32.xlu0 %v4980
      %v4982 = vpop.xlane.xlu0 %4981
      %v4983 = vsel %vm632, %v3534, 0.0
      %4984 = vadd.xlane.f32.xlu0 %v4983
      %v4985 = vpop.xlane.xlu0 %4984
      %v4986 = vsel %vm632, %v3536, 0.0
      %4987 = vadd.xlane.f32.xlu0 %v4986
      %v4988 = vpop.xlane.xlu0 %4987
      %v4989 = vsel %vm632, %v3538, 0.0
      %4990 = vadd.xlane.f32.xlu0 %v4989
      %v4991 = vpop.xlane.xlu0 %4990
      %v4992 = vsel %vm632, %v3540, 0.0
      %4993 = vadd.xlane.f32.xlu0 %v4992
      %v4994 = vpop.xlane.xlu0 %4993
      %v4995 = vsel %vm632, %v3542, 0.0
      %4996 = vadd.xlane.f32.xlu0 %v4995
      %v4997 = vpop.xlane.xlu0 %4996
      %v4998 = vsel %vm632, %v3544, 0.0
      %4999 = vadd.xlane.f32.xlu0 %v4998
      %v5000 = vpop.xlane.xlu0 %4999
      %v5001 = vsel %vm632, %v3546, 0.0
      %5002 = vadd.xlane.f32.xlu0 %v5001
      %v5003 = vpop.xlane.xlu0 %5002
      %v5004 = vsel %vm632, %v3548, 0.0
      %5005 = vadd.xlane.f32.xlu0 %v5004
      %v5006 = vpop.xlane.xlu0 %5005
      %v5007 = vsel %vm632, %v3550, 0.0
      %5008 = vadd.xlane.f32.xlu0 %v5007
      %v5009 = vpop.xlane.xlu0 %5008
      %v5010 = vsel %vm632, %v3552, 0.0
      %5011 = vadd.xlane.f32.xlu0 %v5010
      %v5012 = vpop.xlane.xlu0 %5011
      %v5013 = vsel %vm632, %v3554, 0.0
      %5014 = vadd.xlane.f32.xlu0 %v5013
      %v5015 = vpop.xlane.xlu0 %5014
      %v5016 = vsel %vm632, %v3556, 0.0
      %5017 = vadd.xlane.f32.xlu0 %v5016
      %v5018 = vpop.xlane.xlu0 %5017
      %v5019 = vsel %vm632, %v3558, 0.0
      %5020 = vadd.xlane.f32.xlu0 %v5019
      %v5021 = vpop.xlane.xlu0 %5020
      %v5022 = vsel %vm632, %v3560, 0.0
      %5023 = vadd.xlane.f32.xlu0 %v5022
      %v5024 = vpop.xlane.xlu0 %5023
      %v5025 = vsel %vm632, %v3562, 0.0
      %5026 = vadd.xlane.f32.xlu0 %v5025
      %v5027 = vpop.xlane.xlu0 %5026
      %v5028 = vsel %vm632, %v3564, 0.0
      %5029 = vadd.xlane.f32.xlu0 %v5028
      %v5030 = vpop.xlane.xlu0 %5029
      %v5031 = vsel %vm632, %v3566, 0.0
      %5032 = vadd.xlane.f32.xlu0 %v5031
      %v5033 = vpop.xlane.xlu0 %5032
      %v5034 = vsel %vm632, %v3568, 0.0
      %5035 = vadd.xlane.f32.xlu0 %v5034
      %v5036 = vpop.xlane.xlu0 %5035
      %v5037 = vsel %vm632, %v3570, 0.0
      %5038 = vadd.xlane.f32.xlu0 %v5037
      %v5039 = vpop.xlane.xlu0 %5038
      %v5040 = vsel %vm632, %v3572, 0.0
      %5041 = vadd.xlane.f32.xlu0 %v5040
      %v5042 = vpop.xlane.xlu0 %5041
      %v5043 = vsel %vm632, %v3574, 0.0
      %5044 = vadd.xlane.f32.xlu0 %v5043
      %v5045 = vpop.xlane.xlu0 %5044
      %v5046 = vsel %vm632, %v3576, 0.0
      %5047 = vadd.xlane.f32.xlu0 %v5046
      %v5048 = vpop.xlane.xlu0 %5047
      %v5049 = vsel %vm632, %v3578, 0.0
      %5050 = vadd.xlane.f32.xlu0 %v5049
      %v5051 = vpop.xlane.xlu0 %5050
      %v5052 = vsel %vm632, %v3580, 0.0
      %5053 = vadd.xlane.f32.xlu0 %v5052
      %v5054 = vpop.xlane.xlu0 %5053
      %v5055 = vsel %vm632, %v3582, 0.0
      %5056 = vadd.xlane.f32.xlu0 %v5055
      %v5057 = vpop.xlane.xlu0 %5056
      %v5058 = vsel %vm632, %v3584, 0.0
      %5059 = vadd.xlane.f32.xlu0 %v5058
      %v5060 = vpop.xlane.xlu0 %5059
      %v5061 = vsel %vm632, %v3586, 0.0
      %5062 = vadd.xlane.f32.xlu0 %v5061
      %v5063 = vpop.xlane.xlu0 %5062
      %v5064 = vsel %vm632, %v3588, 0.0
      %5065 = vadd.xlane.f32.xlu0 %v5064
      %v5066 = vpop.xlane.xlu0 %5065
      %v5067 = vsel %vm632, %v3590, 0.0
      %5068 = vadd.xlane.f32.xlu0 %v5067
      %v5069 = vpop.xlane.xlu0 %5068
      %v5070 = vsel %vm632, %v3592, 0.0
      %5071 = vadd.xlane.f32.xlu0 %v5070
      %v5072 = vpop.xlane.xlu0 %5071
      %v5073 = vsel %vm632, %v3594, 0.0
      %5074 = vadd.xlane.f32.xlu0 %v5073
      %v5075 = vpop.xlane.xlu0 %5074
      %v5076 = vsel %vm632, %v3596, 0.0
      %5077 = vadd.xlane.f32.xlu0 %v5076
      %v5078 = vpop.xlane.xlu0 %5077
      %v5079 = vsel %vm632, %v3598, 0.0
      %5080 = vadd.xlane.f32.xlu0 %v5079
      %v5081 = vpop.xlane.xlu0 %5080
      %v5082 = vsel %vm632, %v3600, 0.0
      %5083 = vadd.xlane.f32.xlu0 %v5082
      %v5084 = vpop.xlane.xlu0 %5083
      %v5085 = vsel %vm632, %v3602, 0.0
      %5086 = vadd.xlane.f32.xlu0 %v5085
      %v5087 = vpop.xlane.xlu0 %5086
      %v5088 = vsel %vm632, %v3604, 0.0
      %5089 = vadd.xlane.f32.xlu0 %v5088
      %v5090 = vpop.xlane.xlu0 %5089
      %v5091 = vsel %vm632, %v3606, 0.0
      %5092 = vadd.xlane.f32.xlu0 %v5091
      %v5093 = vpop.xlane.xlu0 %5092
      %v5094 = vsel %vm632, %v3608, 0.0
      %5095 = vadd.xlane.f32.xlu0 %v5094
      %v5096 = vpop.xlane.xlu0 %5095
      %v5097 = vsel %vm632, %v3610, 0.0
      %5098 = vadd.xlane.f32.xlu0 %v5097
      %v5099 = vpop.xlane.xlu0 %5098
      %v5100 = vsel %vm632, %v3612, 0.0
      %5101 = vadd.xlane.f32.xlu0 %v5100
      %v5102 = vpop.xlane.xlu0 %5101
      %v5103 = vsel %vm632, %v3614, 0.0
      %5104 = vadd.xlane.f32.xlu0 %v5103
      %v5105 = vpop.xlane.xlu0 %5104
      %v5106 = vsel %vm632, %v3616, 0.0
      %5107 = vadd.xlane.f32.xlu0 %v5106
      %v5108 = vpop.xlane.xlu0 %5107
      %v5109 = vsel %vm632, %v3618, 0.0
      %5110 = vadd.xlane.f32.xlu0 %v5109
      %v5111 = vpop.xlane.xlu0 %5110
      %v5112 = vsel %vm632, %v3620, 0.0
      %5113 = vadd.xlane.f32.xlu0 %v5112
      %v5114 = vpop.xlane.xlu0 %5113
      %v5115 = vsel %vm632, %v3622, 0.0
      %5116 = vadd.xlane.f32.xlu0 %v5115
      %v5117 = vpop.xlane.xlu0 %5116
      %v5118 = vsel %vm632, %v3624, 0.0
      %5119 = vadd.xlane.f32.xlu0 %v5118
      %v5120 = vpop.xlane.xlu0 %5119
      %v5121 = vsel %vm632, %v3626, 0.0
      %5122 = vadd.xlane.f32.xlu0 %v5121
      %v5123 = vpop.xlane.xlu0 %5122
      %v5124 = vsel %vm632, %v3628, 0.0
      %5125 = vadd.xlane.f32.xlu0 %v5124
      %v5126 = vpop.xlane.xlu0 %5125
      %v5127 = vsel %vm632, %v3630, 0.0
      %5128 = vadd.xlane.f32.xlu0 %v5127
      %v5129 = vpop.xlane.xlu0 %5128
      %v5130 = vsel %vm632, %v3632, 0.0
      %5131 = vadd.xlane.f32.xlu0 %v5130
      %v5132 = vpop.xlane.xlu0 %5131
      %v5133 = vsel %vm632, %v3634, 0.0
      %5134 = vadd.xlane.f32.xlu0 %v5133
      %v5135 = vpop.xlane.xlu0 %5134
      %v5136 = vsel %vm632, %v3636, 0.0
      %5137 = vadd.xlane.f32.xlu0 %v5136
      %v5138 = vpop.xlane.xlu0 %5137
      %v5139 = vsel %vm632, %v3638, 0.0
      %5140 = vadd.xlane.f32.xlu0 %v5139
      %v5141 = vpop.xlane.xlu0 %5140
      %v5142 = vsel %vm632, %v3640, 0.0
      %5143 = vadd.xlane.f32.xlu0 %v5142
      %v5144 = vpop.xlane.xlu0 %5143
      %v5145 = vsel %vm632, %v3642, 0.0
      %5146 = vadd.xlane.f32.xlu0 %v5145
      %v5147 = vpop.xlane.xlu0 %5146
      %v5148 = vsel %vm632, %v3644, 0.0
      %5149 = vadd.xlane.f32.xlu0 %v5148
      %v5150 = vpop.xlane.xlu0 %5149
      %v5151 = vsel %vm632, %v3646, 0.0
      %5152 = vadd.xlane.f32.xlu0 %v5151
      %v5153 = vpop.xlane.xlu0 %5152
      %v5154 = vsel %vm632, %v3648, 0.0
      %5155 = vadd.xlane.f32.xlu0 %v5154
      %v5156 = vpop.xlane.xlu0 %5155
      %v5157 = vsel %vm632, %v3650, 0.0
      %5158 = vadd.xlane.f32.xlu0 %v5157
      %v5159 = vpop.xlane.xlu0 %5158
      %v5160 = vsel %vm632, %v3652, 0.0
      %5161 = vadd.xlane.f32.xlu0 %v5160
      %v5162 = vpop.xlane.xlu0 %5161
      %v5163 = vsel %vm632, %v3654, 0.0
      %5164 = vadd.xlane.f32.xlu0 %v5163
      %v5165 = vpop.xlane.xlu0 %5164
      %v5166 = vsel %vm632, %v3656, 0.0
      %5167 = vadd.xlane.f32.xlu0 %v5166
      %v5168 = vpop.xlane.xlu0 %5167
      %v5169 = vsel %vm632, %v3658, 0.0
      %5170 = vadd.xlane.f32.xlu0 %v5169
      %v5171 = vpop.xlane.xlu0 %5170
      %v5172 = vsel %vm632, %v3660, 0.0
      %5173 = vadd.xlane.f32.xlu0 %v5172
      %v5174 = vpop.xlane.xlu0 %5173
      %v5175 = vsel %vm632, %v3662, 0.0
      %5176 = vadd.xlane.f32.xlu0 %v5175
      %v5177 = vpop.xlane.xlu0 %5176
      %v5178 = vsel %vm632, %v3664, 0.0
      %5179 = vadd.xlane.f32.xlu0 %v5178
      %v5180 = vpop.xlane.xlu0 %5179
      %v5181 = vsel %vm632, %v3666, 0.0
      %5182 = vadd.xlane.f32.xlu0 %v5181
      %v5183 = vpop.xlane.xlu0 %5182
      %v5184 = vsel %vm632, %v3668, 0.0
      %5185 = vadd.xlane.f32.xlu0 %v5184
      %v5186 = vpop.xlane.xlu0 %5185
      %v5187 = vsel %vm632, %v3670, 0.0
      %5188 = vadd.xlane.f32.xlu0 %v5187
      %v5189 = vpop.xlane.xlu0 %5188
      %v5190 = vsel %vm632, %v3672, 0.0
      %5191 = vadd.xlane.f32.xlu0 %v5190
      %v5192 = vpop.xlane.xlu0 %5191
      %v5193 = vsel %vm632, %v3674, 0.0
      %5194 = vadd.xlane.f32.xlu0 %v5193
      %v5195 = vpop.xlane.xlu0 %5194
      %v5196 = vsel %vm632, %v3676, 0.0
      %5197 = vadd.xlane.f32.xlu0 %v5196
      %v5198 = vpop.xlane.xlu0 %5197
      %v5199 = vsel %vm632, %v3678, 0.0
      %5200 = vadd.xlane.f32.xlu0 %v5199
      %v5201 = vpop.xlane.xlu0 %5200
      %v5202 = vsel %vm632, %v3680, 0.0
      %5203 = vadd.xlane.f32.xlu0 %v5202
      %v5204 = vpop.xlane.xlu0 %5203
      %v5205 = vsel %vm632, %v3682, 0.0
      %5206 = vadd.xlane.f32.xlu0 %v5205
      %v5207 = vpop.xlane.xlu0 %5206
      %v5208 = vsel %vm632, %v3684, 0.0
      %5209 = vadd.xlane.f32.xlu0 %v5208
      %v5210 = vpop.xlane.xlu0 %5209
      %v5211 = vsel %vm632, %v3686, 0.0
      %5212 = vadd.xlane.f32.xlu0 %v5211
      %v5213 = vpop.xlane.xlu0 %5212
      %v5214 = vsel %vm632, %v3688, 0.0
      %5215 = vadd.xlane.f32.xlu0 %v5214
      %v5216 = vpop.xlane.xlu0 %5215
      %v5217 = vsel %vm632, %v3690, 0.0
      %5218 = vadd.xlane.f32.xlu0 %v5217
      %v5219 = vpop.xlane.xlu0 %5218
      %v5220 = vsel %vm632, %v3692, 0.0
      %5221 = vadd.xlane.f32.xlu0 %v5220
      %v5222 = vpop.xlane.xlu0 %5221
      %v5223 = vsel %vm632, %v3694, 0.0
      %5224 = vadd.xlane.f32.xlu0 %v5223
      %v5225 = vpop.xlane.xlu0 %5224
      %v5226 = vsel %vm632, %v3696, 0.0
      %5227 = vadd.xlane.f32.xlu0 %v5226
      %v5228 = vpop.xlane.xlu0 %5227
      %v5229 = vsel %vm632, %v3698, 0.0
      %5230 = vadd.xlane.f32.xlu0 %v5229
      %v5231 = vpop.xlane.xlu0 %5230
      %v5232 = vsel %vm632, %v3700, 0.0
      %5233 = vadd.xlane.f32.xlu0 %v5232
      %v5234 = vpop.xlane.xlu0 %5233
      %v5235 = vsel %vm632, %v3702, 0.0
      %5236 = vadd.xlane.f32.xlu0 %v5235
      %v5237 = vpop.xlane.xlu0 %5236
      %v5238 = vsel %vm632, %v3704, 0.0
      %5239 = vadd.xlane.f32.xlu0 %v5238
      %v5240 = vpop.xlane.xlu0 %5239
      %v5241 = vlog2.pop %v3707
      %v5242 = vmul.f32 %v5241, 0.6931472
      %v5243 = vlog2.pop %v3710
      %v5244 = vmul.f32 %v5243, 0.6931472
      %v5245 = vlog2.pop %v3713
      %v5246 = vmul.f32 %v5245, 0.6931472
      %v5247 = vlog2.pop %v3716
      %v5248 = vmul.f32 %v5247, 0.6931472
      %v5249 = vlog2.pop %v3719
      %v5250 = vmul.f32 %v5249, 0.6931472
      %v5251 = vlog2.pop %v3722
      %v5252 = vmul.f32 %v5251, 0.6931472
      %v5253 = vlog2.pop %v3725
      %v5254 = vmul.f32 %v5253, 0.6931472
      %v5255 = vlog2.pop %v3728
      %v5256 = vmul.f32 %v5255, 0.6931472
      %v5257 = vlog2.pop %v3731
      %v5258 = vmul.f32 %v5257, 0.6931472
      %v5259 = vlog2.pop %v3734
      %v5260 = vmul.f32 %v5259, 0.6931472
      %v5261 = vlog2.pop %v3737
      %v5262 = vmul.f32 %v5261, 0.6931472
      %v5263 = vlog2.pop %v3740
      %v5264 = vmul.f32 %v5263, 0.6931472
      %v5265 = vlog2.pop %v3743
      %v5266 = vmul.f32 %v5265, 0.6931472
      %v5267 = vlog2.pop %v3746
      %v5268 = vmul.f32 %v5267, 0.6931472
      %v5269 = vlog2.pop %v3749
      %v5270 = vmul.f32 %v5269, 0.6931472
      %v5271 = vlog2.pop %v3752
      %v5272 = vmul.f32 %v5271, 0.6931472
      %v5273 = vlog2.pop %v3755
      %v5274 = vmul.f32 %v5273, 0.6931472
      %v5275 = vlog2.pop %v3758
      %v5276 = vmul.f32 %v5275, 0.6931472
      %v5277 = vlog2.pop %v3761
      %v5278 = vmul.f32 %v5277, 0.6931472
      %v5279 = vlog2.pop %v3764
      %v5280 = vmul.f32 %v5279, 0.6931472
      %v5281 = vlog2.pop %v3767
      %v5282 = vmul.f32 %v5281, 0.6931472
      %v5283 = vlog2.pop %v3770
      %v5284 = vmul.f32 %v5283, 0.6931472
      %v5285 = vlog2.pop %v3773
      %v5286 = vmul.f32 %v5285, 0.6931472
      %v5287 = vlog2.pop %v3776
      %v5288 = vmul.f32 %v5287, 0.6931472
      %v5289 = vlog2.pop %v3779
      %v5290 = vmul.f32 %v5289, 0.6931472
      %v5291 = vlog2.pop %v3782
      %v5292 = vmul.f32 %v5291, 0.6931472
      %v5293 = vlog2.pop %v3785
      %v5294 = vmul.f32 %v5293, 0.6931472
      %v5295 = vlog2.pop %v3788
      %v5296 = vmul.f32 %v5295, 0.6931472
      %v5297 = vlog2.pop %v3791
      %v5298 = vmul.f32 %v5297, 0.6931472
      %v5299 = vlog2.pop %v3794
      %v5300 = vmul.f32 %v5299, 0.6931472
      %v5301 = vlog2.pop %v3797
      %v5302 = vmul.f32 %v5301, 0.6931472
      %v5303 = vlog2.pop %v3800
      %v5304 = vmul.f32 %v5303, 0.6931472
      %v5305 = vlog2.pop %v3803
      %v5306 = vmul.f32 %v5305, 0.6931472
      %v5307 = vlog2.pop %v3806
      %v5308 = vmul.f32 %v5307, 0.6931472
      %v5309 = vlog2.pop %v3809
      %v5310 = vmul.f32 %v5309, 0.6931472
      %v5311 = vlog2.pop %v3812
      %v5312 = vmul.f32 %v5311, 0.6931472
      %v5313 = vlog2.pop %v3815
      %v5314 = vmul.f32 %v5313, 0.6931472
      %v5315 = vlog2.pop %v3818
      %v5316 = vmul.f32 %v5315, 0.6931472
      %v5317 = vlog2.pop %v3821
      %v5318 = vmul.f32 %v5317, 0.6931472
      %v5319 = vlog2.pop %v3824
      %v5320 = vmul.f32 %v5319, 0.6931472
      %v5321 = vlog2.pop %v3827
      %v5322 = vmul.f32 %v5321, 0.6931472
      %v5323 = vlog2.pop %v3830
      %v5324 = vmul.f32 %v5323, 0.6931472
      %v5325 = vlog2.pop %v3833
      %v5326 = vmul.f32 %v5325, 0.6931472
      %v5327 = vlog2.pop %v3836
      %v5328 = vmul.f32 %v5327, 0.6931472
      %v5329 = vlog2.pop %v3839
      %v5330 = vmul.f32 %v5329, 0.6931472
      %v5331 = vlog2.pop %v3842
      %v5332 = vmul.f32 %v5331, 0.6931472
      %v5333 = vlog2.pop %v3845
      %v5334 = vmul.f32 %v5333, 0.6931472
      %v5335 = vlog2.pop %v3848
      %v5336 = vmul.f32 %v5335, 0.6931472
      %v5337 = vlog2.pop %v3851
      %v5338 = vmul.f32 %v5337, 0.6931472
      %v5339 = vlog2.pop %v3854
      %v5340 = vmul.f32 %v5339, 0.6931472
      %v5341 = vlog2.pop %v3857
      %v5342 = vmul.f32 %v5341, 0.6931472
      %v5343 = vlog2.pop %v3860
      %v5344 = vmul.f32 %v5343, 0.6931472
      %v5345 = vlog2.pop %v3863
      %v5346 = vmul.f32 %v5345, 0.6931472
      %v5347 = vlog2.pop %v3866
      %v5348 = vmul.f32 %v5347, 0.6931472
      %v5349 = vlog2.pop %v3869
      %v5350 = vmul.f32 %v5349, 0.6931472
      %v5351 = vlog2.pop %v3872
      %v5352 = vmul.f32 %v5351, 0.6931472
      %v5353 = vlog2.pop %v3875
      %v5354 = vmul.f32 %v5353, 0.6931472
      %v5355 = vlog2.pop %v3878
      %v5356 = vmul.f32 %v5355, 0.6931472
      %v5357 = vlog2.pop %v3881
      %v5358 = vmul.f32 %v5357, 0.6931472
      %v5359 = vlog2.pop %v3884
      %v5360 = vmul.f32 %v5359, 0.6931472
      %v5361 = vlog2.pop %v3887
      %v5362 = vmul.f32 %v5361, 0.6931472
      %v5363 = vlog2.pop %v3890
      %v5364 = vmul.f32 %v5363, 0.6931472
      %v5365 = vlog2.pop %v3893
      %v5366 = vmul.f32 %v5365, 0.6931472
      %v5367 = vlog2.pop %v3896
      %v5368 = vmul.f32 %v5367, 0.6931472
      %v5369 = vlog2.pop %v3899
      %v5370 = vmul.f32 %v5369, 0.6931472
      %v5371 = vlog2.pop %v3902
      %v5372 = vmul.f32 %v5371, 0.6931472
      %v5373 = vlog2.pop %v3905
      %v5374 = vmul.f32 %v5373, 0.6931472
      %v5375 = vlog2.pop %v3908
      %v5376 = vmul.f32 %v5375, 0.6931472
      %v5377 = vlog2.pop %v3911
      %v5378 = vmul.f32 %v5377, 0.6931472
      %v5379 = vlog2.pop %v3914
      %v5380 = vmul.f32 %v5379, 0.6931472
      %v5381 = vlog2.pop %v3917
      %v5382 = vmul.f32 %v5381, 0.6931472
      %v5383 = vlog2.pop %v3920
      %v5384 = vmul.f32 %v5383, 0.6931472
      %v5385 = vlog2.pop %v3923
      %v5386 = vmul.f32 %v5385, 0.6931472
      %v5387 = vlog2.pop %v3926
      %v5388 = vmul.f32 %v5387, 0.6931472
      %v5389 = vlog2.pop %v3929
      %v5390 = vmul.f32 %v5389, 0.6931472
      %v5391 = vlog2.pop %v3932
      %v5392 = vmul.f32 %v5391, 0.6931472
      %v5393 = vlog2.pop %v3935
      %v5394 = vmul.f32 %v5393, 0.6931472
      %v5395 = vlog2.pop %v3938
      %v5396 = vmul.f32 %v5395, 0.6931472
      %v5397 = vlog2.pop %v3941
      %v5398 = vmul.f32 %v5397, 0.6931472
      %v5399 = vlog2.pop %v3944
      %v5400 = vmul.f32 %v5399, 0.6931472
      %v5401 = vlog2.pop %v3947
      %v5402 = vmul.f32 %v5401, 0.6931472
      %v5403 = vlog2.pop %v3950
      %v5404 = vmul.f32 %v5403, 0.6931472
      %v5405 = vlog2.pop %v3953
      %v5406 = vmul.f32 %v5405, 0.6931472
      %v5407 = vlog2.pop %v3956
      %v5408 = vmul.f32 %v5407, 0.6931472
      %v5409 = vlog2.pop %v3959
      %v5410 = vmul.f32 %v5409, 0.6931472
      %v5411 = vlog2.pop %v3962
      %v5412 = vmul.f32 %v5411, 0.6931472
      %v5413 = vlog2.pop %v3965
      %v5414 = vmul.f32 %v5413, 0.6931472
      %v5415 = vlog2.pop %v3968
      %v5416 = vmul.f32 %v5415, 0.6931472
      %v5417 = vlog2.pop %v3971
      %v5418 = vmul.f32 %v5417, 0.6931472
      %v5419 = vlog2.pop %v3974
      %v5420 = vmul.f32 %v5419, 0.6931472
      %v5421 = vlog2.pop %v3977
      %v5422 = vmul.f32 %v5421, 0.6931472
      %v5423 = vlog2.pop %v3980
      %v5424 = vmul.f32 %v5423, 0.6931472
      %v5425 = vlog2.pop %v3983
      %v5426 = vmul.f32 %v5425, 0.6931472
      %v5427 = vlog2.pop %v3986
      %v5428 = vmul.f32 %v5427, 0.6931472
      %v5429 = vlog2.pop %v3989
      %v5430 = vmul.f32 %v5429, 0.6931472
      %v5431 = vlog2.pop %v3992
      %v5432 = vmul.f32 %v5431, 0.6931472
      %v5433 = vlog2.pop %v3995
      %v5434 = vmul.f32 %v5433, 0.6931472
      %v5435 = vlog2.pop %v3998
      %v5436 = vmul.f32 %v5435, 0.6931472
      %v5437 = vlog2.pop %v4001
      %v5438 = vmul.f32 %v5437, 0.6931472
      %v5439 = vlog2.pop %v4004
      %v5440 = vmul.f32 %v5439, 0.6931472
      %v5441 = vlog2.pop %v4007
      %v5442 = vmul.f32 %v5441, 0.6931472
      %v5443 = vlog2.pop %v4010
      %v5444 = vmul.f32 %v5443, 0.6931472
      %v5445 = vlog2.pop %v4013
      %v5446 = vmul.f32 %v5445, 0.6931472
      %v5447 = vlog2.pop %v4016
      %v5448 = vmul.f32 %v5447, 0.6931472
      %v5449 = vlog2.pop %v4019
      %v5450 = vmul.f32 %v5449, 0.6931472
      %v5451 = vlog2.pop %v4022
      %v5452 = vmul.f32 %v5451, 0.6931472
      %v5453 = vlog2.pop %v4025
      %v5454 = vmul.f32 %v5453, 0.6931472
      %v5455 = vlog2.pop %v4028
      %v5456 = vmul.f32 %v5455, 0.6931472
      %v5457 = vlog2.pop %v4031
      %v5458 = vmul.f32 %v5457, 0.6931472
      %v5459 = vlog2.pop %v4034
      %v5460 = vmul.f32 %v5459, 0.6931472
      %v5461 = vlog2.pop %v4037
      %v5462 = vmul.f32 %v5461, 0.6931472
      %v5463 = vlog2.pop %v4040
      %v5464 = vmul.f32 %v5463, 0.6931472
      %v5465 = vlog2.pop %v4043
      %v5466 = vmul.f32 %v5465, 0.6931472
      %v5467 = vlog2.pop %v4046
      %v5468 = vmul.f32 %v5467, 0.6931472
      %v5469 = vlog2.pop %v4049
      %v5470 = vmul.f32 %v5469, 0.6931472
      %v5471 = vlog2.pop %v4052
      %v5472 = vmul.f32 %v5471, 0.6931472
      %v5473 = vlog2.pop %v4055
      %v5474 = vmul.f32 %v5473, 0.6931472
      %v5475 = vlog2.pop %v4058
      %v5476 = vmul.f32 %v5475, 0.6931472
      %v5477 = vlog2.pop %v4061
      %v5478 = vmul.f32 %v5477, 0.6931472
      %v5479 = vlog2.pop %v4064
      %v5480 = vmul.f32 %v5479, 0.6931472
      %v5481 = vlog2.pop %v4067
      %v5482 = vmul.f32 %v5481, 0.6931472
      %v5483 = vlog2.pop %v4070
      %v5484 = vmul.f32 %v5483, 0.6931472
      %v5485 = vlog2.pop %v4073
      %v5486 = vmul.f32 %v5485, 0.6931472
      %v5487 = vlog2.pop %v4076
      %v5488 = vmul.f32 %v5487, 0.6931472
      %v5489 = vlog2.pop %v4079
      %v5490 = vmul.f32 %v5489, 0.6931472
      %v5491 = vlog2.pop %v4082
      %v5492 = vmul.f32 %v5491, 0.6931472
      %v5493 = vlog2.pop %v4085
      %v5494 = vmul.f32 %v5493, 0.6931472
      %v5495 = vlog2.pop %v4088
      %v5496 = vmul.f32 %v5495, 0.6931472
      %v5497 = vlog2.pop %v4091
      %v5498 = vmul.f32 %v5497, 0.6931472
      %v5499 = vlog2.pop %v4094
      %v5500 = vmul.f32 %v5499, 0.6931472
      %v5501 = vlog2.pop %v4097
      %v5502 = vmul.f32 %v5501, 0.6931472
      %v5503 = vlog2.pop %v4100
      %v5504 = vmul.f32 %v5503, 0.6931472
      %v5505 = vlog2.pop %v4103
      %v5506 = vmul.f32 %v5505, 0.6931472
      %v5507 = vlog2.pop %v4106
      %v5508 = vmul.f32 %v5507, 0.6931472
      %v5509 = vlog2.pop %v4109
      %v5510 = vmul.f32 %v5509, 0.6931472
      %v5511 = vlog2.pop %v4112
      %v5512 = vmul.f32 %v5511, 0.6931472
      %v5513 = vlog2.pop %v4115
      %v5514 = vmul.f32 %v5513, 0.6931472
      %v5515 = vlog2.pop %v4118
      %v5516 = vmul.f32 %v5515, 0.6931472
      %v5517 = vlog2.pop %v4121
      %v5518 = vmul.f32 %v5517, 0.6931472
      %v5519 = vlog2.pop %v4124
      %v5520 = vmul.f32 %v5519, 0.6931472
      %v5521 = vlog2.pop %v4127
      %v5522 = vmul.f32 %v5521, 0.6931472
      %v5523 = vlog2.pop %v4130
      %v5524 = vmul.f32 %v5523, 0.6931472
      %v5525 = vlog2.pop %v4133
      %v5526 = vmul.f32 %v5525, 0.6931472
      %v5527 = vlog2.pop %v4136
      %v5528 = vmul.f32 %v5527, 0.6931472
      %v5529 = vlog2.pop %v4139
      %v5530 = vmul.f32 %v5529, 0.6931472
      %v5531 = vlog2.pop %v4142
      %v5532 = vmul.f32 %v5531, 0.6931472
      %v5533 = vlog2.pop %v4145
      %v5534 = vmul.f32 %v5533, 0.6931472
      %v5535 = vlog2.pop %v4148
      %v5536 = vmul.f32 %v5535, 0.6931472
      %v5537 = vlog2.pop %v4151
      %v5538 = vmul.f32 %v5537, 0.6931472
      %v5539 = vlog2.pop %v4154
      %v5540 = vmul.f32 %v5539, 0.6931472
      %v5541 = vlog2.pop %v4157
      %v5542 = vmul.f32 %v5541, 0.6931472
      %v5543 = vlog2.pop %v4160
      %v5544 = vmul.f32 %v5543, 0.6931472
      %v5545 = vlog2.pop %v4163
      %v5546 = vmul.f32 %v5545, 0.6931472
      %v5547 = vlog2.pop %v4166
      %v5548 = vmul.f32 %v5547, 0.6931472
      %v5549 = vlog2.pop %v4169
      %v5550 = vmul.f32 %v5549, 0.6931472
      %v5551 = vlog2.pop %v4172
      %v5552 = vmul.f32 %v5551, 0.6931472
      %v5553 = vlog2.pop %v4175
      %v5554 = vmul.f32 %v5553, 0.6931472
      %v5555 = vlog2.pop %v4178
      %v5556 = vmul.f32 %v5555, 0.6931472
      %v5557 = vlog2.pop %v4181
      %v5558 = vmul.f32 %v5557, 0.6931472
      %v5559 = vlog2.pop %v4184
      %v5560 = vmul.f32 %v5559, 0.6931472
      %v5561 = vlog2.pop %v4187
      %v5562 = vmul.f32 %v5561, 0.6931472
      %v5563 = vlog2.pop %v4190
      %v5564 = vmul.f32 %v5563, 0.6931472
      %v5565 = vlog2.pop %v4193
      %v5566 = vmul.f32 %v5565, 0.6931472
      %v5567 = vlog2.pop %v4196
      %v5568 = vmul.f32 %v5567, 0.6931472
      %v5569 = vlog2.pop %v4199
      %v5570 = vmul.f32 %v5569, 0.6931472
      %v5571 = vlog2.pop %v4202
      %v5572 = vmul.f32 %v5571, 0.6931472
      %v5573 = vlog2.pop %v4205
      %v5574 = vmul.f32 %v5573, 0.6931472
      %v5575 = vlog2.pop %v4208
      %v5576 = vmul.f32 %v5575, 0.6931472
      %v5577 = vlog2.pop %v4211
      %v5578 = vmul.f32 %v5577, 0.6931472
      %v5579 = vlog2.pop %v4214
      %v5580 = vmul.f32 %v5579, 0.6931472
      %v5581 = vlog2.pop %v4217
      %v5582 = vmul.f32 %v5581, 0.6931472
      %v5583 = vlog2.pop %v4220
      %v5584 = vmul.f32 %v5583, 0.6931472
      %v5585 = vlog2.pop %v4223
      %v5586 = vmul.f32 %v5585, 0.6931472
      %v5587 = vlog2.pop %v4226
      %v5588 = vmul.f32 %v5587, 0.6931472
      %v5589 = vlog2.pop %v4229
      %v5590 = vmul.f32 %v5589, 0.6931472
      %v5591 = vlog2.pop %v4232
      %v5592 = vmul.f32 %v5591, 0.6931472
      %v5593 = vlog2.pop %v4235
      %v5594 = vmul.f32 %v5593, 0.6931472
      %v5595 = vlog2.pop %v4238
      %v5596 = vmul.f32 %v5595, 0.6931472
      %v5597 = vlog2.pop %v4241
      %v5598 = vmul.f32 %v5597, 0.6931472
      %v5599 = vlog2.pop %v4244
      %v5600 = vmul.f32 %v5599, 0.6931472
      %v5601 = vlog2.pop %v4247
      %v5602 = vmul.f32 %v5601, 0.6931472
      %v5603 = vlog2.pop %v4250
      %v5604 = vmul.f32 %v5603, 0.6931472
      %v5605 = vlog2.pop %v4253
      %v5606 = vmul.f32 %v5605, 0.6931472
      %v5607 = vlog2.pop %v4256
      %v5608 = vmul.f32 %v5607, 0.6931472
      %v5609 = vlog2.pop %v4259
      %v5610 = vmul.f32 %v5609, 0.6931472
      %v5611 = vlog2.pop %v4262
      %v5612 = vmul.f32 %v5611, 0.6931472
      %v5613 = vlog2.pop %v4265
      %v5614 = vmul.f32 %v5613, 0.6931472
      %v5615 = vlog2.pop %v4268
      %v5616 = vmul.f32 %v5615, 0.6931472
      %v5617 = vlog2.pop %v4271
      %v5618 = vmul.f32 %v5617, 0.6931472
      %v5619 = vlog2.pop %v4274
      %v5620 = vmul.f32 %v5619, 0.6931472
      %v5621 = vlog2.pop %v4277
      %v5622 = vmul.f32 %v5621, 0.6931472
      %v5623 = vlog2.pop %v4280
      %v5624 = vmul.f32 %v5623, 0.6931472
      %v5625 = vlog2.pop %v4283
      %v5626 = vmul.f32 %v5625, 0.6931472
      %v5627 = vlog2.pop %v4286
      %v5628 = vmul.f32 %v5627, 0.6931472
      %v5629 = vlog2.pop %v4289
      %v5630 = vmul.f32 %v5629, 0.6931472
      %v5631 = vlog2.pop %v4292
      %v5632 = vmul.f32 %v5631, 0.6931472
      %v5633 = vlog2.pop %v4295
      %v5634 = vmul.f32 %v5633, 0.6931472
      %v5635 = vlog2.pop %v4298
      %v5636 = vmul.f32 %v5635, 0.6931472
      %v5637 = vlog2.pop %v4301
      %v5638 = vmul.f32 %v5637, 0.6931472
      %v5639 = vlog2.pop %v4304
      %v5640 = vmul.f32 %v5639, 0.6931472
      %v5641 = vlog2.pop %v4307
      %v5642 = vmul.f32 %v5641, 0.6931472
      %v5643 = vlog2.pop %v4310
      %v5644 = vmul.f32 %v5643, 0.6931472
      %v5645 = vlog2.pop %v4313
      %v5646 = vmul.f32 %v5645, 0.6931472
      %v5647 = vlog2.pop %v4316
      %v5648 = vmul.f32 %v5647, 0.6931472
      %v5649 = vlog2.pop %v4319
      %v5650 = vmul.f32 %v5649, 0.6931472
      %v5651 = vlog2.pop %v4322
      %v5652 = vmul.f32 %v5651, 0.6931472
      %v5653 = vlog2.pop %v4325
      %v5654 = vmul.f32 %v5653, 0.6931472
      %v5655 = vlog2.pop %v4328
      %v5656 = vmul.f32 %v5655, 0.6931472
      %v5657 = vlog2.pop %v4331
      %v5658 = vmul.f32 %v5657, 0.6931472
      %v5659 = vlog2.pop %v4334
      %v5660 = vmul.f32 %v5659, 0.6931472
      %v5661 = vlog2.pop %v4337
      %v5662 = vmul.f32 %v5661, 0.6931472
      %v5663 = vlog2.pop %v4340
      %v5664 = vmul.f32 %v5663, 0.6931472
      %v5665 = vlog2.pop %v4343
      %v5666 = vmul.f32 %v5665, 0.6931472
      %v5667 = vlog2.pop %v4346
      %v5668 = vmul.f32 %v5667, 0.6931472
      %v5669 = vlog2.pop %v4349
      %v5670 = vmul.f32 %v5669, 0.6931472
      %v5671 = vlog2.pop %v4352
      %v5672 = vmul.f32 %v5671, 0.6931472
      %v5673 = vlog2.pop %v4355
      %v5674 = vmul.f32 %v5673, 0.6931472
      %v5675 = vlog2.pop %v4358
      %v5676 = vmul.f32 %v5675, 0.6931472
      %v5677 = vlog2.pop %v4361
      %v5678 = vmul.f32 %v5677, 0.6931472
      %v5679 = vlog2.pop %v4364
      %v5680 = vmul.f32 %v5679, 0.6931472
      %v5681 = vlog2.pop %v4367
      %v5682 = vmul.f32 %v5681, 0.6931472
      %v5683 = vlog2.pop %v4370
      %v5684 = vmul.f32 %v5683, 0.6931472
      %v5685 = vlog2.pop %v4373
      %v5686 = vmul.f32 %v5685, 0.6931472
      %v5687 = vlog2.pop %v4376
      %v5688 = vmul.f32 %v5687, 0.6931472
      %v5689 = vlog2.pop %v4379
      %v5690 = vmul.f32 %v5689, 0.6931472
      %v5691 = vlog2.pop %v4382
      %v5692 = vmul.f32 %v5691, 0.6931472
      %v5693 = vlog2.pop %v4385
      %v5694 = vmul.f32 %v5693, 0.6931472
      %v5695 = vlog2.pop %v4388
      %v5696 = vmul.f32 %v5695, 0.6931472
      %v5697 = vlog2.pop %v4391
      %v5698 = vmul.f32 %v5697, 0.6931472
      %v5699 = vlog2.pop %v4394
      %v5700 = vmul.f32 %v5699, 0.6931472
      %v5701 = vlog2.pop %v4397
      %v5702 = vmul.f32 %v5701, 0.6931472
      %v5703 = vlog2.pop %v4400
      %v5704 = vmul.f32 %v5703, 0.6931472
      %v5705 = vlog2.pop %v4403
      %v5706 = vmul.f32 %v5705, 0.6931472
      %v5707 = vlog2.pop %v4406
      %v5708 = vmul.f32 %v5707, 0.6931472
      %v5709 = vlog2.pop %v4409
      %v5710 = vmul.f32 %v5709, 0.6931472
      %v5711 = vlog2.pop %v4412
      %v5712 = vmul.f32 %v5711, 0.6931472
      %v5713 = vlog2.pop %v4415
      %v5714 = vmul.f32 %v5713, 0.6931472
      %v5715 = vlog2.pop %v4418
      %v5716 = vmul.f32 %v5715, 0.6931472
      %v5717 = vlog2.pop %v4421
      %v5718 = vmul.f32 %v5717, 0.6931472
      %v5719 = vlog2.pop %v4424
      %v5720 = vmul.f32 %v5719, 0.6931472
      %v5721 = vlog2.pop %v4427
      %v5722 = vmul.f32 %v5721, 0.6931472
      %v5723 = vlog2.pop %v4430
      %v5724 = vmul.f32 %v5723, 0.6931472
      %v5725 = vlog2.pop %v4433
      %v5726 = vmul.f32 %v5725, 0.6931472
      %v5727 = vlog2.pop %v4436
      %v5728 = vmul.f32 %v5727, 0.6931472
      %v5729 = vlog2.pop %v4439
      %v5730 = vmul.f32 %v5729, 0.6931472
      %v5731 = vlog2.pop %v4442
      %v5732 = vmul.f32 %v5731, 0.6931472
      %v5733 = vlog2.pop %v4445
      %v5734 = vmul.f32 %v5733, 0.6931472
      %v5735 = vlog2.pop %v4448
      %v5736 = vmul.f32 %v5735, 0.6931472
      %v5737 = vlog2.pop %v4451
      %v5738 = vmul.f32 %v5737, 0.6931472
      %v5739 = vlog2.pop %v4454
      %v5740 = vmul.f32 %v5739, 0.6931472
      %v5741 = vlog2.pop %v4457
      %v5742 = vmul.f32 %v5741, 0.6931472
      %v5743 = vlog2.pop %v4460
      %v5744 = vmul.f32 %v5743, 0.6931472
      %v5745 = vlog2.pop %v4463
      %v5746 = vmul.f32 %v5745, 0.6931472
      %v5747 = vlog2.pop %v4466
      %v5748 = vmul.f32 %v5747, 0.6931472
      %v5749 = vlog2.pop %v4469
      %v5750 = vmul.f32 %v5749, 0.6931472
      %v5751 = vlog2.pop %v4472
      %v5752 = vmul.f32 %v5751, 0.6931472
      %v5753 = vlog2.pop %v4475
      %v5754 = vmul.f32 %v5753, 0.6931472
      %v5755 = vlog2.pop %v4478
      %v5756 = vmul.f32 %v5755, 0.6931472
      %v5757 = vlog2.pop %v4481
      %v5758 = vmul.f32 %v5757, 0.6931472
      %v5759 = vlog2.pop %v4484
      %v5760 = vmul.f32 %v5759, 0.6931472
      %v5761 = vlog2.pop %v4487
      %v5762 = vmul.f32 %v5761, 0.6931472
      %v5763 = vlog2.pop %v4490
      %v5764 = vmul.f32 %v5763, 0.6931472
      %v5765 = vlog2.pop %v4493
      %v5766 = vmul.f32 %v5765, 0.6931472
      %v5767 = vlog2.pop %v4496
      %v5768 = vmul.f32 %v5767, 0.6931472
      %v5769 = vlog2.pop %v4499
      %v5770 = vmul.f32 %v5769, 0.6931472
      %v5771 = vlog2.pop %v4502
      %v5772 = vmul.f32 %v5771, 0.6931472
      %v5773 = vlog2.pop %v4505
      %v5774 = vmul.f32 %v5773, 0.6931472
      %v5775 = vlog2.pop %v4508
      %v5776 = vmul.f32 %v5775, 0.6931472
      %v5777 = vlog2.pop %v4511
      %v5778 = vmul.f32 %v5777, 0.6931472
      %v5779 = vlog2.pop %v4514
      %v5780 = vmul.f32 %v5779, 0.6931472
      %v5781 = vlog2.pop %v4517
      %v5782 = vmul.f32 %v5781, 0.6931472
      %v5783 = vlog2.pop %v4520
      %v5784 = vmul.f32 %v5783, 0.6931472
      %v5785 = vlog2.pop %v4523
      %v5786 = vmul.f32 %v5785, 0.6931472
      %v5787 = vlog2.pop %v4526
      %v5788 = vmul.f32 %v5787, 0.6931472
      %v5789 = vlog2.pop %v4529
      %v5790 = vmul.f32 %v5789, 0.6931472
      %v5791 = vlog2.pop %v4532
      %v5792 = vmul.f32 %v5791, 0.6931472
      %v5793 = vlog2.pop %v4535
      %v5794 = vmul.f32 %v5793, 0.6931472
      %v5795 = vlog2.pop %v4538
      %v5796 = vmul.f32 %v5795, 0.6931472
      %v5797 = vlog2.pop %v4541
      %v5798 = vmul.f32 %v5797, 0.6931472
      %v5799 = vlog2.pop %v4544
      %v5800 = vmul.f32 %v5799, 0.6931472
      %v5801 = vlog2.pop %v4547
      %v5802 = vmul.f32 %v5801, 0.6931472
      %v5803 = vlog2.pop %v4550
      %v5804 = vmul.f32 %v5803, 0.6931472
      %v5805 = vlog2.pop %v4553
      %v5806 = vmul.f32 %v5805, 0.6931472
      %v5807 = vlog2.pop %v4556
      %v5808 = vmul.f32 %v5807, 0.6931472
      %v5809 = vlog2.pop %v4559
      %v5810 = vmul.f32 %v5809, 0.6931472
      %v5811 = vlog2.pop %v4562
      %v5812 = vmul.f32 %v5811, 0.6931472
      %v5813 = vlog2.pop %v4565
      %v5814 = vmul.f32 %v5813, 0.6931472
      %v5815 = vlog2.pop %v4568
      %v5816 = vmul.f32 %v5815, 0.6931472
      %v5817 = vlog2.pop %v4571
      %v5818 = vmul.f32 %v5817, 0.6931472
      %v5819 = vlog2.pop %v4574
      %v5820 = vmul.f32 %v5819, 0.6931472
      %v5821 = vlog2.pop %v4577
      %v5822 = vmul.f32 %v5821, 0.6931472
      %v5823 = vlog2.pop %v4580
      %v5824 = vmul.f32 %v5823, 0.6931472
      %v5825 = vlog2.pop %v4583
      %v5826 = vmul.f32 %v5825, 0.6931472
      %v5827 = vlog2.pop %v4586
      %v5828 = vmul.f32 %v5827, 0.6931472
      %v5829 = vlog2.pop %v4589
      %v5830 = vmul.f32 %v5829, 0.6931472
      %v5831 = vlog2.pop %v4592
      %v5832 = vmul.f32 %v5831, 0.6931472
      %v5833 = vlog2.pop %v4595
      %v5834 = vmul.f32 %v5833, 0.6931472
      %v5835 = vlog2.pop %v4598
      %v5836 = vmul.f32 %v5835, 0.6931472
      %v5837 = vlog2.pop %v4601
      %v5838 = vmul.f32 %v5837, 0.6931472
      %v5839 = vlog2.pop %v4604
      %v5840 = vmul.f32 %v5839, 0.6931472
      %v5841 = vlog2.pop %v4607
      %v5842 = vmul.f32 %v5841, 0.6931472
      %v5843 = vlog2.pop %v4610
      %v5844 = vmul.f32 %v5843, 0.6931472
      %v5845 = vlog2.pop %v4613
      %v5846 = vmul.f32 %v5845, 0.6931472
      %v5847 = vlog2.pop %v4616
      %v5848 = vmul.f32 %v5847, 0.6931472
      %v5849 = vlog2.pop %v4619
      %v5850 = vmul.f32 %v5849, 0.6931472
      %v5851 = vlog2.pop %v4622
      %v5852 = vmul.f32 %v5851, 0.6931472
      %v5853 = vlog2.pop %v4625
      %v5854 = vmul.f32 %v5853, 0.6931472
      %v5855 = vlog2.pop %v4628
      %v5856 = vmul.f32 %v5855, 0.6931472
      %v5857 = vlog2.pop %v4631
      %v5858 = vmul.f32 %v5857, 0.6931472
      %v5859 = vlog2.pop %v4634
      %v5860 = vmul.f32 %v5859, 0.6931472
      %v5861 = vlog2.pop %v4637
      %v5862 = vmul.f32 %v5861, 0.6931472
      %v5863 = vlog2.pop %v4640
      %v5864 = vmul.f32 %v5863, 0.6931472
      %v5865 = vlog2.pop %v4643
      %v5866 = vmul.f32 %v5865, 0.6931472
      %v5867 = vlog2.pop %v4646
      %v5868 = vmul.f32 %v5867, 0.6931472
      %v5869 = vlog2.pop %v4649
      %v5870 = vmul.f32 %v5869, 0.6931472
      %v5871 = vlog2.pop %v4652
      %v5872 = vmul.f32 %v5871, 0.6931472
      %v5873 = vlog2.pop %v4655
      %v5874 = vmul.f32 %v5873, 0.6931472
      %v5875 = vlog2.pop %v4658
      %v5876 = vmul.f32 %v5875, 0.6931472
      %v5877 = vlog2.pop %v4661
      %v5878 = vmul.f32 %v5877, 0.6931472
      %v5879 = vlog2.pop %v4664
      %v5880 = vmul.f32 %v5879, 0.6931472
      %v5881 = vlog2.pop %v4667
      %v5882 = vmul.f32 %v5881, 0.6931472
      %v5883 = vlog2.pop %v4670
      %v5884 = vmul.f32 %v5883, 0.6931472
      %v5885 = vlog2.pop %v4673
      %v5886 = vmul.f32 %v5885, 0.6931472
      %v5887 = vlog2.pop %v4676
      %v5888 = vmul.f32 %v5887, 0.6931472
      %v5889 = vlog2.pop %v4679
      %v5890 = vmul.f32 %v5889, 0.6931472
      %v5891 = vlog2.pop %v4682
      %v5892 = vmul.f32 %v5891, 0.6931472
      %v5893 = vlog2.pop %v4685
      %v5894 = vmul.f32 %v5893, 0.6931472
      %v5895 = vlog2.pop %v4688
      %v5896 = vmul.f32 %v5895, 0.6931472
      %v5897 = vlog2.pop %v4691
      %v5898 = vmul.f32 %v5897, 0.6931472
      %v5899 = vlog2.pop %v4694
      %v5900 = vmul.f32 %v5899, 0.6931472
      %v5901 = vlog2.pop %v4697
      %v5902 = vmul.f32 %v5901, 0.6931472
      %v5903 = vlog2.pop %v4700
      %v5904 = vmul.f32 %v5903, 0.6931472
      %v5905 = vlog2.pop %v4703
      %v5906 = vmul.f32 %v5905, 0.6931472
      %v5907 = vlog2.pop %v4706
      %v5908 = vmul.f32 %v5907, 0.6931472
      %v5909 = vlog2.pop %v4709
      %v5910 = vmul.f32 %v5909, 0.6931472
      %v5911 = vlog2.pop %v4712
      %v5912 = vmul.f32 %v5911, 0.6931472
      %v5913 = vlog2.pop %v4715
      %v5914 = vmul.f32 %v5913, 0.6931472
      %v5915 = vlog2.pop %v4718
      %v5916 = vmul.f32 %v5915, 0.6931472
      %v5917 = vlog2.pop %v4721
      %v5918 = vmul.f32 %v5917, 0.6931472
      %v5919 = vlog2.pop %v4724
      %v5920 = vmul.f32 %v5919, 0.6931472
      %v5921 = vlog2.pop %v4727
      %v5922 = vmul.f32 %v5921, 0.6931472
      %v5923 = vlog2.pop %v4730
      %v5924 = vmul.f32 %v5923, 0.6931472
      %v5925 = vlog2.pop %v4733
      %v5926 = vmul.f32 %v5925, 0.6931472
      %v5927 = vlog2.pop %v4736
      %v5928 = vmul.f32 %v5927, 0.6931472
      %v5929 = vlog2.pop %v4739
      %v5930 = vmul.f32 %v5929, 0.6931472
      %v5931 = vlog2.pop %v4742
      %v5932 = vmul.f32 %v5931, 0.6931472
      %v5933 = vlog2.pop %v4745
      %v5934 = vmul.f32 %v5933, 0.6931472
      %v5935 = vlog2.pop %v4748
      %v5936 = vmul.f32 %v5935, 0.6931472
      %v5937 = vlog2.pop %v4751
      %v5938 = vmul.f32 %v5937, 0.6931472
      %v5939 = vlog2.pop %v4754
      %v5940 = vmul.f32 %v5939, 0.6931472
      %v5941 = vlog2.pop %v4757
      %v5942 = vmul.f32 %v5941, 0.6931472
      %v5943 = vlog2.pop %v4760
      %v5944 = vmul.f32 %v5943, 0.6931472
      %v5945 = vlog2.pop %v4763
      %v5946 = vmul.f32 %v5945, 0.6931472
      %v5947 = vlog2.pop %v4766
      %v5948 = vmul.f32 %v5947, 0.6931472
      %v5949 = vlog2.pop %v4769
      %v5950 = vmul.f32 %v5949, 0.6931472
      %v5951 = vlog2.pop %v4772
      %v5952 = vmul.f32 %v5951, 0.6931472
      %v5953 = vlog2.pop %v4775
      %v5954 = vmul.f32 %v5953, 0.6931472
      %v5955 = vlog2.pop %v4778
      %v5956 = vmul.f32 %v5955, 0.6931472
      %v5957 = vlog2.pop %v4781
      %v5958 = vmul.f32 %v5957, 0.6931472
      %v5959 = vlog2.pop %v4784
      %v5960 = vmul.f32 %v5959, 0.6931472
      %v5961 = vlog2.pop %v4787
      %v5962 = vmul.f32 %v5961, 0.6931472
      %v5963 = vlog2.pop %v4790
      %v5964 = vmul.f32 %v5963, 0.6931472
      %v5965 = vlog2.pop %v4793
      %v5966 = vmul.f32 %v5965, 0.6931472
      %v5967 = vlog2.pop %v4796
      %v5968 = vmul.f32 %v5967, 0.6931472
      %v5969 = vlog2.pop %v4799
      %v5970 = vmul.f32 %v5969, 0.6931472
      %v5971 = vlog2.pop %v4802
      %v5972 = vmul.f32 %v5971, 0.6931472
      %v5973 = vlog2.pop %v4805
      %v5974 = vmul.f32 %v5973, 0.6931472
      %v5975 = vlog2.pop %v4808
      %v5976 = vmul.f32 %v5975, 0.6931472
      %v5977 = vlog2.pop %v4811
      %v5978 = vmul.f32 %v5977, 0.6931472
      %v5979 = vlog2.pop %v4814
      %v5980 = vmul.f32 %v5979, 0.6931472
      %v5981 = vlog2.pop %v4817
      %v5982 = vmul.f32 %v5981, 0.6931472
      %v5983 = vlog2.pop %v4820
      %v5984 = vmul.f32 %v5983, 0.6931472
      %v5985 = vlog2.pop %v4823
      %v5986 = vmul.f32 %v5985, 0.6931472
      %v5987 = vlog2.pop %v4826
      %v5988 = vmul.f32 %v5987, 0.6931472
      %v5989 = vlog2.pop %v4829
      %v5990 = vmul.f32 %v5989, 0.6931472
      %v5991 = vlog2.pop %v4832
      %v5992 = vmul.f32 %v5991, 0.6931472
      %v5993 = vlog2.pop %v4835
      %v5994 = vmul.f32 %v5993, 0.6931472
      %v5995 = vlog2.pop %v4838
      %v5996 = vmul.f32 %v5995, 0.6931472
      %v5997 = vlog2.pop %v4841
      %v5998 = vmul.f32 %v5997, 0.6931472
      %v5999 = vlog2.pop %v4844
      %v6000 = vmul.f32 %v5999, 0.6931472
      %v6001 = vlog2.pop %v4847
      %v6002 = vmul.f32 %v6001, 0.6931472
      %v6003 = vlog2.pop %v4850
      %v6004 = vmul.f32 %v6003, 0.6931472
      %v6005 = vlog2.pop %v4853
      %v6006 = vmul.f32 %v6005, 0.6931472
      %v6007 = vlog2.pop %v4856
      %v6008 = vmul.f32 %v6007, 0.6931472
      %v6009 = vlog2.pop %v4859
      %v6010 = vmul.f32 %v6009, 0.6931472
      %v6011 = vlog2.pop %v4862
      %v6012 = vmul.f32 %v6011, 0.6931472
      %v6013 = vlog2.pop %v4865
      %v6014 = vmul.f32 %v6013, 0.6931472
      %v6015 = vlog2.pop %v4868
      %v6016 = vmul.f32 %v6015, 0.6931472
      %v6017 = vlog2.pop %v4871
      %v6018 = vmul.f32 %v6017, 0.6931472
      %v6019 = vlog2.pop %v4874
      %v6020 = vmul.f32 %v6019, 0.6931472
      %v6021 = vlog2.pop %v4877
      %v6022 = vmul.f32 %v6021, 0.6931472
      %v6023 = vlog2.pop %v4880
      %v6024 = vmul.f32 %v6023, 0.6931472
      %v6025 = vlog2.pop %v4883
      %v6026 = vmul.f32 %v6025, 0.6931472
      %v6027 = vlog2.pop %v4886
      %v6028 = vmul.f32 %v6027, 0.6931472
      %v6029 = vlog2.pop %v4889
      %v6030 = vmul.f32 %v6029, 0.6931472
      %v6031 = vlog2.pop %v4892
      %v6032 = vmul.f32 %v6031, 0.6931472
      %v6033 = vlog2.pop %v4895
      %v6034 = vmul.f32 %v6033, 0.6931472
      %v6035 = vlog2.pop %v4898
      %v6036 = vmul.f32 %v6035, 0.6931472
      %v6037 = vlog2.pop %v4901
      %v6038 = vmul.f32 %v6037, 0.6931472
      %v6039 = vlog2.pop %v4904
      %v6040 = vmul.f32 %v6039, 0.6931472
      %v6041 = vlog2.pop %v4907
      %v6042 = vmul.f32 %v6041, 0.6931472
      %v6043 = vlog2.pop %v4910
      %v6044 = vmul.f32 %v6043, 0.6931472
      %v6045 = vlog2.pop %v4913
      %v6046 = vmul.f32 %v6045, 0.6931472
      %v6047 = vlog2.pop %v4916
      %v6048 = vmul.f32 %v6047, 0.6931472
      %v6049 = vlog2.pop %v4919
      %v6050 = vmul.f32 %v6049, 0.6931472
      %v6051 = vlog2.pop %v4922
      %v6052 = vmul.f32 %v6051, 0.6931472
      %v6053 = vlog2.pop %v4925
      %v6054 = vmul.f32 %v6053, 0.6931472
      %v6055 = vlog2.pop %v4928
      %v6056 = vmul.f32 %v6055, 0.6931472
      %v6057 = vlog2.pop %v4931
      %v6058 = vmul.f32 %v6057, 0.6931472
      %v6059 = vlog2.pop %v4934
      %v6060 = vmul.f32 %v6059, 0.6931472
      %v6061 = vlog2.pop %v4937
      %v6062 = vmul.f32 %v6061, 0.6931472
      %v6063 = vlog2.pop %v4940
      %v6064 = vmul.f32 %v6063, 0.6931472
      %v6065 = vlog2.pop %v4943
      %v6066 = vmul.f32 %v6065, 0.6931472
      %v6067 = vlog2.pop %v4946
      %v6068 = vmul.f32 %v6067, 0.6931472
      %v6069 = vlog2.pop %v4949
      %v6070 = vmul.f32 %v6069, 0.6931472
      %v6071 = vlog2.pop %v4952
      %v6072 = vmul.f32 %v6071, 0.6931472
      %v6073 = vlog2.pop %v4955
      %v6074 = vmul.f32 %v6073, 0.6931472
      %v6075 = vlog2.pop %v4958
      %v6076 = vmul.f32 %v6075, 0.6931472
      %v6077 = vlog2.pop %v4961
      %v6078 = vmul.f32 %v6077, 0.6931472
      %v6079 = vlog2.pop %v4964
      %v6080 = vmul.f32 %v6079, 0.6931472
      %v6081 = vlog2.pop %v4967
      %v6082 = vmul.f32 %v6081, 0.6931472
      %v6083 = vlog2.pop %v4970
      %v6084 = vmul.f32 %v6083, 0.6931472
      %v6085 = vlog2.pop %v4973
      %v6086 = vmul.f32 %v6085, 0.6931472
      %v6087 = vlog2.pop %v4976
      %v6088 = vmul.f32 %v6087, 0.6931472
      %v6089 = vlog2.pop %v4979
      %v6090 = vmul.f32 %v6089, 0.6931472
      %v6091 = vlog2.pop %v4982
      %v6092 = vmul.f32 %v6091, 0.6931472
      %v6093 = vlog2.pop %v4985
      %v6094 = vmul.f32 %v6093, 0.6931472
      %v6095 = vlog2.pop %v4988
      %v6096 = vmul.f32 %v6095, 0.6931472
      %v6097 = vlog2.pop %v4991
      %v6098 = vmul.f32 %v6097, 0.6931472
      %v6099 = vlog2.pop %v4994
      %v6100 = vmul.f32 %v6099, 0.6931472
      %v6101 = vlog2.pop %v4997
      %v6102 = vmul.f32 %v6101, 0.6931472
      %v6103 = vlog2.pop %v5000
      %v6104 = vmul.f32 %v6103, 0.6931472
      %v6105 = vlog2.pop %v5003
      %v6106 = vmul.f32 %v6105, 0.6931472
      %v6107 = vlog2.pop %v5006
      %v6108 = vmul.f32 %v6107, 0.6931472
      %v6109 = vlog2.pop %v5009
      %v6110 = vmul.f32 %v6109, 0.6931472
      %v6111 = vlog2.pop %v5012
      %v6112 = vmul.f32 %v6111, 0.6931472
      %v6113 = vlog2.pop %v5015
      %v6114 = vmul.f32 %v6113, 0.6931472
      %v6115 = vlog2.pop %v5018
      %v6116 = vmul.f32 %v6115, 0.6931472
      %v6117 = vlog2.pop %v5021
      %v6118 = vmul.f32 %v6117, 0.6931472
      %v6119 = vlog2.pop %v5024
      %v6120 = vmul.f32 %v6119, 0.6931472
      %v6121 = vlog2.pop %v5027
      %v6122 = vmul.f32 %v6121, 0.6931472
      %v6123 = vlog2.pop %v5030
      %v6124 = vmul.f32 %v6123, 0.6931472
      %v6125 = vlog2.pop %v5033
      %v6126 = vmul.f32 %v6125, 0.6931472
      %v6127 = vlog2.pop %v5036
      %v6128 = vmul.f32 %v6127, 0.6931472
      %v6129 = vlog2.pop %v5039
      %v6130 = vmul.f32 %v6129, 0.6931472
      %v6131 = vlog2.pop %v5042
      %v6132 = vmul.f32 %v6131, 0.6931472
      %v6133 = vlog2.pop %v5045
      %v6134 = vmul.f32 %v6133, 0.6931472
      %v6135 = vlog2.pop %v5048
      %v6136 = vmul.f32 %v6135, 0.6931472
      %v6137 = vlog2.pop %v5051
      %v6138 = vmul.f32 %v6137, 0.6931472
      %v6139 = vlog2.pop %v5054
      %v6140 = vmul.f32 %v6139, 0.6931472
      %v6141 = vlog2.pop %v5057
      %v6142 = vmul.f32 %v6141, 0.6931472
      %v6143 = vlog2.pop %v5060
      %v6144 = vmul.f32 %v6143, 0.6931472
      %v6145 = vlog2.pop %v5063
      %v6146 = vmul.f32 %v6145, 0.6931472
      %v6147 = vlog2.pop %v5066
      %v6148 = vmul.f32 %v6147, 0.6931472
      %v6149 = vlog2.pop %v5069
      %v6150 = vmul.f32 %v6149, 0.6931472
      %v6151 = vlog2.pop %v5072
      %v6152 = vmul.f32 %v6151, 0.6931472
      %v6153 = vlog2.pop %v5075
      %v6154 = vmul.f32 %v6153, 0.6931472
      %v6155 = vlog2.pop %v5078
      %v6156 = vmul.f32 %v6155, 0.6931472
      %v6157 = vlog2.pop %v5081
      %v6158 = vmul.f32 %v6157, 0.6931472
      %v6159 = vlog2.pop %v5084
      %v6160 = vmul.f32 %v6159, 0.6931472
      %v6161 = vlog2.pop %v5087
      %v6162 = vmul.f32 %v6161, 0.6931472
      %v6163 = vlog2.pop %v5090
      %v6164 = vmul.f32 %v6163, 0.6931472
      %v6165 = vlog2.pop %v5093
      %v6166 = vmul.f32 %v6165, 0.6931472
      %v6167 = vlog2.pop %v5096
      %v6168 = vmul.f32 %v6167, 0.6931472
      %v6169 = vlog2.pop %v5099
      %v6170 = vmul.f32 %v6169, 0.6931472
      %v6171 = vlog2.pop %v5102
      %v6172 = vmul.f32 %v6171, 0.6931472
      %v6173 = vlog2.pop %v5105
      %v6174 = vmul.f32 %v6173, 0.6931472
      %v6175 = vlog2.pop %v5108
      %v6176 = vmul.f32 %v6175, 0.6931472
      %v6177 = vlog2.pop %v5111
      %v6178 = vmul.f32 %v6177, 0.6931472
      %v6179 = vlog2.pop %v5114
      %v6180 = vmul.f32 %v6179, 0.6931472
      %v6181 = vlog2.pop %v5117
      %v6182 = vmul.f32 %v6181, 0.6931472
      %v6183 = vlog2.pop %v5120
      %v6184 = vmul.f32 %v6183, 0.6931472
      %v6185 = vlog2.pop %v5123
      %v6186 = vmul.f32 %v6185, 0.6931472
      %v6187 = vlog2.pop %v5126
      %v6188 = vmul.f32 %v6187, 0.6931472
      %v6189 = vlog2.pop %v5129
      %v6190 = vmul.f32 %v6189, 0.6931472
      %v6191 = vlog2.pop %v5132
      %v6192 = vmul.f32 %v6191, 0.6931472
      %v6193 = vlog2.pop %v5135
      %v6194 = vmul.f32 %v6193, 0.6931472
      %v6195 = vlog2.pop %v5138
      %v6196 = vmul.f32 %v6195, 0.6931472
      %v6197 = vlog2.pop %v5141
      %v6198 = vmul.f32 %v6197, 0.6931472
      %v6199 = vlog2.pop %v5144
      %v6200 = vmul.f32 %v6199, 0.6931472
      %v6201 = vlog2.pop %v5147
      %v6202 = vmul.f32 %v6201, 0.6931472
      %v6203 = vlog2.pop %v5150
      %v6204 = vmul.f32 %v6203, 0.6931472
      %v6205 = vlog2.pop %v5153
      %v6206 = vmul.f32 %v6205, 0.6931472
      %v6207 = vlog2.pop %v5156
      %v6208 = vmul.f32 %v6207, 0.6931472
      %v6209 = vlog2.pop %v5159
      %v6210 = vmul.f32 %v6209, 0.6931472
      %v6211 = vlog2.pop %v5162
      %v6212 = vmul.f32 %v6211, 0.6931472
      %v6213 = vlog2.pop %v5165
      %v6214 = vmul.f32 %v6213, 0.6931472
      %v6215 = vlog2.pop %v5168
      %v6216 = vmul.f32 %v6215, 0.6931472
      %v6217 = vlog2.pop %v5171
      %v6218 = vmul.f32 %v6217, 0.6931472
      %v6219 = vlog2.pop %v5174
      %v6220 = vmul.f32 %v6219, 0.6931472
      %v6221 = vlog2.pop %v5177
      %v6222 = vmul.f32 %v6221, 0.6931472
      %v6223 = vlog2.pop %v5180
      %v6224 = vmul.f32 %v6223, 0.6931472
      %v6225 = vlog2.pop %v5183
      %v6226 = vmul.f32 %v6225, 0.6931472
      %v6227 = vlog2.pop %v5186
      %v6228 = vmul.f32 %v6227, 0.6931472
      %v6229 = vlog2.pop %v5189
      %v6230 = vmul.f32 %v6229, 0.6931472
      %v6231 = vlog2.pop %v5192
      %v6232 = vmul.f32 %v6231, 0.6931472
      %v6233 = vlog2.pop %v5195
      %v6234 = vmul.f32 %v6233, 0.6931472
      %v6235 = vlog2.pop %v5198
      %v6236 = vmul.f32 %v6235, 0.6931472
      %v6237 = vlog2.pop %v5201
      %v6238 = vmul.f32 %v6237, 0.6931472
      %v6239 = vlog2.pop %v5204
      %v6240 = vmul.f32 %v6239, 0.6931472
      %v6241 = vlog2.pop %v5207
      %v6242 = vmul.f32 %v6241, 0.6931472
      %v6243 = vlog2.pop %v5210
      %v6244 = vmul.f32 %v6243, 0.6931472
      %v6245 = vlog2.pop %v5213
      %v6246 = vmul.f32 %v6245, 0.6931472
      %v6247 = vlog2.pop %v5216
      %v6248 = vmul.f32 %v6247, 0.6931472
      %v6249 = vlog2.pop %v5219
      %v6250 = vmul.f32 %v6249, 0.6931472
      %v6251 = vlog2.pop %v5222
      %v6252 = vmul.f32 %v6251, 0.6931472
      %v6253 = vlog2.pop %v5225
      %v6254 = vmul.f32 %v6253, 0.6931472
      %v6255 = vlog2.pop %v5228
      %v6256 = vmul.f32 %v6255, 0.6931472
      %v6257 = vlog2.pop %v5231
      %v6258 = vmul.f32 %v6257, 0.6931472
      %v6259 = vlog2.pop %v5234
      %v6260 = vmul.f32 %v6259, 0.6931472
      %v6261 = vlog2.pop %v5237
      %v6262 = vmul.f32 %v6261, 0.6931472
      %v6263 = vlog2.pop %v5240
      %v6264 = vmul.f32 %v6263, 0.6931472
      %v6265 = vsub.f32 %v2169, %v5242
      %v6266 = vsub.f32 %v2170, %v5244
      %v6267 = vsub.f32 %v2171, %v5246
      %v6268 = vsub.f32 %v2172, %v5248
      %v6269 = vsub.f32 %v2173, %v5250
      %v6270 = vsub.f32 %v2174, %v5252
      %v6271 = vsub.f32 %v2175, %v5254
      %v6272 = vsub.f32 %v2176, %v5256
      %v6273 = vsub.f32 %v2177, %v5258
      %v6274 = vsub.f32 %v2178, %v5260
      %v6275 = vsub.f32 %v2179, %v5262
      %v6276 = vsub.f32 %v2180, %v5264
      %v6277 = vsub.f32 %v2181, %v5266
      %v6278 = vsub.f32 %v2182, %v5268
      %v6279 = vsub.f32 %v2183, %v5270
      %v6280 = vsub.f32 %v2184, %v5272
      %v6281 = vsub.f32 %v2185, %v5274
      %v6282 = vsub.f32 %v2186, %v5276
      %v6283 = vsub.f32 %v2187, %v5278
      %v6284 = vsub.f32 %v2188, %v5280
      %v6285 = vsub.f32 %v2189, %v5282
      %v6286 = vsub.f32 %v2190, %v5284
      %v6287 = vsub.f32 %v2191, %v5286
      %v6288 = vsub.f32 %v2192, %v5288
      %v6289 = vsub.f32 %v2193, %v5290
      %v6290 = vsub.f32 %v2194, %v5292
      %v6291 = vsub.f32 %v2195, %v5294
      %v6292 = vsub.f32 %v2196, %v5296
      %v6293 = vsub.f32 %v2197, %v5298
      %v6294 = vsub.f32 %v2198, %v5300
      %v6295 = vsub.f32 %v2199, %v5302
      %v6296 = vsub.f32 %v2200, %v5304
      %v6297 = vsub.f32 %v2201, %v5306
      %v6298 = vsub.f32 %v2202, %v5308
      %v6299 = vsub.f32 %v2203, %v5310
      %v6300 = vsub.f32 %v2204, %v5312
      %v6301 = vsub.f32 %v2205, %v5314
      %v6302 = vsub.f32 %v2206, %v5316
      %v6303 = vsub.f32 %v2207, %v5318
      %v6304 = vsub.f32 %v2208, %v5320
      %v6305 = vsub.f32 %v2209, %v5322
      %v6306 = vsub.f32 %v2210, %v5324
      %v6307 = vsub.f32 %v2211, %v5326
      %v6308 = vsub.f32 %v2212, %v5328
      %v6309 = vsub.f32 %v2213, %v5330
      %v6310 = vsub.f32 %v2214, %v5332
      %v6311 = vsub.f32 %v2215, %v5334
      %v6312 = vsub.f32 %v2216, %v5336
      %v6313 = vsub.f32 %v2217, %v5338
      %v6314 = vsub.f32 %v2218, %v5340
      %v6315 = vsub.f32 %v2219, %v5342
      %v6316 = vsub.f32 %v2220, %v5344
      %v6317 = vsub.f32 %v2221, %v5346
      %v6318 = vsub.f32 %v2222, %v5348
      %v6319 = vsub.f32 %v2223, %v5350
      %v6320 = vsub.f32 %v2224, %v5352
      %v6321 = vsub.f32 %v2225, %v5354
      %v6322 = vsub.f32 %v2226, %v5356
      %v6323 = vsub.f32 %v2227, %v5358
      %v6324 = vsub.f32 %v2228, %v5360
      %v6325 = vsub.f32 %v2229, %v5362
      %v6326 = vsub.f32 %v2230, %v5364
      %v6327 = vsub.f32 %v2231, %v5366
      %v6328 = vsub.f32 %v2232, %v5368
      %v6329 = vsub.f32 %v2233, %v5370
      %v6330 = vsub.f32 %v2234, %v5372
      %v6331 = vsub.f32 %v2235, %v5374
      %v6332 = vsub.f32 %v2236, %v5376
      %v6333 = vsub.f32 %v2237, %v5378
      %v6334 = vsub.f32 %v2238, %v5380
      %v6335 = vsub.f32 %v2239, %v5382
      %v6336 = vsub.f32 %v2240, %v5384
      %v6337 = vsub.f32 %v2241, %v5386
      %v6338 = vsub.f32 %v2242, %v5388
      %v6339 = vsub.f32 %v2243, %v5390
      %v6340 = vsub.f32 %v2244, %v5392
      %v6341 = vsub.f32 %v2245, %v5394
      %v6342 = vsub.f32 %v2246, %v5396
      %v6343 = vsub.f32 %v2247, %v5398
      %v6344 = vsub.f32 %v2248, %v5400
      %v6345 = vsub.f32 %v2249, %v5402
      %v6346 = vsub.f32 %v2250, %v5404
      %v6347 = vsub.f32 %v2251, %v5406
      %v6348 = vsub.f32 %v2252, %v5408
      %v6349 = vsub.f32 %v2253, %v5410
      %v6350 = vsub.f32 %v2254, %v5412
      %v6351 = vsub.f32 %v2255, %v5414
      %v6352 = vsub.f32 %v2256, %v5416
      %v6353 = vsub.f32 %v2257, %v5418
      %v6354 = vsub.f32 %v2258, %v5420
      %v6355 = vsub.f32 %v2259, %v5422
      %v6356 = vsub.f32 %v2260, %v5424
      %v6357 = vsub.f32 %v2261, %v5426
      %v6358 = vsub.f32 %v2262, %v5428
      %v6359 = vsub.f32 %v2263, %v5430
      %v6360 = vsub.f32 %v2264, %v5432
      %v6361 = vsub.f32 %v2265, %v5434
      %v6362 = vsub.f32 %v2266, %v5436
      %v6363 = vsub.f32 %v2267, %v5438
      %v6364 = vsub.f32 %v2268, %v5440
      %v6365 = vsub.f32 %v2269, %v5442
      %v6366 = vsub.f32 %v2270, %v5444
      %v6367 = vsub.f32 %v2271, %v5446
      %v6368 = vsub.f32 %v2272, %v5448
      %v6369 = vsub.f32 %v2273, %v5450
      %v6370 = vsub.f32 %v2274, %v5452
      %v6371 = vsub.f32 %v2275, %v5454
      %v6372 = vsub.f32 %v2276, %v5456
      %v6373 = vsub.f32 %v2277, %v5458
      %v6374 = vsub.f32 %v2278, %v5460
      %v6375 = vsub.f32 %v2279, %v5462
      %v6376 = vsub.f32 %v2280, %v5464
      %v6377 = vsub.f32 %v2281, %v5466
      %v6378 = vsub.f32 %v2282, %v5468
      %v6379 = vsub.f32 %v2283, %v5470
      %v6380 = vsub.f32 %v2284, %v5472
      %v6381 = vsub.f32 %v2285, %v5474
      %v6382 = vsub.f32 %v2286, %v5476
      %v6383 = vsub.f32 %v2287, %v5478
      %v6384 = vsub.f32 %v2288, %v5480
      %v6385 = vsub.f32 %v2289, %v5482
      %v6386 = vsub.f32 %v2290, %v5484
      %v6387 = vsub.f32 %v2291, %v5486
      %v6388 = vsub.f32 %v2292, %v5488
      %v6389 = vsub.f32 %v2293, %v5490
      %v6390 = vsub.f32 %v2294, %v5492
      %v6391 = vsub.f32 %v2295, %v5494
      %v6392 = vsub.f32 %v2296, %v5496
      %v6393 = vsub.f32 %v2297, %v5498
      %v6394 = vsub.f32 %v2298, %v5500
      %v6395 = vsub.f32 %v2299, %v5502
      %v6396 = vsub.f32 %v2300, %v5504
      %v6397 = vsub.f32 %v2301, %v5506
      %v6398 = vsub.f32 %v2302, %v5508
      %v6399 = vsub.f32 %v2303, %v5510
      %v6400 = vsub.f32 %v2304, %v5512
      %v6401 = vsub.f32 %v2305, %v5514
      %v6402 = vsub.f32 %v2306, %v5516
      %v6403 = vsub.f32 %v2307, %v5518
      %v6404 = vsub.f32 %v2308, %v5520
      %v6405 = vsub.f32 %v2309, %v5522
      %v6406 = vsub.f32 %v2310, %v5524
      %v6407 = vsub.f32 %v2311, %v5526
      %v6408 = vsub.f32 %v2312, %v5528
      %v6409 = vsub.f32 %v2313, %v5530
      %v6410 = vsub.f32 %v2314, %v5532
      %v6411 = vsub.f32 %v2315, %v5534
      %v6412 = vsub.f32 %v2316, %v5536
      %v6413 = vsub.f32 %v2317, %v5538
      %v6414 = vsub.f32 %v2318, %v5540
      %v6415 = vsub.f32 %v2319, %v5542
      %v6416 = vsub.f32 %v2320, %v5544
      %v6417 = vsub.f32 %v2321, %v5546
      %v6418 = vsub.f32 %v2322, %v5548
      %v6419 = vsub.f32 %v2323, %v5550
      %v6420 = vsub.f32 %v2324, %v5552
      %v6421 = vsub.f32 %v2325, %v5554
      %v6422 = vsub.f32 %v2326, %v5556
      %v6423 = vsub.f32 %v2327, %v5558
      %v6424 = vsub.f32 %v2328, %v5560
      %v6425 = vsub.f32 %v2329, %v5562
      %v6426 = vsub.f32 %v2330, %v5564
      %v6427 = vsub.f32 %v2331, %v5566
      %v6428 = vsub.f32 %v2332, %v5568
      %v6429 = vsub.f32 %v2333, %v5570
      %v6430 = vsub.f32 %v2334, %v5572
      %v6431 = vsub.f32 %v2335, %v5574
      %v6432 = vsub.f32 %v2336, %v5576
      %v6433 = vsub.f32 %v2337, %v5578
      %v6434 = vsub.f32 %v2338, %v5580
      %v6435 = vsub.f32 %v2339, %v5582
      %v6436 = vsub.f32 %v2340, %v5584
      %v6437 = vsub.f32 %v2341, %v5586
      %v6438 = vsub.f32 %v2342, %v5588
      %v6439 = vsub.f32 %v2343, %v5590
      %v6440 = vsub.f32 %v2344, %v5592
      %v6441 = vsub.f32 %v2345, %v5594
      %v6442 = vsub.f32 %v2346, %v5596
      %v6443 = vsub.f32 %v2347, %v5598
      %v6444 = vsub.f32 %v2348, %v5600
      %v6445 = vsub.f32 %v2349, %v5602
      %v6446 = vsub.f32 %v2350, %v5604
      %v6447 = vsub.f32 %v2351, %v5606
      %v6448 = vsub.f32 %v2352, %v5608
      %v6449 = vsub.f32 %v2353, %v5610
      %v6450 = vsub.f32 %v2354, %v5612
      %v6451 = vsub.f32 %v2355, %v5614
      %v6452 = vsub.f32 %v2356, %v5616
      %v6453 = vsub.f32 %v2357, %v5618
      %v6454 = vsub.f32 %v2358, %v5620
      %v6455 = vsub.f32 %v2359, %v5622
      %v6456 = vsub.f32 %v2360, %v5624
      %v6457 = vsub.f32 %v2361, %v5626
      %v6458 = vsub.f32 %v2362, %v5628
      %v6459 = vsub.f32 %v2363, %v5630
      %v6460 = vsub.f32 %v2364, %v5632
      %v6461 = vsub.f32 %v2365, %v5634
      %v6462 = vsub.f32 %v2366, %v5636
      %v6463 = vsub.f32 %v2367, %v5638
      %v6464 = vsub.f32 %v2368, %v5640
      %v6465 = vsub.f32 %v2369, %v5642
      %v6466 = vsub.f32 %v2370, %v5644
      %v6467 = vsub.f32 %v2371, %v5646
      %v6468 = vsub.f32 %v2372, %v5648
      %v6469 = vsub.f32 %v2373, %v5650
      %v6470 = vsub.f32 %v2374, %v5652
      %v6471 = vsub.f32 %v2375, %v5654
      %v6472 = vsub.f32 %v2376, %v5656
      %v6473 = vsub.f32 %v2377, %v5658
      %v6474 = vsub.f32 %v2378, %v5660
      %v6475 = vsub.f32 %v2379, %v5662
      %v6476 = vsub.f32 %v2380, %v5664
      %v6477 = vsub.f32 %v2381, %v5666
      %v6478 = vsub.f32 %v2382, %v5668
      %v6479 = vsub.f32 %v2383, %v5670
      %v6480 = vsub.f32 %v2384, %v5672
      %v6481 = vsub.f32 %v2385, %v5674
      %v6482 = vsub.f32 %v2386, %v5676
      %v6483 = vsub.f32 %v2387, %v5678
      %v6484 = vsub.f32 %v2388, %v5680
      %v6485 = vsub.f32 %v2389, %v5682
      %v6486 = vsub.f32 %v2390, %v5684
      %v6487 = vsub.f32 %v2391, %v5686
      %v6488 = vsub.f32 %v2392, %v5688
      %v6489 = vsub.f32 %v2393, %v5690
      %v6490 = vsub.f32 %v2394, %v5692
      %v6491 = vsub.f32 %v2395, %v5694
      %v6492 = vsub.f32 %v2396, %v5696
      %v6493 = vsub.f32 %v2397, %v5698
      %v6494 = vsub.f32 %v2398, %v5700
      %v6495 = vsub.f32 %v2399, %v5702
      %v6496 = vsub.f32 %v2400, %v5704
      %v6497 = vsub.f32 %v2401, %v5706
      %v6498 = vsub.f32 %v2402, %v5708
      %v6499 = vsub.f32 %v2403, %v5710
      %v6500 = vsub.f32 %v2404, %v5712
      %v6501 = vsub.f32 %v2405, %v5714
      %v6502 = vsub.f32 %v2406, %v5716
      %v6503 = vsub.f32 %v2407, %v5718
      %v6504 = vsub.f32 %v2408, %v5720
      %v6505 = vsub.f32 %v2409, %v5722
      %v6506 = vsub.f32 %v2410, %v5724
      %v6507 = vsub.f32 %v2411, %v5726
      %v6508 = vsub.f32 %v2412, %v5728
      %v6509 = vsub.f32 %v2413, %v5730
      %v6510 = vsub.f32 %v2414, %v5732
      %v6511 = vsub.f32 %v2415, %v5734
      %v6512 = vsub.f32 %v2416, %v5736
      %v6513 = vsub.f32 %v2417, %v5738
      %v6514 = vsub.f32 %v2418, %v5740
      %v6515 = vsub.f32 %v2419, %v5742
      %v6516 = vsub.f32 %v2420, %v5744
      %v6517 = vsub.f32 %v2421, %v5746
      %v6518 = vsub.f32 %v2422, %v5748
      %v6519 = vsub.f32 %v2423, %v5750
      %v6520 = vsub.f32 %v2424, %v5752
      %v6521 = vsub.f32 %v2425, %v5754
      %v6522 = vsub.f32 %v2426, %v5756
      %v6523 = vsub.f32 %v2427, %v5758
      %v6524 = vsub.f32 %v2428, %v5760
      %v6525 = vsub.f32 %v2429, %v5762
      %v6526 = vsub.f32 %v2430, %v5764
      %v6527 = vsub.f32 %v2431, %v5766
      %v6528 = vsub.f32 %v2432, %v5768
      %v6529 = vsub.f32 %v2433, %v5770
      %v6530 = vsub.f32 %v2434, %v5772
      %v6531 = vsub.f32 %v2435, %v5774
      %v6532 = vsub.f32 %v2436, %v5776
      %v6533 = vsub.f32 %v2437, %v5778
      %v6534 = vsub.f32 %v2438, %v5780
      %v6535 = vsub.f32 %v2439, %v5782
      %v6536 = vsub.f32 %v2440, %v5784
      %v6537 = vsub.f32 %v2441, %v5786
      %v6538 = vsub.f32 %v2442, %v5788
      %v6539 = vsub.f32 %v2443, %v5790
      %v6540 = vsub.f32 %v2444, %v5792
      %v6541 = vsub.f32 %v2445, %v5794
      %v6542 = vsub.f32 %v2446, %v5796
      %v6543 = vsub.f32 %v2447, %v5798
      %v6544 = vsub.f32 %v2448, %v5800
      %v6545 = vsub.f32 %v2449, %v5802
      %v6546 = vsub.f32 %v2450, %v5804
      %v6547 = vsub.f32 %v2451, %v5806
      %v6548 = vsub.f32 %v2452, %v5808
      %v6549 = vsub.f32 %v2453, %v5810
      %v6550 = vsub.f32 %v2454, %v5812
      %v6551 = vsub.f32 %v2455, %v5814
      %v6552 = vsub.f32 %v2456, %v5816
      %v6553 = vsub.f32 %v2457, %v5818
      %v6554 = vsub.f32 %v2458, %v5820
      %v6555 = vsub.f32 %v2459, %v5822
      %v6556 = vsub.f32 %v2460, %v5824
      %v6557 = vsub.f32 %v2461, %v5826
      %v6558 = vsub.f32 %v2462, %v5828
      %v6559 = vsub.f32 %v2463, %v5830
      %v6560 = vsub.f32 %v2464, %v5832
      %v6561 = vsub.f32 %v2465, %v5834
      %v6562 = vsub.f32 %v2466, %v5836
      %v6563 = vsub.f32 %v2467, %v5838
      %v6564 = vsub.f32 %v2468, %v5840
      %v6565 = vsub.f32 %v2469, %v5842
      %v6566 = vsub.f32 %v2470, %v5844
      %v6567 = vsub.f32 %v2471, %v5846
      %v6568 = vsub.f32 %v2472, %v5848
      %v6569 = vsub.f32 %v2473, %v5850
      %v6570 = vsub.f32 %v2474, %v5852
      %v6571 = vsub.f32 %v2475, %v5854
      %v6572 = vsub.f32 %v2476, %v5856
      %v6573 = vsub.f32 %v2477, %v5858
      %v6574 = vsub.f32 %v2478, %v5860
      %v6575 = vsub.f32 %v2479, %v5862
      %v6576 = vsub.f32 %v2480, %v5864
      %v6577 = vsub.f32 %v2481, %v5866
      %v6578 = vsub.f32 %v2482, %v5868
      %v6579 = vsub.f32 %v2483, %v5870
      %v6580 = vsub.f32 %v2484, %v5872
      %v6581 = vsub.f32 %v2485, %v5874
      %v6582 = vsub.f32 %v2486, %v5876
      %v6583 = vsub.f32 %v2487, %v5878
      %v6584 = vsub.f32 %v2488, %v5880
      %v6585 = vsub.f32 %v2489, %v5882
      %v6586 = vsub.f32 %v2490, %v5884
      %v6587 = vsub.f32 %v2491, %v5886
      %v6588 = vsub.f32 %v2492, %v5888
      %v6589 = vsub.f32 %v2493, %v5890
      %v6590 = vsub.f32 %v2494, %v5892
      %v6591 = vsub.f32 %v2495, %v5894
      %v6592 = vsub.f32 %v2496, %v5896
      %v6593 = vsub.f32 %v2497, %v5898
      %v6594 = vsub.f32 %v2498, %v5900
      %v6595 = vsub.f32 %v2499, %v5902
      %v6596 = vsub.f32 %v2500, %v5904
      %v6597 = vsub.f32 %v2501, %v5906
      %v6598 = vsub.f32 %v2502, %v5908
      %v6599 = vsub.f32 %v2503, %v5910
      %v6600 = vsub.f32 %v2504, %v5912
      %v6601 = vsub.f32 %v2505, %v5914
      %v6602 = vsub.f32 %v2506, %v5916
      %v6603 = vsub.f32 %v2507, %v5918
      %v6604 = vsub.f32 %v2508, %v5920
      %v6605 = vsub.f32 %v2509, %v5922
      %v6606 = vsub.f32 %v2510, %v5924
      %v6607 = vsub.f32 %v2511, %v5926
      %v6608 = vsub.f32 %v2512, %v5928
      %v6609 = vsub.f32 %v2513, %v5930
      %v6610 = vsub.f32 %v2514, %v5932
      %v6611 = vsub.f32 %v2515, %v5934
      %v6612 = vsub.f32 %v2516, %v5936
      %v6613 = vsub.f32 %v2517, %v5938
      %v6614 = vsub.f32 %v2518, %v5940
      %v6615 = vsub.f32 %v2519, %v5942
      %v6616 = vsub.f32 %v2520, %v5944
      %v6617 = vsub.f32 %v2521, %v5946
      %v6618 = vsub.f32 %v2522, %v5948
      %v6619 = vsub.f32 %v2523, %v5950
      %v6620 = vsub.f32 %v2524, %v5952
      %v6621 = vsub.f32 %v2525, %v5954
      %v6622 = vsub.f32 %v2526, %v5956
      %v6623 = vsub.f32 %v2527, %v5958
      %v6624 = vsub.f32 %v2528, %v5960
      %v6625 = vsub.f32 %v2529, %v5962
      %v6626 = vsub.f32 %v2530, %v5964
      %v6627 = vsub.f32 %v2531, %v5966
      %v6628 = vsub.f32 %v2532, %v5968
      %v6629 = vsub.f32 %v2533, %v5970
      %v6630 = vsub.f32 %v2534, %v5972
      %v6631 = vsub.f32 %v2535, %v5974
      %v6632 = vsub.f32 %v2536, %v5976
      %v6633 = vsub.f32 %v2537, %v5978
      %v6634 = vsub.f32 %v2538, %v5980
      %v6635 = vsub.f32 %v2539, %v5982
      %v6636 = vsub.f32 %v2540, %v5984
      %v6637 = vsub.f32 %v2541, %v5986
      %v6638 = vsub.f32 %v2542, %v5988
      %v6639 = vsub.f32 %v2543, %v5990
      %v6640 = vsub.f32 %v2544, %v5992
      %v6641 = vsub.f32 %v2545, %v5994
      %v6642 = vsub.f32 %v2546, %v5996
      %v6643 = vsub.f32 %v2547, %v5998
      %v6644 = vsub.f32 %v2548, %v6000
      %v6645 = vsub.f32 %v2549, %v6002
      %v6646 = vsub.f32 %v2550, %v6004
      %v6647 = vsub.f32 %v2551, %v6006
      %v6648 = vsub.f32 %v2552, %v6008
      %v6649 = vsub.f32 %v2553, %v6010
      %v6650 = vsub.f32 %v2554, %v6012
      %v6651 = vsub.f32 %v2555, %v6014
      %v6652 = vsub.f32 %v2556, %v6016
      %v6653 = vsub.f32 %v2557, %v6018
      %v6654 = vsub.f32 %v2558, %v6020
      %v6655 = vsub.f32 %v2559, %v6022
      %v6656 = vsub.f32 %v2560, %v6024
      %v6657 = vsub.f32 %v2561, %v6026
      %v6658 = vsub.f32 %v2562, %v6028
      %v6659 = vsub.f32 %v2563, %v6030
      %v6660 = vsub.f32 %v2564, %v6032
      %v6661 = vsub.f32 %v2565, %v6034
      %v6662 = vsub.f32 %v2566, %v6036
      %v6663 = vsub.f32 %v2567, %v6038
      %v6664 = vsub.f32 %v2568, %v6040
      %v6665 = vsub.f32 %v2569, %v6042
      %v6666 = vsub.f32 %v2570, %v6044
      %v6667 = vsub.f32 %v2571, %v6046
      %v6668 = vsub.f32 %v2572, %v6048
      %v6669 = vsub.f32 %v2573, %v6050
      %v6670 = vsub.f32 %v2574, %v6052
      %v6671 = vsub.f32 %v2575, %v6054
      %v6672 = vsub.f32 %v2576, %v6056
      %v6673 = vsub.f32 %v2577, %v6058
      %v6674 = vsub.f32 %v2578, %v6060
      %v6675 = vsub.f32 %v2579, %v6062
      %v6676 = vsub.f32 %v2580, %v6064
      %v6677 = vsub.f32 %v2581, %v6066
      %v6678 = vsub.f32 %v2582, %v6068
      %v6679 = vsub.f32 %v2583, %v6070
      %v6680 = vsub.f32 %v2584, %v6072
      %v6681 = vsub.f32 %v2585, %v6074
      %v6682 = vsub.f32 %v2586, %v6076
      %v6683 = vsub.f32 %v2587, %v6078
      %v6684 = vsub.f32 %v2588, %v6080
      %v6685 = vsub.f32 %v2589, %v6082
      %v6686 = vsub.f32 %v2590, %v6084
      %v6687 = vsub.f32 %v2591, %v6086
      %v6688 = vsub.f32 %v2592, %v6088
      %v6689 = vsub.f32 %v2593, %v6090
      %v6690 = vsub.f32 %v2594, %v6092
      %v6691 = vsub.f32 %v2595, %v6094
      %v6692 = vsub.f32 %v2596, %v6096
      %v6693 = vsub.f32 %v2597, %v6098
      %v6694 = vsub.f32 %v2598, %v6100
      %v6695 = vsub.f32 %v2599, %v6102
      %v6696 = vsub.f32 %v2600, %v6104
      %v6697 = vsub.f32 %v2601, %v6106
      %v6698 = vsub.f32 %v2602, %v6108
      %v6699 = vsub.f32 %v2603, %v6110
      %v6700 = vsub.f32 %v2604, %v6112
      %v6701 = vsub.f32 %v2605, %v6114
      %v6702 = vsub.f32 %v2606, %v6116
      %v6703 = vsub.f32 %v2607, %v6118
      %v6704 = vsub.f32 %v2608, %v6120
      %v6705 = vsub.f32 %v2609, %v6122
      %v6706 = vsub.f32 %v2610, %v6124
      %v6707 = vsub.f32 %v2611, %v6126
      %v6708 = vsub.f32 %v2612, %v6128
      %v6709 = vsub.f32 %v2613, %v6130
      %v6710 = vsub.f32 %v2614, %v6132
      %v6711 = vsub.f32 %v2615, %v6134
      %v6712 = vsub.f32 %v2616, %v6136
      %v6713 = vsub.f32 %v2617, %v6138
      %v6714 = vsub.f32 %v2618, %v6140
      %v6715 = vsub.f32 %v2619, %v6142
      %v6716 = vsub.f32 %v2620, %v6144
      %v6717 = vsub.f32 %v2621, %v6146
      %v6718 = vsub.f32 %v2622, %v6148
      %v6719 = vsub.f32 %v2623, %v6150
      %v6720 = vsub.f32 %v2624, %v6152
      %v6721 = vsub.f32 %v2625, %v6154
      %v6722 = vsub.f32 %v2626, %v6156
      %v6723 = vsub.f32 %v2627, %v6158
      %v6724 = vsub.f32 %v2628, %v6160
      %v6725 = vsub.f32 %v2629, %v6162
      %v6726 = vsub.f32 %v2630, %v6164
      %v6727 = vsub.f32 %v2631, %v6166
      %v6728 = vsub.f32 %v2632, %v6168
      %v6729 = vsub.f32 %v2633, %v6170
      %v6730 = vsub.f32 %v2634, %v6172
      %v6731 = vsub.f32 %v2635, %v6174
      %v6732 = vsub.f32 %v2636, %v6176
      %v6733 = vsub.f32 %v2637, %v6178
      %v6734 = vsub.f32 %v2638, %v6180
      %v6735 = vsub.f32 %v2639, %v6182
      %v6736 = vsub.f32 %v2640, %v6184
      %v6737 = vsub.f32 %v2641, %v6186
      %v6738 = vsub.f32 %v2642, %v6188
      %v6739 = vsub.f32 %v2643, %v6190
      %v6740 = vsub.f32 %v2644, %v6192
      %v6741 = vsub.f32 %v2645, %v6194
      %v6742 = vsub.f32 %v2646, %v6196
      %v6743 = vsub.f32 %v2647, %v6198
      %v6744 = vsub.f32 %v2648, %v6200
      %v6745 = vsub.f32 %v2649, %v6202
      %v6746 = vsub.f32 %v2650, %v6204
      %v6747 = vsub.f32 %v2651, %v6206
      %v6748 = vsub.f32 %v2652, %v6208
      %v6749 = vsub.f32 %v2653, %v6210
      %v6750 = vsub.f32 %v2654, %v6212
      %v6751 = vsub.f32 %v2655, %v6214
      %v6752 = vsub.f32 %v2656, %v6216
      %v6753 = vsub.f32 %v2657, %v6218
      %v6754 = vsub.f32 %v2658, %v6220
      %v6755 = vsub.f32 %v2659, %v6222
      %v6756 = vsub.f32 %v2660, %v6224
      %v6757 = vsub.f32 %v2661, %v6226
      %v6758 = vsub.f32 %v2662, %v6228
      %v6759 = vsub.f32 %v2663, %v6230
      %v6760 = vsub.f32 %v2664, %v6232
      %v6761 = vsub.f32 %v2665, %v6234
      %v6762 = vsub.f32 %v2666, %v6236
      %v6763 = vsub.f32 %v2667, %v6238
      %v6764 = vsub.f32 %v2668, %v6240
      %v6765 = vsub.f32 %v2669, %v6242
      %v6766 = vsub.f32 %v2670, %v6244
      %v6767 = vsub.f32 %v2671, %v6246
      %v6768 = vsub.f32 %v2672, %v6248
      %v6769 = vsub.f32 %v2673, %v6250
      %v6770 = vsub.f32 %v2674, %v6252
      %v6771 = vsub.f32 %v2675, %v6254
      %v6772 = vsub.f32 %v2676, %v6256
      %v6773 = vsub.f32 %v2677, %v6258
      %v6774 = vsub.f32 %v2678, %v6260
      %v6775 = vsub.f32 %v2679, %v6262
      %v6776 = vsub.f32 %v2680, %v6264
      %6777 = vst.msk [vmem:[%s118] sm:$0xff] %vm632, %v6265
      %6778 = vst.msk [vmem:[%s118 + $0x8] sm:$0xff] %vm632, %v6266
      %6779 = vst.msk [vmem:[%s118 + $0x10] sm:$0xff] %vm632, %v6267
      %6780 = vst.msk [vmem:[%s118 + $0x18] sm:$0xff] %vm632, %v6268
      %6781 = vst.msk [vmem:[%s118 + $0x20] sm:$0xff] %vm632, %v6269
      %6782 = vst.msk [vmem:[%s118 + $0x28] sm:$0xff] %vm632, %v6270
      %6783 = vst.msk [vmem:[%s118 + $0x30] sm:$0xff] %vm632, %v6271
      %6784 = vst.msk [vmem:[%s118 + $0x38] sm:$0xff] %vm632, %v6272
      %6785 = vst.msk [vmem:[%s118 + $0x40] sm:$0xff] %vm632, %v6273
      %6786 = vst.msk [vmem:[%s118 + $0x48] sm:$0xff] %vm632, %v6274
      %6787 = vst.msk [vmem:[%s118 + $0x50] sm:$0xff] %vm632, %v6275
      %6788 = vst.msk [vmem:[%s118 + $0x58] sm:$0xff] %vm632, %v6276
      %6789 = vst.msk [vmem:[%s118 + $0x60] sm:$0xff] %vm632, %v6277
      %6790 = vst.msk [vmem:[%s118 + $0x68] sm:$0xff] %vm632, %v6278
      %6791 = vst.msk [vmem:[%s118 + $0x70] sm:$0xff] %vm632, %v6279
      %6792 = vst.msk [vmem:[%s118 + $0x78] sm:$0xff] %vm632, %v6280
      %6793 = vst.msk [vmem:[%s118 + $0x80] sm:$0xff] %vm632, %v6281
      %6794 = vst.msk [vmem:[%s118 + $0x88] sm:$0xff] %vm632, %v6282
      %6795 = vst.msk [vmem:[%s118 + $0x90] sm:$0xff] %vm632, %v6283
      %6796 = vst.msk [vmem:[%s118 + $0x98] sm:$0xff] %vm632, %v6284
      %6797 = vst.msk [vmem:[%s118 + $0xa0] sm:$0xff] %vm632, %v6285
      %6798 = vst.msk [vmem:[%s118 + $0xa8] sm:$0xff] %vm632, %v6286
      %6799 = vst.msk [vmem:[%s118 + $0xb0] sm:$0xff] %vm632, %v6287
      %6800 = vst.msk [vmem:[%s118 + $0xb8] sm:$0xff] %vm632, %v6288
      %6801 = vst.msk [vmem:[%s118 + $0xc0] sm:$0xff] %vm632, %v6289
      %6802 = vst.msk [vmem:[%s118 + $0xc8] sm:$0xff] %vm632, %v6290
      %6803 = vst.msk [vmem:[%s118 + $0xd0] sm:$0xff] %vm632, %v6291
      %6804 = vst.msk [vmem:[%s118 + $0xd8] sm:$0xff] %vm632, %v6292
      %6805 = vst.msk [vmem:[%s118 + $0xe0] sm:$0xff] %vm632, %v6293
      %6806 = vst.msk [vmem:[%s118 + $0xe8] sm:$0xff] %vm632, %v6294
      %6807 = vst.msk [vmem:[%s118 + $0xf0] sm:$0xff] %vm632, %v6295
      %6808 = vst.msk [vmem:[%s118 + $0xf8] sm:$0xff] %vm632, %v6296
      %6809 = vst.msk [vmem:[%s118 + $0x100] sm:$0xff] %vm632, %v6297
      %6810 = vst.msk [vmem:[%s118 + $0x108] sm:$0xff] %vm632, %v6298
      %6811 = vst.msk [vmem:[%s118 + $0x110] sm:$0xff] %vm632, %v6299
      %6812 = vst.msk [vmem:[%s118 + $0x118] sm:$0xff] %vm632, %v6300
      %6813 = vst.msk [vmem:[%s118 + $0x120] sm:$0xff] %vm632, %v6301
      %6814 = vst.msk [vmem:[%s118 + $0x128] sm:$0xff] %vm632, %v6302
      %6815 = vst.msk [vmem:[%s118 + $0x130] sm:$0xff] %vm632, %v6303
      %6816 = vst.msk [vmem:[%s118 + $0x138] sm:$0xff] %vm632, %v6304
      %6817 = vst.msk [vmem:[%s118 + $0x140] sm:$0xff] %vm632, %v6305
      %6818 = vst.msk [vmem:[%s118 + $0x148] sm:$0xff] %vm632, %v6306
      %6819 = vst.msk [vmem:[%s118 + $0x150] sm:$0xff] %vm632, %v6307
      %6820 = vst.msk [vmem:[%s118 + $0x158] sm:$0xff] %vm632, %v6308
      %6821 = vst.msk [vmem:[%s118 + $0x160] sm:$0xff] %vm632, %v6309
      %6822 = vst.msk [vmem:[%s118 + $0x168] sm:$0xff] %vm632, %v6310
      %6823 = vst.msk [vmem:[%s118 + $0x170] sm:$0xff] %vm632, %v6311
      %6824 = vst.msk [vmem:[%s118 + $0x178] sm:$0xff] %vm632, %v6312
      %6825 = vst.msk [vmem:[%s118 + $0x180] sm:$0xff] %vm632, %v6313
      %6826 = vst.msk [vmem:[%s118 + $0x188] sm:$0xff] %vm632, %v6314
      %6827 = vst.msk [vmem:[%s118 + $0x190] sm:$0xff] %vm632, %v6315
      %6828 = vst.msk [vmem:[%s118 + $0x198] sm:$0xff] %vm632, %v6316
      %6829 = vst.msk [vmem:[%s118 + $0x1a0] sm:$0xff] %vm632, %v6317
      %6830 = vst.msk [vmem:[%s118 + $0x1a8] sm:$0xff] %vm632, %v6318
      %6831 = vst.msk [vmem:[%s118 + $0x1b0] sm:$0xff] %vm632, %v6319
      %6832 = vst.msk [vmem:[%s118 + $0x1b8] sm:$0xff] %vm632, %v6320
      %6833 = vst.msk [vmem:[%s118 + $0x1c0] sm:$0xff] %vm632, %v6321
      %6834 = vst.msk [vmem:[%s118 + $0x1c8] sm:$0xff] %vm632, %v6322
      %6835 = vst.msk [vmem:[%s118 + $0x1d0] sm:$0xff] %vm632, %v6323
      %6836 = vst.msk [vmem:[%s118 + $0x1d8] sm:$0xff] %vm632, %v6324
      %6837 = vst.msk [vmem:[%s118 + $0x1e0] sm:$0xff] %vm632, %v6325
      %6838 = vst.msk [vmem:[%s118 + $0x1e8] sm:$0xff] %vm632, %v6326
      %6839 = vst.msk [vmem:[%s118 + $0x1f0] sm:$0xff] %vm632, %v6327
      %6840 = vst.msk [vmem:[%s118 + $0x1f8] sm:$0xff] %vm632, %v6328
      %6841 = vst.msk [vmem:[%s118 + $0x200] sm:$0xff] %vm632, %v6329
      %6842 = vst.msk [vmem:[%s118 + $0x208] sm:$0xff] %vm632, %v6330
      %6843 = vst.msk [vmem:[%s118 + $0x210] sm:$0xff] %vm632, %v6331
      %6844 = vst.msk [vmem:[%s118 + $0x218] sm:$0xff] %vm632, %v6332
      %6845 = vst.msk [vmem:[%s118 + $0x220] sm:$0xff] %vm632, %v6333
      %6846 = vst.msk [vmem:[%s118 + $0x228] sm:$0xff] %vm632, %v6334
      %6847 = vst.msk [vmem:[%s118 + $0x230] sm:$0xff] %vm632, %v6335
      %6848 = vst.msk [vmem:[%s118 + $0x238] sm:$0xff] %vm632, %v6336
      %6849 = vst.msk [vmem:[%s118 + $0x240] sm:$0xff] %vm632, %v6337
      %6850 = vst.msk [vmem:[%s118 + $0x248] sm:$0xff] %vm632, %v6338
      %6851 = vst.msk [vmem:[%s118 + $0x250] sm:$0xff] %vm632, %v6339
      %6852 = vst.msk [vmem:[%s118 + $0x258] sm:$0xff] %vm632, %v6340
      %6853 = vst.msk [vmem:[%s118 + $0x260] sm:$0xff] %vm632, %v6341
      %6854 = vst.msk [vmem:[%s118 + $0x268] sm:$0xff] %vm632, %v6342
      %6855 = vst.msk [vmem:[%s118 + $0x270] sm:$0xff] %vm632, %v6343
      %6856 = vst.msk [vmem:[%s118 + $0x278] sm:$0xff] %vm632, %v6344
      %6857 = vst.msk [vmem:[%s118 + $0x280] sm:$0xff] %vm632, %v6345
      %6858 = vst.msk [vmem:[%s118 + $0x288] sm:$0xff] %vm632, %v6346
      %6859 = vst.msk [vmem:[%s118 + $0x290] sm:$0xff] %vm632, %v6347
      %6860 = vst.msk [vmem:[%s118 + $0x298] sm:$0xff] %vm632, %v6348
      %6861 = vst.msk [vmem:[%s118 + $0x2a0] sm:$0xff] %vm632, %v6349
      %6862 = vst.msk [vmem:[%s118 + $0x2a8] sm:$0xff] %vm632, %v6350
      %6863 = vst.msk [vmem:[%s118 + $0x2b0] sm:$0xff] %vm632, %v6351
      %6864 = vst.msk [vmem:[%s118 + $0x2b8] sm:$0xff] %vm632, %v6352
      %6865 = vst.msk [vmem:[%s118 + $0x2c0] sm:$0xff] %vm632, %v6353
      %6866 = vst.msk [vmem:[%s118 + $0x2c8] sm:$0xff] %vm632, %v6354
      %6867 = vst.msk [vmem:[%s118 + $0x2d0] sm:$0xff] %vm632, %v6355
      %6868 = vst.msk [vmem:[%s118 + $0x2d8] sm:$0xff] %vm632, %v6356
      %6869 = vst.msk [vmem:[%s118 + $0x2e0] sm:$0xff] %vm632, %v6357
      %6870 = vst.msk [vmem:[%s118 + $0x2e8] sm:$0xff] %vm632, %v6358
      %6871 = vst.msk [vmem:[%s118 + $0x2f0] sm:$0xff] %vm632, %v6359
      %6872 = vst.msk [vmem:[%s118 + $0x2f8] sm:$0xff] %vm632, %v6360
      %6873 = vst.msk [vmem:[%s118 + $0x300] sm:$0xff] %vm632, %v6361
      %6874 = vst.msk [vmem:[%s118 + $0x308] sm:$0xff] %vm632, %v6362
      %6875 = vst.msk [vmem:[%s118 + $0x310] sm:$0xff] %vm632, %v6363
      %6876 = vst.msk [vmem:[%s118 + $0x318] sm:$0xff] %vm632, %v6364
      %6877 = vst.msk [vmem:[%s118 + $0x320] sm:$0xff] %vm632, %v6365
      %6878 = vst.msk [vmem:[%s118 + $0x328] sm:$0xff] %vm632, %v6366
      %6879 = vst.msk [vmem:[%s118 + $0x330] sm:$0xff] %vm632, %v6367
      %6880 = vst.msk [vmem:[%s118 + $0x338] sm:$0xff] %vm632, %v6368
      %6881 = vst.msk [vmem:[%s118 + $0x340] sm:$0xff] %vm632, %v6369
      %6882 = vst.msk [vmem:[%s118 + $0x348] sm:$0xff] %vm632, %v6370
      %6883 = vst.msk [vmem:[%s118 + $0x350] sm:$0xff] %vm632, %v6371
      %6884 = vst.msk [vmem:[%s118 + $0x358] sm:$0xff] %vm632, %v6372
      %6885 = vst.msk [vmem:[%s118 + $0x360] sm:$0xff] %vm632, %v6373
      %6886 = vst.msk [vmem:[%s118 + $0x368] sm:$0xff] %vm632, %v6374
      %6887 = vst.msk [vmem:[%s118 + $0x370] sm:$0xff] %vm632, %v6375
      %6888 = vst.msk [vmem:[%s118 + $0x378] sm:$0xff] %vm632, %v6376
      %6889 = vst.msk [vmem:[%s118 + $0x380] sm:$0xff] %vm632, %v6377
      %6890 = vst.msk [vmem:[%s118 + $0x388] sm:$0xff] %vm632, %v6378
      %6891 = vst.msk [vmem:[%s118 + $0x390] sm:$0xff] %vm632, %v6379
      %6892 = vst.msk [vmem:[%s118 + $0x398] sm:$0xff] %vm632, %v6380
      %6893 = vst.msk [vmem:[%s118 + $0x3a0] sm:$0xff] %vm632, %v6381
      %6894 = vst.msk [vmem:[%s118 + $0x3a8] sm:$0xff] %vm632, %v6382
      %6895 = vst.msk [vmem:[%s118 + $0x3b0] sm:$0xff] %vm632, %v6383
      %6896 = vst.msk [vmem:[%s118 + $0x3b8] sm:$0xff] %vm632, %v6384
      %6897 = vst.msk [vmem:[%s118 + $0x3c0] sm:$0xff] %vm632, %v6385
      %6898 = vst.msk [vmem:[%s118 + $0x3c8] sm:$0xff] %vm632, %v6386
      %6899 = vst.msk [vmem:[%s118 + $0x3d0] sm:$0xff] %vm632, %v6387
      %6900 = vst.msk [vmem:[%s118 + $0x3d8] sm:$0xff] %vm632, %v6388
      %6901 = vst.msk [vmem:[%s118 + $0x3e0] sm:$0xff] %vm632, %v6389
      %6902 = vst.msk [vmem:[%s118 + $0x3e8] sm:$0xff] %vm632, %v6390
      %6903 = vst.msk [vmem:[%s118 + $0x3f0] sm:$0xff] %vm632, %v6391
      %6904 = vst.msk [vmem:[%s118 + $0x3f8] sm:$0xff] %vm632, %v6392
      %6905 = vst.msk [vmem:[%s118 + $0x400] sm:$0xff] %vm632, %v6393
      %6906 = vst.msk [vmem:[%s118 + $0x408] sm:$0xff] %vm632, %v6394
      %6907 = vst.msk [vmem:[%s118 + $0x410] sm:$0xff] %vm632, %v6395
      %6908 = vst.msk [vmem:[%s118 + $0x418] sm:$0xff] %vm632, %v6396
      %6909 = vst.msk [vmem:[%s118 + $0x420] sm:$0xff] %vm632, %v6397
      %6910 = vst.msk [vmem:[%s118 + $0x428] sm:$0xff] %vm632, %v6398
      %6911 = vst.msk [vmem:[%s118 + $0x430] sm:$0xff] %vm632, %v6399
      %6912 = vst.msk [vmem:[%s118 + $0x438] sm:$0xff] %vm632, %v6400
      %6913 = vst.msk [vmem:[%s118 + $0x440] sm:$0xff] %vm632, %v6401
      %6914 = vst.msk [vmem:[%s118 + $0x448] sm:$0xff] %vm632, %v6402
      %6915 = vst.msk [vmem:[%s118 + $0x450] sm:$0xff] %vm632, %v6403
      %6916 = vst.msk [vmem:[%s118 + $0x458] sm:$0xff] %vm632, %v6404
      %6917 = vst.msk [vmem:[%s118 + $0x460] sm:$0xff] %vm632, %v6405
      %6918 = vst.msk [vmem:[%s118 + $0x468] sm:$0xff] %vm632, %v6406
      %6919 = vst.msk [vmem:[%s118 + $0x470] sm:$0xff] %vm632, %v6407
      %6920 = vst.msk [vmem:[%s118 + $0x478] sm:$0xff] %vm632, %v6408
      %6921 = vst.msk [vmem:[%s118 + $0x480] sm:$0xff] %vm632, %v6409
      %6922 = vst.msk [vmem:[%s118 + $0x488] sm:$0xff] %vm632, %v6410
      %6923 = vst.msk [vmem:[%s118 + $0x490] sm:$0xff] %vm632, %v6411
      %6924 = vst.msk [vmem:[%s118 + $0x498] sm:$0xff] %vm632, %v6412
      %6925 = vst.msk [vmem:[%s118 + $0x4a0] sm:$0xff] %vm632, %v6413
      %6926 = vst.msk [vmem:[%s118 + $0x4a8] sm:$0xff] %vm632, %v6414
      %6927 = vst.msk [vmem:[%s118 + $0x4b0] sm:$0xff] %vm632, %v6415
      %6928 = vst.msk [vmem:[%s118 + $0x4b8] sm:$0xff] %vm632, %v6416
      %6929 = vst.msk [vmem:[%s118 + $0x4c0] sm:$0xff] %vm632, %v6417
      %6930 = vst.msk [vmem:[%s118 + $0x4c8] sm:$0xff] %vm632, %v6418
      %6931 = vst.msk [vmem:[%s118 + $0x4d0] sm:$0xff] %vm632, %v6419
      %6932 = vst.msk [vmem:[%s118 + $0x4d8] sm:$0xff] %vm632, %v6420
      %6933 = vst.msk [vmem:[%s118 + $0x4e0] sm:$0xff] %vm632, %v6421
      %6934 = vst.msk [vmem:[%s118 + $0x4e8] sm:$0xff] %vm632, %v6422
      %6935 = vst.msk [vmem:[%s118 + $0x4f0] sm:$0xff] %vm632, %v6423
      %6936 = vst.msk [vmem:[%s118 + $0x4f8] sm:$0xff] %vm632, %v6424
      %6937 = vst.msk [vmem:[%s118 + $0x500] sm:$0xff] %vm632, %v6425
      %6938 = vst.msk [vmem:[%s118 + $0x508] sm:$0xff] %vm632, %v6426
      %6939 = vst.msk [vmem:[%s118 + $0x510] sm:$0xff] %vm632, %v6427
      %6940 = vst.msk [vmem:[%s118 + $0x518] sm:$0xff] %vm632, %v6428
      %6941 = vst.msk [vmem:[%s118 + $0x520] sm:$0xff] %vm632, %v6429
      %6942 = vst.msk [vmem:[%s118 + $0x528] sm:$0xff] %vm632, %v6430
      %6943 = vst.msk [vmem:[%s118 + $0x530] sm:$0xff] %vm632, %v6431
      %6944 = vst.msk [vmem:[%s118 + $0x538] sm:$0xff] %vm632, %v6432
      %6945 = vst.msk [vmem:[%s118 + $0x540] sm:$0xff] %vm632, %v6433
      %6946 = vst.msk [vmem:[%s118 + $0x548] sm:$0xff] %vm632, %v6434
      %6947 = vst.msk [vmem:[%s118 + $0x550] sm:$0xff] %vm632, %v6435
      %6948 = vst.msk [vmem:[%s118 + $0x558] sm:$0xff] %vm632, %v6436
      %6949 = vst.msk [vmem:[%s118 + $0x560] sm:$0xff] %vm632, %v6437
      %6950 = vst.msk [vmem:[%s118 + $0x568] sm:$0xff] %vm632, %v6438
      %6951 = vst.msk [vmem:[%s118 + $0x570] sm:$0xff] %vm632, %v6439
      %6952 = vst.msk [vmem:[%s118 + $0x578] sm:$0xff] %vm632, %v6440
      %6953 = vst.msk [vmem:[%s118 + $0x580] sm:$0xff] %vm632, %v6441
      %6954 = vst.msk [vmem:[%s118 + $0x588] sm:$0xff] %vm632, %v6442
      %6955 = vst.msk [vmem:[%s118 + $0x590] sm:$0xff] %vm632, %v6443
      %6956 = vst.msk [vmem:[%s118 + $0x598] sm:$0xff] %vm632, %v6444
      %6957 = vst.msk [vmem:[%s118 + $0x5a0] sm:$0xff] %vm632, %v6445
      %6958 = vst.msk [vmem:[%s118 + $0x5a8] sm:$0xff] %vm632, %v6446
      %6959 = vst.msk [vmem:[%s118 + $0x5b0] sm:$0xff] %vm632, %v6447
      %6960 = vst.msk [vmem:[%s118 + $0x5b8] sm:$0xff] %vm632, %v6448
      %6961 = vst.msk [vmem:[%s118 + $0x5c0] sm:$0xff] %vm632, %v6449
      %6962 = vst.msk [vmem:[%s118 + $0x5c8] sm:$0xff] %vm632, %v6450
      %6963 = vst.msk [vmem:[%s118 + $0x5d0] sm:$0xff] %vm632, %v6451
      %6964 = vst.msk [vmem:[%s118 + $0x5d8] sm:$0xff] %vm632, %v6452
      %6965 = vst.msk [vmem:[%s118 + $0x5e0] sm:$0xff] %vm632, %v6453
      %6966 = vst.msk [vmem:[%s118 + $0x5e8] sm:$0xff] %vm632, %v6454
      %6967 = vst.msk [vmem:[%s118 + $0x5f0] sm:$0xff] %vm632, %v6455
      %6968 = vst.msk [vmem:[%s118 + $0x5f8] sm:$0xff] %vm632, %v6456
      %6969 = vst.msk [vmem:[%s118 + $0x600] sm:$0xff] %vm632, %v6457
      %6970 = vst.msk [vmem:[%s118 + $0x608] sm:$0xff] %vm632, %v6458
      %6971 = vst.msk [vmem:[%s118 + $0x610] sm:$0xff] %vm632, %v6459
      %6972 = vst.msk [vmem:[%s118 + $0x618] sm:$0xff] %vm632, %v6460
      %6973 = vst.msk [vmem:[%s118 + $0x620] sm:$0xff] %vm632, %v6461
      %6974 = vst.msk [vmem:[%s118 + $0x628] sm:$0xff] %vm632, %v6462
      %6975 = vst.msk [vmem:[%s118 + $0x630] sm:$0xff] %vm632, %v6463
      %6976 = vst.msk [vmem:[%s118 + $0x638] sm:$0xff] %vm632, %v6464
      %6977 = vst.msk [vmem:[%s118 + $0x640] sm:$0xff] %vm632, %v6465
      %6978 = vst.msk [vmem:[%s118 + $0x648] sm:$0xff] %vm632, %v6466
      %6979 = vst.msk [vmem:[%s118 + $0x650] sm:$0xff] %vm632, %v6467
      %6980 = vst.msk [vmem:[%s118 + $0x658] sm:$0xff] %vm632, %v6468
      %6981 = vst.msk [vmem:[%s118 + $0x660] sm:$0xff] %vm632, %v6469
      %6982 = vst.msk [vmem:[%s118 + $0x668] sm:$0xff] %vm632, %v6470
      %6983 = vst.msk [vmem:[%s118 + $0x670] sm:$0xff] %vm632, %v6471
      %6984 = vst.msk [vmem:[%s118 + $0x678] sm:$0xff] %vm632, %v6472
      %6985 = vst.msk [vmem:[%s118 + $0x680] sm:$0xff] %vm632, %v6473
      %6986 = vst.msk [vmem:[%s118 + $0x688] sm:$0xff] %vm632, %v6474
      %6987 = vst.msk [vmem:[%s118 + $0x690] sm:$0xff] %vm632, %v6475
      %6988 = vst.msk [vmem:[%s118 + $0x698] sm:$0xff] %vm632, %v6476
      %6989 = vst.msk [vmem:[%s118 + $0x6a0] sm:$0xff] %vm632, %v6477
      %6990 = vst.msk [vmem:[%s118 + $0x6a8] sm:$0xff] %vm632, %v6478
      %6991 = vst.msk [vmem:[%s118 + $0x6b0] sm:$0xff] %vm632, %v6479
      %6992 = vst.msk [vmem:[%s118 + $0x6b8] sm:$0xff] %vm632, %v6480
      %6993 = vst.msk [vmem:[%s118 + $0x6c0] sm:$0xff] %vm632, %v6481
      %6994 = vst.msk [vmem:[%s118 + $0x6c8] sm:$0xff] %vm632, %v6482
      %6995 = vst.msk [vmem:[%s118 + $0x6d0] sm:$0xff] %vm632, %v6483
      %6996 = vst.msk [vmem:[%s118 + $0x6d8] sm:$0xff] %vm632, %v6484
      %6997 = vst.msk [vmem:[%s118 + $0x6e0] sm:$0xff] %vm632, %v6485
      %6998 = vst.msk [vmem:[%s118 + $0x6e8] sm:$0xff] %vm632, %v6486
      %6999 = vst.msk [vmem:[%s118 + $0x6f0] sm:$0xff] %vm632, %v6487
      %7000 = vst.msk [vmem:[%s118 + $0x6f8] sm:$0xff] %vm632, %v6488
      %7001 = vst.msk [vmem:[%s118 + $0x700] sm:$0xff] %vm632, %v6489
      %7002 = vst.msk [vmem:[%s118 + $0x708] sm:$0xff] %vm632, %v6490
      %7003 = vst.msk [vmem:[%s118 + $0x710] sm:$0xff] %vm632, %v6491
      %7004 = vst.msk [vmem:[%s118 + $0x718] sm:$0xff] %vm632, %v6492
      %7005 = vst.msk [vmem:[%s118 + $0x720] sm:$0xff] %vm632, %v6493
      %7006 = vst.msk [vmem:[%s118 + $0x728] sm:$0xff] %vm632, %v6494
      %7007 = vst.msk [vmem:[%s118 + $0x730] sm:$0xff] %vm632, %v6495
      %7008 = vst.msk [vmem:[%s118 + $0x738] sm:$0xff] %vm632, %v6496
      %7009 = vst.msk [vmem:[%s118 + $0x740] sm:$0xff] %vm632, %v6497
      %7010 = vst.msk [vmem:[%s118 + $0x748] sm:$0xff] %vm632, %v6498
      %7011 = vst.msk [vmem:[%s118 + $0x750] sm:$0xff] %vm632, %v6499
      %7012 = vst.msk [vmem:[%s118 + $0x758] sm:$0xff] %vm632, %v6500
      %7013 = vst.msk [vmem:[%s118 + $0x760] sm:$0xff] %vm632, %v6501
      %7014 = vst.msk [vmem:[%s118 + $0x768] sm:$0xff] %vm632, %v6502
      %7015 = vst.msk [vmem:[%s118 + $0x770] sm:$0xff] %vm632, %v6503
      %7016 = vst.msk [vmem:[%s118 + $0x778] sm:$0xff] %vm632, %v6504
      %7017 = vst.msk [vmem:[%s118 + $0x780] sm:$0xff] %vm632, %v6505
      %7018 = vst.msk [vmem:[%s118 + $0x788] sm:$0xff] %vm632, %v6506
      %7019 = vst.msk [vmem:[%s118 + $0x790] sm:$0xff] %vm632, %v6507
      %7020 = vst.msk [vmem:[%s118 + $0x798] sm:$0xff] %vm632, %v6508
      %7021 = vst.msk [vmem:[%s118 + $0x7a0] sm:$0xff] %vm632, %v6509
      %7022 = vst.msk [vmem:[%s118 + $0x7a8] sm:$0xff] %vm632, %v6510
      %7023 = vst.msk [vmem:[%s118 + $0x7b0] sm:$0xff] %vm632, %v6511
      %7024 = vst.msk [vmem:[%s118 + $0x7b8] sm:$0xff] %vm632, %v6512
      %7025 = vst.msk [vmem:[%s118 + $0x7c0] sm:$0xff] %vm632, %v6513
      %7026 = vst.msk [vmem:[%s118 + $0x7c8] sm:$0xff] %vm632, %v6514
      %7027 = vst.msk [vmem:[%s118 + $0x7d0] sm:$0xff] %vm632, %v6515
      %7028 = vst.msk [vmem:[%s118 + $0x7d8] sm:$0xff] %vm632, %v6516
      %7029 = vst.msk [vmem:[%s118 + $0x7e0] sm:$0xff] %vm632, %v6517
      %7030 = vst.msk [vmem:[%s118 + $0x7e8] sm:$0xff] %vm632, %v6518
      %7031 = vst.msk [vmem:[%s118 + $0x7f0] sm:$0xff] %vm632, %v6519
      %7032 = vst.msk [vmem:[%s118 + $0x7f8] sm:$0xff] %vm632, %v6520
      %7033 = vst.msk [vmem:[%s118 + $0x800] sm:$0xff] %vm632, %v6521
      %7034 = vst.msk [vmem:[%s118 + $0x808] sm:$0xff] %vm632, %v6522
      %7035 = vst.msk [vmem:[%s118 + $0x810] sm:$0xff] %vm632, %v6523
      %7036 = vst.msk [vmem:[%s118 + $0x818] sm:$0xff] %vm632, %v6524
      %7037 = vst.msk [vmem:[%s118 + $0x820] sm:$0xff] %vm632, %v6525
      %7038 = vst.msk [vmem:[%s118 + $0x828] sm:$0xff] %vm632, %v6526
      %7039 = vst.msk [vmem:[%s118 + $0x830] sm:$0xff] %vm632, %v6527
      %7040 = vst.msk [vmem:[%s118 + $0x838] sm:$0xff] %vm632, %v6528
      %7041 = vst.msk [vmem:[%s118 + $0x840] sm:$0xff] %vm632, %v6529
      %7042 = vst.msk [vmem:[%s118 + $0x848] sm:$0xff] %vm632, %v6530
      %7043 = vst.msk [vmem:[%s118 + $0x850] sm:$0xff] %vm632, %v6531
      %7044 = vst.msk [vmem:[%s118 + $0x858] sm:$0xff] %vm632, %v6532
      %7045 = vst.msk [vmem:[%s118 + $0x860] sm:$0xff] %vm632, %v6533
      %7046 = vst.msk [vmem:[%s118 + $0x868] sm:$0xff] %vm632, %v6534
      %7047 = vst.msk [vmem:[%s118 + $0x870] sm:$0xff] %vm632, %v6535
      %7048 = vst.msk [vmem:[%s118 + $0x878] sm:$0xff] %vm632, %v6536
      %7049 = vst.msk [vmem:[%s118 + $0x880] sm:$0xff] %vm632, %v6537
      %7050 = vst.msk [vmem:[%s118 + $0x888] sm:$0xff] %vm632, %v6538
      %7051 = vst.msk [vmem:[%s118 + $0x890] sm:$0xff] %vm632, %v6539
      %7052 = vst.msk [vmem:[%s118 + $0x898] sm:$0xff] %vm632, %v6540
      %7053 = vst.msk [vmem:[%s118 + $0x8a0] sm:$0xff] %vm632, %v6541
      %7054 = vst.msk [vmem:[%s118 + $0x8a8] sm:$0xff] %vm632, %v6542
      %7055 = vst.msk [vmem:[%s118 + $0x8b0] sm:$0xff] %vm632, %v6543
      %7056 = vst.msk [vmem:[%s118 + $0x8b8] sm:$0xff] %vm632, %v6544
      %7057 = vst.msk [vmem:[%s118 + $0x8c0] sm:$0xff] %vm632, %v6545
      %7058 = vst.msk [vmem:[%s118 + $0x8c8] sm:$0xff] %vm632, %v6546
      %7059 = vst.msk [vmem:[%s118 + $0x8d0] sm:$0xff] %vm632, %v6547
      %7060 = vst.msk [vmem:[%s118 + $0x8d8] sm:$0xff] %vm632, %v6548
      %7061 = vst.msk [vmem:[%s118 + $0x8e0] sm:$0xff] %vm632, %v6549
      %7062 = vst.msk [vmem:[%s118 + $0x8e8] sm:$0xff] %vm632, %v6550
      %7063 = vst.msk [vmem:[%s118 + $0x8f0] sm:$0xff] %vm632, %v6551
      %7064 = vst.msk [vmem:[%s118 + $0x8f8] sm:$0xff] %vm632, %v6552
      %7065 = vst.msk [vmem:[%s118 + $0x900] sm:$0xff] %vm632, %v6553
      %7066 = vst.msk [vmem:[%s118 + $0x908] sm:$0xff] %vm632, %v6554
      %7067 = vst.msk [vmem:[%s118 + $0x910] sm:$0xff] %vm632, %v6555
      %7068 = vst.msk [vmem:[%s118 + $0x918] sm:$0xff] %vm632, %v6556
      %7069 = vst.msk [vmem:[%s118 + $0x920] sm:$0xff] %vm632, %v6557
      %7070 = vst.msk [vmem:[%s118 + $0x928] sm:$0xff] %vm632, %v6558
      %7071 = vst.msk [vmem:[%s118 + $0x930] sm:$0xff] %vm632, %v6559
      %7072 = vst.msk [vmem:[%s118 + $0x938] sm:$0xff] %vm632, %v6560
      %7073 = vst.msk [vmem:[%s118 + $0x940] sm:$0xff] %vm632, %v6561
      %7074 = vst.msk [vmem:[%s118 + $0x948] sm:$0xff] %vm632, %v6562
      %7075 = vst.msk [vmem:[%s118 + $0x950] sm:$0xff] %vm632, %v6563
      %7076 = vst.msk [vmem:[%s118 + $0x958] sm:$0xff] %vm632, %v6564
      %7077 = vst.msk [vmem:[%s118 + $0x960] sm:$0xff] %vm632, %v6565
      %7078 = vst.msk [vmem:[%s118 + $0x968] sm:$0xff] %vm632, %v6566
      %7079 = vst.msk [vmem:[%s118 + $0x970] sm:$0xff] %vm632, %v6567
      %7080 = vst.msk [vmem:[%s118 + $0x978] sm:$0xff] %vm632, %v6568
      %7081 = vst.msk [vmem:[%s118 + $0x980] sm:$0xff] %vm632, %v6569
      %7082 = vst.msk [vmem:[%s118 + $0x988] sm:$0xff] %vm632, %v6570
      %7083 = vst.msk [vmem:[%s118 + $0x990] sm:$0xff] %vm632, %v6571
      %7084 = vst.msk [vmem:[%s118 + $0x998] sm:$0xff] %vm632, %v6572
      %7085 = vst.msk [vmem:[%s118 + $0x9a0] sm:$0xff] %vm632, %v6573
      %7086 = vst.msk [vmem:[%s118 + $0x9a8] sm:$0xff] %vm632, %v6574
      %7087 = vst.msk [vmem:[%s118 + $0x9b0] sm:$0xff] %vm632, %v6575
      %7088 = vst.msk [vmem:[%s118 + $0x9b8] sm:$0xff] %vm632, %v6576
      %7089 = vst.msk [vmem:[%s118 + $0x9c0] sm:$0xff] %vm632, %v6577
      %7090 = vst.msk [vmem:[%s118 + $0x9c8] sm:$0xff] %vm632, %v6578
      %7091 = vst.msk [vmem:[%s118 + $0x9d0] sm:$0xff] %vm632, %v6579
      %7092 = vst.msk [vmem:[%s118 + $0x9d8] sm:$0xff] %vm632, %v6580
      %7093 = vst.msk [vmem:[%s118 + $0x9e0] sm:$0xff] %vm632, %v6581
      %7094 = vst.msk [vmem:[%s118 + $0x9e8] sm:$0xff] %vm632, %v6582
      %7095 = vst.msk [vmem:[%s118 + $0x9f0] sm:$0xff] %vm632, %v6583
      %7096 = vst.msk [vmem:[%s118 + $0x9f8] sm:$0xff] %vm632, %v6584
      %7097 = vst.msk [vmem:[%s118 + $0xa00] sm:$0xff] %vm632, %v6585
      %7098 = vst.msk [vmem:[%s118 + $0xa08] sm:$0xff] %vm632, %v6586
      %7099 = vst.msk [vmem:[%s118 + $0xa10] sm:$0xff] %vm632, %v6587
      %7100 = vst.msk [vmem:[%s118 + $0xa18] sm:$0xff] %vm632, %v6588
      %7101 = vst.msk [vmem:[%s118 + $0xa20] sm:$0xff] %vm632, %v6589
      %7102 = vst.msk [vmem:[%s118 + $0xa28] sm:$0xff] %vm632, %v6590
      %7103 = vst.msk [vmem:[%s118 + $0xa30] sm:$0xff] %vm632, %v6591
      %7104 = vst.msk [vmem:[%s118 + $0xa38] sm:$0xff] %vm632, %v6592
      %7105 = vst.msk [vmem:[%s118 + $0xa40] sm:$0xff] %vm632, %v6593
      %7106 = vst.msk [vmem:[%s118 + $0xa48] sm:$0xff] %vm632, %v6594
      %7107 = vst.msk [vmem:[%s118 + $0xa50] sm:$0xff] %vm632, %v6595
      %7108 = vst.msk [vmem:[%s118 + $0xa58] sm:$0xff] %vm632, %v6596
      %7109 = vst.msk [vmem:[%s118 + $0xa60] sm:$0xff] %vm632, %v6597
      %7110 = vst.msk [vmem:[%s118 + $0xa68] sm:$0xff] %vm632, %v6598
      %7111 = vst.msk [vmem:[%s118 + $0xa70] sm:$0xff] %vm632, %v6599
      %7112 = vst.msk [vmem:[%s118 + $0xa78] sm:$0xff] %vm632, %v6600
      %7113 = vst.msk [vmem:[%s118 + $0xa80] sm:$0xff] %vm632, %v6601
      %7114 = vst.msk [vmem:[%s118 + $0xa88] sm:$0xff] %vm632, %v6602
      %7115 = vst.msk [vmem:[%s118 + $0xa90] sm:$0xff] %vm632, %v6603
      %7116 = vst.msk [vmem:[%s118 + $0xa98] sm:$0xff] %vm632, %v6604
      %7117 = vst.msk [vmem:[%s118 + $0xaa0] sm:$0xff] %vm632, %v6605
      %7118 = vst.msk [vmem:[%s118 + $0xaa8] sm:$0xff] %vm632, %v6606
      %7119 = vst.msk [vmem:[%s118 + $0xab0] sm:$0xff] %vm632, %v6607
      %7120 = vst.msk [vmem:[%s118 + $0xab8] sm:$0xff] %vm632, %v6608
      %7121 = vst.msk [vmem:[%s118 + $0xac0] sm:$0xff] %vm632, %v6609
      %7122 = vst.msk [vmem:[%s118 + $0xac8] sm:$0xff] %vm632, %v6610
      %7123 = vst.msk [vmem:[%s118 + $0xad0] sm:$0xff] %vm632, %v6611
      %7124 = vst.msk [vmem:[%s118 + $0xad8] sm:$0xff] %vm632, %v6612
      %7125 = vst.msk [vmem:[%s118 + $0xae0] sm:$0xff] %vm632, %v6613
      %7126 = vst.msk [vmem:[%s118 + $0xae8] sm:$0xff] %vm632, %v6614
      %7127 = vst.msk [vmem:[%s118 + $0xaf0] sm:$0xff] %vm632, %v6615
      %7128 = vst.msk [vmem:[%s118 + $0xaf8] sm:$0xff] %vm632, %v6616
      %7129 = vst.msk [vmem:[%s118 + $0xb00] sm:$0xff] %vm632, %v6617
      %7130 = vst.msk [vmem:[%s118 + $0xb08] sm:$0xff] %vm632, %v6618
      %7131 = vst.msk [vmem:[%s118 + $0xb10] sm:$0xff] %vm632, %v6619
      %7132 = vst.msk [vmem:[%s118 + $0xb18] sm:$0xff] %vm632, %v6620
      %7133 = vst.msk [vmem:[%s118 + $0xb20] sm:$0xff] %vm632, %v6621
      %7134 = vst.msk [vmem:[%s118 + $0xb28] sm:$0xff] %vm632, %v6622
      %7135 = vst.msk [vmem:[%s118 + $0xb30] sm:$0xff] %vm632, %v6623
      %7136 = vst.msk [vmem:[%s118 + $0xb38] sm:$0xff] %vm632, %v6624
      %7137 = vst.msk [vmem:[%s118 + $0xb40] sm:$0xff] %vm632, %v6625
      %7138 = vst.msk [vmem:[%s118 + $0xb48] sm:$0xff] %vm632, %v6626
      %7139 = vst.msk [vmem:[%s118 + $0xb50] sm:$0xff] %vm632, %v6627
      %7140 = vst.msk [vmem:[%s118 + $0xb58] sm:$0xff] %vm632, %v6628
      %7141 = vst.msk [vmem:[%s118 + $0xb60] sm:$0xff] %vm632, %v6629
      %7142 = vst.msk [vmem:[%s118 + $0xb68] sm:$0xff] %vm632, %v6630
      %7143 = vst.msk [vmem:[%s118 + $0xb70] sm:$0xff] %vm632, %v6631
      %7144 = vst.msk [vmem:[%s118 + $0xb78] sm:$0xff] %vm632, %v6632
      %7145 = vst.msk [vmem:[%s118 + $0xb80] sm:$0xff] %vm632, %v6633
      %7146 = vst.msk [vmem:[%s118 + $0xb88] sm:$0xff] %vm632, %v6634
      %7147 = vst.msk [vmem:[%s118 + $0xb90] sm:$0xff] %vm632, %v6635
      %7148 = vst.msk [vmem:[%s118 + $0xb98] sm:$0xff] %vm632, %v6636
      %7149 = vst.msk [vmem:[%s118 + $0xba0] sm:$0xff] %vm632, %v6637
      %7150 = vst.msk [vmem:[%s118 + $0xba8] sm:$0xff] %vm632, %v6638
      %7151 = vst.msk [vmem:[%s118 + $0xbb0] sm:$0xff] %vm632, %v6639
      %7152 = vst.msk [vmem:[%s118 + $0xbb8] sm:$0xff] %vm632, %v6640
      %7153 = vst.msk [vmem:[%s118 + $0xbc0] sm:$0xff] %vm632, %v6641
      %7154 = vst.msk [vmem:[%s118 + $0xbc8] sm:$0xff] %vm632, %v6642
      %7155 = vst.msk [vmem:[%s118 + $0xbd0] sm:$0xff] %vm632, %v6643
      %7156 = vst.msk [vmem:[%s118 + $0xbd8] sm:$0xff] %vm632, %v6644
      %7157 = vst.msk [vmem:[%s118 + $0xbe0] sm:$0xff] %vm632, %v6645
      %7158 = vst.msk [vmem:[%s118 + $0xbe8] sm:$0xff] %vm632, %v6646
      %7159 = vst.msk [vmem:[%s118 + $0xbf0] sm:$0xff] %vm632, %v6647
      %7160 = vst.msk [vmem:[%s118 + $0xbf8] sm:$0xff] %vm632, %v6648
      %7161 = vst.msk [vmem:[%s118 + $0xc00] sm:$0xff] %vm632, %v6649
      %7162 = vst.msk [vmem:[%s118 + $0xc08] sm:$0xff] %vm632, %v6650
      %7163 = vst.msk [vmem:[%s118 + $0xc10] sm:$0xff] %vm632, %v6651
      %7164 = vst.msk [vmem:[%s118 + $0xc18] sm:$0xff] %vm632, %v6652
      %7165 = vst.msk [vmem:[%s118 + $0xc20] sm:$0xff] %vm632, %v6653
      %7166 = vst.msk [vmem:[%s118 + $0xc28] sm:$0xff] %vm632, %v6654
      %7167 = vst.msk [vmem:[%s118 + $0xc30] sm:$0xff] %vm632, %v6655
      %7168 = vst.msk [vmem:[%s118 + $0xc38] sm:$0xff] %vm632, %v6656
      %7169 = vst.msk [vmem:[%s118 + $0xc40] sm:$0xff] %vm632, %v6657
      %7170 = vst.msk [vmem:[%s118 + $0xc48] sm:$0xff] %vm632, %v6658
      %7171 = vst.msk [vmem:[%s118 + $0xc50] sm:$0xff] %vm632, %v6659
      %7172 = vst.msk [vmem:[%s118 + $0xc58] sm:$0xff] %vm632, %v6660
      %7173 = vst.msk [vmem:[%s118 + $0xc60] sm:$0xff] %vm632, %v6661
      %7174 = vst.msk [vmem:[%s118 + $0xc68] sm:$0xff] %vm632, %v6662
      %7175 = vst.msk [vmem:[%s118 + $0xc70] sm:$0xff] %vm632, %v6663
      %7176 = vst.msk [vmem:[%s118 + $0xc78] sm:$0xff] %vm632, %v6664
      %7177 = vst.msk [vmem:[%s118 + $0xc80] sm:$0xff] %vm632, %v6665
      %7178 = vst.msk [vmem:[%s118 + $0xc88] sm:$0xff] %vm632, %v6666
      %7179 = vst.msk [vmem:[%s118 + $0xc90] sm:$0xff] %vm632, %v6667
      %7180 = vst.msk [vmem:[%s118 + $0xc98] sm:$0xff] %vm632, %v6668
      %7181 = vst.msk [vmem:[%s118 + $0xca0] sm:$0xff] %vm632, %v6669
      %7182 = vst.msk [vmem:[%s118 + $0xca8] sm:$0xff] %vm632, %v6670
      %7183 = vst.msk [vmem:[%s118 + $0xcb0] sm:$0xff] %vm632, %v6671
      %7184 = vst.msk [vmem:[%s118 + $0xcb8] sm:$0xff] %vm632, %v6672
      %7185 = vst.msk [vmem:[%s118 + $0xcc0] sm:$0xff] %vm632, %v6673
      %7186 = vst.msk [vmem:[%s118 + $0xcc8] sm:$0xff] %vm632, %v6674
      %7187 = vst.msk [vmem:[%s118 + $0xcd0] sm:$0xff] %vm632, %v6675
      %7188 = vst.msk [vmem:[%s118 + $0xcd8] sm:$0xff] %vm632, %v6676
      %7189 = vst.msk [vmem:[%s118 + $0xce0] sm:$0xff] %vm632, %v6677
      %7190 = vst.msk [vmem:[%s118 + $0xce8] sm:$0xff] %vm632, %v6678
      %7191 = vst.msk [vmem:[%s118 + $0xcf0] sm:$0xff] %vm632, %v6679
      %7192 = vst.msk [vmem:[%s118 + $0xcf8] sm:$0xff] %vm632, %v6680
      %7193 = vst.msk [vmem:[%s118 + $0xd00] sm:$0xff] %vm632, %v6681
      %7194 = vst.msk [vmem:[%s118 + $0xd08] sm:$0xff] %vm632, %v6682
      %7195 = vst.msk [vmem:[%s118 + $0xd10] sm:$0xff] %vm632, %v6683
      %7196 = vst.msk [vmem:[%s118 + $0xd18] sm:$0xff] %vm632, %v6684
      %7197 = vst.msk [vmem:[%s118 + $0xd20] sm:$0xff] %vm632, %v6685
      %7198 = vst.msk [vmem:[%s118 + $0xd28] sm:$0xff] %vm632, %v6686
      %7199 = vst.msk [vmem:[%s118 + $0xd30] sm:$0xff] %vm632, %v6687
      %7200 = vst.msk [vmem:[%s118 + $0xd38] sm:$0xff] %vm632, %v6688
      %7201 = vst.msk [vmem:[%s118 + $0xd40] sm:$0xff] %vm632, %v6689
      %7202 = vst.msk [vmem:[%s118 + $0xd48] sm:$0xff] %vm632, %v6690
      %7203 = vst.msk [vmem:[%s118 + $0xd50] sm:$0xff] %vm632, %v6691
      %7204 = vst.msk [vmem:[%s118 + $0xd58] sm:$0xff] %vm632, %v6692
      %7205 = vst.msk [vmem:[%s118 + $0xd60] sm:$0xff] %vm632, %v6693
      %7206 = vst.msk [vmem:[%s118 + $0xd68] sm:$0xff] %vm632, %v6694
      %7207 = vst.msk [vmem:[%s118 + $0xd70] sm:$0xff] %vm632, %v6695
      %7208 = vst.msk [vmem:[%s118 + $0xd78] sm:$0xff] %vm632, %v6696
      %7209 = vst.msk [vmem:[%s118 + $0xd80] sm:$0xff] %vm632, %v6697
      %7210 = vst.msk [vmem:[%s118 + $0xd88] sm:$0xff] %vm632, %v6698
      %7211 = vst.msk [vmem:[%s118 + $0xd90] sm:$0xff] %vm632, %v6699
      %7212 = vst.msk [vmem:[%s118 + $0xd98] sm:$0xff] %vm632, %v6700
      %7213 = vst.msk [vmem:[%s118 + $0xda0] sm:$0xff] %vm632, %v6701
      %7214 = vst.msk [vmem:[%s118 + $0xda8] sm:$0xff] %vm632, %v6702
      %7215 = vst.msk [vmem:[%s118 + $0xdb0] sm:$0xff] %vm632, %v6703
      %7216 = vst.msk [vmem:[%s118 + $0xdb8] sm:$0xff] %vm632, %v6704
      %7217 = vst.msk [vmem:[%s118 + $0xdc0] sm:$0xff] %vm632, %v6705
      %7218 = vst.msk [vmem:[%s118 + $0xdc8] sm:$0xff] %vm632, %v6706
      %7219 = vst.msk [vmem:[%s118 + $0xdd0] sm:$0xff] %vm632, %v6707
      %7220 = vst.msk [vmem:[%s118 + $0xdd8] sm:$0xff] %vm632, %v6708
      %7221 = vst.msk [vmem:[%s118 + $0xde0] sm:$0xff] %vm632, %v6709
      %7222 = vst.msk [vmem:[%s118 + $0xde8] sm:$0xff] %vm632, %v6710
      %7223 = vst.msk [vmem:[%s118 + $0xdf0] sm:$0xff] %vm632, %v6711
      %7224 = vst.msk [vmem:[%s118 + $0xdf8] sm:$0xff] %vm632, %v6712
      %7225 = vst.msk [vmem:[%s118 + $0xe00] sm:$0xff] %vm632, %v6713
      %7226 = vst.msk [vmem:[%s118 + $0xe08] sm:$0xff] %vm632, %v6714
      %7227 = vst.msk [vmem:[%s118 + $0xe10] sm:$0xff] %vm632, %v6715
      %7228 = vst.msk [vmem:[%s118 + $0xe18] sm:$0xff] %vm632, %v6716
      %7229 = vst.msk [vmem:[%s118 + $0xe20] sm:$0xff] %vm632, %v6717
      %7230 = vst.msk [vmem:[%s118 + $0xe28] sm:$0xff] %vm632, %v6718
      %7231 = vst.msk [vmem:[%s118 + $0xe30] sm:$0xff] %vm632, %v6719
      %7232 = vst.msk [vmem:[%s118 + $0xe38] sm:$0xff] %vm632, %v6720
      %7233 = vst.msk [vmem:[%s118 + $0xe40] sm:$0xff] %vm632, %v6721
      %7234 = vst.msk [vmem:[%s118 + $0xe48] sm:$0xff] %vm632, %v6722
      %7235 = vst.msk [vmem:[%s118 + $0xe50] sm:$0xff] %vm632, %v6723
      %7236 = vst.msk [vmem:[%s118 + $0xe58] sm:$0xff] %vm632, %v6724
      %7237 = vst.msk [vmem:[%s118 + $0xe60] sm:$0xff] %vm632, %v6725
      %7238 = vst.msk [vmem:[%s118 + $0xe68] sm:$0xff] %vm632, %v6726
      %7239 = vst.msk [vmem:[%s118 + $0xe70] sm:$0xff] %vm632, %v6727
      %7240 = vst.msk [vmem:[%s118 + $0xe78] sm:$0xff] %vm632, %v6728
      %7241 = vst.msk [vmem:[%s118 + $0xe80] sm:$0xff] %vm632, %v6729
      %7242 = vst.msk [vmem:[%s118 + $0xe88] sm:$0xff] %vm632, %v6730
      %7243 = vst.msk [vmem:[%s118 + $0xe90] sm:$0xff] %vm632, %v6731
      %7244 = vst.msk [vmem:[%s118 + $0xe98] sm:$0xff] %vm632, %v6732
      %7245 = vst.msk [vmem:[%s118 + $0xea0] sm:$0xff] %vm632, %v6733
      %7246 = vst.msk [vmem:[%s118 + $0xea8] sm:$0xff] %vm632, %v6734
      %7247 = vst.msk [vmem:[%s118 + $0xeb0] sm:$0xff] %vm632, %v6735
      %7248 = vst.msk [vmem:[%s118 + $0xeb8] sm:$0xff] %vm632, %v6736
      %7249 = vst.msk [vmem:[%s118 + $0xec0] sm:$0xff] %vm632, %v6737
      %7250 = vst.msk [vmem:[%s118 + $0xec8] sm:$0xff] %vm632, %v6738
      %7251 = vst.msk [vmem:[%s118 + $0xed0] sm:$0xff] %vm632, %v6739
      %7252 = vst.msk [vmem:[%s118 + $0xed8] sm:$0xff] %vm632, %v6740
      %7253 = vst.msk [vmem:[%s118 + $0xee0] sm:$0xff] %vm632, %v6741
      %7254 = vst.msk [vmem:[%s118 + $0xee8] sm:$0xff] %vm632, %v6742
      %7255 = vst.msk [vmem:[%s118 + $0xef0] sm:$0xff] %vm632, %v6743
      %7256 = vst.msk [vmem:[%s118 + $0xef8] sm:$0xff] %vm632, %v6744
      %7257 = vst.msk [vmem:[%s118 + $0xf00] sm:$0xff] %vm632, %v6745
      %7258 = vst.msk [vmem:[%s118 + $0xf08] sm:$0xff] %vm632, %v6746
      %7259 = vst.msk [vmem:[%s118 + $0xf10] sm:$0xff] %vm632, %v6747
      %7260 = vst.msk [vmem:[%s118 + $0xf18] sm:$0xff] %vm632, %v6748
      %7261 = vst.msk [vmem:[%s118 + $0xf20] sm:$0xff] %vm632, %v6749
      %7262 = vst.msk [vmem:[%s118 + $0xf28] sm:$0xff] %vm632, %v6750
      %7263 = vst.msk [vmem:[%s118 + $0xf30] sm:$0xff] %vm632, %v6751
      %7264 = vst.msk [vmem:[%s118 + $0xf38] sm:$0xff] %vm632, %v6752
      %7265 = vst.msk [vmem:[%s118 + $0xf40] sm:$0xff] %vm632, %v6753
      %7266 = vst.msk [vmem:[%s118 + $0xf48] sm:$0xff] %vm632, %v6754
      %7267 = vst.msk [vmem:[%s118 + $0xf50] sm:$0xff] %vm632, %v6755
      %7268 = vst.msk [vmem:[%s118 + $0xf58] sm:$0xff] %vm632, %v6756
      %7269 = vst.msk [vmem:[%s118 + $0xf60] sm:$0xff] %vm632, %v6757
      %7270 = vst.msk [vmem:[%s118 + $0xf68] sm:$0xff] %vm632, %v6758
      %7271 = vst.msk [vmem:[%s118 + $0xf70] sm:$0xff] %vm632, %v6759
      %7272 = vst.msk [vmem:[%s118 + $0xf78] sm:$0xff] %vm632, %v6760
      %7273 = vst.msk [vmem:[%s118 + $0xf80] sm:$0xff] %vm632, %v6761
      %7274 = vst.msk [vmem:[%s118 + $0xf88] sm:$0xff] %vm632, %v6762
      %7275 = vst.msk [vmem:[%s118 + $0xf90] sm:$0xff] %vm632, %v6763
      %7276 = vst.msk [vmem:[%s118 + $0xf98] sm:$0xff] %vm632, %v6764
      %7277 = vst.msk [vmem:[%s118 + $0xfa0] sm:$0xff] %vm632, %v6765
      %7278 = vst.msk [vmem:[%s118 + $0xfa8] sm:$0xff] %vm632, %v6766
      %7279 = vst.msk [vmem:[%s118 + $0xfb0] sm:$0xff] %vm632, %v6767
      %7280 = vst.msk [vmem:[%s118 + $0xfb8] sm:$0xff] %vm632, %v6768
      %7281 = vst.msk [vmem:[%s118 + $0xfc0] sm:$0xff] %vm632, %v6769
      %7282 = vst.msk [vmem:[%s118 + $0xfc8] sm:$0xff] %vm632, %v6770
      %7283 = vst.msk [vmem:[%s118 + $0xfd0] sm:$0xff] %vm632, %v6771
      %7284 = vst.msk [vmem:[%s118 + $0xfd8] sm:$0xff] %vm632, %v6772
      %7285 = vst.msk [vmem:[%s118 + $0xfe0] sm:$0xff] %vm632, %v6773
      %7286 = vst.msk [vmem:[%s118 + $0xfe8] sm:$0xff] %vm632, %v6774
      %7287 = vst.msk [vmem:[%s118 + $0xff0] sm:$0xff] %vm632, %v6775
      %7288 = vst.msk [vmem:[%s118 + $0xff8] sm:$0xff] %vm632, %v6776
      %s7289 = smul.u32 512, %s12
      %p7290 = scmp.lt.s32.totalorder %s7289, 1023
      %s7291 = scalar_select %p7290, %s7289, 1023
      %s7292 = smul.addr %s7291, 8
      %s7293 = scalar_lea.vmem %s1, %s7292
      // Predicated region
      $region25: #{tpu_custom_call.1} parent=23 // pred_check
        %p7294 = pneg %p56
      $region26: #{tpu_custom_call.1} parent=23 // pred_check_branch
        %7296 = sbr.rel (%p7294) target = $region28
      $region27: #{tpu_custom_call.1} parent=23 // pred_region
        %s7297 = smul.u32 512, %s12
      $region28: #{tpu_custom_call.1} parent=23 // pred_fallthru
        _
    $region24: #{tpu_custom_call.1} parent=5 // pred_fallthru
      _
    %p7298 = scmp.le.s32.totalorder 2, %s7
    // Predicated region
    $region29: #{tpu_custom_call.1} parent=5 // pred_check
      %p7299 = pneg %p7298
    $region30: #{tpu_custom_call.1} parent=5 // pred_check_branch
      %7301 = sbr.rel (%p7299) target = $region32
    $region31: #{tpu_custom_call.1} parent=5 // pred_region
      %s7302 = ssub.s32 %s7, 2
      // Predicated region
      $region33: #{tpu_custom_call.1} parent=31 // pred_check
        %p7303 = pneg %p62
      $region34: #{tpu_custom_call.1} parent=31 // pred_check_branch
        %7305 = sbr.rel (%p7303) target = $region36
      $region35: #{tpu_custom_call.1} parent=31 // pred_region
        %s7306 = smul.u32 512, %s13
        %p7307 = scmp.lt.s32.totalorder %s7306, 1023
        %s7308 = scalar_select %p7307, %s7306, 1023
        %s7309 = smul.addr %s7308, 8
        %s7310 = scalar_lea.vmem %s1, %s7309
      $region36: #{tpu_custom_call.1} parent=31 // pred_fallthru
        _
    $region32: #{tpu_custom_call.1} parent=5 // pred_fallthru
      _
  $region6: #{tpu_custom_call.1} parent=0 // loop_footer
    %s11 = sadd.s32 1, %s7
  $region7: #{tpu_custom_call.1} parent=0 // loop_footer_branch
    %6 = sbr.rel target = $region3
  $region8: #{tpu_custom_call.1} parent=0 // loop_exit
    _

</llo_original>
